<compile_context>
chip_gen: v7x
topology: tpu7x:2x2x1
jax: 0.10.0
libtpu: 0.0.40
codegen_flags: <defaults>
</compile_context>

<pallas_src>
from math import ceil

import numpy as np
import jax
import jax.numpy as jnp
from jax import lax
from jax.experimental import pallas as pl
from jax.experimental.pallas import tpu as pltpu


# ----------------------------------------------------------------------------
# In-kernel building blocks (traced inside the single fused kernel)
# ----------------------------------------------------------------------------

def _mm(a, w):
    """(B, N, F) f32 x (F, O) bf16 -> (B, N, O) f32 on the MXU."""
    return jnp.einsum('bnf,fo->bno', a.astype(jnp.bfloat16), w,
                      preferred_element_type=jnp.float32)


def _mm2(a, w):
    """(B, F) f32 x (F, O) bf16 -> (B, O) f32 on the MXU."""
    return jnp.einsum('bf,fo->bo', a.astype(jnp.bfloat16), w,
                      preferred_element_type=jnp.float32)


def _deg_inv(adj_b):
    """1 / clamp(rowsum(adj), min=1): row-sum on the MXU (ones-matmul), EUP reciprocal."""
    n = adj_b.shape[-1]
    deg = jnp.einsum('bnm,mk->bnk', adj_b, jnp.ones((n, 1), jnp.bfloat16),
                     preferred_element_type=jnp.float32)              # (B, N, 1) f32
    return pl.reciprocal(jnp.maximum(deg, 1.0), approx=True)


def _agg(adj_b, deg_inv, x):
    """Mean neighborhood aggregation: (adj @ x) * deg_inv (bf16 MXU, f32 scale)."""
    return jnp.einsum('bnm,bmf->bnf', adj_b, x.astype(jnp.bfloat16),
                      preferred_element_type=jnp.float32) * deg_inv


def _sage_bn_layer(parts, aggs, w_ref, vec, mask):
    """DenseSAGEConv + optional mask + ReLU + BatchNorm1d (training batch stats).

    parts/aggs are row-block lists (no channel concat is ever materialized).
    w_ref: (2, sum(fin_i), fout) bf16 with [0]=lin_rel, [1]=lin_root.
    vec:   (3, fout) f32 value = [bias, bn_gamma, bn_beta].
    """
    y = None
    off = 0
    for p, a in zip(parts, aggs):
        f = p.shape[-1]
        t = _mm(a, w_ref[0, off:off + f, :]) + _mm(p, w_ref[1, off:off + f, :])
        y = t if y is None else y + t
        off += f
    y = y + vec[0:1]
    if mask is not None:                  # stages 2/3 skip the multiply at trace time
        y = y * mask
    y = jnp.maximum(y, 0.0)
    # one-pass batch statistics over all B*N rows (matches reference's .view(-1, C))
    mu = jnp.mean(y, axis=(0, 1), keepdims=True)
    ms = jnp.mean(y * y, axis=(0, 1), keepdims=True)
    var = jnp.maximum(ms - mu * mu, 0.0)
    scale = lax.rsqrt(var + 1e-5) * vec[1:2]
    return y * scale + (vec[2:3] - mu * scale)


def _gnn_layers(parts, aggs1, adj_b, deg_inv, mask, w1, w2, w3, vec1, vec2, vec3):
    """Three SAGE+BN layers; the layer-1 aggregation is precomputed (shared pool/embed)."""
    x1 = _sage_bn_layer(parts, aggs1, w1, vec1, mask)
    x2 = _sage_bn_layer([x1], [_agg(adj_b, deg_inv, x1)], w2, vec2, mask)
    x3 = _sage_bn_layer([x2], [_agg(adj_b, deg_inv, x2)], w3, vec3, mask)
    return x1, x2, x3


def _stage(parts, adj_b, deg_inv, mask, pool, emb):
    """gnn_pool + gnn_embed + dense_diff_pool; returns pooled feature parts + pooled adj."""
    pw1, pw2, pw3, plin, pvec12, pvec3 = pool
    ew1, ew2, ew3, evec = emb
    h = pw1.shape[-1]
    c = pw3.shape[-1]

    # layer-1 aggregation computed ONCE and shared by pool and embed GNNs
    aggs1 = [_agg(adj_b, deg_inv, p) for p in parts]

    # pool GNN (lin=True): s = relu(cat(x1,x2,x3) @ L + b) without materializing the concat
    p1, p2, p3 = _gnn_layers(parts, aggs1, adj_b, deg_inv, mask,
                             pw1, pw2, pw3, pvec12[0], pvec12[1], pvec3[0:3])
    s = (_mm(p1, plin[0:h, :]) + _mm(p2, plin[h:2 * h, :])
         + _mm(p3, plin[2 * h:2 * h + c, :]) + pvec3[3:4])
    s = jnp.maximum(s, 0.0)

    # embed GNN (lin=False): output kept as three row-block parts (no concat)
    e1, e2, e3 = _gnn_layers(parts, aggs1, adj_b, deg_inv, mask,
                             ew1, ew2, ew3, evec[0], evec[1], evec[2])

    # dense_diff_pool: softmax over clusters (exact divide).  Masking s alone is
    # mathematically equivalent to the reference masking both s and x in S^T X / S^T A S.
    s = jnp.exp(s - jnp.max(s, axis=-1, keepdims=True))
    s = s / jnp.sum(s, axis=-1, keepdims=True)
    if mask is not None:
        s = s * mask
    s_b = s.astype(jnp.bfloat16)
    new_parts = [jnp.einsum('bnc,bnf->bcf', s_b, e.astype(jnp.bfloat16),
                            preferred_element_type=jnp.float32)          # S^T X per part
                 for e in (e1, e2, e3)]
    sta = jnp.einsum('bnc,bnm->bcm', s_b, adj_b,
                     preferred_element_type=jnp.float32)                 # S^T A
    new_adj = jnp.einsum('bcm,bmk->bck', sta.astype(jnp.bfloat16), s_b,
                         preferred_element_type=jnp.float32)             # (S^T A) S
    # TODO(synk): dense_diff_pool's link_loss / ent_loss are not returned by
    # DiffPoolGNN.forward, so they are not computed here.
    return new_parts, new_adj


# ----------------------------------------------------------------------------
# The single fused Pallas kernel
# ----------------------------------------------------------------------------

def _diffpool_kernel(*refs):
    out_ref = refs[-1]
    it = iter(refs[:-1])
    x_ref, adj_ref, mask_ref = next(it), next(it), next(it)
    pool1 = [next(it) for _ in range(6)]
    emb1 = [next(it) for _ in range(4)]
    pool2 = [next(it) for _ in range(6)]
    emb2 = [next(it) for _ in range(4)]
    emb3 = [next(it) for _ in range(4)]
    lin1_w, lin1_b, pred_w, pred_b = next(it), next(it), next(it), next(it)

    x = x_ref[...]                       # (B, N, F) f32
    adj_b = adj_ref[...]                 # (B, N, N) bf16 straight from HBM (exact ints)
    mask = mask_ref[...]                 # (B, N, 1) f32

    # ---- stage 1: gnn1_pool + gnn1_embed + dense_diff_pool (real node mask) ----
    di = _deg_inv(adj_b)
    parts, adj = _stage([x], adj_b, di, mask, pool1, emb1)

    # ---- stage 2: gnn2_pool + gnn2_embed + dense_diff_pool (reference mask=None) ----
    adj_b = adj.astype(jnp.bfloat16)
    di = _deg_inv(adj_b)
    parts, adj = _stage(parts, adj_b, di, None, pool2, emb2)

    # ---- stage 3: gnn3_embed + node-mean + relu(lin1) + all prediction heads ----
    adj_b = adj.astype(jnp.bfloat16)
    di = _deg_inv(adj_b)
    ew1, ew2, ew3, evec = emb3
    aggs = [_agg(adj_b, di, p) for p in parts]
    f1, f2, f3 = _gnn_layers(parts, aggs, adj_b, di, None,
                             ew1, ew2, ew3, evec[0], evec[1], evec[2])
    h = ew1.shape[-1]
    m1, m2, m3 = (jnp.mean(f, axis=1) for f in (f1, f2, f3))   # x.mean(dim=1), per part
    z = (_mm2(m1, lin1_w[0:h, :]) + _mm2(m2, lin1_w[h:2 * h, :])
         + _mm2(m3, lin1_w[2 * h:3 * h, :]) + lin1_b[...])
    z = jnp.maximum(z, 0.0)                                    # relu(lin1(x))
    # all max_seq_len heads as one lane-dense (width 128) matmul + unmasked store
    out_ref[...] = _mm2(z, pred_w[...]) + pred_b[...]


# ----------------------------------------------------------------------------
# Wrapper (one pallas_call, whole batch in one block, no grid)
# ----------------------------------------------------------------------------

def diffpool_gnn_forward(params, x_dense, adj, mask):
    B = x_dense.shape[0]
    args = ([x_dense, adj.astype(jnp.bfloat16), mask]
            + list(params["pool1"]) + list(params["embed1"])
            + list(params["pool2"]) + list(params["embed2"])
            + list(params["embed3"])
            + [params["lin1_w"], params["lin1_b"], params["pred_w"], params["pred_b"]])
    out = pl.pallas_call(
        _diffpool_kernel,
        out_shape=jax.ShapeDtypeStruct((B, params["out_pad"]), jnp.float32),
        compiler_params=pltpu.CompilerParams(vmem_limit_bytes=48 * 1024 * 1024),
    )(*args)
    sv = params["max_seq_len"] * params["num_vocab"]
    preds = out[:, :sv].reshape(B, params["max_seq_len"], params["num_vocab"])
    return [preds[:, i, :] for i in range(params["max_seq_len"])]


# ----------------------------------------------------------------------------
# Parameter init (deterministic, synthetic; weights stacked/packed, bf16 for MXU)
# ----------------------------------------------------------------------------

def _uniform(key, shape, fan_in):
    bound = 1.0 / np.sqrt(fan_in)
    return jax.random.uniform(key, shape, jnp.float32, -bound, bound)


def _init_conv(key, fin, fout):
    k1, k2, k3 = jax.random.split(key, 3)
    w = jnp.stack([_uniform(k1, (fin, fout), fin),       # lin_rel
                   _uniform(k2, (fin, fout), fin)])      # lin_root
    vec = jnp.stack([_uniform(k3, (fout,), fin),         # bias
                     jnp.ones((fout,), jnp.float32),     # bn gamma
                     jnp.zeros((fout,), jnp.float32)])   # bn beta
    return w.astype(jnp.bfloat16), vec


def init_embed_gnn(key, fin, h):
    ks = jax.random.split(key, 3)
    w1, v1 = _init_conv(ks[0], fin, h)
    w2, v2 = _init_conv(ks[1], h, h)
    w3, v3 = _init_conv(ks[2], h, h)
    return [w1, w2, w3, jnp.stack([v1, v2, v3])]          # 4 arrays


def init_pool_gnn(key, fin, h, c):
    ks = jax.random.split(key, 5)
    w1, v1 = _init_conv(ks[0], fin, h)
    w2, v2 = _init_conv(ks[1], h, h)
    w3, v3 = _init_conv(ks[2], h, c)
    flin = 2 * h + c
    lin_w = _uniform(ks[3], (flin, c), flin).astype(jnp.bfloat16)
    lin_b = _uniform(ks[4], (1, c), flin)
    vec3 = jnp.concatenate([v3, lin_b], axis=0)           # (4, c): b3, g3, beta3, lin_b
    return [w1, w2, w3, lin_w, jnp.stack([v1, v2]), vec3]  # 6 arrays


def init_diffpool_gnn(key, num_vocab, max_seq_len, emb_dim, max_nodes,
                      num_nodetypes, num_nodeattrs, max_depth):
    ks = jax.random.split(key, 11)
    c1 = ceil(0.25 * max_nodes)
    c2 = ceil(0.25 * c1)
    fin2 = 3 * emb_dim                   # 2*hidden + embedding_dim
    sv = max_seq_len * num_vocab
    out_pad = max(128, ((sv + 127) // 128) * 128)

    # stacked prediction heads: one lane-dense (emb_dim, out_pad) matmul
    hw, hb = [], []
    for k in jax.random.split(ks[9], max_seq_len):
        k1, k2 = jax.random.split(k)
        hw.append(_uniform(k1, (emb_dim, num_vocab), emb_dim))
        hb.append(_uniform(k2, (1, num_vocab), emb_dim))
    pred_w = jnp.concatenate(hw, axis=1)
    pred_b = jnp.concatenate(hb, axis=1)
    pad = out_pad - pred_w.shape[1]
    if pad:
        pred_w = jnp.concatenate([pred_w, jnp.zeros((emb_dim, pad), jnp.float32)], axis=1)
        pred_b = jnp.concatenate([pred_b, jnp.zeros((1, pad), jnp.float32)], axis=1)

    k1, k2 = jax.random.split(ks[8])
    return {
        "type_emb": 0.1 * jax.random.normal(ks[0], (num_nodetypes, emb_dim), jnp.float32),
        "attr_emb": 0.1 * jax.random.normal(ks[1], (num_nodeattrs, emb_dim), jnp.float32),
        "depth_emb": 0.1 * jax.random.normal(ks[2], (max_depth + 1, emb_dim), jnp.float32),
        "pool1": init_pool_gnn(ks[3], emb_dim, emb_dim, c1),
        "embed1": init_embed_gnn(ks[4], emb_dim, emb_dim),
        "pool2": init_pool_gnn(ks[5], fin2, emb_dim, c2),
        "embed2": init_embed_gnn(ks[6], fin2, emb_dim),
        "embed3": init_embed_gnn(ks[7], fin2, emb_dim),
        "lin1_w": _uniform(k1, (fin2, emb_dim), fin2).astype(jnp.bfloat16),
        "lin1_b": _uniform(k2, (1, emb_dim), fin2),
        "pred_w": pred_w.astype(jnp.bfloat16),
        "pred_b": pred_b,
        "max_depth": max_depth,
        "max_seq_len": max_seq_len,
        "num_vocab": num_vocab,
        "out_pad": out_pad,
    }


# ----------------------------------------------------------------------------
# Glue: node encoder + sparse->dense batching (host/XLA, not kernel work)
# ----------------------------------------------------------------------------

def node_encode(params, node_x, node_depth):
    depth = jnp.minimum(node_depth, params["max_depth"])
    return (params["type_emb"][node_x[:, 0]]
            + params["attr_emb"][node_x[:, 1]]
            + params["depth_emb"][depth])


def to_dense(h, edge_index, batch_np):
    """to_dense_batch + to_dense_adj (numpy indices are static)."""
    B = int(batch_np.max()) + 1
    counts = np.bincount(batch_np, minlength=B)
    N = int(counts.max())
    pos = np.concatenate([np.arange(c) for c in counts]).astype(np.int32)

    x_dense = jnp.zeros((B, N, h.shape[1]), jnp.float32)
    x_dense = x_dense.at[batch_np, pos].set(h)

    mask = np.zeros((B, N, 1), np.float32)
    mask[batch_np, pos, 0] = 1.0

    adj = np.zeros((B, N, N), np.float32)
    src, dst = edge_index
    adj[batch_np[src], pos[src], pos[dst]] += 1.0
    return x_dense, jnp.asarray(adj), jnp.asarray(mask)


# ----------------------------------------------------------------------------
# Main
# ----------------------------------------------------------------------------

if __name__ == "__main__":
    num_vocab = 10
    max_seq_len = 3
    emb_dim = 32
    max_nodes = 32          # -> C1 = 8 clusters, C2 = 2 clusters
    num_nodetypes = 20
    num_nodeattrs = 30
    max_depth = 10

    key = jax.random.PRNGKey(0)
    k_params, k_x, k_attr, k_depth = jax.random.split(key, 4)
    params = init_diffpool_gnn(k_params, num_vocab, max_seq_len, emb_dim, max_nodes,
                               num_nodetypes, num_nodeattrs, max_depth)

    # Synthetic batched graph: 2 graphs with 6 and 8 nodes, bidirectional chain edges
    nodes_per_graph = [6, 8]
    total_nodes = sum(nodes_per_graph)
    batch_np = np.repeat(np.arange(len(nodes_per_graph)), nodes_per_graph).astype(np.int32)

    node_type = jax.random.randint(k_x, (total_nodes, 1), 0, num_nodetypes)
    node_attr = jax.random.randint(k_attr, (total_nodes, 1), 0, num_nodeattrs)
    node_x = jnp.concatenate([node_type, node_attr], axis=1)          # (14, 2)
    node_depth = jax.random.randint(k_depth, (total_nodes,), 0, max_depth + 3)

    edges = []
    off = 0
    for n in nodes_per_graph:
        for i in range(n - 1):
            edges.append((off + i, off + i + 1))
            edges.append((off + i + 1, off + i))
        off += n
    edge_index = np.asarray(edges, dtype=np.int32).T                  # (2, E)

    # Forward
    h_nodes = node_encode(params, node_x, node_depth)                 # (14, emb)
    x_dense, adj, mask = to_dense(h_nodes, edge_index, batch_np)      # (2,8,32),(2,8,8),(2,8,1)

    fwd = jax.jit(lambda xd, a, m: diffpool_gnn_forward(params, xd, a, m))
    pred_list = fwd(x_dense, adj, mask)
    pred_list = [jax.block_until_ready(p) for p in pred_list]

    assert len(pred_list) == max_seq_len
    for p in pred_list:
        assert p.shape == (len(nodes_per_graph), num_vocab)
        assert bool(jnp.all(jnp.isfinite(p)))
    print("KERNEL_OK")
</pallas_src>

<mosaic_0001>
module attributes {stable_mosaic.version = 11 : i64} {
  func.func @_diffpool_kernel(%arg0: memref<2x8x32xf32, #tpu.memory_space<vmem>>, %arg1: memref<2x8x8xbf16, #tpu.memory_space<vmem>>, %arg2: memref<2x8x1xf32, #tpu.memory_space<vmem>>, %arg3: memref<2x32x32xbf16, #tpu.memory_space<vmem>>, %arg4: memref<2x32x32xbf16, #tpu.memory_space<vmem>>, %arg5: memref<2x32x8xbf16, #tpu.memory_space<vmem>>, %arg6: memref<72x8xbf16, #tpu.memory_space<vmem>>, %arg7: memref<2x3x32xf32, #tpu.memory_space<vmem>>, %arg8: memref<4x8xf32, #tpu.memory_space<vmem>>, %arg9: memref<2x32x32xbf16, #tpu.memory_space<vmem>>, %arg10: memref<2x32x32xbf16, #tpu.memory_space<vmem>>, %arg11: memref<2x32x32xbf16, #tpu.memory_space<vmem>>, %arg12: memref<3x3x32xf32, #tpu.memory_space<vmem>>, %arg13: memref<2x96x32xbf16, #tpu.memory_space<vmem>>, %arg14: memref<2x32x32xbf16, #tpu.memory_space<vmem>>, %arg15: memref<2x32x2xbf16, #tpu.memory_space<vmem>>, %arg16: memref<66x2xbf16, #tpu.memory_space<vmem>>, %arg17: memref<2x3x32xf32, #tpu.memory_space<vmem>>, %arg18: memref<4x2xf32, #tpu.memory_space<vmem>>, %arg19: memref<2x96x32xbf16, #tpu.memory_space<vmem>>, %arg20: memref<2x32x32xbf16, #tpu.memory_space<vmem>>, %arg21: memref<2x32x32xbf16, #tpu.memory_space<vmem>>, %arg22: memref<3x3x32xf32, #tpu.memory_space<vmem>>, %arg23: memref<2x96x32xbf16, #tpu.memory_space<vmem>>, %arg24: memref<2x32x32xbf16, #tpu.memory_space<vmem>>, %arg25: memref<2x32x32xbf16, #tpu.memory_space<vmem>>, %arg26: memref<3x3x32xf32, #tpu.memory_space<vmem>>, %arg27: memref<96x32xbf16, #tpu.memory_space<vmem>>, %arg28: memref<1x32xf32, #tpu.memory_space<vmem>>, %arg29: memref<32x128xbf16, #tpu.memory_space<vmem>>, %arg30: memref<1x128xf32, #tpu.memory_space<vmem>>, %arg31: memref<2x128xf32, #tpu.memory_space<vmem>>) attributes {dimension_semantics = [], scalar_prefetch = 0 : i64, scratch_operands = 0 : i64, tpu.core_type = #tpu.core_type<tc>} {
    %c0 = arith.constant 0 : index
    %c0_0 = arith.constant 0 : index
    %c0_1 = arith.constant 0 : index
    %0 = vector.load %arg0[%c0, %c0_0, %c0_1] : memref<2x8x32xf32, #tpu.memory_space<vmem>>, vector<2x8x32xf32>
    %c0_2 = arith.constant 0 : index
    %c0_3 = arith.constant 0 : index
    %c0_4 = arith.constant 0 : index
    %1 = vector.load %arg1[%c0_2, %c0_3, %c0_4] : memref<2x8x8xbf16, #tpu.memory_space<vmem>>, vector<2x8x8xbf16>
    %c0_5 = arith.constant 0 : index
    %c0_6 = arith.constant 0 : index
    %c0_7 = arith.constant 0 : index
    %2 = vector.load %arg2[%c0_5, %c0_6, %c0_7] : memref<2x8x1xf32, #tpu.memory_space<vmem>>, vector<2x8x1xf32>
    %cst = arith.constant 1.000000e+00 : bf16
    %3 = vector.broadcast %cst : bf16 to vector<8x1xbf16>
    "tpu.trace_start"() <{level = 10 : i32, message = "bnm,mk->bnk"}> : () -> ()
    %cst_8 = arith.constant dense<0.000000e+00> : vector<2x8x1xf32>
    %4 = tpu.matmul %1, %3, %cst_8 {dimension_numbers = #tpu.dot_dimension_numbers<[2], [0], [0, 1], [1], [0, 0, 0, 1, 1, 1], [], []>} : vector<2x8x8xbf16>, vector<8x1xbf16>, vector<2x8x1xf32> -> vector<2x8x1xf32>
    "tpu.trace_stop"() : () -> ()
    %cst_9 = arith.constant 1.000000e+00 : f32
    %5 = vector.broadcast %cst_9 : f32 to vector<2x8x1xf32>
    %6 = arith.maximumf %4, %5 : vector<2x8x1xf32>
    %7 = tpu.reciprocal %6 {approx = true} : vector<2x8x1xf32> -> vector<2x8x1xf32>
    %8 = arith.truncf %0 : vector<2x8x32xf32> to vector<2x8x32xbf16>
    "tpu.trace_start"() <{level = 10 : i32, message = "bnm,bmf->bnf"}> : () -> ()
    %cst_10 = arith.constant dense<0.000000e+00> : vector<2x8x32xf32>
    %9 = tpu.matmul %1, %8, %cst_10 {dimension_numbers = #tpu.dot_dimension_numbers<[2], [1], [1], [2], [0, 0, 0, 1, 1, 2], [0], [0]>} : vector<2x8x8xbf16>, vector<2x8x32xbf16>, vector<2x8x32xf32> -> vector<2x8x32xf32>
    "tpu.trace_stop"() : () -> ()
    %10 = vector.broadcast %7 : vector<2x8x1xf32> to vector<2x8x32xf32>
    %11 = arith.mulf %9, %10 : vector<2x8x32xf32>
    %c0_11 = arith.constant 0 : index
    %c0_12 = arith.constant 0 : index
    %c0_13 = arith.constant 0 : index
    %12 = vector.load %arg7[%c0_11, %c0_12, %c0_13] : memref<2x3x32xf32, #tpu.memory_space<vmem>>, vector<1x3x32xf32>
    %13 = vector.shape_cast %12 : vector<1x3x32xf32> to vector<3x32xf32>
    %c1 = arith.constant 1 : index
    %c0_14 = arith.constant 0 : index
    %c0_15 = arith.constant 0 : index
    %14 = vector.load %arg7[%c1, %c0_14, %c0_15] : memref<2x3x32xf32, #tpu.memory_space<vmem>>, vector<1x3x32xf32>
    %15 = vector.shape_cast %14 : vector<1x3x32xf32> to vector<3x32xf32>
    %c0_16 = arith.constant 0 : index
    %c0_17 = arith.constant 0 : index
    %16 = vector.load %arg8[%c0_16, %c0_17] : memref<4x8xf32, #tpu.memory_space<vmem>>, vector<3x8xf32>
    %c0_18 = arith.constant 0 : index
    %c0_19 = arith.constant 0 : index
    %c0_20 = arith.constant 0 : index
    %17 = vector.load %arg3[%c0_18, %c0_19, %c0_20] : memref<2x32x32xbf16, #tpu.memory_space<vmem>>, vector<1x32x32xbf16>
    %18 = vector.shape_cast %17 : vector<1x32x32xbf16> to vector<32x32xbf16>
    %19 = arith.truncf %11 : vector<2x8x32xf32> to vector<2x8x32xbf16>
    "tpu.trace_start"() <{level = 10 : i32, message = "bnf,fo->bno"}> : () -> ()
    %cst_21 = arith.constant dense<0.000000e+00> : vector<2x8x32xf32>
    %20 = tpu.matmul %19, %18, %cst_21 {dimension_numbers = #tpu.dot_dimension_numbers<[2], [0], [0, 1], [1], [0, 0, 0, 1, 1, 1], [], []>} : vector<2x8x32xbf16>, vector<32x32xbf16>, vector<2x8x32xf32> -> vector<2x8x32xf32>
    "tpu.trace_stop"() : () -> ()
    %c1_22 = arith.constant 1 : index
    %c0_23 = arith.constant 0 : index
    %c0_24 = arith.constant 0 : index
    %21 = vector.load %arg3[%c1_22, %c0_23, %c0_24] : memref<2x32x32xbf16, #tpu.memory_space<vmem>>, vector<1x32x32xbf16>
    %22 = vector.shape_cast %21 : vector<1x32x32xbf16> to vector<32x32xbf16>
    %23 = arith.truncf %0 : vector<2x8x32xf32> to vector<2x8x32xbf16>
    "tpu.trace_start"() <{level = 10 : i32, message = "bnf,fo->bno"}> : () -> ()
    %cst_25 = arith.constant dense<0.000000e+00> : vector<2x8x32xf32>
    %24 = tpu.matmul %23, %22, %cst_25 {dimension_numbers = #tpu.dot_dimension_numbers<[2], [0], [0, 1], [1], [0, 0, 0, 1, 1, 1], [], []>} : vector<2x8x32xbf16>, vector<32x32xbf16>, vector<2x8x32xf32> -> vector<2x8x32xf32>
    "tpu.trace_stop"() : () -> ()
    %25 = arith.addf %20, %24 : vector<2x8x32xf32>
    %26 = vector.extract_strided_slice %13 {offsets = [0, 0], sizes = [1, 32], strides = [1, 1]} : vector<3x32xf32> to vector<1x32xf32>
    %27 = vector.shape_cast %26 : vector<1x32xf32> to vector<1x1x32xf32>
    %28 = vector.broadcast %27 : vector<1x1x32xf32> to vector<2x8x32xf32>
    %29 = arith.addf %25, %28 : vector<2x8x32xf32>
    %30 = vector.broadcast %2 : vector<2x8x1xf32> to vector<2x8x32xf32>
    %31 = arith.mulf %29, %30 : vector<2x8x32xf32>
    %cst_26 = arith.constant 0.000000e+00 : f32
    %32 = vector.broadcast %cst_26 : f32 to vector<2x8x32xf32>
    %33 = arith.maximumf %31, %32 : vector<2x8x32xf32>
    %cst_27 = arith.constant dense<0.000000e+00> : vector<32xf32>
    %34 = vector.multi_reduction <add>, %33, %cst_27 [0, 1] : vector<2x8x32xf32> to vector<32xf32>
    %35 = vector.shape_cast %34 : vector<32xf32> to vector<1x1x32xf32>
    %cst_28 = arith.constant 1.600000e+01 : f32
    %36 = vector.broadcast %cst_28 : f32 to vector<1x1x32xf32>
    %37 = arith.divf %35, %36 : vector<1x1x32xf32>
    %38 = arith.mulf %33, %33 : vector<2x8x32xf32>
    %cst_29 = arith.constant dense<0.000000e+00> : vector<32xf32>
    %39 = vector.multi_reduction <add>, %38, %cst_29 [0, 1] : vector<2x8x32xf32> to vector<32xf32>
    %40 = vector.shape_cast %39 : vector<32xf32> to vector<1x1x32xf32>
    %cst_30 = arith.constant 1.600000e+01 : f32
    %41 = vector.broadcast %cst_30 : f32 to vector<1x1x32xf32>
    %42 = arith.divf %40, %41 : vector<1x1x32xf32>
    %43 = arith.mulf %37, %37 : vector<1x1x32xf32>
    %44 = arith.subf %42, %43 : vector<1x1x32xf32>
    %cst_31 = arith.constant 0.000000e+00 : f32
    %45 = vector.broadcast %cst_31 : f32 to vector<1x1x32xf32>
    %46 = arith.maximumf %44, %45 : vector<1x1x32xf32>
    %cst_32 = arith.constant 9.99999974E-6 : f32
    %47 = vector.broadcast %cst_32 : f32 to vector<1x1x32xf32>
    %48 = arith.addf %46, %47 : vector<1x1x32xf32>
    %49 = math.rsqrt %48 : vector<1x1x32xf32>
    %50 = vector.extract_strided_slice %13 {offsets = [1, 0], sizes = [1, 32], strides = [1, 1]} : vector<3x32xf32> to vector<1x32xf32>
    %51 = vector.shape_cast %50 : vector<1x32xf32> to vector<1x1x32xf32>
    %52 = arith.mulf %49, %51 : vector<1x1x32xf32>
    %53 = vector.broadcast %52 : vector<1x1x32xf32> to vector<2x8x32xf32>
    %54 = arith.mulf %33, %53 : vector<2x8x32xf32>
    %55 = vector.extract_strided_slice %13 {offsets = [2, 0], sizes = [1, 32], strides = [1, 1]} : vector<3x32xf32> to vector<1x32xf32>
    %56 = arith.mulf %37, %52 : vector<1x1x32xf32>
    %57 = vector.shape_cast %55 : vector<1x32xf32> to vector<1x1x32xf32>
    %58 = arith.subf %57, %56 : vector<1x1x32xf32>
    %59 = vector.broadcast %58 : vector<1x1x32xf32> to vector<2x8x32xf32>
    %60 = arith.addf %54, %59 : vector<2x8x32xf32>
    %61 = arith.truncf %60 : vector<2x8x32xf32> to vector<2x8x32xbf16>
    "tpu.trace_start"() <{level = 10 : i32, message = "bnm,bmf->bnf"}> : () -> ()
    %cst_33 = arith.constant dense<0.000000e+00> : vector<2x8x32xf32>
    %62 = tpu.matmul %1, %61, %cst_33 {dimension_numbers = #tpu.dot_dimension_numbers<[2], [1], [1], [2], [0, 0, 0, 1, 1, 2], [0], [0]>} : vector<2x8x8xbf16>, vector<2x8x32xbf16>, vector<2x8x32xf32> -> vector<2x8x32xf32>
    "tpu.trace_stop"() : () -> ()
    %63 = vector.broadcast %7 : vector<2x8x1xf32> to vector<2x8x32xf32>
    %64 = arith.mulf %62, %63 : vector<2x8x32xf32>
    %c0_34 = arith.constant 0 : index
    %c0_35 = arith.constant 0 : index
    %c0_36 = arith.constant 0 : index
    %65 = vector.load %arg4[%c0_34, %c0_35, %c0_36] : memref<2x32x32xbf16, #tpu.memory_space<vmem>>, vector<1x32x32xbf16>
    %66 = vector.shape_cast %65 : vector<1x32x32xbf16> to vector<32x32xbf16>
    %67 = arith.truncf %64 : vector<2x8x32xf32> to vector<2x8x32xbf16>
    "tpu.trace_start"() <{level = 10 : i32, message = "bnf,fo->bno"}> : () -> ()
    %cst_37 = arith.constant dense<0.000000e+00> : vector<2x8x32xf32>
    %68 = tpu.matmul %67, %66, %cst_37 {dimension_numbers = #tpu.dot_dimension_numbers<[2], [0], [0, 1], [1], [0, 0, 0, 1, 1, 1], [], []>} : vector<2x8x32xbf16>, vector<32x32xbf16>, vector<2x8x32xf32> -> vector<2x8x32xf32>
    "tpu.trace_stop"() : () -> ()
    %c1_38 = arith.constant 1 : index
    %c0_39 = arith.constant 0 : index
    %c0_40 = arith.constant 0 : index
    %69 = vector.load %arg4[%c1_38, %c0_39, %c0_40] : memref<2x32x32xbf16, #tpu.memory_space<vmem>>, vector<1x32x32xbf16>
    %70 = vector.shape_cast %69 : vector<1x32x32xbf16> to vector<32x32xbf16>
    %71 = arith.truncf %60 : vector<2x8x32xf32> to vector<2x8x32xbf16>
    "tpu.trace_start"() <{level = 10 : i32, message = "bnf,fo->bno"}> : () -> ()
    %cst_41 = arith.constant dense<0.000000e+00> : vector<2x8x32xf32>
    %72 = tpu.matmul %71, %70, %cst_41 {dimension_numbers = #tpu.dot_dimension_numbers<[2], [0], [0, 1], [1], [0, 0, 0, 1, 1, 1], [], []>} : vector<2x8x32xbf16>, vector<32x32xbf16>, vector<2x8x32xf32> -> vector<2x8x32xf32>
    "tpu.trace_stop"() : () -> ()
    %73 = arith.addf %68, %72 : vector<2x8x32xf32>
    %74 = vector.extract_strided_slice %15 {offsets = [0, 0], sizes = [1, 32], strides = [1, 1]} : vector<3x32xf32> to vector<1x32xf32>
    %75 = vector.shape_cast %74 : vector<1x32xf32> to vector<1x1x32xf32>
    %76 = vector.broadcast %75 : vector<1x1x32xf32> to vector<2x8x32xf32>
    %77 = arith.addf %73, %76 : vector<2x8x32xf32>
    %78 = vector.broadcast %2 : vector<2x8x1xf32> to vector<2x8x32xf32>
    %79 = arith.mulf %77, %78 : vector<2x8x32xf32>
    %cst_42 = arith.constant 0.000000e+00 : f32
    %80 = vector.broadcast %cst_42 : f32 to vector<2x8x32xf32>
    %81 = arith.maximumf %79, %80 : vector<2x8x32xf32>
    %cst_43 = arith.constant dense<0.000000e+00> : vector<32xf32>
    %82 = vector.multi_reduction <add>, %81, %cst_43 [0, 1] : vector<2x8x32xf32> to vector<32xf32>
    %83 = vector.shape_cast %82 : vector<32xf32> to vector<1x1x32xf32>
    %cst_44 = arith.constant 1.600000e+01 : f32
    %84 = vector.broadcast %cst_44 : f32 to vector<1x1x32xf32>
    %85 = arith.divf %83, %84 : vector<1x1x32xf32>
    %86 = arith.mulf %81, %81 : vector<2x8x32xf32>
    %cst_45 = arith.constant dense<0.000000e+00> : vector<32xf32>
    %87 = vector.multi_reduction <add>, %86, %cst_45 [0, 1] : vector<2x8x32xf32> to vector<32xf32>
    %88 = vector.shape_cast %87 : vector<32xf32> to vector<1x1x32xf32>
    %cst_46 = arith.constant 1.600000e+01 : f32
    %89 = vector.broadcast %cst_46 : f32 to vector<1x1x32xf32>
    %90 = arith.divf %88, %89 : vector<1x1x32xf32>
    %91 = arith.mulf %85, %85 : vector<1x1x32xf32>
    %92 = arith.subf %90, %91 : vector<1x1x32xf32>
    %cst_47 = arith.constant 0.000000e+00 : f32
    %93 = vector.broadcast %cst_47 : f32 to vector<1x1x32xf32>
    %94 = arith.maximumf %92, %93 : vector<1x1x32xf32>
    %cst_48 = arith.constant 9.99999974E-6 : f32
    %95 = vector.broadcast %cst_48 : f32 to vector<1x1x32xf32>
    %96 = arith.addf %94, %95 : vector<1x1x32xf32>
    %97 = math.rsqrt %96 : vector<1x1x32xf32>
    %98 = vector.extract_strided_slice %15 {offsets = [1, 0], sizes = [1, 32], strides = [1, 1]} : vector<3x32xf32> to vector<1x32xf32>
    %99 = vector.shape_cast %98 : vector<1x32xf32> to vector<1x1x32xf32>
    %100 = arith.mulf %97, %99 : vector<1x1x32xf32>
    %101 = vector.broadcast %100 : vector<1x1x32xf32> to vector<2x8x32xf32>
    %102 = arith.mulf %81, %101 : vector<2x8x32xf32>
    %103 = vector.extract_strided_slice %15 {offsets = [2, 0], sizes = [1, 32], strides = [1, 1]} : vector<3x32xf32> to vector<1x32xf32>
    %104 = arith.mulf %85, %100 : vector<1x1x32xf32>
    %105 = vector.shape_cast %103 : vector<1x32xf32> to vector<1x1x32xf32>
    %106 = arith.subf %105, %104 : vector<1x1x32xf32>
    %107 = vector.broadcast %106 : vector<1x1x32xf32> to vector<2x8x32xf32>
    %108 = arith.addf %102, %107 : vector<2x8x32xf32>
    %109 = arith.truncf %108 : vector<2x8x32xf32> to vector<2x8x32xbf16>
    "tpu.trace_start"() <{level = 10 : i32, message = "bnm,bmf->bnf"}> : () -> ()
    %cst_49 = arith.constant dense<0.000000e+00> : vector<2x8x32xf32>
    %110 = tpu.matmul %1, %109, %cst_49 {dimension_numbers = #tpu.dot_dimension_numbers<[2], [1], [1], [2], [0, 0, 0, 1, 1, 2], [0], [0]>} : vector<2x8x8xbf16>, vector<2x8x32xbf16>, vector<2x8x32xf32> -> vector<2x8x32xf32>
    "tpu.trace_stop"() : () -> ()
    %111 = vector.broadcast %7 : vector<2x8x1xf32> to vector<2x8x32xf32>
    %112 = arith.mulf %110, %111 : vector<2x8x32xf32>
    %c0_50 = arith.constant 0 : index
    %c0_51 = arith.constant 0 : index
    %c0_52 = arith.constant 0 : index
    %113 = vector.load %arg5[%c0_50, %c0_51, %c0_52] : memref<2x32x8xbf16, #tpu.memory_space<vmem>>, vector<1x32x8xbf16>
    %114 = vector.shape_cast %113 : vector<1x32x8xbf16> to vector<32x8xbf16>
    %115 = arith.truncf %112 : vector<2x8x32xf32> to vector<2x8x32xbf16>
    "tpu.trace_start"() <{level = 10 : i32, message = "bnf,fo->bno"}> : () -> ()
    %cst_53 = arith.constant dense<0.000000e+00> : vector<2x8x8xf32>
    %116 = tpu.matmul %115, %114, %cst_53 {dimension_numbers = #tpu.dot_dimension_numbers<[2], [0], [0, 1], [1], [0, 0, 0, 1, 1, 1], [], []>} : vector<2x8x32xbf16>, vector<32x8xbf16>, vector<2x8x8xf32> -> vector<2x8x8xf32>
    "tpu.trace_stop"() : () -> ()
    %c1_54 = arith.constant 1 : index
    %c0_55 = arith.constant 0 : index
    %c0_56 = arith.constant 0 : index
    %117 = vector.load %arg5[%c1_54, %c0_55, %c0_56] : memref<2x32x8xbf16, #tpu.memory_space<vmem>>, vector<1x32x8xbf16>
    %118 = vector.shape_cast %117 : vector<1x32x8xbf16> to vector<32x8xbf16>
    %119 = arith.truncf %108 : vector<2x8x32xf32> to vector<2x8x32xbf16>
    "tpu.trace_start"() <{level = 10 : i32, message = "bnf,fo->bno"}> : () -> ()
    %cst_57 = arith.constant dense<0.000000e+00> : vector<2x8x8xf32>
    %120 = tpu.matmul %119, %118, %cst_57 {dimension_numbers = #tpu.dot_dimension_numbers<[2], [0], [0, 1], [1], [0, 0, 0, 1, 1, 1], [], []>} : vector<2x8x32xbf16>, vector<32x8xbf16>, vector<2x8x8xf32> -> vector<2x8x8xf32>
    "tpu.trace_stop"() : () -> ()
    %121 = arith.addf %116, %120 : vector<2x8x8xf32>
    %122 = vector.extract_strided_slice %16 {offsets = [0, 0], sizes = [1, 8], strides = [1, 1]} : vector<3x8xf32> to vector<1x8xf32>
    %123 = vector.shape_cast %122 : vector<1x8xf32> to vector<1x1x8xf32>
    %124 = vector.broadcast %123 : vector<1x1x8xf32> to vector<2x8x8xf32>
    %125 = arith.addf %121, %124 : vector<2x8x8xf32>
    %126 = vector.broadcast %2 : vector<2x8x1xf32> to vector<2x8x8xf32>
    %127 = arith.mulf %125, %126 : vector<2x8x8xf32>
    %cst_58 = arith.constant 0.000000e+00 : f32
    %128 = vector.broadcast %cst_58 : f32 to vector<2x8x8xf32>
    %129 = arith.maximumf %127, %128 : vector<2x8x8xf32>
    %cst_59 = arith.constant dense<0.000000e+00> : vector<8xf32>
    %130 = vector.multi_reduction <add>, %129, %cst_59 [0, 1] : vector<2x8x8xf32> to vector<8xf32>
    %131 = vector.shape_cast %130 : vector<8xf32> to vector<1x1x8xf32>
    %cst_60 = arith.constant 1.600000e+01 : f32
    %132 = vector.broadcast %cst_60 : f32 to vector<1x1x8xf32>
    %133 = arith.divf %131, %132 : vector<1x1x8xf32>
    %134 = arith.mulf %129, %129 : vector<2x8x8xf32>
    %cst_61 = arith.constant dense<0.000000e+00> : vector<8xf32>
    %135 = vector.multi_reduction <add>, %134, %cst_61 [0, 1] : vector<2x8x8xf32> to vector<8xf32>
    %136 = vector.shape_cast %135 : vector<8xf32> to vector<1x1x8xf32>
    %cst_62 = arith.constant 1.600000e+01 : f32
    %137 = vector.broadcast %cst_62 : f32 to vector<1x1x8xf32>
    %138 = arith.divf %136, %137 : vector<1x1x8xf32>
    %139 = arith.mulf %133, %133 : vector<1x1x8xf32>
    %140 = arith.subf %138, %139 : vector<1x1x8xf32>
    %cst_63 = arith.constant 0.000000e+00 : f32
    %141 = vector.broadcast %cst_63 : f32 to vector<1x1x8xf32>
    %142 = arith.maximumf %140, %141 : vector<1x1x8xf32>
    %cst_64 = arith.constant 9.99999974E-6 : f32
    %143 = vector.broadcast %cst_64 : f32 to vector<1x1x8xf32>
    %144 = arith.addf %142, %143 : vector<1x1x8xf32>
    %145 = math.rsqrt %144 : vector<1x1x8xf32>
    %146 = vector.extract_strided_slice %16 {offsets = [1, 0], sizes = [1, 8], strides = [1, 1]} : vector<3x8xf32> to vector<1x8xf32>
    %147 = vector.shape_cast %146 : vector<1x8xf32> to vector<1x1x8xf32>
    %148 = arith.mulf %145, %147 : vector<1x1x8xf32>
    %149 = vector.broadcast %148 : vector<1x1x8xf32> to vector<2x8x8xf32>
    %150 = arith.mulf %129, %149 : vector<2x8x8xf32>
    %151 = vector.extract_strided_slice %16 {offsets = [2, 0], sizes = [1, 8], strides = [1, 1]} : vector<3x8xf32> to vector<1x8xf32>
    %152 = arith.mulf %133, %148 : vector<1x1x8xf32>
    %153 = vector.shape_cast %151 : vector<1x8xf32> to vector<1x1x8xf32>
    %154 = arith.subf %153, %152 : vector<1x1x8xf32>
    %155 = vector.broadcast %154 : vector<1x1x8xf32> to vector<2x8x8xf32>
    %156 = arith.addf %150, %155 : vector<2x8x8xf32>
    %c0_65 = arith.constant 0 : index
    %c0_66 = arith.constant 0 : index
    %157 = vector.load %arg6[%c0_65, %c0_66] : memref<72x8xbf16, #tpu.memory_space<vmem>>, vector<32x8xbf16>
    %158 = arith.truncf %60 : vector<2x8x32xf32> to vector<2x8x32xbf16>
    "tpu.trace_start"() <{level = 10 : i32, message = "bnf,fo->bno"}> : () -> ()
    %cst_67 = arith.constant dense<0.000000e+00> : vector<2x8x8xf32>
    %159 = tpu.matmul %158, %157, %cst_67 {dimension_numbers = #tpu.dot_dimension_numbers<[2], [0], [0, 1], [1], [0, 0, 0, 1, 1, 1], [], []>} : vector<2x8x32xbf16>, vector<32x8xbf16>, vector<2x8x8xf32> -> vector<2x8x8xf32>
    "tpu.trace_stop"() : () -> ()
    %c32 = arith.constant 32 : index
    %c0_68 = arith.constant 0 : index
    %160 = vector.load %arg6[%c32, %c0_68] : memref<72x8xbf16, #tpu.memory_space<vmem>>, vector<32x8xbf16>
    %161 = arith.truncf %108 : vector<2x8x32xf32> to vector<2x8x32xbf16>
    "tpu.trace_start"() <{level = 10 : i32, message = "bnf,fo->bno"}> : () -> ()
    %cst_69 = arith.constant dense<0.000000e+00> : vector<2x8x8xf32>
    %162 = tpu.matmul %161, %160, %cst_69 {dimension_numbers = #tpu.dot_dimension_numbers<[2], [0], [0, 1], [1], [0, 0, 0, 1, 1, 1], [], []>} : vector<2x8x32xbf16>, vector<32x8xbf16>, vector<2x8x8xf32> -> vector<2x8x8xf32>
    "tpu.trace_stop"() : () -> ()
    %163 = arith.addf %159, %162 : vector<2x8x8xf32>
    %c64 = arith.constant 64 : index
    %c0_70 = arith.constant 0 : index
    %164 = vector.load %arg6[%c64, %c0_70] : memref<72x8xbf16, #tpu.memory_space<vmem>>, vector<8x8xbf16>
    %165 = arith.truncf %156 : vector<2x8x8xf32> to vector<2x8x8xbf16>
    "tpu.trace_start"() <{level = 10 : i32, message = "bnf,fo->bno"}> : () -> ()
    %cst_71 = arith.constant dense<0.000000e+00> : vector<2x8x8xf32>
    %166 = tpu.matmul %165, %164, %cst_71 {dimension_numbers = #tpu.dot_dimension_numbers<[2], [0], [0, 1], [1], [0, 0, 0, 1, 1, 1], [], []>} : vector<2x8x8xbf16>, vector<8x8xbf16>, vector<2x8x8xf32> -> vector<2x8x8xf32>
    "tpu.trace_stop"() : () -> ()
    %167 = arith.addf %163, %166 : vector<2x8x8xf32>
    %c3 = arith.constant 3 : index
    %c0_72 = arith.constant 0 : index
    %168 = vector.load %arg8[%c3, %c0_72] : memref<4x8xf32, #tpu.memory_space<vmem>>, vector<1x8xf32>
    %169 = vector.shape_cast %168 : vector<1x8xf32> to vector<1x1x8xf32>
    %170 = vector.broadcast %169 : vector<1x1x8xf32> to vector<2x8x8xf32>
    %171 = arith.addf %167, %170 : vector<2x8x8xf32>
    %cst_73 = arith.constant 0.000000e+00 : f32
    %172 = vector.broadcast %cst_73 : f32 to vector<2x8x8xf32>
    %173 = arith.maximumf %171, %172 : vector<2x8x8xf32>
    %c0_74 = arith.constant 0 : index
    %c0_75 = arith.constant 0 : index
    %c0_76 = arith.constant 0 : index
    %174 = vector.load %arg12[%c0_74, %c0_75, %c0_76] : memref<3x3x32xf32, #tpu.memory_space<vmem>>, vector<1x3x32xf32>
    %175 = vector.shape_cast %174 : vector<1x3x32xf32> to vector<3x32xf32>
    %c1_77 = arith.constant 1 : index
    %c0_78 = arith.constant 0 : index
    %c0_79 = arith.constant 0 : index
    %176 = vector.load %arg12[%c1_77, %c0_78, %c0_79] : memref<3x3x32xf32, #tpu.memory_space<vmem>>, vector<1x3x32xf32>
    %177 = vector.shape_cast %176 : vector<1x3x32xf32> to vector<3x32xf32>
    %c2 = arith.constant 2 : index
    %c0_80 = arith.constant 0 : index
    %c0_81 = arith.constant 0 : index
    %178 = vector.load %arg12[%c2, %c0_80, %c0_81] : memref<3x3x32xf32, #tpu.memory_space<vmem>>, vector<1x3x32xf32>
    %179 = vector.shape_cast %178 : vector<1x3x32xf32> to vector<3x32xf32>
    %c0_82 = arith.constant 0 : index
    %c0_83 = arith.constant 0 : index
    %c0_84 = arith.constant 0 : index
    %180 = vector.load %arg9[%c0_82, %c0_83, %c0_84] : memref<2x32x32xbf16, #tpu.memory_space<vmem>>, vector<1x32x32xbf16>
    %181 = vector.shape_cast %180 : vector<1x32x32xbf16> to vector<32x32xbf16>
    %182 = arith.truncf %11 : vector<2x8x32xf32> to vector<2x8x32xbf16>
    "tpu.trace_start"() <{level = 10 : i32, message = "bnf,fo->bno"}> : () -> ()
    %cst_85 = arith.constant dense<0.000000e+00> : vector<2x8x32xf32>
    %183 = tpu.matmul %182, %181, %cst_85 {dimension_numbers = #tpu.dot_dimension_numbers<[2], [0], [0, 1], [1], [0, 0, 0, 1, 1, 1], [], []>} : vector<2x8x32xbf16>, vector<32x32xbf16>, vector<2x8x32xf32> -> vector<2x8x32xf32>
    "tpu.trace_stop"() : () -> ()
    %c1_86 = arith.constant 1 : index
    %c0_87 = arith.constant 0 : index
    %c0_88 = arith.constant 0 : index
    %184 = vector.load %arg9[%c1_86, %c0_87, %c0_88] : memref<2x32x32xbf16, #tpu.memory_space<vmem>>, vector<1x32x32xbf16>
    %185 = vector.shape_cast %184 : vector<1x32x32xbf16> to vector<32x32xbf16>
    %186 = arith.truncf %0 : vector<2x8x32xf32> to vector<2x8x32xbf16>
    "tpu.trace_start"() <{level = 10 : i32, message = "bnf,fo->bno"}> : () -> ()
    %cst_89 = arith.constant dense<0.000000e+00> : vector<2x8x32xf32>
    %187 = tpu.matmul %186, %185, %cst_89 {dimension_numbers = #tpu.dot_dimension_numbers<[2], [0], [0, 1], [1], [0, 0, 0, 1, 1, 1], [], []>} : vector<2x8x32xbf16>, vector<32x32xbf16>, vector<2x8x32xf32> -> vector<2x8x32xf32>
    "tpu.trace_stop"() : () -> ()
    %188 = arith.addf %183, %187 : vector<2x8x32xf32>
    %189 = vector.extract_strided_slice %175 {offsets = [0, 0], sizes = [1, 32], strides = [1, 1]} : vector<3x32xf32> to vector<1x32xf32>
    %190 = vector.shape_cast %189 : vector<1x32xf32> to vector<1x1x32xf32>
    %191 = vector.broadcast %190 : vector<1x1x32xf32> to vector<2x8x32xf32>
    %192 = arith.addf %188, %191 : vector<2x8x32xf32>
    %193 = vector.broadcast %2 : vector<2x8x1xf32> to vector<2x8x32xf32>
    %194 = arith.mulf %192, %193 : vector<2x8x32xf32>
    %cst_90 = arith.constant 0.000000e+00 : f32
    %195 = vector.broadcast %cst_90 : f32 to vector<2x8x32xf32>
    %196 = arith.maximumf %194, %195 : vector<2x8x32xf32>
    %cst_91 = arith.constant dense<0.000000e+00> : vector<32xf32>
    %197 = vector.multi_reduction <add>, %196, %cst_91 [0, 1] : vector<2x8x32xf32> to vector<32xf32>
    %198 = vector.shape_cast %197 : vector<32xf32> to vector<1x1x32xf32>
    %cst_92 = arith.constant 1.600000e+01 : f32
    %199 = vector.broadcast %cst_92 : f32 to vector<1x1x32xf32>
    %200 = arith.divf %198, %199 : vector<1x1x32xf32>
    %201 = arith.mulf %196, %196 : vector<2x8x32xf32>
    %cst_93 = arith.constant dense<0.000000e+00> : vector<32xf32>
    %202 = vector.multi_reduction <add>, %201, %cst_93 [0, 1] : vector<2x8x32xf32> to vector<32xf32>
    %203 = vector.shape_cast %202 : vector<32xf32> to vector<1x1x32xf32>
    %cst_94 = arith.constant 1.600000e+01 : f32
    %204 = vector.broadcast %cst_94 : f32 to vector<1x1x32xf32>
    %205 = arith.divf %203, %204 : vector<1x1x32xf32>
    %206 = arith.mulf %200, %200 : vector<1x1x32xf32>
    %207 = arith.subf %205, %206 : vector<1x1x32xf32>
    %cst_95 = arith.constant 0.000000e+00 : f32
    %208 = vector.broadcast %cst_95 : f32 to vector<1x1x32xf32>
    %209 = arith.maximumf %207, %208 : vector<1x1x32xf32>
    %cst_96 = arith.constant 9.99999974E-6 : f32
    %210 = vector.broadcast %cst_96 : f32 to vector<1x1x32xf32>
    %211 = arith.addf %209, %210 : vector<1x1x32xf32>
    %212 = math.rsqrt %211 : vector<1x1x32xf32>
    %213 = vector.extract_strided_slice %175 {offsets = [1, 0], sizes = [1, 32], strides = [1, 1]} : vector<3x32xf32> to vector<1x32xf32>
    %214 = vector.shape_cast %213 : vector<1x32xf32> to vector<1x1x32xf32>
    %215 = arith.mulf %212, %214 : vector<1x1x32xf32>
    %216 = vector.broadcast %215 : vector<1x1x32xf32> to vector<2x8x32xf32>
    %217 = arith.mulf %196, %216 : vector<2x8x32xf32>
    %218 = vector.extract_strided_slice %175 {offsets = [2, 0], sizes = [1, 32], strides = [1, 1]} : vector<3x32xf32> to vector<1x32xf32>
    %219 = arith.mulf %200, %215 : vector<1x1x32xf32>
    %220 = vector.shape_cast %218 : vector<1x32xf32> to vector<1x1x32xf32>
    %221 = arith.subf %220, %219 : vector<1x1x32xf32>
    %222 = vector.broadcast %221 : vector<1x1x32xf32> to vector<2x8x32xf32>
    %223 = arith.addf %217, %222 : vector<2x8x32xf32>
    %224 = arith.truncf %223 : vector<2x8x32xf32> to vector<2x8x32xbf16>
    "tpu.trace_start"() <{level = 10 : i32, message = "bnm,bmf->bnf"}> : () -> ()
    %cst_97 = arith.constant dense<0.000000e+00> : vector<2x8x32xf32>
    %225 = tpu.matmul %1, %224, %cst_97 {dimension_numbers = #tpu.dot_dimension_numbers<[2], [1], [1], [2], [0, 0, 0, 1, 1, 2], [0], [0]>} : vector<2x8x8xbf16>, vector<2x8x32xbf16>, vector<2x8x32xf32> -> vector<2x8x32xf32>
    "tpu.trace_stop"() : () -> ()
    %226 = vector.broadcast %7 : vector<2x8x1xf32> to vector<2x8x32xf32>
    %227 = arith.mulf %225, %226 : vector<2x8x32xf32>
    %c0_98 = arith.constant 0 : index
    %c0_99 = arith.constant 0 : index
    %c0_100 = arith.constant 0 : index
    %228 = vector.load %arg10[%c0_98, %c0_99, %c0_100] : memref<2x32x32xbf16, #tpu.memory_space<vmem>>, vector<1x32x32xbf16>
    %229 = vector.shape_cast %228 : vector<1x32x32xbf16> to vector<32x32xbf16>
    %230 = arith.truncf %227 : vector<2x8x32xf32> to vector<2x8x32xbf16>
    "tpu.trace_start"() <{level = 10 : i32, message = "bnf,fo->bno"}> : () -> ()
    %cst_101 = arith.constant dense<0.000000e+00> : vector<2x8x32xf32>
    %231 = tpu.matmul %230, %229, %cst_101 {dimension_numbers = #tpu.dot_dimension_numbers<[2], [0], [0, 1], [1], [0, 0, 0, 1, 1, 1], [], []>} : vector<2x8x32xbf16>, vector<32x32xbf16>, vector<2x8x32xf32> -> vector<2x8x32xf32>
    "tpu.trace_stop"() : () -> ()
    %c1_102 = arith.constant 1 : index
    %c0_103 = arith.constant 0 : index
    %c0_104 = arith.constant 0 : index
    %232 = vector.load %arg10[%c1_102, %c0_103, %c0_104] : memref<2x32x32xbf16, #tpu.memory_space<vmem>>, vector<1x32x32xbf16>
    %233 = vector.shape_cast %232 : vector<1x32x32xbf16> to vector<32x32xbf16>
    %234 = arith.truncf %223 : vector<2x8x32xf32> to vector<2x8x32xbf16>
    "tpu.trace_start"() <{level = 10 : i32, message = "bnf,fo->bno"}> : () -> ()
    %cst_105 = arith.constant dense<0.000000e+00> : vector<2x8x32xf32>
    %235 = tpu.matmul %234, %233, %cst_105 {dimension_numbers = #tpu.dot_dimension_numbers<[2], [0], [0, 1], [1], [0, 0, 0, 1, 1, 1], [], []>} : vector<2x8x32xbf16>, vector<32x32xbf16>, vector<2x8x32xf32> -> vector<2x8x32xf32>
    "tpu.trace_stop"() : () -> ()
    %236 = arith.addf %231, %235 : vector<2x8x32xf32>
    %237 = vector.extract_strided_slice %177 {offsets = [0, 0], sizes = [1, 32], strides = [1, 1]} : vector<3x32xf32> to vector<1x32xf32>
    %238 = vector.shape_cast %237 : vector<1x32xf32> to vector<1x1x32xf32>
    %239 = vector.broadcast %238 : vector<1x1x32xf32> to vector<2x8x32xf32>
    %240 = arith.addf %236, %239 : vector<2x8x32xf32>
    %241 = vector.broadcast %2 : vector<2x8x1xf32> to vector<2x8x32xf32>
    %242 = arith.mulf %240, %241 : vector<2x8x32xf32>
    %cst_106 = arith.constant 0.000000e+00 : f32
    %243 = vector.broadcast %cst_106 : f32 to vector<2x8x32xf32>
    %244 = arith.maximumf %242, %243 : vector<2x8x32xf32>
    %cst_107 = arith.constant dense<0.000000e+00> : vector<32xf32>
    %245 = vector.multi_reduction <add>, %244, %cst_107 [0, 1] : vector<2x8x32xf32> to vector<32xf32>
    %246 = vector.shape_cast %245 : vector<32xf32> to vector<1x1x32xf32>
    %cst_108 = arith.constant 1.600000e+01 : f32
    %247 = vector.broadcast %cst_108 : f32 to vector<1x1x32xf32>
    %248 = arith.divf %246, %247 : vector<1x1x32xf32>
    %249 = arith.mulf %244, %244 : vector<2x8x32xf32>
    %cst_109 = arith.constant dense<0.000000e+00> : vector<32xf32>
    %250 = vector.multi_reduction <add>, %249, %cst_109 [0, 1] : vector<2x8x32xf32> to vector<32xf32>
    %251 = vector.shape_cast %250 : vector<32xf32> to vector<1x1x32xf32>
    %cst_110 = arith.constant 1.600000e+01 : f32
    %252 = vector.broadcast %cst_110 : f32 to vector<1x1x32xf32>
    %253 = arith.divf %251, %252 : vector<1x1x32xf32>
    %254 = arith.mulf %248, %248 : vector<1x1x32xf32>
    %255 = arith.subf %253, %254 : vector<1x1x32xf32>
    %cst_111 = arith.constant 0.000000e+00 : f32
    %256 = vector.broadcast %cst_111 : f32 to vector<1x1x32xf32>
    %257 = arith.maximumf %255, %256 : vector<1x1x32xf32>
    %cst_112 = arith.constant 9.99999974E-6 : f32
    %258 = vector.broadcast %cst_112 : f32 to vector<1x1x32xf32>
    %259 = arith.addf %257, %258 : vector<1x1x32xf32>
    %260 = math.rsqrt %259 : vector<1x1x32xf32>
    %261 = vector.extract_strided_slice %177 {offsets = [1, 0], sizes = [1, 32], strides = [1, 1]} : vector<3x32xf32> to vector<1x32xf32>
    %262 = vector.shape_cast %261 : vector<1x32xf32> to vector<1x1x32xf32>
    %263 = arith.mulf %260, %262 : vector<1x1x32xf32>
    %264 = vector.broadcast %263 : vector<1x1x32xf32> to vector<2x8x32xf32>
    %265 = arith.mulf %244, %264 : vector<2x8x32xf32>
    %266 = vector.extract_strided_slice %177 {offsets = [2, 0], sizes = [1, 32], strides = [1, 1]} : vector<3x32xf32> to vector<1x32xf32>
    %267 = arith.mulf %248, %263 : vector<1x1x32xf32>
    %268 = vector.shape_cast %266 : vector<1x32xf32> to vector<1x1x32xf32>
    %269 = arith.subf %268, %267 : vector<1x1x32xf32>
    %270 = vector.broadcast %269 : vector<1x1x32xf32> to vector<2x8x32xf32>
    %271 = arith.addf %265, %270 : vector<2x8x32xf32>
    %272 = arith.truncf %271 : vector<2x8x32xf32> to vector<2x8x32xbf16>
    "tpu.trace_start"() <{level = 10 : i32, message = "bnm,bmf->bnf"}> : () -> ()
    %cst_113 = arith.constant dense<0.000000e+00> : vector<2x8x32xf32>
    %273 = tpu.matmul %1, %272, %cst_113 {dimension_numbers = #tpu.dot_dimension_numbers<[2], [1], [1], [2], [0, 0, 0, 1, 1, 2], [0], [0]>} : vector<2x8x8xbf16>, vector<2x8x32xbf16>, vector<2x8x32xf32> -> vector<2x8x32xf32>
    "tpu.trace_stop"() : () -> ()
    %274 = vector.broadcast %7 : vector<2x8x1xf32> to vector<2x8x32xf32>
    %275 = arith.mulf %273, %274 : vector<2x8x32xf32>
    %c0_114 = arith.constant 0 : index
    %c0_115 = arith.constant 0 : index
    %c0_116 = arith.constant 0 : index
    %276 = vector.load %arg11[%c0_114, %c0_115, %c0_116] : memref<2x32x32xbf16, #tpu.memory_space<vmem>>, vector<1x32x32xbf16>
    %277 = vector.shape_cast %276 : vector<1x32x32xbf16> to vector<32x32xbf16>
    %278 = arith.truncf %275 : vector<2x8x32xf32> to vector<2x8x32xbf16>
    "tpu.trace_start"() <{level = 10 : i32, message = "bnf,fo->bno"}> : () -> ()
    %cst_117 = arith.constant dense<0.000000e+00> : vector<2x8x32xf32>
    %279 = tpu.matmul %278, %277, %cst_117 {dimension_numbers = #tpu.dot_dimension_numbers<[2], [0], [0, 1], [1], [0, 0, 0, 1, 1, 1], [], []>} : vector<2x8x32xbf16>, vector<32x32xbf16>, vector<2x8x32xf32> -> vector<2x8x32xf32>
    "tpu.trace_stop"() : () -> ()
    %c1_118 = arith.constant 1 : index
    %c0_119 = arith.constant 0 : index
    %c0_120 = arith.constant 0 : index
    %280 = vector.load %arg11[%c1_118, %c0_119, %c0_120] : memref<2x32x32xbf16, #tpu.memory_space<vmem>>, vector<1x32x32xbf16>
    %281 = vector.shape_cast %280 : vector<1x32x32xbf16> to vector<32x32xbf16>
    %282 = arith.truncf %271 : vector<2x8x32xf32> to vector<2x8x32xbf16>
    "tpu.trace_start"() <{level = 10 : i32, message = "bnf,fo->bno"}> : () -> ()
    %cst_121 = arith.constant dense<0.000000e+00> : vector<2x8x32xf32>
    %283 = tpu.matmul %282, %281, %cst_121 {dimension_numbers = #tpu.dot_dimension_numbers<[2], [0], [0, 1], [1], [0, 0, 0, 1, 1, 1], [], []>} : vector<2x8x32xbf16>, vector<32x32xbf16>, vector<2x8x32xf32> -> vector<2x8x32xf32>
    "tpu.trace_stop"() : () -> ()
    %284 = arith.addf %279, %283 : vector<2x8x32xf32>
    %285 = vector.extract_strided_slice %179 {offsets = [0, 0], sizes = [1, 32], strides = [1, 1]} : vector<3x32xf32> to vector<1x32xf32>
    %286 = vector.shape_cast %285 : vector<1x32xf32> to vector<1x1x32xf32>
    %287 = vector.broadcast %286 : vector<1x1x32xf32> to vector<2x8x32xf32>
    %288 = arith.addf %284, %287 : vector<2x8x32xf32>
    %289 = vector.broadcast %2 : vector<2x8x1xf32> to vector<2x8x32xf32>
    %290 = arith.mulf %288, %289 : vector<2x8x32xf32>
    %cst_122 = arith.constant 0.000000e+00 : f32
    %291 = vector.broadcast %cst_122 : f32 to vector<2x8x32xf32>
    %292 = arith.maximumf %290, %291 : vector<2x8x32xf32>
    %cst_123 = arith.constant dense<0.000000e+00> : vector<32xf32>
    %293 = vector.multi_reduction <add>, %292, %cst_123 [0, 1] : vector<2x8x32xf32> to vector<32xf32>
    %294 = vector.shape_cast %293 : vector<32xf32> to vector<1x1x32xf32>
    %cst_124 = arith.constant 1.600000e+01 : f32
    %295 = vector.broadcast %cst_124 : f32 to vector<1x1x32xf32>
    %296 = arith.divf %294, %295 : vector<1x1x32xf32>
    %297 = arith.mulf %292, %292 : vector<2x8x32xf32>
    %cst_125 = arith.constant dense<0.000000e+00> : vector<32xf32>
    %298 = vector.multi_reduction <add>, %297, %cst_125 [0, 1] : vector<2x8x32xf32> to vector<32xf32>
    %299 = vector.shape_cast %298 : vector<32xf32> to vector<1x1x32xf32>
    %cst_126 = arith.constant 1.600000e+01 : f32
    %300 = vector.broadcast %cst_126 : f32 to vector<1x1x32xf32>
    %301 = arith.divf %299, %300 : vector<1x1x32xf32>
    %302 = arith.mulf %296, %296 : vector<1x1x32xf32>
    %303 = arith.subf %301, %302 : vector<1x1x32xf32>
    %cst_127 = arith.constant 0.000000e+00 : f32
    %304 = vector.broadcast %cst_127 : f32 to vector<1x1x32xf32>
    %305 = arith.maximumf %303, %304 : vector<1x1x32xf32>
    %cst_128 = arith.constant 9.99999974E-6 : f32
    %306 = vector.broadcast %cst_128 : f32 to vector<1x1x32xf32>
    %307 = arith.addf %305, %306 : vector<1x1x32xf32>
    %308 = math.rsqrt %307 : vector<1x1x32xf32>
    %309 = vector.extract_strided_slice %179 {offsets = [1, 0], sizes = [1, 32], strides = [1, 1]} : vector<3x32xf32> to vector<1x32xf32>
    %310 = vector.shape_cast %309 : vector<1x32xf32> to vector<1x1x32xf32>
    %311 = arith.mulf %308, %310 : vector<1x1x32xf32>
    %312 = vector.broadcast %311 : vector<1x1x32xf32> to vector<2x8x32xf32>
    %313 = arith.mulf %292, %312 : vector<2x8x32xf32>
    %314 = vector.extract_strided_slice %179 {offsets = [2, 0], sizes = [1, 32], strides = [1, 1]} : vector<3x32xf32> to vector<1x32xf32>
    %315 = arith.mulf %296, %311 : vector<1x1x32xf32>
    %316 = vector.shape_cast %314 : vector<1x32xf32> to vector<1x1x32xf32>
    %317 = arith.subf %316, %315 : vector<1x1x32xf32>
    %318 = vector.broadcast %317 : vector<1x1x32xf32> to vector<2x8x32xf32>
    %319 = arith.addf %313, %318 : vector<2x8x32xf32>
    %cst_129 = arith.constant dense<0xFF800000> : vector<2x8xf32>
    %320 = vector.multi_reduction <maximumf>, %173, %cst_129 [2] : vector<2x8x8xf32> to vector<2x8xf32>
    %321 = vector.shape_cast %320 : vector<2x8xf32> to vector<2x8x1xf32>
    %322 = vector.broadcast %321 : vector<2x8x1xf32> to vector<2x8x8xf32>
    %323 = arith.subf %173, %322 : vector<2x8x8xf32>
    %324 = math.exp %323 : vector<2x8x8xf32>
    %cst_130 = arith.constant dense<0.000000e+00> : vector<2x8xf32>
    %325 = vector.multi_reduction <add>, %324, %cst_130 [2] : vector<2x8x8xf32> to vector<2x8xf32>
    %326 = vector.shape_cast %325 : vector<2x8xf32> to vector<2x8x1xf32>
    %327 = vector.broadcast %326 : vector<2x8x1xf32> to vector<2x8x8xf32>
    %328 = arith.divf %324, %327 : vector<2x8x8xf32>
    %329 = vector.broadcast %2 : vector<2x8x1xf32> to vector<2x8x8xf32>
    %330 = arith.mulf %328, %329 : vector<2x8x8xf32>
    %331 = arith.truncf %330 : vector<2x8x8xf32> to vector<2x8x8xbf16>
    %332 = arith.truncf %223 : vector<2x8x32xf32> to vector<2x8x32xbf16>
    "tpu.trace_start"() <{level = 10 : i32, message = "bnc,bnf->bcf"}> : () -> ()
    %cst_131 = arith.constant dense<0.000000e+00> : vector<2x8x32xf32>
    %333 = tpu.matmul %331, %332, %cst_131 {dimension_numbers = #tpu.dot_dimension_numbers<[1], [1], [2], [2], [0, 0, 0, 2, 1, 2], [0], [0]>} : vector<2x8x8xbf16>, vector<2x8x32xbf16>, vector<2x8x32xf32> -> vector<2x8x32xf32>
    "tpu.trace_stop"() : () -> ()
    %334 = arith.truncf %271 : vector<2x8x32xf32> to vector<2x8x32xbf16>
    "tpu.trace_start"() <{level = 10 : i32, message = "bnc,bnf->bcf"}> : () -> ()
    %cst_132 = arith.constant dense<0.000000e+00> : vector<2x8x32xf32>
    %335 = tpu.matmul %331, %334, %cst_132 {dimension_numbers = #tpu.dot_dimension_numbers<[1], [1], [2], [2], [0, 0, 0, 2, 1, 2], [0], [0]>} : vector<2x8x8xbf16>, vector<2x8x32xbf16>, vector<2x8x32xf32> -> vector<2x8x32xf32>
    "tpu.trace_stop"() : () -> ()
    %336 = arith.truncf %319 : vector<2x8x32xf32> to vector<2x8x32xbf16>
    "tpu.trace_start"() <{level = 10 : i32, message = "bnc,bnf->bcf"}> : () -> ()
    %cst_133 = arith.constant dense<0.000000e+00> : vector<2x8x32xf32>
    %337 = tpu.matmul %331, %336, %cst_133 {dimension_numbers = #tpu.dot_dimension_numbers<[1], [1], [2], [2], [0, 0, 0, 2, 1, 2], [0], [0]>} : vector<2x8x8xbf16>, vector<2x8x32xbf16>, vector<2x8x32xf32> -> vector<2x8x32xf32>
    "tpu.trace_stop"() : () -> ()
    "tpu.trace_start"() <{level = 10 : i32, message = "bnc,bnm->bcm"}> : () -> ()
    %cst_134 = arith.constant dense<0.000000e+00> : vector<2x8x8xf32>
    %338 = tpu.matmul %331, %1, %cst_134 {dimension_numbers = #tpu.dot_dimension_numbers<[1], [1], [2], [2], [0, 0, 0, 2, 1, 2], [0], [0]>} : vector<2x8x8xbf16>, vector<2x8x8xbf16>, vector<2x8x8xf32> -> vector<2x8x8xf32>
    "tpu.trace_stop"() : () -> ()
    %339 = arith.truncf %338 : vector<2x8x8xf32> to vector<2x8x8xbf16>
    "tpu.trace_start"() <{level = 10 : i32, message = "bcm,bmk->bck"}> : () -> ()
    %cst_135 = arith.constant dense<0.000000e+00> : vector<2x8x8xf32>
    %340 = tpu.matmul %339, %331, %cst_135 {dimension_numbers = #tpu.dot_dimension_numbers<[2], [1], [1], [2], [0, 0, 0, 1, 1, 2], [0], [0]>} : vector<2x8x8xbf16>, vector<2x8x8xbf16>, vector<2x8x8xf32> -> vector<2x8x8xf32>
    "tpu.trace_stop"() : () -> ()
    %341 = arith.truncf %340 : vector<2x8x8xf32> to vector<2x8x8xbf16>
    %cst_136 = arith.constant 1.000000e+00 : bf16
    %342 = vector.broadcast %cst_136 : bf16 to vector<8x1xbf16>
    "tpu.trace_start"() <{level = 10 : i32, message = "bnm,mk->bnk"}> : () -> ()
    %cst_137 = arith.constant dense<0.000000e+00> : vector<2x8x1xf32>
    %343 = tpu.matmul %341, %342, %cst_137 {dimension_numbers = #tpu.dot_dimension_numbers<[2], [0], [0, 1], [1], [0, 0, 0, 1, 1, 1], [], []>} : vector<2x8x8xbf16>, vector<8x1xbf16>, vector<2x8x1xf32> -> vector<2x8x1xf32>
    "tpu.trace_stop"() : () -> ()
    %cst_138 = arith.constant 1.000000e+00 : f32
    %344 = vector.broadcast %cst_138 : f32 to vector<2x8x1xf32>
    %345 = arith.maximumf %343, %344 : vector<2x8x1xf32>
    %346 = tpu.reciprocal %345 {approx = true} : vector<2x8x1xf32> -> vector<2x8x1xf32>
    %347 = arith.truncf %333 : vector<2x8x32xf32> to vector<2x8x32xbf16>
    "tpu.trace_start"() <{level = 10 : i32, message = "bnm,bmf->bnf"}> : () -> ()
    %cst_139 = arith.constant dense<0.000000e+00> : vector<2x8x32xf32>
    %348 = tpu.matmul %341, %347, %cst_139 {dimension_numbers = #tpu.dot_dimension_numbers<[2], [1], [1], [2], [0, 0, 0, 1, 1, 2], [0], [0]>} : vector<2x8x8xbf16>, vector<2x8x32xbf16>, vector<2x8x32xf32> -> vector<2x8x32xf32>
    "tpu.trace_stop"() : () -> ()
    %349 = vector.broadcast %346 : vector<2x8x1xf32> to vector<2x8x32xf32>
    %350 = arith.mulf %348, %349 : vector<2x8x32xf32>
    %351 = arith.truncf %335 : vector<2x8x32xf32> to vector<2x8x32xbf16>
    "tpu.trace_start"() <{level = 10 : i32, message = "bnm,bmf->bnf"}> : () -> ()
    %cst_140 = arith.constant dense<0.000000e+00> : vector<2x8x32xf32>
    %352 = tpu.matmul %341, %351, %cst_140 {dimension_numbers = #tpu.dot_dimension_numbers<[2], [1], [1], [2], [0, 0, 0, 1, 1, 2], [0], [0]>} : vector<2x8x8xbf16>, vector<2x8x32xbf16>, vector<2x8x32xf32> -> vector<2x8x32xf32>
    "tpu.trace_stop"() : () -> ()
    %353 = vector.broadcast %346 : vector<2x8x1xf32> to vector<2x8x32xf32>
    %354 = arith.mulf %352, %353 : vector<2x8x32xf32>
    %355 = arith.truncf %337 : vector<2x8x32xf32> to vector<2x8x32xbf16>
    "tpu.trace_start"() <{level = 10 : i32, message = "bnm,bmf->bnf"}> : () -> ()
    %cst_141 = arith.constant dense<0.000000e+00> : vector<2x8x32xf32>
    %356 = tpu.matmul %341, %355, %cst_141 {dimension_numbers = #tpu.dot_dimension_numbers<[2], [1], [1], [2], [0, 0, 0, 1, 1, 2], [0], [0]>} : vector<2x8x8xbf16>, vector<2x8x32xbf16>, vector<2x8x32xf32> -> vector<2x8x32xf32>
    "tpu.trace_stop"() : () -> ()
    %357 = vector.broadcast %346 : vector<2x8x1xf32> to vector<2x8x32xf32>
    %358 = arith.mulf %356, %357 : vector<2x8x32xf32>
    %c0_142 = arith.constant 0 : index
    %c0_143 = arith.constant 0 : index
    %c0_144 = arith.constant 0 : index
    %359 = vector.load %arg17[%c0_142, %c0_143, %c0_144] : memref<2x3x32xf32, #tpu.memory_space<vmem>>, vector<1x3x32xf32>
    %360 = vector.shape_cast %359 : vector<1x3x32xf32> to vector<3x32xf32>
    %c1_145 = arith.constant 1 : index
    %c0_146 = arith.constant 0 : index
    %c0_147 = arith.constant 0 : index
    %361 = vector.load %arg17[%c1_145, %c0_146, %c0_147] : memref<2x3x32xf32, #tpu.memory_space<vmem>>, vector<1x3x32xf32>
    %362 = vector.shape_cast %361 : vector<1x3x32xf32> to vector<3x32xf32>
    %c0_148 = arith.constant 0 : index
    %c0_149 = arith.constant 0 : index
    %363 = vector.load %arg18[%c0_148, %c0_149] : memref<4x2xf32, #tpu.memory_space<vmem>>, vector<3x2xf32>
    %c0_150 = arith.constant 0 : index
    %c0_151 = arith.constant 0 : index
    %c0_152 = arith.constant 0 : index
    %364 = vector.load %arg13[%c0_150, %c0_151, %c0_152] : memref<2x96x32xbf16, #tpu.memory_space<vmem>>, vector<1x32x32xbf16>
    %365 = vector.shape_cast %364 : vector<1x32x32xbf16> to vector<32x32xbf16>
    %366 = arith.truncf %350 : vector<2x8x32xf32> to vector<2x8x32xbf16>
    "tpu.trace_start"() <{level = 10 : i32, message = "bnf,fo->bno"}> : () -> ()
    %cst_153 = arith.constant dense<0.000000e+00> : vector<2x8x32xf32>
    %367 = tpu.matmul %366, %365, %cst_153 {dimension_numbers = #tpu.dot_dimension_numbers<[2], [0], [0, 1], [1], [0, 0, 0, 1, 1, 1], [], []>} : vector<2x8x32xbf16>, vector<32x32xbf16>, vector<2x8x32xf32> -> vector<2x8x32xf32>
    "tpu.trace_stop"() : () -> ()
    %c1_154 = arith.constant 1 : index
    %c0_155 = arith.constant 0 : index
    %c0_156 = arith.constant 0 : index
    %368 = vector.load %arg13[%c1_154, %c0_155, %c0_156] : memref<2x96x32xbf16, #tpu.memory_space<vmem>>, vector<1x32x32xbf16>
    %369 = vector.shape_cast %368 : vector<1x32x32xbf16> to vector<32x32xbf16>
    %370 = arith.truncf %333 : vector<2x8x32xf32> to vector<2x8x32xbf16>
    "tpu.trace_start"() <{level = 10 : i32, message = "bnf,fo->bno"}> : () -> ()
    %cst_157 = arith.constant dense<0.000000e+00> : vector<2x8x32xf32>
    %371 = tpu.matmul %370, %369, %cst_157 {dimension_numbers = #tpu.dot_dimension_numbers<[2], [0], [0, 1], [1], [0, 0, 0, 1, 1, 1], [], []>} : vector<2x8x32xbf16>, vector<32x32xbf16>, vector<2x8x32xf32> -> vector<2x8x32xf32>
    "tpu.trace_stop"() : () -> ()
    %372 = arith.addf %367, %371 : vector<2x8x32xf32>
    %c0_158 = arith.constant 0 : index
    %c32_159 = arith.constant 32 : index
    %c0_160 = arith.constant 0 : index
    %373 = vector.load %arg13[%c0_158, %c32_159, %c0_160] : memref<2x96x32xbf16, #tpu.memory_space<vmem>>, vector<1x32x32xbf16>
    %374 = vector.shape_cast %373 : vector<1x32x32xbf16> to vector<32x32xbf16>
    %375 = arith.truncf %354 : vector<2x8x32xf32> to vector<2x8x32xbf16>
    "tpu.trace_start"() <{level = 10 : i32, message = "bnf,fo->bno"}> : () -> ()
    %cst_161 = arith.constant dense<0.000000e+00> : vector<2x8x32xf32>
    %376 = tpu.matmul %375, %374, %cst_161 {dimension_numbers = #tpu.dot_dimension_numbers<[2], [0], [0, 1], [1], [0, 0, 0, 1, 1, 1], [], []>} : vector<2x8x32xbf16>, vector<32x32xbf16>, vector<2x8x32xf32> -> vector<2x8x32xf32>
    "tpu.trace_stop"() : () -> ()
    %c1_162 = arith.constant 1 : index
    %c32_163 = arith.constant 32 : index
    %c0_164 = arith.constant 0 : index
    %377 = vector.load %arg13[%c1_162, %c32_163, %c0_164] : memref<2x96x32xbf16, #tpu.memory_space<vmem>>, vector<1x32x32xbf16>
    %378 = vector.shape_cast %377 : vector<1x32x32xbf16> to vector<32x32xbf16>
    %379 = arith.truncf %335 : vector<2x8x32xf32> to vector<2x8x32xbf16>
    "tpu.trace_start"() <{level = 10 : i32, message = "bnf,fo->bno"}> : () -> ()
    %cst_165 = arith.constant dense<0.000000e+00> : vector<2x8x32xf32>
    %380 = tpu.matmul %379, %378, %cst_165 {dimension_numbers = #tpu.dot_dimension_numbers<[2], [0], [0, 1], [1], [0, 0, 0, 1, 1, 1], [], []>} : vector<2x8x32xbf16>, vector<32x32xbf16>, vector<2x8x32xf32> -> vector<2x8x32xf32>
    "tpu.trace_stop"() : () -> ()
    %381 = arith.addf %376, %380 : vector<2x8x32xf32>
    %382 = arith.addf %372, %381 : vector<2x8x32xf32>
    %c0_166 = arith.constant 0 : index
    %c64_167 = arith.constant 64 : index
    %c0_168 = arith.constant 0 : index
    %383 = vector.load %arg13[%c0_166, %c64_167, %c0_168] : memref<2x96x32xbf16, #tpu.memory_space<vmem>>, vector<1x32x32xbf16>
    %384 = vector.shape_cast %383 : vector<1x32x32xbf16> to vector<32x32xbf16>
    %385 = arith.truncf %358 : vector<2x8x32xf32> to vector<2x8x32xbf16>
    "tpu.trace_start"() <{level = 10 : i32, message = "bnf,fo->bno"}> : () -> ()
    %cst_169 = arith.constant dense<0.000000e+00> : vector<2x8x32xf32>
    %386 = tpu.matmul %385, %384, %cst_169 {dimension_numbers = #tpu.dot_dimension_numbers<[2], [0], [0, 1], [1], [0, 0, 0, 1, 1, 1], [], []>} : vector<2x8x32xbf16>, vector<32x32xbf16>, vector<2x8x32xf32> -> vector<2x8x32xf32>
    "tpu.trace_stop"() : () -> ()
    %c1_170 = arith.constant 1 : index
    %c64_171 = arith.constant 64 : index
    %c0_172 = arith.constant 0 : index
    %387 = vector.load %arg13[%c1_170, %c64_171, %c0_172] : memref<2x96x32xbf16, #tpu.memory_space<vmem>>, vector<1x32x32xbf16>
    %388 = vector.shape_cast %387 : vector<1x32x32xbf16> to vector<32x32xbf16>
    %389 = arith.truncf %337 : vector<2x8x32xf32> to vector<2x8x32xbf16>
    "tpu.trace_start"() <{level = 10 : i32, message = "bnf,fo->bno"}> : () -> ()
    %cst_173 = arith.constant dense<0.000000e+00> : vector<2x8x32xf32>
    %390 = tpu.matmul %389, %388, %cst_173 {dimension_numbers = #tpu.dot_dimension_numbers<[2], [0], [0, 1], [1], [0, 0, 0, 1, 1, 1], [], []>} : vector<2x8x32xbf16>, vector<32x32xbf16>, vector<2x8x32xf32> -> vector<2x8x32xf32>
    "tpu.trace_stop"() : () -> ()
    %391 = arith.addf %386, %390 : vector<2x8x32xf32>
    %392 = arith.addf %382, %391 : vector<2x8x32xf32>
    %393 = vector.extract_strided_slice %360 {offsets = [0, 0], sizes = [1, 32], strides = [1, 1]} : vector<3x32xf32> to vector<1x32xf32>
    %394 = vector.shape_cast %393 : vector<1x32xf32> to vector<1x1x32xf32>
    %395 = vector.broadcast %394 : vector<1x1x32xf32> to vector<2x8x32xf32>
    %396 = arith.addf %392, %395 : vector<2x8x32xf32>
    %cst_174 = arith.constant 0.000000e+00 : f32
    %397 = vector.broadcast %cst_174 : f32 to vector<2x8x32xf32>
    %398 = arith.maximumf %396, %397 : vector<2x8x32xf32>
    %cst_175 = arith.constant dense<0.000000e+00> : vector<32xf32>
    %399 = vector.multi_reduction <add>, %398, %cst_175 [0, 1] : vector<2x8x32xf32> to vector<32xf32>
    %400 = vector.shape_cast %399 : vector<32xf32> to vector<1x1x32xf32>
    %cst_176 = arith.constant 1.600000e+01 : f32
    %401 = vector.broadcast %cst_176 : f32 to vector<1x1x32xf32>
    %402 = arith.divf %400, %401 : vector<1x1x32xf32>
    %403 = arith.mulf %398, %398 : vector<2x8x32xf32>
    %cst_177 = arith.constant dense<0.000000e+00> : vector<32xf32>
    %404 = vector.multi_reduction <add>, %403, %cst_177 [0, 1] : vector<2x8x32xf32> to vector<32xf32>
    %405 = vector.shape_cast %404 : vector<32xf32> to vector<1x1x32xf32>
    %cst_178 = arith.constant 1.600000e+01 : f32
    %406 = vector.broadcast %cst_178 : f32 to vector<1x1x32xf32>
    %407 = arith.divf %405, %406 : vector<1x1x32xf32>
    %408 = arith.mulf %402, %402 : vector<1x1x32xf32>
    %409 = arith.subf %407, %408 : vector<1x1x32xf32>
    %cst_179 = arith.constant 0.000000e+00 : f32
    %410 = vector.broadcast %cst_179 : f32 to vector<1x1x32xf32>
    %411 = arith.maximumf %409, %410 : vector<1x1x32xf32>
    %cst_180 = arith.constant 9.99999974E-6 : f32
    %412 = vector.broadcast %cst_180 : f32 to vector<1x1x32xf32>
    %413 = arith.addf %411, %412 : vector<1x1x32xf32>
    %414 = math.rsqrt %413 : vector<1x1x32xf32>
    %415 = vector.extract_strided_slice %360 {offsets = [1, 0], sizes = [1, 32], strides = [1, 1]} : vector<3x32xf32> to vector<1x32xf32>
    %416 = vector.shape_cast %415 : vector<1x32xf32> to vector<1x1x32xf32>
    %417 = arith.mulf %414, %416 : vector<1x1x32xf32>
    %418 = vector.broadcast %417 : vector<1x1x32xf32> to vector<2x8x32xf32>
    %419 = arith.mulf %398, %418 : vector<2x8x32xf32>
    %420 = vector.extract_strided_slice %360 {offsets = [2, 0], sizes = [1, 32], strides = [1, 1]} : vector<3x32xf32> to vector<1x32xf32>
    %421 = arith.mulf %402, %417 : vector<1x1x32xf32>
    %422 = vector.shape_cast %420 : vector<1x32xf32> to vector<1x1x32xf32>
    %423 = arith.subf %422, %421 : vector<1x1x32xf32>
    %424 = vector.broadcast %423 : vector<1x1x32xf32> to vector<2x8x32xf32>
    %425 = arith.addf %419, %424 : vector<2x8x32xf32>
    %426 = arith.truncf %425 : vector<2x8x32xf32> to vector<2x8x32xbf16>
    "tpu.trace_start"() <{level = 10 : i32, message = "bnm,bmf->bnf"}> : () -> ()
    %cst_181 = arith.constant dense<0.000000e+00> : vector<2x8x32xf32>
    %427 = tpu.matmul %341, %426, %cst_181 {dimension_numbers = #tpu.dot_dimension_numbers<[2], [1], [1], [2], [0, 0, 0, 1, 1, 2], [0], [0]>} : vector<2x8x8xbf16>, vector<2x8x32xbf16>, vector<2x8x32xf32> -> vector<2x8x32xf32>
    "tpu.trace_stop"() : () -> ()
    %428 = vector.broadcast %346 : vector<2x8x1xf32> to vector<2x8x32xf32>
    %429 = arith.mulf %427, %428 : vector<2x8x32xf32>
    %c0_182 = arith.constant 0 : index
    %c0_183 = arith.constant 0 : index
    %c0_184 = arith.constant 0 : index
    %430 = vector.load %arg14[%c0_182, %c0_183, %c0_184] : memref<2x32x32xbf16, #tpu.memory_space<vmem>>, vector<1x32x32xbf16>
    %431 = vector.shape_cast %430 : vector<1x32x32xbf16> to vector<32x32xbf16>
    %432 = arith.truncf %429 : vector<2x8x32xf32> to vector<2x8x32xbf16>
    "tpu.trace_start"() <{level = 10 : i32, message = "bnf,fo->bno"}> : () -> ()
    %cst_185 = arith.constant dense<0.000000e+00> : vector<2x8x32xf32>
    %433 = tpu.matmul %432, %431, %cst_185 {dimension_numbers = #tpu.dot_dimension_numbers<[2], [0], [0, 1], [1], [0, 0, 0, 1, 1, 1], [], []>} : vector<2x8x32xbf16>, vector<32x32xbf16>, vector<2x8x32xf32> -> vector<2x8x32xf32>
    "tpu.trace_stop"() : () -> ()
    %c1_186 = arith.constant 1 : index
    %c0_187 = arith.constant 0 : index
    %c0_188 = arith.constant 0 : index
    %434 = vector.load %arg14[%c1_186, %c0_187, %c0_188] : memref<2x32x32xbf16, #tpu.memory_space<vmem>>, vector<1x32x32xbf16>
    %435 = vector.shape_cast %434 : vector<1x32x32xbf16> to vector<32x32xbf16>
    %436 = arith.truncf %425 : vector<2x8x32xf32> to vector<2x8x32xbf16>
    "tpu.trace_start"() <{level = 10 : i32, message = "bnf,fo->bno"}> : () -> ()
    %cst_189 = arith.constant dense<0.000000e+00> : vector<2x8x32xf32>
    %437 = tpu.matmul %436, %435, %cst_189 {dimension_numbers = #tpu.dot_dimension_numbers<[2], [0], [0, 1], [1], [0, 0, 0, 1, 1, 1], [], []>} : vector<2x8x32xbf16>, vector<32x32xbf16>, vector<2x8x32xf32> -> vector<2x8x32xf32>
    "tpu.trace_stop"() : () -> ()
    %438 = arith.addf %433, %437 : vector<2x8x32xf32>
    %439 = vector.extract_strided_slice %362 {offsets = [0, 0], sizes = [1, 32], strides = [1, 1]} : vector<3x32xf32> to vector<1x32xf32>
    %440 = vector.shape_cast %439 : vector<1x32xf32> to vector<1x1x32xf32>
    %441 = vector.broadcast %440 : vector<1x1x32xf32> to vector<2x8x32xf32>
    %442 = arith.addf %438, %441 : vector<2x8x32xf32>
    %cst_190 = arith.constant 0.000000e+00 : f32
    %443 = vector.broadcast %cst_190 : f32 to vector<2x8x32xf32>
    %444 = arith.maximumf %442, %443 : vector<2x8x32xf32>
    %cst_191 = arith.constant dense<0.000000e+00> : vector<32xf32>
    %445 = vector.multi_reduction <add>, %444, %cst_191 [0, 1] : vector<2x8x32xf32> to vector<32xf32>
    %446 = vector.shape_cast %445 : vector<32xf32> to vector<1x1x32xf32>
    %cst_192 = arith.constant 1.600000e+01 : f32
    %447 = vector.broadcast %cst_192 : f32 to vector<1x1x32xf32>
    %448 = arith.divf %446, %447 : vector<1x1x32xf32>
    %449 = arith.mulf %444, %444 : vector<2x8x32xf32>
    %cst_193 = arith.constant dense<0.000000e+00> : vector<32xf32>
    %450 = vector.multi_reduction <add>, %449, %cst_193 [0, 1] : vector<2x8x32xf32> to vector<32xf32>
    %451 = vector.shape_cast %450 : vector<32xf32> to vector<1x1x32xf32>
    %cst_194 = arith.constant 1.600000e+01 : f32
    %452 = vector.broadcast %cst_194 : f32 to vector<1x1x32xf32>
    %453 = arith.divf %451, %452 : vector<1x1x32xf32>
    %454 = arith.mulf %448, %448 : vector<1x1x32xf32>
    %455 = arith.subf %453, %454 : vector<1x1x32xf32>
    %cst_195 = arith.constant 0.000000e+00 : f32
    %456 = vector.broadcast %cst_195 : f32 to vector<1x1x32xf32>
    %457 = arith.maximumf %455, %456 : vector<1x1x32xf32>
    %cst_196 = arith.constant 9.99999974E-6 : f32
    %458 = vector.broadcast %cst_196 : f32 to vector<1x1x32xf32>
    %459 = arith.addf %457, %458 : vector<1x1x32xf32>
    %460 = math.rsqrt %459 : vector<1x1x32xf32>
    %461 = vector.extract_strided_slice %362 {offsets = [1, 0], sizes = [1, 32], strides = [1, 1]} : vector<3x32xf32> to vector<1x32xf32>
    %462 = vector.shape_cast %461 : vector<1x32xf32> to vector<1x1x32xf32>
    %463 = arith.mulf %460, %462 : vector<1x1x32xf32>
    %464 = vector.broadcast %463 : vector<1x1x32xf32> to vector<2x8x32xf32>
    %465 = arith.mulf %444, %464 : vector<2x8x32xf32>
    %466 = vector.extract_strided_slice %362 {offsets = [2, 0], sizes = [1, 32], strides = [1, 1]} : vector<3x32xf32> to vector<1x32xf32>
    %467 = arith.mulf %448, %463 : vector<1x1x32xf32>
    %468 = vector.shape_cast %466 : vector<1x32xf32> to vector<1x1x32xf32>
    %469 = arith.subf %468, %467 : vector<1x1x32xf32>
    %470 = vector.broadcast %469 : vector<1x1x32xf32> to vector<2x8x32xf32>
    %471 = arith.addf %465, %470 : vector<2x8x32xf32>
    %472 = arith.truncf %471 : vector<2x8x32xf32> to vector<2x8x32xbf16>
    "tpu.trace_start"() <{level = 10 : i32, message = "bnm,bmf->bnf"}> : () -> ()
    %cst_197 = arith.constant dense<0.000000e+00> : vector<2x8x32xf32>
    %473 = tpu.matmul %341, %472, %cst_197 {dimension_numbers = #tpu.dot_dimension_numbers<[2], [1], [1], [2], [0, 0, 0, 1, 1, 2], [0], [0]>} : vector<2x8x8xbf16>, vector<2x8x32xbf16>, vector<2x8x32xf32> -> vector<2x8x32xf32>
    "tpu.trace_stop"() : () -> ()
    %474 = vector.broadcast %346 : vector<2x8x1xf32> to vector<2x8x32xf32>
    %475 = arith.mulf %473, %474 : vector<2x8x32xf32>
    %c0_198 = arith.constant 0 : index
    %c0_199 = arith.constant 0 : index
    %c0_200 = arith.constant 0 : index
    %476 = vector.load %arg15[%c0_198, %c0_199, %c0_200] : memref<2x32x2xbf16, #tpu.memory_space<vmem>>, vector<1x32x2xbf16>
    %477 = vector.shape_cast %476 : vector<1x32x2xbf16> to vector<32x2xbf16>
    %478 = arith.truncf %475 : vector<2x8x32xf32> to vector<2x8x32xbf16>
    "tpu.trace_start"() <{level = 10 : i32, message = "bnf,fo->bno"}> : () -> ()
    %cst_201 = arith.constant dense<0.000000e+00> : vector<2x8x2xf32>
    %479 = tpu.matmul %478, %477, %cst_201 {dimension_numbers = #tpu.dot_dimension_numbers<[2], [0], [0, 1], [1], [0, 0, 0, 1, 1, 1], [], []>} : vector<2x8x32xbf16>, vector<32x2xbf16>, vector<2x8x2xf32> -> vector<2x8x2xf32>
    "tpu.trace_stop"() : () -> ()
    %c1_202 = arith.constant 1 : index
    %c0_203 = arith.constant 0 : index
    %c0_204 = arith.constant 0 : index
    %480 = vector.load %arg15[%c1_202, %c0_203, %c0_204] : memref<2x32x2xbf16, #tpu.memory_space<vmem>>, vector<1x32x2xbf16>
    %481 = vector.shape_cast %480 : vector<1x32x2xbf16> to vector<32x2xbf16>
    %482 = arith.truncf %471 : vector<2x8x32xf32> to vector<2x8x32xbf16>
    "tpu.trace_start"() <{level = 10 : i32, message = "bnf,fo->bno"}> : () -> ()
    %cst_205 = arith.constant dense<0.000000e+00> : vector<2x8x2xf32>
    %483 = tpu.matmul %482, %481, %cst_205 {dimension_numbers = #tpu.dot_dimension_numbers<[2], [0], [0, 1], [1], [0, 0, 0, 1, 1, 1], [], []>} : vector<2x8x32xbf16>, vector<32x2xbf16>, vector<2x8x2xf32> -> vector<2x8x2xf32>
    "tpu.trace_stop"() : () -> ()
    %484 = arith.addf %479, %483 : vector<2x8x2xf32>
    %485 = vector.extract_strided_slice %363 {offsets = [0, 0], sizes = [1, 2], strides = [1, 1]} : vector<3x2xf32> to vector<1x2xf32>
    %486 = vector.shape_cast %485 : vector<1x2xf32> to vector<1x1x2xf32>
    %487 = vector.broadcast %486 : vector<1x1x2xf32> to vector<2x8x2xf32>
    %488 = arith.addf %484, %487 : vector<2x8x2xf32>
    %cst_206 = arith.constant 0.000000e+00 : f32
    %489 = vector.broadcast %cst_206 : f32 to vector<2x8x2xf32>
    %490 = arith.maximumf %488, %489 : vector<2x8x2xf32>
    %cst_207 = arith.constant dense<0.000000e+00> : vector<2xf32>
    %491 = vector.multi_reduction <add>, %490, %cst_207 [0, 1] : vector<2x8x2xf32> to vector<2xf32>
    %492 = vector.shape_cast %491 : vector<2xf32> to vector<1x1x2xf32>
    %cst_208 = arith.constant 1.600000e+01 : f32
    %493 = vector.broadcast %cst_208 : f32 to vector<1x1x2xf32>
    %494 = arith.divf %492, %493 : vector<1x1x2xf32>
    %495 = arith.mulf %490, %490 : vector<2x8x2xf32>
    %cst_209 = arith.constant dense<0.000000e+00> : vector<2xf32>
    %496 = vector.multi_reduction <add>, %495, %cst_209 [0, 1] : vector<2x8x2xf32> to vector<2xf32>
    %497 = vector.shape_cast %496 : vector<2xf32> to vector<1x1x2xf32>
    %cst_210 = arith.constant 1.600000e+01 : f32
    %498 = vector.broadcast %cst_210 : f32 to vector<1x1x2xf32>
    %499 = arith.divf %497, %498 : vector<1x1x2xf32>
    %500 = arith.mulf %494, %494 : vector<1x1x2xf32>
    %501 = arith.subf %499, %500 : vector<1x1x2xf32>
    %cst_211 = arith.constant 0.000000e+00 : f32
    %502 = vector.broadcast %cst_211 : f32 to vector<1x1x2xf32>
    %503 = arith.maximumf %501, %502 : vector<1x1x2xf32>
    %cst_212 = arith.constant 9.99999974E-6 : f32
    %504 = vector.broadcast %cst_212 : f32 to vector<1x1x2xf32>
    %505 = arith.addf %503, %504 : vector<1x1x2xf32>
    %506 = math.rsqrt %505 : vector<1x1x2xf32>
    %507 = vector.extract_strided_slice %363 {offsets = [1, 0], sizes = [1, 2], strides = [1, 1]} : vector<3x2xf32> to vector<1x2xf32>
    %508 = vector.shape_cast %507 : vector<1x2xf32> to vector<1x1x2xf32>
    %509 = arith.mulf %506, %508 : vector<1x1x2xf32>
    %510 = vector.broadcast %509 : vector<1x1x2xf32> to vector<2x8x2xf32>
    %511 = arith.mulf %490, %510 : vector<2x8x2xf32>
    %512 = vector.extract_strided_slice %363 {offsets = [2, 0], sizes = [1, 2], strides = [1, 1]} : vector<3x2xf32> to vector<1x2xf32>
    %513 = arith.mulf %494, %509 : vector<1x1x2xf32>
    %514 = vector.shape_cast %512 : vector<1x2xf32> to vector<1x1x2xf32>
    %515 = arith.subf %514, %513 : vector<1x1x2xf32>
    %516 = vector.broadcast %515 : vector<1x1x2xf32> to vector<2x8x2xf32>
    %517 = arith.addf %511, %516 : vector<2x8x2xf32>
    %c0_213 = arith.constant 0 : index
    %c0_214 = arith.constant 0 : index
    %518 = vector.load %arg16[%c0_213, %c0_214] : memref<66x2xbf16, #tpu.memory_space<vmem>>, vector<32x2xbf16>
    %519 = arith.truncf %425 : vector<2x8x32xf32> to vector<2x8x32xbf16>
    "tpu.trace_start"() <{level = 10 : i32, message = "bnf,fo->bno"}> : () -> ()
    %cst_215 = arith.constant dense<0.000000e+00> : vector<2x8x2xf32>
    %520 = tpu.matmul %519, %518, %cst_215 {dimension_numbers = #tpu.dot_dimension_numbers<[2], [0], [0, 1], [1], [0, 0, 0, 1, 1, 1], [], []>} : vector<2x8x32xbf16>, vector<32x2xbf16>, vector<2x8x2xf32> -> vector<2x8x2xf32>
    "tpu.trace_stop"() : () -> ()
    %c32_216 = arith.constant 32 : index
    %c0_217 = arith.constant 0 : index
    %521 = vector.load %arg16[%c32_216, %c0_217] : memref<66x2xbf16, #tpu.memory_space<vmem>>, vector<32x2xbf16>
    %522 = arith.truncf %471 : vector<2x8x32xf32> to vector<2x8x32xbf16>
    "tpu.trace_start"() <{level = 10 : i32, message = "bnf,fo->bno"}> : () -> ()
    %cst_218 = arith.constant dense<0.000000e+00> : vector<2x8x2xf32>
    %523 = tpu.matmul %522, %521, %cst_218 {dimension_numbers = #tpu.dot_dimension_numbers<[2], [0], [0, 1], [1], [0, 0, 0, 1, 1, 1], [], []>} : vector<2x8x32xbf16>, vector<32x2xbf16>, vector<2x8x2xf32> -> vector<2x8x2xf32>
    "tpu.trace_stop"() : () -> ()
    %524 = arith.addf %520, %523 : vector<2x8x2xf32>
    %c64_219 = arith.constant 64 : index
    %c0_220 = arith.constant 0 : index
    %525 = vector.load %arg16[%c64_219, %c0_220] : memref<66x2xbf16, #tpu.memory_space<vmem>>, vector<2x2xbf16>
    %526 = arith.truncf %517 : vector<2x8x2xf32> to vector<2x8x2xbf16>
    "tpu.trace_start"() <{level = 10 : i32, message = "bnf,fo->bno"}> : () -> ()
    %cst_221 = arith.constant dense<0.000000e+00> : vector<2x8x2xf32>
    %527 = tpu.matmul %526, %525, %cst_221 {dimension_numbers = #tpu.dot_dimension_numbers<[2], [0], [0, 1], [1], [0, 0, 0, 1, 1, 1], [], []>} : vector<2x8x2xbf16>, vector<2x2xbf16>, vector<2x8x2xf32> -> vector<2x8x2xf32>
    "tpu.trace_stop"() : () -> ()
    %528 = arith.addf %524, %527 : vector<2x8x2xf32>
    %c3_222 = arith.constant 3 : index
    %c0_223 = arith.constant 0 : index
    %529 = vector.load %arg18[%c3_222, %c0_223] : memref<4x2xf32, #tpu.memory_space<vmem>>, vector<1x2xf32>
    %530 = vector.shape_cast %529 : vector<1x2xf32> to vector<1x1x2xf32>
    %531 = vector.broadcast %530 : vector<1x1x2xf32> to vector<2x8x2xf32>
    %532 = arith.addf %528, %531 : vector<2x8x2xf32>
    %cst_224 = arith.constant 0.000000e+00 : f32
    %533 = vector.broadcast %cst_224 : f32 to vector<2x8x2xf32>
    %534 = arith.maximumf %532, %533 : vector<2x8x2xf32>
    %c0_225 = arith.constant 0 : index
    %c0_226 = arith.constant 0 : index
    %c0_227 = arith.constant 0 : index
    %535 = vector.load %arg22[%c0_225, %c0_226, %c0_227] : memref<3x3x32xf32, #tpu.memory_space<vmem>>, vector<1x3x32xf32>
    %536 = vector.shape_cast %535 : vector<1x3x32xf32> to vector<3x32xf32>
    %c1_228 = arith.constant 1 : index
    %c0_229 = arith.constant 0 : index
    %c0_230 = arith.constant 0 : index
    %537 = vector.load %arg22[%c1_228, %c0_229, %c0_230] : memref<3x3x32xf32, #tpu.memory_space<vmem>>, vector<1x3x32xf32>
    %538 = vector.shape_cast %537 : vector<1x3x32xf32> to vector<3x32xf32>
    %c2_231 = arith.constant 2 : index
    %c0_232 = arith.constant 0 : index
    %c0_233 = arith.constant 0 : index
    %539 = vector.load %arg22[%c2_231, %c0_232, %c0_233] : memref<3x3x32xf32, #tpu.memory_space<vmem>>, vector<1x3x32xf32>
    %540 = vector.shape_cast %539 : vector<1x3x32xf32> to vector<3x32xf32>
    %c0_234 = arith.constant 0 : index
    %c0_235 = arith.constant 0 : index
    %c0_236 = arith.constant 0 : index
    %541 = vector.load %arg19[%c0_234, %c0_235, %c0_236] : memref<2x96x32xbf16, #tpu.memory_space<vmem>>, vector<1x32x32xbf16>
    %542 = vector.shape_cast %541 : vector<1x32x32xbf16> to vector<32x32xbf16>
    %543 = arith.truncf %350 : vector<2x8x32xf32> to vector<2x8x32xbf16>
    "tpu.trace_start"() <{level = 10 : i32, message = "bnf,fo->bno"}> : () -> ()
    %cst_237 = arith.constant dense<0.000000e+00> : vector<2x8x32xf32>
    %544 = tpu.matmul %543, %542, %cst_237 {dimension_numbers = #tpu.dot_dimension_numbers<[2], [0], [0, 1], [1], [0, 0, 0, 1, 1, 1], [], []>} : vector<2x8x32xbf16>, vector<32x32xbf16>, vector<2x8x32xf32> -> vector<2x8x32xf32>
    "tpu.trace_stop"() : () -> ()
    %c1_238 = arith.constant 1 : index
    %c0_239 = arith.constant 0 : index
    %c0_240 = arith.constant 0 : index
    %545 = vector.load %arg19[%c1_238, %c0_239, %c0_240] : memref<2x96x32xbf16, #tpu.memory_space<vmem>>, vector<1x32x32xbf16>
    %546 = vector.shape_cast %545 : vector<1x32x32xbf16> to vector<32x32xbf16>
    %547 = arith.truncf %333 : vector<2x8x32xf32> to vector<2x8x32xbf16>
    "tpu.trace_start"() <{level = 10 : i32, message = "bnf,fo->bno"}> : () -> ()
    %cst_241 = arith.constant dense<0.000000e+00> : vector<2x8x32xf32>
    %548 = tpu.matmul %547, %546, %cst_241 {dimension_numbers = #tpu.dot_dimension_numbers<[2], [0], [0, 1], [1], [0, 0, 0, 1, 1, 1], [], []>} : vector<2x8x32xbf16>, vector<32x32xbf16>, vector<2x8x32xf32> -> vector<2x8x32xf32>
    "tpu.trace_stop"() : () -> ()
    %549 = arith.addf %544, %548 : vector<2x8x32xf32>
    %c0_242 = arith.constant 0 : index
    %c32_243 = arith.constant 32 : index
    %c0_244 = arith.constant 0 : index
    %550 = vector.load %arg19[%c0_242, %c32_243, %c0_244] : memref<2x96x32xbf16, #tpu.memory_space<vmem>>, vector<1x32x32xbf16>
    %551 = vector.shape_cast %550 : vector<1x32x32xbf16> to vector<32x32xbf16>
    %552 = arith.truncf %354 : vector<2x8x32xf32> to vector<2x8x32xbf16>
    "tpu.trace_start"() <{level = 10 : i32, message = "bnf,fo->bno"}> : () -> ()
    %cst_245 = arith.constant dense<0.000000e+00> : vector<2x8x32xf32>
    %553 = tpu.matmul %552, %551, %cst_245 {dimension_numbers = #tpu.dot_dimension_numbers<[2], [0], [0, 1], [1], [0, 0, 0, 1, 1, 1], [], []>} : vector<2x8x32xbf16>, vector<32x32xbf16>, vector<2x8x32xf32> -> vector<2x8x32xf32>
    "tpu.trace_stop"() : () -> ()
    %c1_246 = arith.constant 1 : index
    %c32_247 = arith.constant 32 : index
    %c0_248 = arith.constant 0 : index
    %554 = vector.load %arg19[%c1_246, %c32_247, %c0_248] : memref<2x96x32xbf16, #tpu.memory_space<vmem>>, vector<1x32x32xbf16>
    %555 = vector.shape_cast %554 : vector<1x32x32xbf16> to vector<32x32xbf16>
    %556 = arith.truncf %335 : vector<2x8x32xf32> to vector<2x8x32xbf16>
    "tpu.trace_start"() <{level = 10 : i32, message = "bnf,fo->bno"}> : () -> ()
    %cst_249 = arith.constant dense<0.000000e+00> : vector<2x8x32xf32>
    %557 = tpu.matmul %556, %555, %cst_249 {dimension_numbers = #tpu.dot_dimension_numbers<[2], [0], [0, 1], [1], [0, 0, 0, 1, 1, 1], [], []>} : vector<2x8x32xbf16>, vector<32x32xbf16>, vector<2x8x32xf32> -> vector<2x8x32xf32>
    "tpu.trace_stop"() : () -> ()
    %558 = arith.addf %553, %557 : vector<2x8x32xf32>
    %559 = arith.addf %549, %558 : vector<2x8x32xf32>
    %c0_250 = arith.constant 0 : index
    %c64_251 = arith.constant 64 : index
    %c0_252 = arith.constant 0 : index
    %560 = vector.load %arg19[%c0_250, %c64_251, %c0_252] : memref<2x96x32xbf16, #tpu.memory_space<vmem>>, vector<1x32x32xbf16>
    %561 = vector.shape_cast %560 : vector<1x32x32xbf16> to vector<32x32xbf16>
    %562 = arith.truncf %358 : vector<2x8x32xf32> to vector<2x8x32xbf16>
    "tpu.trace_start"() <{level = 10 : i32, message = "bnf,fo->bno"}> : () -> ()
    %cst_253 = arith.constant dense<0.000000e+00> : vector<2x8x32xf32>
    %563 = tpu.matmul %562, %561, %cst_253 {dimension_numbers = #tpu.dot_dimension_numbers<[2], [0], [0, 1], [1], [0, 0, 0, 1, 1, 1], [], []>} : vector<2x8x32xbf16>, vector<32x32xbf16>, vector<2x8x32xf32> -> vector<2x8x32xf32>
    "tpu.trace_stop"() : () -> ()
    %c1_254 = arith.constant 1 : index
    %c64_255 = arith.constant 64 : index
    %c0_256 = arith.constant 0 : index
    %564 = vector.load %arg19[%c1_254, %c64_255, %c0_256] : memref<2x96x32xbf16, #tpu.memory_space<vmem>>, vector<1x32x32xbf16>
    %565 = vector.shape_cast %564 : vector<1x32x32xbf16> to vector<32x32xbf16>
    %566 = arith.truncf %337 : vector<2x8x32xf32> to vector<2x8x32xbf16>
    "tpu.trace_start"() <{level = 10 : i32, message = "bnf,fo->bno"}> : () -> ()
    %cst_257 = arith.constant dense<0.000000e+00> : vector<2x8x32xf32>
    %567 = tpu.matmul %566, %565, %cst_257 {dimension_numbers = #tpu.dot_dimension_numbers<[2], [0], [0, 1], [1], [0, 0, 0, 1, 1, 1], [], []>} : vector<2x8x32xbf16>, vector<32x32xbf16>, vector<2x8x32xf32> -> vector<2x8x32xf32>
    "tpu.trace_stop"() : () -> ()
    %568 = arith.addf %563, %567 : vector<2x8x32xf32>
    %569 = arith.addf %559, %568 : vector<2x8x32xf32>
    %570 = vector.extract_strided_slice %536 {offsets = [0, 0], sizes = [1, 32], strides = [1, 1]} : vector<3x32xf32> to vector<1x32xf32>
    %571 = vector.shape_cast %570 : vector<1x32xf32> to vector<1x1x32xf32>
    %572 = vector.broadcast %571 : vector<1x1x32xf32> to vector<2x8x32xf32>
    %573 = arith.addf %569, %572 : vector<2x8x32xf32>
    %cst_258 = arith.constant 0.000000e+00 : f32
    %574 = vector.broadcast %cst_258 : f32 to vector<2x8x32xf32>
    %575 = arith.maximumf %573, %574 : vector<2x8x32xf32>
    %cst_259 = arith.constant dense<0.000000e+00> : vector<32xf32>
    %576 = vector.multi_reduction <add>, %575, %cst_259 [0, 1] : vector<2x8x32xf32> to vector<32xf32>
    %577 = vector.shape_cast %576 : vector<32xf32> to vector<1x1x32xf32>
    %cst_260 = arith.constant 1.600000e+01 : f32
    %578 = vector.broadcast %cst_260 : f32 to vector<1x1x32xf32>
    %579 = arith.divf %577, %578 : vector<1x1x32xf32>
    %580 = arith.mulf %575, %575 : vector<2x8x32xf32>
    %cst_261 = arith.constant dense<0.000000e+00> : vector<32xf32>
    %581 = vector.multi_reduction <add>, %580, %cst_261 [0, 1] : vector<2x8x32xf32> to vector<32xf32>
    %582 = vector.shape_cast %581 : vector<32xf32> to vector<1x1x32xf32>
    %cst_262 = arith.constant 1.600000e+01 : f32
    %583 = vector.broadcast %cst_262 : f32 to vector<1x1x32xf32>
    %584 = arith.divf %582, %583 : vector<1x1x32xf32>
    %585 = arith.mulf %579, %579 : vector<1x1x32xf32>
    %586 = arith.subf %584, %585 : vector<1x1x32xf32>
    %cst_263 = arith.constant 0.000000e+00 : f32
    %587 = vector.broadcast %cst_263 : f32 to vector<1x1x32xf32>
    %588 = arith.maximumf %586, %587 : vector<1x1x32xf32>
    %cst_264 = arith.constant 9.99999974E-6 : f32
    %589 = vector.broadcast %cst_264 : f32 to vector<1x1x32xf32>
    %590 = arith.addf %588, %589 : vector<1x1x32xf32>
    %591 = math.rsqrt %590 : vector<1x1x32xf32>
    %592 = vector.extract_strided_slice %536 {offsets = [1, 0], sizes = [1, 32], strides = [1, 1]} : vector<3x32xf32> to vector<1x32xf32>
    %593 = vector.shape_cast %592 : vector<1x32xf32> to vector<1x1x32xf32>
    %594 = arith.mulf %591, %593 : vector<1x1x32xf32>
    %595 = vector.broadcast %594 : vector<1x1x32xf32> to vector<2x8x32xf32>
    %596 = arith.mulf %575, %595 : vector<2x8x32xf32>
    %597 = vector.extract_strided_slice %536 {offsets = [2, 0], sizes = [1, 32], strides = [1, 1]} : vector<3x32xf32> to vector<1x32xf32>
    %598 = arith.mulf %579, %594 : vector<1x1x32xf32>
    %599 = vector.shape_cast %597 : vector<1x32xf32> to vector<1x1x32xf32>
    %600 = arith.subf %599, %598 : vector<1x1x32xf32>
    %601 = vector.broadcast %600 : vector<1x1x32xf32> to vector<2x8x32xf32>
    %602 = arith.addf %596, %601 : vector<2x8x32xf32>
    %603 = arith.truncf %602 : vector<2x8x32xf32> to vector<2x8x32xbf16>
    "tpu.trace_start"() <{level = 10 : i32, message = "bnm,bmf->bnf"}> : () -> ()
    %cst_265 = arith.constant dense<0.000000e+00> : vector<2x8x32xf32>
    %604 = tpu.matmul %341, %603, %cst_265 {dimension_numbers = #tpu.dot_dimension_numbers<[2], [1], [1], [2], [0, 0, 0, 1, 1, 2], [0], [0]>} : vector<2x8x8xbf16>, vector<2x8x32xbf16>, vector<2x8x32xf32> -> vector<2x8x32xf32>
    "tpu.trace_stop"() : () -> ()
    %605 = vector.broadcast %346 : vector<2x8x1xf32> to vector<2x8x32xf32>
    %606 = arith.mulf %604, %605 : vector<2x8x32xf32>
    %c0_266 = arith.constant 0 : index
    %c0_267 = arith.constant 0 : index
    %c0_268 = arith.constant 0 : index
    %607 = vector.load %arg20[%c0_266, %c0_267, %c0_268] : memref<2x32x32xbf16, #tpu.memory_space<vmem>>, vector<1x32x32xbf16>
    %608 = vector.shape_cast %607 : vector<1x32x32xbf16> to vector<32x32xbf16>
    %609 = arith.truncf %606 : vector<2x8x32xf32> to vector<2x8x32xbf16>
    "tpu.trace_start"() <{level = 10 : i32, message = "bnf,fo->bno"}> : () -> ()
    %cst_269 = arith.constant dense<0.000000e+00> : vector<2x8x32xf32>
    %610 = tpu.matmul %609, %608, %cst_269 {dimension_numbers = #tpu.dot_dimension_numbers<[2], [0], [0, 1], [1], [0, 0, 0, 1, 1, 1], [], []>} : vector<2x8x32xbf16>, vector<32x32xbf16>, vector<2x8x32xf32> -> vector<2x8x32xf32>
    "tpu.trace_stop"() : () -> ()
    %c1_270 = arith.constant 1 : index
    %c0_271 = arith.constant 0 : index
    %c0_272 = arith.constant 0 : index
    %611 = vector.load %arg20[%c1_270, %c0_271, %c0_272] : memref<2x32x32xbf16, #tpu.memory_space<vmem>>, vector<1x32x32xbf16>
    %612 = vector.shape_cast %611 : vector<1x32x32xbf16> to vector<32x32xbf16>
    %613 = arith.truncf %602 : vector<2x8x32xf32> to vector<2x8x32xbf16>
    "tpu.trace_start"() <{level = 10 : i32, message = "bnf,fo->bno"}> : () -> ()
    %cst_273 = arith.constant dense<0.000000e+00> : vector<2x8x32xf32>
    %614 = tpu.matmul %613, %612, %cst_273 {dimension_numbers = #tpu.dot_dimension_numbers<[2], [0], [0, 1], [1], [0, 0, 0, 1, 1, 1], [], []>} : vector<2x8x32xbf16>, vector<32x32xbf16>, vector<2x8x32xf32> -> vector<2x8x32xf32>
    "tpu.trace_stop"() : () -> ()
    %615 = arith.addf %610, %614 : vector<2x8x32xf32>
    %616 = vector.extract_strided_slice %538 {offsets = [0, 0], sizes = [1, 32], strides = [1, 1]} : vector<3x32xf32> to vector<1x32xf32>
    %617 = vector.shape_cast %616 : vector<1x32xf32> to vector<1x1x32xf32>
    %618 = vector.broadcast %617 : vector<1x1x32xf32> to vector<2x8x32xf32>
    %619 = arith.addf %615, %618 : vector<2x8x32xf32>
    %cst_274 = arith.constant 0.000000e+00 : f32
    %620 = vector.broadcast %cst_274 : f32 to vector<2x8x32xf32>
    %621 = arith.maximumf %619, %620 : vector<2x8x32xf32>
    %cst_275 = arith.constant dense<0.000000e+00> : vector<32xf32>
    %622 = vector.multi_reduction <add>, %621, %cst_275 [0, 1] : vector<2x8x32xf32> to vector<32xf32>
    %623 = vector.shape_cast %622 : vector<32xf32> to vector<1x1x32xf32>
    %cst_276 = arith.constant 1.600000e+01 : f32
    %624 = vector.broadcast %cst_276 : f32 to vector<1x1x32xf32>
    %625 = arith.divf %623, %624 : vector<1x1x32xf32>
    %626 = arith.mulf %621, %621 : vector<2x8x32xf32>
    %cst_277 = arith.constant dense<0.000000e+00> : vector<32xf32>
    %627 = vector.multi_reduction <add>, %626, %cst_277 [0, 1] : vector<2x8x32xf32> to vector<32xf32>
    %628 = vector.shape_cast %627 : vector<32xf32> to vector<1x1x32xf32>
    %cst_278 = arith.constant 1.600000e+01 : f32
    %629 = vector.broadcast %cst_278 : f32 to vector<1x1x32xf32>
    %630 = arith.divf %628, %629 : vector<1x1x32xf32>
    %631 = arith.mulf %625, %625 : vector<1x1x32xf32>
    %632 = arith.subf %630, %631 : vector<1x1x32xf32>
    %cst_279 = arith.constant 0.000000e+00 : f32
    %633 = vector.broadcast %cst_279 : f32 to vector<1x1x32xf32>
    %634 = arith.maximumf %632, %633 : vector<1x1x32xf32>
    %cst_280 = arith.constant 9.99999974E-6 : f32
    %635 = vector.broadcast %cst_280 : f32 to vector<1x1x32xf32>
    %636 = arith.addf %634, %635 : vector<1x1x32xf32>
    %637 = math.rsqrt %636 : vector<1x1x32xf32>
    %638 = vector.extract_strided_slice %538 {offsets = [1, 0], sizes = [1, 32], strides = [1, 1]} : vector<3x32xf32> to vector<1x32xf32>
    %639 = vector.shape_cast %638 : vector<1x32xf32> to vector<1x1x32xf32>
    %640 = arith.mulf %637, %639 : vector<1x1x32xf32>
    %641 = vector.broadcast %640 : vector<1x1x32xf32> to vector<2x8x32xf32>
    %642 = arith.mulf %621, %641 : vector<2x8x32xf32>
    %643 = vector.extract_strided_slice %538 {offsets = [2, 0], sizes = [1, 32], strides = [1, 1]} : vector<3x32xf32> to vector<1x32xf32>
    %644 = arith.mulf %625, %640 : vector<1x1x32xf32>
    %645 = vector.shape_cast %643 : vector<1x32xf32> to vector<1x1x32xf32>
    %646 = arith.subf %645, %644 : vector<1x1x32xf32>
    %647 = vector.broadcast %646 : vector<1x1x32xf32> to vector<2x8x32xf32>
    %648 = arith.addf %642, %647 : vector<2x8x32xf32>
    %649 = arith.truncf %648 : vector<2x8x32xf32> to vector<2x8x32xbf16>
    "tpu.trace_start"() <{level = 10 : i32, message = "bnm,bmf->bnf"}> : () -> ()
    %cst_281 = arith.constant dense<0.000000e+00> : vector<2x8x32xf32>
    %650 = tpu.matmul %341, %649, %cst_281 {dimension_numbers = #tpu.dot_dimension_numbers<[2], [1], [1], [2], [0, 0, 0, 1, 1, 2], [0], [0]>} : vector<2x8x8xbf16>, vector<2x8x32xbf16>, vector<2x8x32xf32> -> vector<2x8x32xf32>
    "tpu.trace_stop"() : () -> ()
    %651 = vector.broadcast %346 : vector<2x8x1xf32> to vector<2x8x32xf32>
    %652 = arith.mulf %650, %651 : vector<2x8x32xf32>
    %c0_282 = arith.constant 0 : index
    %c0_283 = arith.constant 0 : index
    %c0_284 = arith.constant 0 : index
    %653 = vector.load %arg21[%c0_282, %c0_283, %c0_284] : memref<2x32x32xbf16, #tpu.memory_space<vmem>>, vector<1x32x32xbf16>
    %654 = vector.shape_cast %653 : vector<1x32x32xbf16> to vector<32x32xbf16>
    %655 = arith.truncf %652 : vector<2x8x32xf32> to vector<2x8x32xbf16>
    "tpu.trace_start"() <{level = 10 : i32, message = "bnf,fo->bno"}> : () -> ()
    %cst_285 = arith.constant dense<0.000000e+00> : vector<2x8x32xf32>
    %656 = tpu.matmul %655, %654, %cst_285 {dimension_numbers = #tpu.dot_dimension_numbers<[2], [0], [0, 1], [1], [0, 0, 0, 1, 1, 1], [], []>} : vector<2x8x32xbf16>, vector<32x32xbf16>, vector<2x8x32xf32> -> vector<2x8x32xf32>
    "tpu.trace_stop"() : () -> ()
    %c1_286 = arith.constant 1 : index
    %c0_287 = arith.constant 0 : index
    %c0_288 = arith.constant 0 : index
    %657 = vector.load %arg21[%c1_286, %c0_287, %c0_288] : memref<2x32x32xbf16, #tpu.memory_space<vmem>>, vector<1x32x32xbf16>
    %658 = vector.shape_cast %657 : vector<1x32x32xbf16> to vector<32x32xbf16>
    %659 = arith.truncf %648 : vector<2x8x32xf32> to vector<2x8x32xbf16>
    "tpu.trace_start"() <{level = 10 : i32, message = "bnf,fo->bno"}> : () -> ()
    %cst_289 = arith.constant dense<0.000000e+00> : vector<2x8x32xf32>
    %660 = tpu.matmul %659, %658, %cst_289 {dimension_numbers = #tpu.dot_dimension_numbers<[2], [0], [0, 1], [1], [0, 0, 0, 1, 1, 1], [], []>} : vector<2x8x32xbf16>, vector<32x32xbf16>, vector<2x8x32xf32> -> vector<2x8x32xf32>
    "tpu.trace_stop"() : () -> ()
    %661 = arith.addf %656, %660 : vector<2x8x32xf32>
    %662 = vector.extract_strided_slice %540 {offsets = [0, 0], sizes = [1, 32], strides = [1, 1]} : vector<3x32xf32> to vector<1x32xf32>
    %663 = vector.shape_cast %662 : vector<1x32xf32> to vector<1x1x32xf32>
    %664 = vector.broadcast %663 : vector<1x1x32xf32> to vector<2x8x32xf32>
    %665 = arith.addf %661, %664 : vector<2x8x32xf32>
    %cst_290 = arith.constant 0.000000e+00 : f32
    %666 = vector.broadcast %cst_290 : f32 to vector<2x8x32xf32>
    %667 = arith.maximumf %665, %666 : vector<2x8x32xf32>
    %cst_291 = arith.constant dense<0.000000e+00> : vector<32xf32>
    %668 = vector.multi_reduction <add>, %667, %cst_291 [0, 1] : vector<2x8x32xf32> to vector<32xf32>
    %669 = vector.shape_cast %668 : vector<32xf32> to vector<1x1x32xf32>
    %cst_292 = arith.constant 1.600000e+01 : f32
    %670 = vector.broadcast %cst_292 : f32 to vector<1x1x32xf32>
    %671 = arith.divf %669, %670 : vector<1x1x32xf32>
    %672 = arith.mulf %667, %667 : vector<2x8x32xf32>
    %cst_293 = arith.constant dense<0.000000e+00> : vector<32xf32>
    %673 = vector.multi_reduction <add>, %672, %cst_293 [0, 1] : vector<2x8x32xf32> to vector<32xf32>
    %674 = vector.shape_cast %673 : vector<32xf32> to vector<1x1x32xf32>
    %cst_294 = arith.constant 1.600000e+01 : f32
    %675 = vector.broadcast %cst_294 : f32 to vector<1x1x32xf32>
    %676 = arith.divf %674, %675 : vector<1x1x32xf32>
    %677 = arith.mulf %671, %671 : vector<1x1x32xf32>
    %678 = arith.subf %676, %677 : vector<1x1x32xf32>
    %cst_295 = arith.constant 0.000000e+00 : f32
    %679 = vector.broadcast %cst_295 : f32 to vector<1x1x32xf32>
    %680 = arith.maximumf %678, %679 : vector<1x1x32xf32>
    %cst_296 = arith.constant 9.99999974E-6 : f32
    %681 = vector.broadcast %cst_296 : f32 to vector<1x1x32xf32>
    %682 = arith.addf %680, %681 : vector<1x1x32xf32>
    %683 = math.rsqrt %682 : vector<1x1x32xf32>
    %684 = vector.extract_strided_slice %540 {offsets = [1, 0], sizes = [1, 32], strides = [1, 1]} : vector<3x32xf32> to vector<1x32xf32>
    %685 = vector.shape_cast %684 : vector<1x32xf32> to vector<1x1x32xf32>
    %686 = arith.mulf %683, %685 : vector<1x1x32xf32>
    %687 = vector.broadcast %686 : vector<1x1x32xf32> to vector<2x8x32xf32>
    %688 = arith.mulf %667, %687 : vector<2x8x32xf32>
    %689 = vector.extract_strided_slice %540 {offsets = [2, 0], sizes = [1, 32], strides = [1, 1]} : vector<3x32xf32> to vector<1x32xf32>
    %690 = arith.mulf %671, %686 : vector<1x1x32xf32>
    %691 = vector.shape_cast %689 : vector<1x32xf32> to vector<1x1x32xf32>
    %692 = arith.subf %691, %690 : vector<1x1x32xf32>
    %693 = vector.broadcast %692 : vector<1x1x32xf32> to vector<2x8x32xf32>
    %694 = arith.addf %688, %693 : vector<2x8x32xf32>
    %cst_297 = arith.constant dense<0xFF800000> : vector<2x8xf32>
    %695 = vector.multi_reduction <maximumf>, %534, %cst_297 [2] : vector<2x8x2xf32> to vector<2x8xf32>
    %696 = vector.shape_cast %695 : vector<2x8xf32> to vector<2x8x1xf32>
    %697 = vector.broadcast %696 : vector<2x8x1xf32> to vector<2x8x2xf32>
    %698 = arith.subf %534, %697 : vector<2x8x2xf32>
    %699 = math.exp %698 : vector<2x8x2xf32>
    %cst_298 = arith.constant dense<0.000000e+00> : vector<2x8xf32>
    %700 = vector.multi_reduction <add>, %699, %cst_298 [2] : vector<2x8x2xf32> to vector<2x8xf32>
    %701 = vector.shape_cast %700 : vector<2x8xf32> to vector<2x8x1xf32>
    %702 = vector.broadcast %701 : vector<2x8x1xf32> to vector<2x8x2xf32>
    %703 = arith.divf %699, %702 : vector<2x8x2xf32>
    %704 = arith.truncf %703 : vector<2x8x2xf32> to vector<2x8x2xbf16>
    %705 = arith.truncf %602 : vector<2x8x32xf32> to vector<2x8x32xbf16>
    "tpu.trace_start"() <{level = 10 : i32, message = "bnc,bnf->bcf"}> : () -> ()
    %cst_299 = arith.constant dense<0.000000e+00> : vector<2x2x32xf32>
    %706 = tpu.matmul %704, %705, %cst_299 {dimension_numbers = #tpu.dot_dimension_numbers<[1], [1], [2], [2], [0, 0, 0, 2, 1, 2], [0], [0]>} : vector<2x8x2xbf16>, vector<2x8x32xbf16>, vector<2x2x32xf32> -> vector<2x2x32xf32>
    "tpu.trace_stop"() : () -> ()
    %707 = arith.truncf %648 : vector<2x8x32xf32> to vector<2x8x32xbf16>
    "tpu.trace_start"() <{level = 10 : i32, message = "bnc,bnf->bcf"}> : () -> ()
    %cst_300 = arith.constant dense<0.000000e+00> : vector<2x2x32xf32>
    %708 = tpu.matmul %704, %707, %cst_300 {dimension_numbers = #tpu.dot_dimension_numbers<[1], [1], [2], [2], [0, 0, 0, 2, 1, 2], [0], [0]>} : vector<2x8x2xbf16>, vector<2x8x32xbf16>, vector<2x2x32xf32> -> vector<2x2x32xf32>
    "tpu.trace_stop"() : () -> ()
    %709 = arith.truncf %694 : vector<2x8x32xf32> to vector<2x8x32xbf16>
    "tpu.trace_start"() <{level = 10 : i32, message = "bnc,bnf->bcf"}> : () -> ()
    %cst_301 = arith.constant dense<0.000000e+00> : vector<2x2x32xf32>
    %710 = tpu.matmul %704, %709, %cst_301 {dimension_numbers = #tpu.dot_dimension_numbers<[1], [1], [2], [2], [0, 0, 0, 2, 1, 2], [0], [0]>} : vector<2x8x2xbf16>, vector<2x8x32xbf16>, vector<2x2x32xf32> -> vector<2x2x32xf32>
    "tpu.trace_stop"() : () -> ()
    "tpu.trace_start"() <{level = 10 : i32, message = "bnc,bnm->bcm"}> : () -> ()
    %cst_302 = arith.constant dense<0.000000e+00> : vector<2x2x8xf32>
    %711 = tpu.matmul %704, %341, %cst_302 {dimension_numbers = #tpu.dot_dimension_numbers<[1], [1], [2], [2], [0, 0, 0, 2, 1, 2], [0], [0]>} : vector<2x8x2xbf16>, vector<2x8x8xbf16>, vector<2x2x8xf32> -> vector<2x2x8xf32>
    "tpu.trace_stop"() : () -> ()
    %712 = arith.truncf %711 : vector<2x2x8xf32> to vector<2x2x8xbf16>
    "tpu.trace_start"() <{level = 10 : i32, message = "bcm,bmk->bck"}> : () -> ()
    %cst_303 = arith.constant dense<0.000000e+00> : vector<2x2x2xf32>
    %713 = tpu.matmul %712, %704, %cst_303 {dimension_numbers = #tpu.dot_dimension_numbers<[2], [1], [1], [2], [0, 0, 0, 1, 1, 2], [0], [0]>} : vector<2x2x8xbf16>, vector<2x8x2xbf16>, vector<2x2x2xf32> -> vector<2x2x2xf32>
    "tpu.trace_stop"() : () -> ()
    %714 = arith.truncf %713 : vector<2x2x2xf32> to vector<2x2x2xbf16>
    %cst_304 = arith.constant 1.000000e+00 : bf16
    %715 = vector.broadcast %cst_304 : bf16 to vector<2x1xbf16>
    "tpu.trace_start"() <{level = 10 : i32, message = "bnm,mk->bnk"}> : () -> ()
    %cst_305 = arith.constant dense<0.000000e+00> : vector<2x2x1xf32>
    %716 = tpu.matmul %714, %715, %cst_305 {dimension_numbers = #tpu.dot_dimension_numbers<[2], [0], [0, 1], [1], [0, 0, 0, 1, 1, 1], [], []>} : vector<2x2x2xbf16>, vector<2x1xbf16>, vector<2x2x1xf32> -> vector<2x2x1xf32>
    "tpu.trace_stop"() : () -> ()
    %cst_306 = arith.constant 1.000000e+00 : f32
    %717 = vector.broadcast %cst_306 : f32 to vector<2x2x1xf32>
    %718 = arith.maximumf %716, %717 : vector<2x2x1xf32>
    %719 = tpu.reciprocal %718 {approx = true} : vector<2x2x1xf32> -> vector<2x2x1xf32>
    %720 = arith.truncf %706 : vector<2x2x32xf32> to vector<2x2x32xbf16>
    "tpu.trace_start"() <{level = 10 : i32, message = "bnm,bmf->bnf"}> : () -> ()
    %cst_307 = arith.constant dense<0.000000e+00> : vector<2x2x32xf32>
    %721 = tpu.matmul %714, %720, %cst_307 {dimension_numbers = #tpu.dot_dimension_numbers<[2], [1], [1], [2], [0, 0, 0, 1, 1, 2], [0], [0]>} : vector<2x2x2xbf16>, vector<2x2x32xbf16>, vector<2x2x32xf32> -> vector<2x2x32xf32>
    "tpu.trace_stop"() : () -> ()
    %722 = vector.broadcast %719 : vector<2x2x1xf32> to vector<2x2x32xf32>
    %723 = arith.mulf %721, %722 : vector<2x2x32xf32>
    %724 = arith.truncf %708 : vector<2x2x32xf32> to vector<2x2x32xbf16>
    "tpu.trace_start"() <{level = 10 : i32, message = "bnm,bmf->bnf"}> : () -> ()
    %cst_308 = arith.constant dense<0.000000e+00> : vector<2x2x32xf32>
    %725 = tpu.matmul %714, %724, %cst_308 {dimension_numbers = #tpu.dot_dimension_numbers<[2], [1], [1], [2], [0, 0, 0, 1, 1, 2], [0], [0]>} : vector<2x2x2xbf16>, vector<2x2x32xbf16>, vector<2x2x32xf32> -> vector<2x2x32xf32>
    "tpu.trace_stop"() : () -> ()
    %726 = vector.broadcast %719 : vector<2x2x1xf32> to vector<2x2x32xf32>
    %727 = arith.mulf %725, %726 : vector<2x2x32xf32>
    %728 = arith.truncf %710 : vector<2x2x32xf32> to vector<2x2x32xbf16>
    "tpu.trace_start"() <{level = 10 : i32, message = "bnm,bmf->bnf"}> : () -> ()
    %cst_309 = arith.constant dense<0.000000e+00> : vector<2x2x32xf32>
    %729 = tpu.matmul %714, %728, %cst_309 {dimension_numbers = #tpu.dot_dimension_numbers<[2], [1], [1], [2], [0, 0, 0, 1, 1, 2], [0], [0]>} : vector<2x2x2xbf16>, vector<2x2x32xbf16>, vector<2x2x32xf32> -> vector<2x2x32xf32>
    "tpu.trace_stop"() : () -> ()
    %730 = vector.broadcast %719 : vector<2x2x1xf32> to vector<2x2x32xf32>
    %731 = arith.mulf %729, %730 : vector<2x2x32xf32>
    %c0_310 = arith.constant 0 : index
    %c0_311 = arith.constant 0 : index
    %c0_312 = arith.constant 0 : index
    %732 = vector.load %arg26[%c0_310, %c0_311, %c0_312] : memref<3x3x32xf32, #tpu.memory_space<vmem>>, vector<1x3x32xf32>
    %733 = vector.shape_cast %732 : vector<1x3x32xf32> to vector<3x32xf32>
    %c1_313 = arith.constant 1 : index
    %c0_314 = arith.constant 0 : index
    %c0_315 = arith.constant 0 : index
    %734 = vector.load %arg26[%c1_313, %c0_314, %c0_315] : memref<3x3x32xf32, #tpu.memory_space<vmem>>, vector<1x3x32xf32>
    %735 = vector.shape_cast %734 : vector<1x3x32xf32> to vector<3x32xf32>
    %c2_316 = arith.constant 2 : index
    %c0_317 = arith.constant 0 : index
    %c0_318 = arith.constant 0 : index
    %736 = vector.load %arg26[%c2_316, %c0_317, %c0_318] : memref<3x3x32xf32, #tpu.memory_space<vmem>>, vector<1x3x32xf32>
    %737 = vector.shape_cast %736 : vector<1x3x32xf32> to vector<3x32xf32>
    %c0_319 = arith.constant 0 : index
    %c0_320 = arith.constant 0 : index
    %c0_321 = arith.constant 0 : index
    %738 = vector.load %arg23[%c0_319, %c0_320, %c0_321] : memref<2x96x32xbf16, #tpu.memory_space<vmem>>, vector<1x32x32xbf16>
    %739 = vector.shape_cast %738 : vector<1x32x32xbf16> to vector<32x32xbf16>
    %740 = arith.truncf %723 : vector<2x2x32xf32> to vector<2x2x32xbf16>
    "tpu.trace_start"() <{level = 10 : i32, message = "bnf,fo->bno"}> : () -> ()
    %cst_322 = arith.constant dense<0.000000e+00> : vector<2x2x32xf32>
    %741 = tpu.matmul %740, %739, %cst_322 {dimension_numbers = #tpu.dot_dimension_numbers<[2], [0], [0, 1], [1], [0, 0, 0, 1, 1, 1], [], []>} : vector<2x2x32xbf16>, vector<32x32xbf16>, vector<2x2x32xf32> -> vector<2x2x32xf32>
    "tpu.trace_stop"() : () -> ()
    %c1_323 = arith.constant 1 : index
    %c0_324 = arith.constant 0 : index
    %c0_325 = arith.constant 0 : index
    %742 = vector.load %arg23[%c1_323, %c0_324, %c0_325] : memref<2x96x32xbf16, #tpu.memory_space<vmem>>, vector<1x32x32xbf16>
    %743 = vector.shape_cast %742 : vector<1x32x32xbf16> to vector<32x32xbf16>
    %744 = arith.truncf %706 : vector<2x2x32xf32> to vector<2x2x32xbf16>
    "tpu.trace_start"() <{level = 10 : i32, message = "bnf,fo->bno"}> : () -> ()
    %cst_326 = arith.constant dense<0.000000e+00> : vector<2x2x32xf32>
    %745 = tpu.matmul %744, %743, %cst_326 {dimension_numbers = #tpu.dot_dimension_numbers<[2], [0], [0, 1], [1], [0, 0, 0, 1, 1, 1], [], []>} : vector<2x2x32xbf16>, vector<32x32xbf16>, vector<2x2x32xf32> -> vector<2x2x32xf32>
    "tpu.trace_stop"() : () -> ()
    %746 = arith.addf %741, %745 : vector<2x2x32xf32>
    %c0_327 = arith.constant 0 : index
    %c32_328 = arith.constant 32 : index
    %c0_329 = arith.constant 0 : index
    %747 = vector.load %arg23[%c0_327, %c32_328, %c0_329] : memref<2x96x32xbf16, #tpu.memory_space<vmem>>, vector<1x32x32xbf16>
    %748 = vector.shape_cast %747 : vector<1x32x32xbf16> to vector<32x32xbf16>
    %749 = arith.truncf %727 : vector<2x2x32xf32> to vector<2x2x32xbf16>
    "tpu.trace_start"() <{level = 10 : i32, message = "bnf,fo->bno"}> : () -> ()
    %cst_330 = arith.constant dense<0.000000e+00> : vector<2x2x32xf32>
    %750 = tpu.matmul %749, %748, %cst_330 {dimension_numbers = #tpu.dot_dimension_numbers<[2], [0], [0, 1], [1], [0, 0, 0, 1, 1, 1], [], []>} : vector<2x2x32xbf16>, vector<32x32xbf16>, vector<2x2x32xf32> -> vector<2x2x32xf32>
    "tpu.trace_stop"() : () -> ()
    %c1_331 = arith.constant 1 : index
    %c32_332 = arith.constant 32 : index
    %c0_333 = arith.constant 0 : index
    %751 = vector.load %arg23[%c1_331, %c32_332, %c0_333] : memref<2x96x32xbf16, #tpu.memory_space<vmem>>, vector<1x32x32xbf16>
    %752 = vector.shape_cast %751 : vector<1x32x32xbf16> to vector<32x32xbf16>
    %753 = arith.truncf %708 : vector<2x2x32xf32> to vector<2x2x32xbf16>
    "tpu.trace_start"() <{level = 10 : i32, message = "bnf,fo->bno"}> : () -> ()
    %cst_334 = arith.constant dense<0.000000e+00> : vector<2x2x32xf32>
    %754 = tpu.matmul %753, %752, %cst_334 {dimension_numbers = #tpu.dot_dimension_numbers<[2], [0], [0, 1], [1], [0, 0, 0, 1, 1, 1], [], []>} : vector<2x2x32xbf16>, vector<32x32xbf16>, vector<2x2x32xf32> -> vector<2x2x32xf32>
    "tpu.trace_stop"() : () -> ()
    %755 = arith.addf %750, %754 : vector<2x2x32xf32>
    %756 = arith.addf %746, %755 : vector<2x2x32xf32>
    %c0_335 = arith.constant 0 : index
    %c64_336 = arith.constant 64 : index
    %c0_337 = arith.constant 0 : index
    %757 = vector.load %arg23[%c0_335, %c64_336, %c0_337] : memref<2x96x32xbf16, #tpu.memory_space<vmem>>, vector<1x32x32xbf16>
    %758 = vector.shape_cast %757 : vector<1x32x32xbf16> to vector<32x32xbf16>
    %759 = arith.truncf %731 : vector<2x2x32xf32> to vector<2x2x32xbf16>
    "tpu.trace_start"() <{level = 10 : i32, message = "bnf,fo->bno"}> : () -> ()
    %cst_338 = arith.constant dense<0.000000e+00> : vector<2x2x32xf32>
    %760 = tpu.matmul %759, %758, %cst_338 {dimension_numbers = #tpu.dot_dimension_numbers<[2], [0], [0, 1], [1], [0, 0, 0, 1, 1, 1], [], []>} : vector<2x2x32xbf16>, vector<32x32xbf16>, vector<2x2x32xf32> -> vector<2x2x32xf32>
    "tpu.trace_stop"() : () -> ()
    %c1_339 = arith.constant 1 : index
    %c64_340 = arith.constant 64 : index
    %c0_341 = arith.constant 0 : index
    %761 = vector.load %arg23[%c1_339, %c64_340, %c0_341] : memref<2x96x32xbf16, #tpu.memory_space<vmem>>, vector<1x32x32xbf16>
    %762 = vector.shape_cast %761 : vector<1x32x32xbf16> to vector<32x32xbf16>
    %763 = arith.truncf %710 : vector<2x2x32xf32> to vector<2x2x32xbf16>
    "tpu.trace_start"() <{level = 10 : i32, message = "bnf,fo->bno"}> : () -> ()
    %cst_342 = arith.constant dense<0.000000e+00> : vector<2x2x32xf32>
    %764 = tpu.matmul %763, %762, %cst_342 {dimension_numbers = #tpu.dot_dimension_numbers<[2], [0], [0, 1], [1], [0, 0, 0, 1, 1, 1], [], []>} : vector<2x2x32xbf16>, vector<32x32xbf16>, vector<2x2x32xf32> -> vector<2x2x32xf32>
    "tpu.trace_stop"() : () -> ()
    %765 = arith.addf %760, %764 : vector<2x2x32xf32>
    %766 = arith.addf %756, %765 : vector<2x2x32xf32>
    %767 = vector.extract_strided_slice %733 {offsets = [0, 0], sizes = [1, 32], strides = [1, 1]} : vector<3x32xf32> to vector<1x32xf32>
    %768 = vector.shape_cast %767 : vector<1x32xf32> to vector<1x1x32xf32>
    %769 = vector.broadcast %768 : vector<1x1x32xf32> to vector<2x2x32xf32>
    %770 = arith.addf %766, %769 : vector<2x2x32xf32>
    %cst_343 = arith.constant 0.000000e+00 : f32
    %771 = vector.broadcast %cst_343 : f32 to vector<2x2x32xf32>
    %772 = arith.maximumf %770, %771 : vector<2x2x32xf32>
    %cst_344 = arith.constant dense<0.000000e+00> : vector<32xf32>
    %773 = vector.multi_reduction <add>, %772, %cst_344 [0, 1] : vector<2x2x32xf32> to vector<32xf32>
    %774 = vector.shape_cast %773 : vector<32xf32> to vector<1x1x32xf32>
    %cst_345 = arith.constant 4.000000e+00 : f32
    %775 = vector.broadcast %cst_345 : f32 to vector<1x1x32xf32>
    %776 = arith.divf %774, %775 : vector<1x1x32xf32>
    %777 = arith.mulf %772, %772 : vector<2x2x32xf32>
    %cst_346 = arith.constant dense<0.000000e+00> : vector<32xf32>
    %778 = vector.multi_reduction <add>, %777, %cst_346 [0, 1] : vector<2x2x32xf32> to vector<32xf32>
    %779 = vector.shape_cast %778 : vector<32xf32> to vector<1x1x32xf32>
    %cst_347 = arith.constant 4.000000e+00 : f32
    %780 = vector.broadcast %cst_347 : f32 to vector<1x1x32xf32>
    %781 = arith.divf %779, %780 : vector<1x1x32xf32>
    %782 = arith.mulf %776, %776 : vector<1x1x32xf32>
    %783 = arith.subf %781, %782 : vector<1x1x32xf32>
    %cst_348 = arith.constant 0.000000e+00 : f32
    %784 = vector.broadcast %cst_348 : f32 to vector<1x1x32xf32>
    %785 = arith.maximumf %783, %784 : vector<1x1x32xf32>
    %cst_349 = arith.constant 9.99999974E-6 : f32
    %786 = vector.broadcast %cst_349 : f32 to vector<1x1x32xf32>
    %787 = arith.addf %785, %786 : vector<1x1x32xf32>
    %788 = math.rsqrt %787 : vector<1x1x32xf32>
    %789 = vector.extract_strided_slice %733 {offsets = [1, 0], sizes = [1, 32], strides = [1, 1]} : vector<3x32xf32> to vector<1x32xf32>
    %790 = vector.shape_cast %789 : vector<1x32xf32> to vector<1x1x32xf32>
    %791 = arith.mulf %788, %790 : vector<1x1x32xf32>
    %792 = vector.broadcast %791 : vector<1x1x32xf32> to vector<2x2x32xf32>
    %793 = arith.mulf %772, %792 : vector<2x2x32xf32>
    %794 = vector.extract_strided_slice %733 {offsets = [2, 0], sizes = [1, 32], strides = [1, 1]} : vector<3x32xf32> to vector<1x32xf32>
    %795 = arith.mulf %776, %791 : vector<1x1x32xf32>
    %796 = vector.shape_cast %794 : vector<1x32xf32> to vector<1x1x32xf32>
    %797 = arith.subf %796, %795 : vector<1x1x32xf32>
    %798 = vector.broadcast %797 : vector<1x1x32xf32> to vector<2x2x32xf32>
    %799 = arith.addf %793, %798 : vector<2x2x32xf32>
    %800 = arith.truncf %799 : vector<2x2x32xf32> to vector<2x2x32xbf16>
    "tpu.trace_start"() <{level = 10 : i32, message = "bnm,bmf->bnf"}> : () -> ()
    %cst_350 = arith.constant dense<0.000000e+00> : vector<2x2x32xf32>
    %801 = tpu.matmul %714, %800, %cst_350 {dimension_numbers = #tpu.dot_dimension_numbers<[2], [1], [1], [2], [0, 0, 0, 1, 1, 2], [0], [0]>} : vector<2x2x2xbf16>, vector<2x2x32xbf16>, vector<2x2x32xf32> -> vector<2x2x32xf32>
    "tpu.trace_stop"() : () -> ()
    %802 = vector.broadcast %719 : vector<2x2x1xf32> to vector<2x2x32xf32>
    %803 = arith.mulf %801, %802 : vector<2x2x32xf32>
    %c0_351 = arith.constant 0 : index
    %c0_352 = arith.constant 0 : index
    %c0_353 = arith.constant 0 : index
    %804 = vector.load %arg24[%c0_351, %c0_352, %c0_353] : memref<2x32x32xbf16, #tpu.memory_space<vmem>>, vector<1x32x32xbf16>
    %805 = vector.shape_cast %804 : vector<1x32x32xbf16> to vector<32x32xbf16>
    %806 = arith.truncf %803 : vector<2x2x32xf32> to vector<2x2x32xbf16>
    "tpu.trace_start"() <{level = 10 : i32, message = "bnf,fo->bno"}> : () -> ()
    %cst_354 = arith.constant dense<0.000000e+00> : vector<2x2x32xf32>
    %807 = tpu.matmul %806, %805, %cst_354 {dimension_numbers = #tpu.dot_dimension_numbers<[2], [0], [0, 1], [1], [0, 0, 0, 1, 1, 1], [], []>} : vector<2x2x32xbf16>, vector<32x32xbf16>, vector<2x2x32xf32> -> vector<2x2x32xf32>
    "tpu.trace_stop"() : () -> ()
    %c1_355 = arith.constant 1 : index
    %c0_356 = arith.constant 0 : index
    %c0_357 = arith.constant 0 : index
    %808 = vector.load %arg24[%c1_355, %c0_356, %c0_357] : memref<2x32x32xbf16, #tpu.memory_space<vmem>>, vector<1x32x32xbf16>
    %809 = vector.shape_cast %808 : vector<1x32x32xbf16> to vector<32x32xbf16>
    %810 = arith.truncf %799 : vector<2x2x32xf32> to vector<2x2x32xbf16>
    "tpu.trace_start"() <{level = 10 : i32, message = "bnf,fo->bno"}> : () -> ()
    %cst_358 = arith.constant dense<0.000000e+00> : vector<2x2x32xf32>
    %811 = tpu.matmul %810, %809, %cst_358 {dimension_numbers = #tpu.dot_dimension_numbers<[2], [0], [0, 1], [1], [0, 0, 0, 1, 1, 1], [], []>} : vector<2x2x32xbf16>, vector<32x32xbf16>, vector<2x2x32xf32> -> vector<2x2x32xf32>
    "tpu.trace_stop"() : () -> ()
    %812 = arith.addf %807, %811 : vector<2x2x32xf32>
    %813 = vector.extract_strided_slice %735 {offsets = [0, 0], sizes = [1, 32], strides = [1, 1]} : vector<3x32xf32> to vector<1x32xf32>
    %814 = vector.shape_cast %813 : vector<1x32xf32> to vector<1x1x32xf32>
    %815 = vector.broadcast %814 : vector<1x1x32xf32> to vector<2x2x32xf32>
    %816 = arith.addf %812, %815 : vector<2x2x32xf32>
    %cst_359 = arith.constant 0.000000e+00 : f32
    %817 = vector.broadcast %cst_359 : f32 to vector<2x2x32xf32>
    %818 = arith.maximumf %816, %817 : vector<2x2x32xf32>
    %cst_360 = arith.constant dense<0.000000e+00> : vector<32xf32>
    %819 = vector.multi_reduction <add>, %818, %cst_360 [0, 1] : vector<2x2x32xf32> to vector<32xf32>
    %820 = vector.shape_cast %819 : vector<32xf32> to vector<1x1x32xf32>
    %cst_361 = arith.constant 4.000000e+00 : f32
    %821 = vector.broadcast %cst_361 : f32 to vector<1x1x32xf32>
    %822 = arith.divf %820, %821 : vector<1x1x32xf32>
    %823 = arith.mulf %818, %818 : vector<2x2x32xf32>
    %cst_362 = arith.constant dense<0.000000e+00> : vector<32xf32>
    %824 = vector.multi_reduction <add>, %823, %cst_362 [0, 1] : vector<2x2x32xf32> to vector<32xf32>
    %825 = vector.shape_cast %824 : vector<32xf32> to vector<1x1x32xf32>
    %cst_363 = arith.constant 4.000000e+00 : f32
    %826 = vector.broadcast %cst_363 : f32 to vector<1x1x32xf32>
    %827 = arith.divf %825, %826 : vector<1x1x32xf32>
    %828 = arith.mulf %822, %822 : vector<1x1x32xf32>
    %829 = arith.subf %827, %828 : vector<1x1x32xf32>
    %cst_364 = arith.constant 0.000000e+00 : f32
    %830 = vector.broadcast %cst_364 : f32 to vector<1x1x32xf32>
    %831 = arith.maximumf %829, %830 : vector<1x1x32xf32>
    %cst_365 = arith.constant 9.99999974E-6 : f32
    %832 = vector.broadcast %cst_365 : f32 to vector<1x1x32xf32>
    %833 = arith.addf %831, %832 : vector<1x1x32xf32>
    %834 = math.rsqrt %833 : vector<1x1x32xf32>
    %835 = vector.extract_strided_slice %735 {offsets = [1, 0], sizes = [1, 32], strides = [1, 1]} : vector<3x32xf32> to vector<1x32xf32>
    %836 = vector.shape_cast %835 : vector<1x32xf32> to vector<1x1x32xf32>
    %837 = arith.mulf %834, %836 : vector<1x1x32xf32>
    %838 = vector.broadcast %837 : vector<1x1x32xf32> to vector<2x2x32xf32>
    %839 = arith.mulf %818, %838 : vector<2x2x32xf32>
    %840 = vector.extract_strided_slice %735 {offsets = [2, 0], sizes = [1, 32], strides = [1, 1]} : vector<3x32xf32> to vector<1x32xf32>
    %841 = arith.mulf %822, %837 : vector<1x1x32xf32>
    %842 = vector.shape_cast %840 : vector<1x32xf32> to vector<1x1x32xf32>
    %843 = arith.subf %842, %841 : vector<1x1x32xf32>
    %844 = vector.broadcast %843 : vector<1x1x32xf32> to vector<2x2x32xf32>
    %845 = arith.addf %839, %844 : vector<2x2x32xf32>
    %846 = arith.truncf %845 : vector<2x2x32xf32> to vector<2x2x32xbf16>
    "tpu.trace_start"() <{level = 10 : i32, message = "bnm,bmf->bnf"}> : () -> ()
    %cst_366 = arith.constant dense<0.000000e+00> : vector<2x2x32xf32>
    %847 = tpu.matmul %714, %846, %cst_366 {dimension_numbers = #tpu.dot_dimension_numbers<[2], [1], [1], [2], [0, 0, 0, 1, 1, 2], [0], [0]>} : vector<2x2x2xbf16>, vector<2x2x32xbf16>, vector<2x2x32xf32> -> vector<2x2x32xf32>
    "tpu.trace_stop"() : () -> ()
    %848 = vector.broadcast %719 : vector<2x2x1xf32> to vector<2x2x32xf32>
    %849 = arith.mulf %847, %848 : vector<2x2x32xf32>
    %c0_367 = arith.constant 0 : index
    %c0_368 = arith.constant 0 : index
    %c0_369 = arith.constant 0 : index
    %850 = vector.load %arg25[%c0_367, %c0_368, %c0_369] : memref<2x32x32xbf16, #tpu.memory_space<vmem>>, vector<1x32x32xbf16>
    %851 = vector.shape_cast %850 : vector<1x32x32xbf16> to vector<32x32xbf16>
    %852 = arith.truncf %849 : vector<2x2x32xf32> to vector<2x2x32xbf16>
    "tpu.trace_start"() <{level = 10 : i32, message = "bnf,fo->bno"}> : () -> ()
    %cst_370 = arith.constant dense<0.000000e+00> : vector<2x2x32xf32>
    %853 = tpu.matmul %852, %851, %cst_370 {dimension_numbers = #tpu.dot_dimension_numbers<[2], [0], [0, 1], [1], [0, 0, 0, 1, 1, 1], [], []>} : vector<2x2x32xbf16>, vector<32x32xbf16>, vector<2x2x32xf32> -> vector<2x2x32xf32>
    "tpu.trace_stop"() : () -> ()
    %c1_371 = arith.constant 1 : index
    %c0_372 = arith.constant 0 : index
    %c0_373 = arith.constant 0 : index
    %854 = vector.load %arg25[%c1_371, %c0_372, %c0_373] : memref<2x32x32xbf16, #tpu.memory_space<vmem>>, vector<1x32x32xbf16>
    %855 = vector.shape_cast %854 : vector<1x32x32xbf16> to vector<32x32xbf16>
    %856 = arith.truncf %845 : vector<2x2x32xf32> to vector<2x2x32xbf16>
    "tpu.trace_start"() <{level = 10 : i32, message = "bnf,fo->bno"}> : () -> ()
    %cst_374 = arith.constant dense<0.000000e+00> : vector<2x2x32xf32>
    %857 = tpu.matmul %856, %855, %cst_374 {dimension_numbers = #tpu.dot_dimension_numbers<[2], [0], [0, 1], [1], [0, 0, 0, 1, 1, 1], [], []>} : vector<2x2x32xbf16>, vector<32x32xbf16>, vector<2x2x32xf32> -> vector<2x2x32xf32>
    "tpu.trace_stop"() : () -> ()
    %858 = arith.addf %853, %857 : vector<2x2x32xf32>
    %859 = vector.extract_strided_slice %737 {offsets = [0, 0], sizes = [1, 32], strides = [1, 1]} : vector<3x32xf32> to vector<1x32xf32>
    %860 = vector.shape_cast %859 : vector<1x32xf32> to vector<1x1x32xf32>
    %861 = vector.broadcast %860 : vector<1x1x32xf32> to vector<2x2x32xf32>
    %862 = arith.addf %858, %861 : vector<2x2x32xf32>
    %cst_375 = arith.constant 0.000000e+00 : f32
    %863 = vector.broadcast %cst_375 : f32 to vector<2x2x32xf32>
    %864 = arith.maximumf %862, %863 : vector<2x2x32xf32>
    %cst_376 = arith.constant dense<0.000000e+00> : vector<32xf32>
    %865 = vector.multi_reduction <add>, %864, %cst_376 [0, 1] : vector<2x2x32xf32> to vector<32xf32>
    %866 = vector.shape_cast %865 : vector<32xf32> to vector<1x1x32xf32>
    %cst_377 = arith.constant 4.000000e+00 : f32
    %867 = vector.broadcast %cst_377 : f32 to vector<1x1x32xf32>
    %868 = arith.divf %866, %867 : vector<1x1x32xf32>
    %869 = arith.mulf %864, %864 : vector<2x2x32xf32>
    %cst_378 = arith.constant dense<0.000000e+00> : vector<32xf32>
    %870 = vector.multi_reduction <add>, %869, %cst_378 [0, 1] : vector<2x2x32xf32> to vector<32xf32>
    %871 = vector.shape_cast %870 : vector<32xf32> to vector<1x1x32xf32>
    %cst_379 = arith.constant 4.000000e+00 : f32
    %872 = vector.broadcast %cst_379 : f32 to vector<1x1x32xf32>
    %873 = arith.divf %871, %872 : vector<1x1x32xf32>
    %874 = arith.mulf %868, %868 : vector<1x1x32xf32>
    %875 = arith.subf %873, %874 : vector<1x1x32xf32>
    %cst_380 = arith.constant 0.000000e+00 : f32
    %876 = vector.broadcast %cst_380 : f32 to vector<1x1x32xf32>
    %877 = arith.maximumf %875, %876 : vector<1x1x32xf32>
    %cst_381 = arith.constant 9.99999974E-6 : f32
    %878 = vector.broadcast %cst_381 : f32 to vector<1x1x32xf32>
    %879 = arith.addf %877, %878 : vector<1x1x32xf32>
    %880 = math.rsqrt %879 : vector<1x1x32xf32>
    %881 = vector.extract_strided_slice %737 {offsets = [1, 0], sizes = [1, 32], strides = [1, 1]} : vector<3x32xf32> to vector<1x32xf32>
    %882 = vector.shape_cast %881 : vector<1x32xf32> to vector<1x1x32xf32>
    %883 = arith.mulf %880, %882 : vector<1x1x32xf32>
    %884 = vector.broadcast %883 : vector<1x1x32xf32> to vector<2x2x32xf32>
    %885 = arith.mulf %864, %884 : vector<2x2x32xf32>
    %886 = vector.extract_strided_slice %737 {offsets = [2, 0], sizes = [1, 32], strides = [1, 1]} : vector<3x32xf32> to vector<1x32xf32>
    %887 = arith.mulf %868, %883 : vector<1x1x32xf32>
    %888 = vector.shape_cast %886 : vector<1x32xf32> to vector<1x1x32xf32>
    %889 = arith.subf %888, %887 : vector<1x1x32xf32>
    %890 = vector.broadcast %889 : vector<1x1x32xf32> to vector<2x2x32xf32>
    %891 = arith.addf %885, %890 : vector<2x2x32xf32>
    %cst_382 = arith.constant dense<0.000000e+00> : vector<2x32xf32>
    %892 = vector.multi_reduction <add>, %799, %cst_382 [1] : vector<2x2x32xf32> to vector<2x32xf32>
    %cst_383 = arith.constant 2.000000e+00 : f32
    %893 = vector.broadcast %cst_383 : f32 to vector<2x32xf32>
    %894 = arith.divf %892, %893 : vector<2x32xf32>
    %cst_384 = arith.constant dense<0.000000e+00> : vector<2x32xf32>
    %895 = vector.multi_reduction <add>, %845, %cst_384 [1] : vector<2x2x32xf32> to vector<2x32xf32>
    %cst_385 = arith.constant 2.000000e+00 : f32
    %896 = vector.broadcast %cst_385 : f32 to vector<2x32xf32>
    %897 = arith.divf %895, %896 : vector<2x32xf32>
    %cst_386 = arith.constant dense<0.000000e+00> : vector<2x32xf32>
    %898 = vector.multi_reduction <add>, %891, %cst_386 [1] : vector<2x2x32xf32> to vector<2x32xf32>
    %cst_387 = arith.constant 2.000000e+00 : f32
    %899 = vector.broadcast %cst_387 : f32 to vector<2x32xf32>
    %900 = arith.divf %898, %899 : vector<2x32xf32>
    %c0_388 = arith.constant 0 : index
    %c0_389 = arith.constant 0 : index
    %901 = vector.load %arg27[%c0_388, %c0_389] : memref<96x32xbf16, #tpu.memory_space<vmem>>, vector<32x32xbf16>
    %902 = arith.truncf %894 : vector<2x32xf32> to vector<2x32xbf16>
    "tpu.trace_start"() <{level = 10 : i32, message = "bf,fo->bo"}> : () -> ()
    %cst_390 = arith.constant dense<0.000000e+00> : vector<2x32xf32>
    %903 = tpu.matmul %902, %901, %cst_390 {dimension_numbers = #tpu.dot_dimension_numbers<[1], [0], [0], [1], [0, 0, 1, 1], [], []>} : vector<2x32xbf16>, vector<32x32xbf16>, vector<2x32xf32> -> vector<2x32xf32>
    "tpu.trace_stop"() : () -> ()
    %c32_391 = arith.constant 32 : index
    %c0_392 = arith.constant 0 : index
    %904 = vector.load %arg27[%c32_391, %c0_392] : memref<96x32xbf16, #tpu.memory_space<vmem>>, vector<32x32xbf16>
    %905 = arith.truncf %897 : vector<2x32xf32> to vector<2x32xbf16>
    "tpu.trace_start"() <{level = 10 : i32, message = "bf,fo->bo"}> : () -> ()
    %cst_393 = arith.constant dense<0.000000e+00> : vector<2x32xf32>
    %906 = tpu.matmul %905, %904, %cst_393 {dimension_numbers = #tpu.dot_dimension_numbers<[1], [0], [0], [1], [0, 0, 1, 1], [], []>} : vector<2x32xbf16>, vector<32x32xbf16>, vector<2x32xf32> -> vector<2x32xf32>
    "tpu.trace_stop"() : () -> ()
    %907 = arith.addf %903, %906 : vector<2x32xf32>
    %c64_394 = arith.constant 64 : index
    %c0_395 = arith.constant 0 : index
    %908 = vector.load %arg27[%c64_394, %c0_395] : memref<96x32xbf16, #tpu.memory_space<vmem>>, vector<32x32xbf16>
    %909 = arith.truncf %900 : vector<2x32xf32> to vector<2x32xbf16>
    "tpu.trace_start"() <{level = 10 : i32, message = "bf,fo->bo"}> : () -> ()
    %cst_396 = arith.constant dense<0.000000e+00> : vector<2x32xf32>
    %910 = tpu.matmul %909, %908, %cst_396 {dimension_numbers = #tpu.dot_dimension_numbers<[1], [0], [0], [1], [0, 0, 1, 1], [], []>} : vector<2x32xbf16>, vector<32x32xbf16>, vector<2x32xf32> -> vector<2x32xf32>
    "tpu.trace_stop"() : () -> ()
    %911 = arith.addf %907, %910 : vector<2x32xf32>
    %c0_397 = arith.constant 0 : index
    %c0_398 = arith.constant 0 : index
    %912 = vector.load %arg28[%c0_397, %c0_398] : memref<1x32xf32, #tpu.memory_space<vmem>>, vector<1x32xf32>
    %913 = vector.broadcast %912 : vector<1x32xf32> to vector<2x32xf32>
    %914 = arith.addf %911, %913 : vector<2x32xf32>
    %cst_399 = arith.constant 0.000000e+00 : f32
    %915 = vector.broadcast %cst_399 : f32 to vector<2x32xf32>
    %916 = arith.maximumf %914, %915 : vector<2x32xf32>
    %c0_400 = arith.constant 0 : index
    %c0_401 = arith.constant 0 : index
    %917 = vector.load %arg29[%c0_400, %c0_401] : memref<32x128xbf16, #tpu.memory_space<vmem>>, vector<32x128xbf16>
    %918 = arith.truncf %916 : vector<2x32xf32> to vector<2x32xbf16>
    "tpu.trace_start"() <{level = 10 : i32, message = "bf,fo->bo"}> : () -> ()
    %cst_402 = arith.constant dense<0.000000e+00> : vector<2x128xf32>
    %919 = tpu.matmul %918, %917, %cst_402 {dimension_numbers = #tpu.dot_dimension_numbers<[1], [0], [0], [1], [0, 0, 1, 1], [], []>} : vector<2x32xbf16>, vector<32x128xbf16>, vector<2x128xf32> -> vector<2x128xf32>
    "tpu.trace_stop"() : () -> ()
    %c0_403 = arith.constant 0 : index
    %c0_404 = arith.constant 0 : index
    %920 = vector.load %arg30[%c0_403, %c0_404] : memref<1x128xf32, #tpu.memory_space<vmem>>, vector<1x128xf32>
    %921 = vector.broadcast %920 : vector<1x128xf32> to vector<2x128xf32>
    %922 = arith.addf %919, %921 : vector<2x128xf32>
    %c0_405 = arith.constant 0 : index
    %c0_406 = arith.constant 0 : index
    %923 = vector.load %arg31[%c0_405, %c0_406] : memref<2x128xf32, #tpu.memory_space<vmem>>, vector<2x128xf32>
    tpu.vector_store %arg31[%c0_405, %c0_406], %922 {strides = array<i32>} : memref<2x128xf32, #tpu.memory_space<vmem>>, vector<2x128xf32>,
    return
  }
}

</mosaic_0001>

<llo_original>
// kernel: _lambda_.1
$region0: #{_lambda_.1}
  #allocation0 [shape = 'u32[]', space=smem, size = 0x4, offset = 0x4, fixed_abs, tag = 'smem constant byte address 0x4 - core index']
  #allocation1 [shape = 'u32[144,128]{1,0:T(1,128)}', space=vmem, size = 0x12000, scoped, tag = 'internal scratch']
  %s0 = inlined_call_operand.smem [shape: u32[32], index: -1, kind: input, shape index: {}]
  %s1 = sld [smem:[%s0]]
  %s2 = scalar_lea.smem %s0, 1
  %s3 = sld [smem:[%s2]]
  %s4 = scalar_lea.smem %s0, 2
  %s5 = sld [smem:[%s4]]
  %s6 = scalar_lea.smem %s0, 3
  %s7 = sld [smem:[%s6]]
  %s8 = scalar_lea.smem %s0, 4
  %s9 = sld [smem:[%s8]]
  %s10 = scalar_lea.smem %s0, 5
  %s11 = sld [smem:[%s10]]
  %s12 = scalar_lea.smem %s0, 6
  %s13 = sld [smem:[%s12]]
  %s14 = scalar_lea.smem %s0, 7
  %s15 = sld [smem:[%s14]]
  %s16 = scalar_lea.smem %s0, 8
  %s17 = sld [smem:[%s16]]
  %s18 = scalar_lea.smem %s0, 9
  %s19 = sld [smem:[%s18]]
  %s20 = scalar_lea.smem %s0, 10
  %s21 = sld [smem:[%s20]]
  %s22 = scalar_lea.smem %s0, 11
  %s23 = sld [smem:[%s22]]
  %s24 = scalar_lea.smem %s0, 12
  %s25 = sld [smem:[%s24]]
  %s26 = scalar_lea.smem %s0, 13
  %s27 = sld [smem:[%s26]]
  %s28 = scalar_lea.smem %s0, 14
  %s29 = sld [smem:[%s28]]
  %s30 = scalar_lea.smem %s0, 15
  %s31 = sld [smem:[%s30]]
  %s32 = scalar_lea.smem %s0, 16
  %s33 = sld [smem:[%s32]]
  %s34 = scalar_lea.smem %s0, 17
  %s35 = sld [smem:[%s34]]
  %s36 = scalar_lea.smem %s0, 18
  %s37 = sld [smem:[%s36]]
  %s38 = scalar_lea.smem %s0, 19
  %s39 = sld [smem:[%s38]]
  %s40 = scalar_lea.smem %s0, 20
  %s41 = sld [smem:[%s40]]
  %s42 = scalar_lea.smem %s0, 21
  %s43 = sld [smem:[%s42]]
  %s44 = scalar_lea.smem %s0, 22
  %s45 = sld [smem:[%s44]]
  %s46 = scalar_lea.smem %s0, 23
  %s47 = sld [smem:[%s46]]
  %s48 = scalar_lea.smem %s0, 24
  %s49 = sld [smem:[%s48]]
  %s50 = scalar_lea.smem %s0, 25
  %s51 = sld [smem:[%s50]]
  %s52 = scalar_lea.smem %s0, 26
  %s53 = sld [smem:[%s52]]
  %s54 = scalar_lea.smem %s0, 27
  %s55 = sld [smem:[%s54]]
  %s56 = scalar_lea.smem %s0, 28
  %s57 = sld [smem:[%s56]]
  %s58 = scalar_lea.smem %s0, 29
  %s59 = sld [smem:[%s58]]
  %s60 = scalar_lea.smem %s0, 30
  %s61 = sld [smem:[%s60]]
  %s62 = scalar_lea.smem %s0, 31
  %s63 = sld [smem:[%s62]]
  %s64 = sld [smem:[#allocation0]]
  $region238: #{_lambda_.1} parent=0
    _
  %s66 = ssub.s32 1, %s64
  %s67 = scalar_select 0, %s66, %s64
  $region1: #{_lambda_.1} parent=0
    #allocation2 [shape = 'u8[8192]{0}', space=vmem, size = 0x2000, scoped, tag = 'input window, operand 0, single buffered']
    #allocation3 [shape = 's32[1]{0}', space=sflag, size = 0x4, scoped, tag = 'scoped memory for _lambda_.1']
    #allocation4 [shape = 'u8[16384]{0}', space=vmem, size = 0x4000, scoped, tag = 'input window, operand 3, single buffered']
    #allocation5 [shape = 's32[1]{0}', space=sflag, size = 0x4, scoped, tag = 'scoped memory for _lambda_.1']
    #allocation6 [shape = 'u8[16384]{0}', space=vmem, size = 0x4000, scoped, tag = 'input window, operand 4, single buffered']
    #allocation7 [shape = 'u8[16384]{0}', space=vmem, size = 0x4000, scoped, tag = 'input window, operand 5, single buffered']
    #allocation8 [shape = 's32[1]{0}', space=sflag, size = 0x4, scoped, tag = 'scoped memory for _lambda_.1']
    #allocation9 [shape = 'u8[18432]{0}', space=vmem, size = 0x4800, scoped, tag = 'input window, operand 6, single buffered']
    #allocation10 [shape = 'u8[4096]{0}', space=vmem, size = 0x1000, scoped, tag = 'input window, operand 7, single buffered']
    #allocation11 [shape = 's32[1]{0}', space=sflag, size = 0x4, scoped, tag = 'scoped memory for _lambda_.1']
    #allocation12 [shape = 'u8[2048]{0}', space=vmem, size = 0x800, scoped, tag = 'input window, operand 8, single buffered']
    #allocation13 [shape = 'u8[16384]{0}', space=vmem, size = 0x4000, scoped, tag = 'input window, operand 9, single buffered']
    #allocation14 [shape = 's32[1]{0}', space=sflag, size = 0x4, scoped, tag = 'scoped memory for _lambda_.1']
    #allocation15 [shape = 'u8[16384]{0}', space=vmem, size = 0x4000, scoped, tag = 'input window, operand 10, single buffered']
    #allocation16 [shape = 'u8[16384]{0}', space=vmem, size = 0x4000, scoped, tag = 'input window, operand 11, single buffered']
    #allocation17 [shape = 's32[1]{0}', space=sflag, size = 0x4, scoped, tag = 'scoped memory for _lambda_.1']
    #allocation18 [shape = 'u8[6144]{0}', space=vmem, size = 0x1800, scoped, tag = 'input window, operand 12, single buffered']
    #allocation19 [shape = 'u8[49152]{0}', space=vmem, size = 0xc000, scoped, tag = 'input window, operand 13, single buffered']
    #allocation20 [shape = 's32[1]{0}', space=sflag, size = 0x4, scoped, tag = 'scoped memory for _lambda_.1']
    #allocation21 [shape = 'u8[16384]{0}', space=vmem, size = 0x4000, scoped, tag = 'input window, operand 14, single buffered']
    #allocation22 [shape = 'u8[16384]{0}', space=vmem, size = 0x4000, scoped, tag = 'input window, operand 15, single buffered']
    #allocation23 [shape = 's32[1]{0}', space=sflag, size = 0x4, scoped, tag = 'scoped memory for _lambda_.1']
    #allocation24 [shape = 'u8[18432]{0}', space=vmem, size = 0x4800, scoped, tag = 'input window, operand 16, single buffered']
    #allocation25 [shape = 'u8[4096]{0}', space=vmem, size = 0x1000, scoped, tag = 'input window, operand 17, single buffered']
    #allocation26 [shape = 's32[1]{0}', space=sflag, size = 0x4, scoped, tag = 'scoped memory for _lambda_.1']
    #allocation27 [shape = 'u8[2048]{0}', space=vmem, size = 0x800, scoped, tag = 'input window, operand 18, single buffered']
    #allocation28 [shape = 'u8[16384]{0}', space=vmem, size = 0x4000, scoped, tag = 'input window, operand 20, single buffered']
    #allocation29 [shape = 's32[1]{0}', space=sflag, size = 0x4, scoped, tag = 'scoped memory for _lambda_.1']
    #allocation30 [shape = 'u8[16384]{0}', space=vmem, size = 0x4000, scoped, tag = 'input window, operand 21, single buffered']
    #allocation31 [shape = 'u8[6144]{0}', space=vmem, size = 0x1800, scoped, tag = 'input window, operand 22, single buffered']
    #allocation32 [shape = 's32[1]{0}', space=sflag, size = 0x4, scoped, tag = 'scoped memory for _lambda_.1']
    #allocation33 [shape = 'u8[16384]{0}', space=vmem, size = 0x4000, scoped, tag = 'input window, operand 24, single buffered']
    #allocation34 [shape = 'u8[16384]{0}', space=vmem, size = 0x4000, scoped, tag = 'input window, operand 25, single buffered']
    #allocation35 [shape = 's32[1]{0}', space=sflag, size = 0x4, scoped, tag = 'scoped memory for _lambda_.1']
    #allocation36 [shape = 'u8[6144]{0}', space=vmem, size = 0x1800, scoped, tag = 'input window, operand 26, single buffered']
    #allocation37 [shape = 'u8[24576]{0}', space=vmem, size = 0x6000, scoped, tag = 'input window, operand 27, single buffered']
    #allocation38 [shape = 's32[1]{0}', space=sflag, size = 0x4, scoped, tag = 'scoped memory for _lambda_.1']
    #allocation39 [shape = 'u8[512]{0}', space=vmem, size = 0x400, scoped, tag = 'input window, operand 28, single buffered']
    #allocation40 [shape = 'u8[512]{0}', space=vmem, size = 0x400, scoped, tag = 'input window, operand 30, single buffered']
    #allocation41 [shape = 's32[1]{0}', space=sflag, size = 0x4, scoped, tag = 'scoped memory for _lambda_.1']
    %68 = vsyncpa [#allocation3], 0
    %69 = vsyncpa [#allocation5], 0
    %70 = vsyncpa [#allocation8], 0
    %71 = vsyncpa [#allocation11], 0
    %72 = vsyncpa [#allocation14], 0
    %73 = vsyncpa [#allocation17], 0
    %74 = vsyncpa [#allocation20], 0
    %75 = vsyncpa [#allocation23], 0
    %76 = vsyncpa [#allocation26], 0
    %77 = vsyncpa [#allocation29], 0
    %78 = vsyncpa [#allocation32], 0
    %79 = vsyncpa [#allocation35], 0
    %80 = vsyncpa [#allocation38], 0
    %81 = vsyncpa [#allocation41], 0
    // Predicated region
    $region2: #{_lambda_.1} parent=1 // pred_check
      _
    $region3: #{_lambda_.1} parent=1 // pred_check_branch
      %83 = sbr.rel (0) target = $region5
    $region4: #{_lambda_.1} parent=1 // pred_region
      %s85 = ssub.s32 256, 256
      %86 = vsyncadd [#allocation3], %s85
      %s87 = sshll.u32 [#allocation2], 4
      %s88 = int_to_ptr.vmem [resolvable:$true] %s87
      %93 = dma.hbm_to_vmem [thread:$0]  %s1, 256, %s88, [#allocation3], 128, 128, 8
    $region5: #{_lambda_.1} parent=1 // pred_fallthru
      _
    // Predicated region
    $region6: #{_lambda_.1} parent=1 // pred_check
      _
    $region7: #{_lambda_.1} parent=1 // pred_check_branch
      %95 = sbr.rel (0) target = $region9
    $region8: #{_lambda_.1} parent=1 // pred_region
      _
    $region9: #{_lambda_.1} parent=1 // pred_fallthru
      _
    // Predicated region
    $region10: #{_lambda_.1} parent=1 // pred_check
      _
    $region11: #{_lambda_.1} parent=1 // pred_check_branch
      %97 = sbr.rel (0) target = $region13
    $region12: #{_lambda_.1} parent=1 // pred_region
      _
    $region13: #{_lambda_.1} parent=1 // pred_fallthru
      _
    // Predicated region
    $region14: #{_lambda_.1} parent=1 // pred_check
      _
    $region15: #{_lambda_.1} parent=1 // pred_check_branch
      %99 = sbr.rel (0) target = $region17
    $region16: #{_lambda_.1} parent=1 // pred_region
      %s101 = ssub.s32 512, 512
      %102 = vsyncadd [#allocation5], %s101
      %s103 = sshll.u32 [#allocation4], 4
      %s104 = int_to_ptr.vmem [resolvable:$true] %s103
      %109 = dma.hbm_to_vmem [thread:$0]  %s7, 512, %s104, [#allocation5], 64, 64, 4
    $region17: #{_lambda_.1} parent=1 // pred_fallthru
      _
    // Predicated region
    $region18: #{_lambda_.1} parent=1 // pred_check
      _
    $region19: #{_lambda_.1} parent=1 // pred_check_branch
      %111 = sbr.rel (0) target = $region21
    $region20: #{_lambda_.1} parent=1 // pred_region
      %s113 = ssub.s32 512, 512
      %114 = vsyncadd [#allocation5], %s113
      %s115 = sshll.u32 [#allocation6], 4
      %s116 = int_to_ptr.vmem [resolvable:$true] %s115
      %121 = dma.hbm_to_vmem [thread:$0]  %s9, 512, %s116, [#allocation5], 64, 64, 4
    $region21: #{_lambda_.1} parent=1 // pred_fallthru
      _
    // Predicated region
    $region22: #{_lambda_.1} parent=1 // pred_check
      _
    $region23: #{_lambda_.1} parent=1 // pred_check_branch
      %123 = sbr.rel (0) target = $region25
    $region24: #{_lambda_.1} parent=1 // pred_region
      %s125 = ssub.s32 512, 512
      %126 = vsyncadd [#allocation8], %s125
      %s127 = sshll.u32 [#allocation7], 4
      %s128 = int_to_ptr.vmem [resolvable:$true] %s127
      %133 = dma.hbm_to_vmem [thread:$0]  %s11, 512, %s128, [#allocation8], 64, 64, 4
    $region25: #{_lambda_.1} parent=1 // pred_fallthru
      _
    // Predicated region
    $region26: #{_lambda_.1} parent=1 // pred_check
      _
    $region27: #{_lambda_.1} parent=1 // pred_check_branch
      %135 = sbr.rel (0) target = $region29
    $region28: #{_lambda_.1} parent=1 // pred_region
      %s137 = ssub.s32 576, 576
      %138 = vsyncadd [#allocation8], %s137
      %s139 = sshll.u32 [#allocation9], 4
      %s140 = int_to_ptr.vmem [resolvable:$true] %s139
      %145 = dma.hbm_to_vmem [thread:$0]  %s13, 576, %s140, [#allocation8], 64, 64, 4
    $region29: #{_lambda_.1} parent=1 // pred_fallthru
      _
    // Predicated region
    $region30: #{_lambda_.1} parent=1 // pred_check
      _
    $region31: #{_lambda_.1} parent=1 // pred_check_branch
      %147 = sbr.rel (0) target = $region33
    $region32: #{_lambda_.1} parent=1 // pred_region
      %s149 = ssub.s32 128, 128
      %150 = vsyncadd [#allocation11], %s149
      %s151 = sshll.u32 [#allocation10], 4
      %s152 = int_to_ptr.vmem [resolvable:$true] %s151
      %157 = dma.hbm_to_vmem [thread:$0]  %s15, 128, %s152, [#allocation11], 64, 64, 4
    $region33: #{_lambda_.1} parent=1 // pred_fallthru
      _
    // Predicated region
    $region34: #{_lambda_.1} parent=1 // pred_check
      _
    $region35: #{_lambda_.1} parent=1 // pred_check_branch
      %159 = sbr.rel (0) target = $region37
    $region36: #{_lambda_.1} parent=1 // pred_region
      %s161 = ssub.s32 64, 64
      %162 = vsyncadd [#allocation11], %s161
      %s164 = sshll.u32 [#allocation12], 4
      %s165 = int_to_ptr.vmem [resolvable:$true] %s164
      %167 = dma.hbm_to_vmem [thread:$0]  %s17, 64, %s165, [#allocation11]
    $region37: #{_lambda_.1} parent=1 // pred_fallthru
      _
    // Predicated region
    $region38: #{_lambda_.1} parent=1 // pred_check
      _
    $region39: #{_lambda_.1} parent=1 // pred_check_branch
      %169 = sbr.rel (0) target = $region41
    $region40: #{_lambda_.1} parent=1 // pred_region
      %s171 = ssub.s32 512, 512
      %172 = vsyncadd [#allocation14], %s171
      %s173 = sshll.u32 [#allocation13], 4
      %s174 = int_to_ptr.vmem [resolvable:$true] %s173
      %179 = dma.hbm_to_vmem [thread:$0]  %s19, 512, %s174, [#allocation14], 64, 64, 4
    $region41: #{_lambda_.1} parent=1 // pred_fallthru
      _
    // Predicated region
    $region42: #{_lambda_.1} parent=1 // pred_check
      _
    $region43: #{_lambda_.1} parent=1 // pred_check_branch
      %181 = sbr.rel (0) target = $region45
    $region44: #{_lambda_.1} parent=1 // pred_region
      %s183 = ssub.s32 512, 512
      %184 = vsyncadd [#allocation14], %s183
      %s185 = sshll.u32 [#allocation15], 4
      %s186 = int_to_ptr.vmem [resolvable:$true] %s185
      %191 = dma.hbm_to_vmem [thread:$0]  %s21, 512, %s186, [#allocation14], 64, 64, 4
    $region45: #{_lambda_.1} parent=1 // pred_fallthru
      _
    // Predicated region
    $region46: #{_lambda_.1} parent=1 // pred_check
      _
    $region47: #{_lambda_.1} parent=1 // pred_check_branch
      %193 = sbr.rel (0) target = $region49
    $region48: #{_lambda_.1} parent=1 // pred_region
      %s195 = ssub.s32 512, 512
      %196 = vsyncadd [#allocation17], %s195
      %s197 = sshll.u32 [#allocation16], 4
      %s198 = int_to_ptr.vmem [resolvable:$true] %s197
      %203 = dma.hbm_to_vmem [thread:$0]  %s23, 512, %s198, [#allocation17], 64, 64, 4
    $region49: #{_lambda_.1} parent=1 // pred_fallthru
      _
    // Predicated region
    $region50: #{_lambda_.1} parent=1 // pred_check
      _
    $region51: #{_lambda_.1} parent=1 // pred_check_branch
      %205 = sbr.rel (0) target = $region53
    $region52: #{_lambda_.1} parent=1 // pred_region
      %s207 = ssub.s32 192, 192
      %208 = vsyncadd [#allocation17], %s207
      %s209 = sshll.u32 [#allocation18], 4
      %s210 = int_to_ptr.vmem [resolvable:$true] %s209
      %215 = dma.hbm_to_vmem [thread:$0]  %s25, 192, %s210, [#allocation17], 64, 64, 4
    $region53: #{_lambda_.1} parent=1 // pred_fallthru
      _
    // Predicated region
    $region54: #{_lambda_.1} parent=1 // pred_check
      _
    $region55: #{_lambda_.1} parent=1 // pred_check_branch
      %217 = sbr.rel (0) target = $region57
    $region56: #{_lambda_.1} parent=1 // pred_region
      %s219 = ssub.s32 1536, 1536
      %220 = vsyncadd [#allocation20], %s219
      %s221 = sshll.u32 [#allocation19], 4
      %s222 = int_to_ptr.vmem [resolvable:$true] %s221
      %227 = dma.hbm_to_vmem [thread:$0]  %s27, 1536, %s222, [#allocation20], 64, 64, 4
    $region57: #{_lambda_.1} parent=1 // pred_fallthru
      _
    // Predicated region
    $region58: #{_lambda_.1} parent=1 // pred_check
      _
    $region59: #{_lambda_.1} parent=1 // pred_check_branch
      %229 = sbr.rel (0) target = $region61
    $region60: #{_lambda_.1} parent=1 // pred_region
      %s231 = ssub.s32 512, 512
      %232 = vsyncadd [#allocation20], %s231
      %s233 = sshll.u32 [#allocation21], 4
      %s234 = int_to_ptr.vmem [resolvable:$true] %s233
      %239 = dma.hbm_to_vmem [thread:$0]  %s29, 512, %s234, [#allocation20], 64, 64, 4
    $region61: #{_lambda_.1} parent=1 // pred_fallthru
      _
    // Predicated region
    $region62: #{_lambda_.1} parent=1 // pred_check
      _
    $region63: #{_lambda_.1} parent=1 // pred_check_branch
      %241 = sbr.rel (0) target = $region65
    $region64: #{_lambda_.1} parent=1 // pred_region
      %s243 = ssub.s32 512, 512
      %244 = vsyncadd [#allocation23], %s243
      %s245 = sshll.u32 [#allocation22], 4
      %s246 = int_to_ptr.vmem [resolvable:$true] %s245
      %251 = dma.hbm_to_vmem [thread:$0]  %s31, 512, %s246, [#allocation23], 64, 64, 4
    $region65: #{_lambda_.1} parent=1 // pred_fallthru
      _
    // Predicated region
    $region66: #{_lambda_.1} parent=1 // pred_check
      _
    $region67: #{_lambda_.1} parent=1 // pred_check_branch
      %253 = sbr.rel (0) target = $region69
    $region68: #{_lambda_.1} parent=1 // pred_region
      %s255 = ssub.s32 576, 576
      %256 = vsyncadd [#allocation23], %s255
      %s257 = sshll.u32 [#allocation24], 4
      %s258 = int_to_ptr.vmem [resolvable:$true] %s257
      %263 = dma.hbm_to_vmem [thread:$0]  %s33, 576, %s258, [#allocation23], 64, 64, 4
    $region69: #{_lambda_.1} parent=1 // pred_fallthru
      _
    // Predicated region
    $region70: #{_lambda_.1} parent=1 // pred_check
      _
    $region71: #{_lambda_.1} parent=1 // pred_check_branch
      %265 = sbr.rel (0) target = $region73
    $region72: #{_lambda_.1} parent=1 // pred_region
      %s267 = ssub.s32 128, 128
      %268 = vsyncadd [#allocation26], %s267
      %s269 = sshll.u32 [#allocation25], 4
      %s270 = int_to_ptr.vmem [resolvable:$true] %s269
      %275 = dma.hbm_to_vmem [thread:$0]  %s35, 128, %s270, [#allocation26], 64, 64, 4
    $region73: #{_lambda_.1} parent=1 // pred_fallthru
      _
    // Predicated region
    $region74: #{_lambda_.1} parent=1 // pred_check
      _
    $region75: #{_lambda_.1} parent=1 // pred_check_branch
      %277 = sbr.rel (0) target = $region77
    $region76: #{_lambda_.1} parent=1 // pred_region
      %s279 = ssub.s32 64, 64
      %280 = vsyncadd [#allocation26], %s279
      %s282 = sshll.u32 [#allocation27], 4
      %s283 = int_to_ptr.vmem [resolvable:$true] %s282
      %285 = dma.hbm_to_vmem [thread:$0]  %s37, 64, %s283, [#allocation26]
    $region77: #{_lambda_.1} parent=1 // pred_fallthru
      _
    // Predicated region
    $region78: #{_lambda_.1} parent=1 // pred_check
      _
    $region79: #{_lambda_.1} parent=1 // pred_check_branch
      %287 = sbr.rel (0) target = $region81
    $region80: #{_lambda_.1} parent=1 // pred_region
      _
    $region81: #{_lambda_.1} parent=1 // pred_fallthru
      _
    // Predicated region
    $region82: #{_lambda_.1} parent=1 // pred_check
      _
    $region83: #{_lambda_.1} parent=1 // pred_check_branch
      %289 = sbr.rel (0) target = $region85
    $region84: #{_lambda_.1} parent=1 // pred_region
      %s291 = ssub.s32 512, 512
      %292 = vsyncadd [#allocation29], %s291
      %s293 = sshll.u32 [#allocation28], 4
      %s294 = int_to_ptr.vmem [resolvable:$true] %s293
      %299 = dma.hbm_to_vmem [thread:$0]  %s41, 512, %s294, [#allocation29], 64, 64, 4
    $region85: #{_lambda_.1} parent=1 // pred_fallthru
      _
    // Predicated region
    $region86: #{_lambda_.1} parent=1 // pred_check
      _
    $region87: #{_lambda_.1} parent=1 // pred_check_branch
      %301 = sbr.rel (0) target = $region89
    $region88: #{_lambda_.1} parent=1 // pred_region
      %s303 = ssub.s32 512, 512
      %304 = vsyncadd [#allocation29], %s303
      %s305 = sshll.u32 [#allocation30], 4
      %s306 = int_to_ptr.vmem [resolvable:$true] %s305
      %311 = dma.hbm_to_vmem [thread:$0]  %s43, 512, %s306, [#allocation29], 64, 64, 4
    $region89: #{_lambda_.1} parent=1 // pred_fallthru
      _
    // Predicated region
    $region90: #{_lambda_.1} parent=1 // pred_check
      _
    $region91: #{_lambda_.1} parent=1 // pred_check_branch
      %313 = sbr.rel (0) target = $region93
    $region92: #{_lambda_.1} parent=1 // pred_region
      %s315 = ssub.s32 192, 192
      %316 = vsyncadd [#allocation32], %s315
      %s317 = sshll.u32 [#allocation31], 4
      %s318 = int_to_ptr.vmem [resolvable:$true] %s317
      %323 = dma.hbm_to_vmem [thread:$0]  %s45, 192, %s318, [#allocation32], 64, 64, 4
    $region93: #{_lambda_.1} parent=1 // pred_fallthru
      _
    // Predicated region
    $region94: #{_lambda_.1} parent=1 // pred_check
      _
    $region95: #{_lambda_.1} parent=1 // pred_check_branch
      %325 = sbr.rel (0) target = $region97
    $region96: #{_lambda_.1} parent=1 // pred_region
      _
    $region97: #{_lambda_.1} parent=1 // pred_fallthru
      _
    // Predicated region
    $region98: #{_lambda_.1} parent=1 // pred_check
      _
    $region99: #{_lambda_.1} parent=1 // pred_check_branch
      %327 = sbr.rel (0) target = $region101
    $region100: #{_lambda_.1} parent=1 // pred_region
      %s329 = ssub.s32 512, 512
      %330 = vsyncadd [#allocation32], %s329
      %s331 = sshll.u32 [#allocation33], 4
      %s332 = int_to_ptr.vmem [resolvable:$true] %s331
      %337 = dma.hbm_to_vmem [thread:$0]  %s49, 512, %s332, [#allocation32], 64, 64, 4
    $region101: #{_lambda_.1} parent=1 // pred_fallthru
      _
    // Predicated region
    $region102: #{_lambda_.1} parent=1 // pred_check
      _
    $region103: #{_lambda_.1} parent=1 // pred_check_branch
      %339 = sbr.rel (0) target = $region105
    $region104: #{_lambda_.1} parent=1 // pred_region
      %s341 = ssub.s32 512, 512
      %342 = vsyncadd [#allocation35], %s341
      %s343 = sshll.u32 [#allocation34], 4
      %s344 = int_to_ptr.vmem [resolvable:$true] %s343
      %349 = dma.hbm_to_vmem [thread:$0]  %s51, 512, %s344, [#allocation35], 64, 64, 4
    $region105: #{_lambda_.1} parent=1 // pred_fallthru
      _
    // Predicated region
    $region106: #{_lambda_.1} parent=1 // pred_check
      _
    $region107: #{_lambda_.1} parent=1 // pred_check_branch
      %351 = sbr.rel (0) target = $region109
    $region108: #{_lambda_.1} parent=1 // pred_region
      %s353 = ssub.s32 192, 192
      %354 = vsyncadd [#allocation35], %s353
      %s355 = sshll.u32 [#allocation36], 4
      %s356 = int_to_ptr.vmem [resolvable:$true] %s355
      %361 = dma.hbm_to_vmem [thread:$0]  %s53, 192, %s356, [#allocation35], 64, 64, 4
    $region109: #{_lambda_.1} parent=1 // pred_fallthru
      _
    // Predicated region
    $region110: #{_lambda_.1} parent=1 // pred_check
      _
    $region111: #{_lambda_.1} parent=1 // pred_check_branch
      %363 = sbr.rel (0) target = $region113
    $region112: #{_lambda_.1} parent=1 // pred_region
      %s365 = ssub.s32 768, 768
      %366 = vsyncadd [#allocation38], %s365
      %s367 = sshll.u32 [#allocation37], 4
      %s368 = int_to_ptr.vmem [resolvable:$true] %s367
      %373 = dma.hbm_to_vmem [thread:$0]  %s55, 768, %s368, [#allocation38], 64, 64, 4
    $region113: #{_lambda_.1} parent=1 // pred_fallthru
      _
    // Predicated region
    $region114: #{_lambda_.1} parent=1 // pred_check
      _
    $region115: #{_lambda_.1} parent=1 // pred_check_branch
      %375 = sbr.rel (0) target = $region117
    $region116: #{_lambda_.1} parent=1 // pred_region
      %s377 = ssub.s32 16, 16
      %378 = vsyncadd [#allocation38], %s377
      %s380 = sshll.u32 [#allocation39], 4
      %s381 = int_to_ptr.vmem [resolvable:$true] %s380
      %383 = dma.hbm_to_vmem [thread:$0]  %s57, 16, %s381, [#allocation38]
    $region117: #{_lambda_.1} parent=1 // pred_fallthru
      _
    // Predicated region
    $region118: #{_lambda_.1} parent=1 // pred_check
      _
    $region119: #{_lambda_.1} parent=1 // pred_check_branch
      %385 = sbr.rel (0) target = $region121
    $region120: #{_lambda_.1} parent=1 // pred_region
      _
    $region121: #{_lambda_.1} parent=1 // pred_fallthru
      _
    // Predicated region
    $region122: #{_lambda_.1} parent=1 // pred_check
      _
    $region123: #{_lambda_.1} parent=1 // pred_check_branch
      %387 = sbr.rel (0) target = $region125
    $region124: #{_lambda_.1} parent=1 // pred_region
      %s389 = ssub.s32 16, 16
      %390 = vsyncadd [#allocation41], %s389
      %s392 = sshll.u32 [#allocation40], 4
      %s393 = int_to_ptr.vmem [resolvable:$true] %s392
      %395 = dma.hbm_to_vmem [thread:$0]  %s61, 16, %s393, [#allocation41]
    $region125: #{_lambda_.1} parent=1 // pred_fallthru
      _
    // Predicated region
    $region126: #{_lambda_.1} parent=1 // pred_check
      _
    $region127: #{_lambda_.1} parent=1 // pred_check_branch
      %397 = sbr.rel (0) target = $region129
    $region128: #{_lambda_.1} parent=1 // pred_region
      %398 = dma.done [#allocation3], 256
    $region129: #{_lambda_.1} parent=1 // pred_fallthru
      _
    // Predicated region
    $region130: #{_lambda_.1} parent=1 // pred_check
      _
    $region131: #{_lambda_.1} parent=1 // pred_check_branch
      %400 = sbr.rel (0) target = $region133
    $region132: #{_lambda_.1} parent=1 // pred_region
      %401 = dma.done [#allocation5], 512
    $region133: #{_lambda_.1} parent=1 // pred_fallthru
      _
    // Predicated region
    $region134: #{_lambda_.1} parent=1 // pred_check
      _
    $region135: #{_lambda_.1} parent=1 // pred_check_branch
      %403 = sbr.rel (0) target = $region137
    $region136: #{_lambda_.1} parent=1 // pred_region
      %404 = dma.done [#allocation5], 512
    $region137: #{_lambda_.1} parent=1 // pred_fallthru
      _
    // Predicated region
    $region138: #{_lambda_.1} parent=1 // pred_check
      _
    $region139: #{_lambda_.1} parent=1 // pred_check_branch
      %406 = sbr.rel (0) target = $region141
    $region140: #{_lambda_.1} parent=1 // pred_region
      %407 = dma.done [#allocation8], 512
    $region141: #{_lambda_.1} parent=1 // pred_fallthru
      _
    // Predicated region
    $region142: #{_lambda_.1} parent=1 // pred_check
      _
    $region143: #{_lambda_.1} parent=1 // pred_check_branch
      %409 = sbr.rel (0) target = $region145
    $region144: #{_lambda_.1} parent=1 // pred_region
      %410 = dma.done [#allocation8], 576
    $region145: #{_lambda_.1} parent=1 // pred_fallthru
      _
    // Predicated region
    $region146: #{_lambda_.1} parent=1 // pred_check
      _
    $region147: #{_lambda_.1} parent=1 // pred_check_branch
      %412 = sbr.rel (0) target = $region149
    $region148: #{_lambda_.1} parent=1 // pred_region
      %413 = dma.done [#allocation11], 128
    $region149: #{_lambda_.1} parent=1 // pred_fallthru
      _
    // Predicated region
    $region150: #{_lambda_.1} parent=1 // pred_check
      _
    $region151: #{_lambda_.1} parent=1 // pred_check_branch
      %415 = sbr.rel (0) target = $region153
    $region152: #{_lambda_.1} parent=1 // pred_region
      %416 = dma.done [#allocation11], 64
    $region153: #{_lambda_.1} parent=1 // pred_fallthru
      _
    // Predicated region
    $region154: #{_lambda_.1} parent=1 // pred_check
      _
    $region155: #{_lambda_.1} parent=1 // pred_check_branch
      %418 = sbr.rel (0) target = $region157
    $region156: #{_lambda_.1} parent=1 // pred_region
      %419 = dma.done [#allocation14], 512
    $region157: #{_lambda_.1} parent=1 // pred_fallthru
      _
    // Predicated region
    $region158: #{_lambda_.1} parent=1 // pred_check
      _
    $region159: #{_lambda_.1} parent=1 // pred_check_branch
      %421 = sbr.rel (0) target = $region161
    $region160: #{_lambda_.1} parent=1 // pred_region
      %422 = dma.done [#allocation14], 512
    $region161: #{_lambda_.1} parent=1 // pred_fallthru
      _
    // Predicated region
    $region162: #{_lambda_.1} parent=1 // pred_check
      _
    $region163: #{_lambda_.1} parent=1 // pred_check_branch
      %424 = sbr.rel (0) target = $region165
    $region164: #{_lambda_.1} parent=1 // pred_region
      %425 = dma.done [#allocation17], 512
    $region165: #{_lambda_.1} parent=1 // pred_fallthru
      _
    // Predicated region
    $region166: #{_lambda_.1} parent=1 // pred_check
      _
    $region167: #{_lambda_.1} parent=1 // pred_check_branch
      %427 = sbr.rel (0) target = $region169
    $region168: #{_lambda_.1} parent=1 // pred_region
      %428 = dma.done [#allocation17], 192
    $region169: #{_lambda_.1} parent=1 // pred_fallthru
      _
    // Predicated region
    $region170: #{_lambda_.1} parent=1 // pred_check
      _
    $region171: #{_lambda_.1} parent=1 // pred_check_branch
      %430 = sbr.rel (0) target = $region173
    $region172: #{_lambda_.1} parent=1 // pred_region
      %431 = dma.done [#allocation20], 1536
    $region173: #{_lambda_.1} parent=1 // pred_fallthru
      _
    // Predicated region
    $region174: #{_lambda_.1} parent=1 // pred_check
      _
    $region175: #{_lambda_.1} parent=1 // pred_check_branch
      %433 = sbr.rel (0) target = $region177
    $region176: #{_lambda_.1} parent=1 // pred_region
      %434 = dma.done [#allocation20], 512
    $region177: #{_lambda_.1} parent=1 // pred_fallthru
      _
    // Predicated region
    $region178: #{_lambda_.1} parent=1 // pred_check
      _
    $region179: #{_lambda_.1} parent=1 // pred_check_branch
      %436 = sbr.rel (0) target = $region181
    $region180: #{_lambda_.1} parent=1 // pred_region
      %437 = dma.done [#allocation23], 512
    $region181: #{_lambda_.1} parent=1 // pred_fallthru
      _
    // Predicated region
    $region182: #{_lambda_.1} parent=1 // pred_check
      _
    $region183: #{_lambda_.1} parent=1 // pred_check_branch
      %439 = sbr.rel (0) target = $region185
    $region184: #{_lambda_.1} parent=1 // pred_region
      %440 = dma.done [#allocation23], 576
    $region185: #{_lambda_.1} parent=1 // pred_fallthru
      _
    // Predicated region
    $region186: #{_lambda_.1} parent=1 // pred_check
      _
    $region187: #{_lambda_.1} parent=1 // pred_check_branch
      %442 = sbr.rel (0) target = $region189
    $region188: #{_lambda_.1} parent=1 // pred_region
      %443 = dma.done [#allocation26], 128
    $region189: #{_lambda_.1} parent=1 // pred_fallthru
      _
    // Predicated region
    $region190: #{_lambda_.1} parent=1 // pred_check
      _
    $region191: #{_lambda_.1} parent=1 // pred_check_branch
      %445 = sbr.rel (0) target = $region193
    $region192: #{_lambda_.1} parent=1 // pred_region
      %446 = dma.done [#allocation26], 64
    $region193: #{_lambda_.1} parent=1 // pred_fallthru
      _
    // Predicated region
    $region194: #{_lambda_.1} parent=1 // pred_check
      _
    $region195: #{_lambda_.1} parent=1 // pred_check_branch
      %448 = sbr.rel (0) target = $region197
    $region196: #{_lambda_.1} parent=1 // pred_region
      %449 = dma.done [#allocation29], 512
    $region197: #{_lambda_.1} parent=1 // pred_fallthru
      _
    // Predicated region
    $region198: #{_lambda_.1} parent=1 // pred_check
      _
    $region199: #{_lambda_.1} parent=1 // pred_check_branch
      %451 = sbr.rel (0) target = $region201
    $region200: #{_lambda_.1} parent=1 // pred_region
      %452 = dma.done [#allocation29], 512
    $region201: #{_lambda_.1} parent=1 // pred_fallthru
      _
    // Predicated region
    $region202: #{_lambda_.1} parent=1 // pred_check
      _
    $region203: #{_lambda_.1} parent=1 // pred_check_branch
      %454 = sbr.rel (0) target = $region205
    $region204: #{_lambda_.1} parent=1 // pred_region
      %455 = dma.done [#allocation32], 192
    $region205: #{_lambda_.1} parent=1 // pred_fallthru
      _
    // Predicated region
    $region206: #{_lambda_.1} parent=1 // pred_check
      _
    $region207: #{_lambda_.1} parent=1 // pred_check_branch
      %457 = sbr.rel (0) target = $region209
    $region208: #{_lambda_.1} parent=1 // pred_region
      %458 = dma.done [#allocation32], 512
    $region209: #{_lambda_.1} parent=1 // pred_fallthru
      _
    // Predicated region
    $region210: #{_lambda_.1} parent=1 // pred_check
      _
    $region211: #{_lambda_.1} parent=1 // pred_check_branch
      %460 = sbr.rel (0) target = $region213
    $region212: #{_lambda_.1} parent=1 // pred_region
      %461 = dma.done [#allocation35], 512
    $region213: #{_lambda_.1} parent=1 // pred_fallthru
      _
    // Predicated region
    $region214: #{_lambda_.1} parent=1 // pred_check
      _
    $region215: #{_lambda_.1} parent=1 // pred_check_branch
      %463 = sbr.rel (0) target = $region217
    $region216: #{_lambda_.1} parent=1 // pred_region
      %464 = dma.done [#allocation35], 192
    $region217: #{_lambda_.1} parent=1 // pred_fallthru
      _
    // Predicated region
    $region218: #{_lambda_.1} parent=1 // pred_check
      _
    $region219: #{_lambda_.1} parent=1 // pred_check_branch
      %466 = sbr.rel (0) target = $region221
    $region220: #{_lambda_.1} parent=1 // pred_region
      %467 = dma.done [#allocation38], 768
    $region221: #{_lambda_.1} parent=1 // pred_fallthru
      _
    // Predicated region
    $region222: #{_lambda_.1} parent=1 // pred_check
      _
    $region223: #{_lambda_.1} parent=1 // pred_check_branch
      %469 = sbr.rel (0) target = $region225
    $region224: #{_lambda_.1} parent=1 // pred_region
      %470 = dma.done [#allocation38], 16
    $region225: #{_lambda_.1} parent=1 // pred_fallthru
      _
    // Predicated region
    $region226: #{_lambda_.1} parent=1 // pred_check
      _
    $region227: #{_lambda_.1} parent=1 // pred_check_branch
      %472 = sbr.rel (0) target = $region229
    $region228: #{_lambda_.1} parent=1 // pred_region
      %473 = dma.done [#allocation41], 16
    $region229: #{_lambda_.1} parent=1 // pred_fallthru
      _
    %v476 = vld [vmem:[#allocation2] sm:$0xff]
    %v477 = vld [vmem:[#allocation2 + $0x8] sm:$0xff]
    %v478 = vld [vmem:[%s3] sm:$0xf]
    %v479 = vld [vmem:[%s3 + $0x4] sm:$0xf]
    %v480 = vld [vmem:[%s5] sm:$0xff]
    %v481 = vld [vmem:[%s5 + $0x8] sm:$0xff]
    %v484 = vunpack.c.l.b16 %v478
    %v485 = vunpack.c.l.b16 %v479
    %v486 = vpack.c.b16 %v485, %v484
    %vm487 = vcmask 64512
    %v489 = vsel %vm487, %v486, 0
    %vm491 = vcmask 1043456
    %v493 = vsel %vm491, 1065369472, 0
    %495 = vmatprep.subr.bf16.mxu0 0
    %496 = vmatpush1.bf16.msra.mxu0 %v493
    %497 = vmatprep.subr.bf16.mxu0 0
    %498 = vmatpush1.bf16.msra.mxu0 0
    %499 = vmatprep.subr.bf16.mxu0 0
    %500 = vmatpush1.bf16.msra.mxu0 0
    %501 = vmatprep.subr.bf16.mxu0 0
    %502 = vmatpush1.bf16.msra.mxu0 0
    %503 = vmatprep.subr.bf16.mxu0 0
    %504 = vmatpush1.bf16.msra.mxu0 0
    %505 = vmatprep.subr.bf16.mxu0 0
    %506 = vmatpush1.bf16.msra.mxu0 0
    %507 = vmatprep.subr.bf16.mxu0 0
    %508 = vmatpush1.bf16.msra.mxu0 0
    %509 = vmatprep.subr.bf16.mxu0 0
    %510 = vmatpush1.bf16.msra.mxu0 0
    %511 = vmatprep.subr.bf16.mxu0 0
    %512 = vmatpush1.bf16.msra.mxu0 0
    %513 = vmatprep.subr.bf16.mxu0 0
    %514 = vmatpush1.bf16.msra.mxu0 0
    %515 = vmatprep.subr.bf16.mxu0 0
    %516 = vmatpush1.bf16.msra.mxu0 0
    %517 = vmatprep.subr.bf16.mxu0 0
    %518 = vmatpush1.bf16.msra.mxu0 0
    %519 = vmatprep.subr.bf16.mxu0 0
    %520 = vmatpush1.bf16.msra.mxu0 0
    %521 = vmatprep.subr.bf16.mxu0 0
    %522 = vmatpush1.bf16.msra.mxu0 0
    %523 = vmatprep.subr.bf16.mxu0 0
    %524 = vmatpush1.bf16.msra.mxu0 0
    %525 = vmatprep.subr.bf16.mxu0 0
    %526 = vmatpush1.bf16.msra.mxu0 0
    %527 = vmatprep.mubr.bf16.mxu0 0
    %528 = vmatmul.mubr.bf16.gmra.mrb[0].mxu0 %v489
    %v529 = vpop.f32.mrb[0].mxu0
    %v530 = vadd.f32 0.0, %v529
    %v531 = vpop.f32.mrb[0].mxu0
    %v532 = vpop.f32.mrb[0].mxu0
    %v533 = vadd.f32 0.0, %v532
    %v534 = vpop.f32.mrb[0].mxu0
    %535 = vdwg.mxu0
    %v536 = vmax.f32 %v530, 1.0
    %v537 = vmax.f32 %v533, 1.0
    %v538 = vrcp.pop %v536
    %v539 = vrcp.pop %v537
    %v540 = vpack.c.bf16 %v476, %v476
    %v541 = vpack.c.bf16 %v477, %v477
    %v543 = vsel %vm487, %v478, 0
    %v546 = vsel %vm491, %v540, 0
    %548 = vmatprep.subr.bf16.mxu0 0
    %549 = vmatpush1.bf16.msra.mxu0 %v546
    %550 = vmatprep.subr.bf16.mxu0 0
    %551 = vmatpush1.bf16.msra.mxu0 0
    %552 = vmatprep.subr.bf16.mxu0 0
    %553 = vmatpush1.bf16.msra.mxu0 0
    %554 = vmatprep.subr.bf16.mxu0 0
    %555 = vmatpush1.bf16.msra.mxu0 0
    %556 = vmatprep.subr.bf16.mxu0 0
    %557 = vmatpush1.bf16.msra.mxu0 0
    %558 = vmatprep.subr.bf16.mxu0 0
    %559 = vmatpush1.bf16.msra.mxu0 0
    %560 = vmatprep.subr.bf16.mxu0 0
    %561 = vmatpush1.bf16.msra.mxu0 0
    %562 = vmatprep.subr.bf16.mxu0 0
    %563 = vmatpush1.bf16.msra.mxu0 0
    %564 = vmatprep.subr.bf16.mxu0 0
    %565 = vmatpush1.bf16.msra.mxu0 0
    %566 = vmatprep.subr.bf16.mxu0 0
    %567 = vmatpush1.bf16.msra.mxu0 0
    %568 = vmatprep.subr.bf16.mxu0 0
    %569 = vmatpush1.bf16.msra.mxu0 0
    %570 = vmatprep.subr.bf16.mxu0 0
    %571 = vmatpush1.bf16.msra.mxu0 0
    %572 = vmatprep.subr.bf16.mxu0 0
    %573 = vmatpush1.bf16.msra.mxu0 0
    %574 = vmatprep.subr.bf16.mxu0 0
    %575 = vmatpush1.bf16.msra.mxu0 0
    %576 = vmatprep.subr.bf16.mxu0 0
    %577 = vmatpush1.bf16.msra.mxu0 0
    %578 = vmatprep.subr.bf16.mxu0 0
    %579 = vmatpush1.bf16.msra.mxu0 0
    %580 = vmatprep.mubr.bf16.mxu0 0
    %581 = vmatmul.mubr.bf16.gmra.mrb[0].mxu0 %v543
    %v582 = vpop.f32.mrb[0].mxu0
    %v583 = vadd.f32 0.0, %v582
    %v584 = vpop.f32.mrb[0].mxu0
    %v585 = vpop.f32.mrb[0].mxu0
    %v586 = vpop.f32.mrb[0].mxu0
    %587 = vdwg.mxu0
    %v589 = vsel %vm487, %v479, 0
    %v592 = vsel %vm491, %v541, 0
    %594 = vmatprep.subr.bf16.mxu0 0
    %595 = vmatpush1.bf16.msra.mxu0 %v592
    %596 = vmatprep.subr.bf16.mxu0 0
    %597 = vmatpush1.bf16.msra.mxu0 0
    %598 = vmatprep.subr.bf16.mxu0 0
    %599 = vmatpush1.bf16.msra.mxu0 0
    %600 = vmatprep.subr.bf16.mxu0 0
    %601 = vmatpush1.bf16.msra.mxu0 0
    %602 = vmatprep.subr.bf16.mxu0 0
    %603 = vmatpush1.bf16.msra.mxu0 0
    %604 = vmatprep.subr.bf16.mxu0 0
    %605 = vmatpush1.bf16.msra.mxu0 0
    %606 = vmatprep.subr.bf16.mxu0 0
    %607 = vmatpush1.bf16.msra.mxu0 0
    %608 = vmatprep.subr.bf16.mxu0 0
    %609 = vmatpush1.bf16.msra.mxu0 0
    %610 = vmatprep.subr.bf16.mxu0 0
    %611 = vmatpush1.bf16.msra.mxu0 0
    %612 = vmatprep.subr.bf16.mxu0 0
    %613 = vmatpush1.bf16.msra.mxu0 0
    %614 = vmatprep.subr.bf16.mxu0 0
    %615 = vmatpush1.bf16.msra.mxu0 0
    %616 = vmatprep.subr.bf16.mxu0 0
    %617 = vmatpush1.bf16.msra.mxu0 0
    %618 = vmatprep.subr.bf16.mxu0 0
    %619 = vmatpush1.bf16.msra.mxu0 0
    %620 = vmatprep.subr.bf16.mxu0 0
    %621 = vmatpush1.bf16.msra.mxu0 0
    %622 = vmatprep.subr.bf16.mxu0 0
    %623 = vmatpush1.bf16.msra.mxu0 0
    %624 = vmatprep.subr.bf16.mxu0 0
    %625 = vmatpush1.bf16.msra.mxu0 0
    %626 = vmatprep.mubr.bf16.mxu0 0
    %627 = vmatmul.mubr.bf16.gmra.mrb[0].mxu0 %v589
    %v628 = vpop.f32.mrb[0].mxu0
    %v629 = vadd.f32 0.0, %v628
    %v630 = vpop.f32.mrb[0].mxu0
    %v631 = vpop.f32.mrb[0].mxu0
    %v632 = vpop.f32.mrb[0].mxu0
    %633 = vdwg.mxu0
    %635 = vset.pattern.permute.xlu0 0
    %636 = vperm.xlu0 %635, %v538
    %v637 = vpop.permute.xlu0 %636
    %640 = vset.pattern.permute.xlu0 0
    %641 = vperm.xlu0 %640, %v539
    %v642 = vpop.permute.xlu0 %641
    %v644 = vmul.f32 %v583, %v637
    %v645 = vmul.f32 %v629, %v642
    %v646 = vld [vmem:[#allocation10] sm:$0x7]
    %s647 = scalar_lea.vmem [#allocation10], 4
    %v648 = vld [vmem:[%s647] sm:$0x7]
    %v649 = vld [vmem:[#allocation12] sm:$0x7]
    %v650 = vld [vmem:[#allocation4] sm:$0xf]
    %v651 = vld [vmem:[#allocation4 + $0x4] sm:$0xf]
    %v652 = vld [vmem:[#allocation4 + $0x8] sm:$0xf]
    %v653 = vld [vmem:[#allocation4 + $0xc] sm:$0xf]
    %v654 = vpack.c.bf16 %v644, %v644
    %v655 = vpack.c.bf16 %v645, %v645
    %s656 = scalar_lea.vmem [#allocation4], 16
    %v657 = vld [vmem:[%s656] sm:$0xf]
    %v658 = vld [vmem:[%s656 + $0x4] sm:$0xf]
    %v659 = vld [vmem:[%s656 + $0x8] sm:$0xf]
    %v660 = vld [vmem:[%s656 + $0xc] sm:$0xf]
    %v663 = vunpack.c.l.b16 %v540
    %v664 = vunpack.c.l.b16 %v541
    %v665 = vpack.c.b16 %v664, %v663
    %v670 = vunpack.c.l.b16 %v657
    %v671 = vunpack.c.l.b16 %v658
    %v672 = vunpack.c.l.b16 %v659
    %v673 = vunpack.c.l.b16 %v660
    %v674 = vpack.c.b16 %v671, %v670
    %v675 = vpack.c.b16 %v673, %v672
    %vm678 = vcmask 261120
    %v680 = vsel %vm678, %v665, 0
    %682 = vmatprep.subr.bf16.mxu0 0
    %683 = vmatpush1.bf16.msra.mxu0 %v674
    %684 = vmatprep.subr.bf16.mxu0 0
    %685 = vmatpush1.bf16.msra.mxu0 %v675
    %686 = vmatprep.subr.bf16.mxu0 0
    %687 = vmatpush1.bf16.msra.mxu0 0
    %688 = vmatprep.subr.bf16.mxu0 0
    %689 = vmatpush1.bf16.msra.mxu0 0
    %690 = vmatprep.subr.bf16.mxu0 0
    %691 = vmatpush1.bf16.msra.mxu0 0
    %692 = vmatprep.subr.bf16.mxu0 0
    %693 = vmatpush1.bf16.msra.mxu0 0
    %694 = vmatprep.subr.bf16.mxu0 0
    %695 = vmatpush1.bf16.msra.mxu0 0
    %696 = vmatprep.subr.bf16.mxu0 0
    %697 = vmatpush1.bf16.msra.mxu0 0
    %698 = vmatprep.subr.bf16.mxu0 0
    %699 = vmatpush1.bf16.msra.mxu0 0
    %700 = vmatprep.subr.bf16.mxu0 0
    %701 = vmatpush1.bf16.msra.mxu0 0
    %702 = vmatprep.subr.bf16.mxu0 0
    %703 = vmatpush1.bf16.msra.mxu0 0
    %704 = vmatprep.subr.bf16.mxu0 0
    %705 = vmatpush1.bf16.msra.mxu0 0
    %706 = vmatprep.subr.bf16.mxu0 0
    %707 = vmatpush1.bf16.msra.mxu0 0
    %708 = vmatprep.subr.bf16.mxu0 0
    %709 = vmatpush1.bf16.msra.mxu0 0
    %710 = vmatprep.subr.bf16.mxu0 0
    %711 = vmatpush1.bf16.msra.mxu0 0
    %712 = vmatprep.subr.bf16.mxu0 0
    %713 = vmatpush1.bf16.msra.mxu0 0
    %714 = vmatprep.mubr.bf16.mxu0 0
    %715 = vmatmul.mubr.bf16.gmra.mrb[0].mxu0 %v680
    %v716 = vpop.f32.mrb[0].mxu0
    %v717 = vadd.f32 0.0, %v716
    %v718 = vpop.f32.mrb[0].mxu0
    %v719 = vpop.f32.mrb[0].mxu0
    %v720 = vadd.f32 0.0, %v719
    %v721 = vpop.f32.mrb[0].mxu0
    %722 = vdwg.mxu0
    %v725 = vunpack.c.l.b16 %v654
    %v726 = vunpack.c.l.b16 %v655
    %v727 = vpack.c.b16 %v726, %v725
    %v732 = vunpack.c.l.b16 %v650
    %v733 = vunpack.c.l.b16 %v651
    %v734 = vunpack.c.l.b16 %v652
    %v735 = vunpack.c.l.b16 %v653
    %v736 = vpack.c.b16 %v733, %v732
    %v737 = vpack.c.b16 %v735, %v734
    %v741 = vsel %vm678, %v727, 0
    %743 = vmatprep.subr.bf16.mxu0 0
    %744 = vmatpush1.bf16.msra.mxu0 %v736
    %745 = vmatprep.subr.bf16.mxu0 0
    %746 = vmatpush1.bf16.msra.mxu0 %v737
    %747 = vmatprep.subr.bf16.mxu0 0
    %748 = vmatpush1.bf16.msra.mxu0 0
    %749 = vmatprep.subr.bf16.mxu0 0
    %750 = vmatpush1.bf16.msra.mxu0 0
    %751 = vmatprep.subr.bf16.mxu0 0
    %752 = vmatpush1.bf16.msra.mxu0 0
    %753 = vmatprep.subr.bf16.mxu0 0
    %754 = vmatpush1.bf16.msra.mxu0 0
    %755 = vmatprep.subr.bf16.mxu0 0
    %756 = vmatpush1.bf16.msra.mxu0 0
    %757 = vmatprep.subr.bf16.mxu0 0
    %758 = vmatpush1.bf16.msra.mxu0 0
    %759 = vmatprep.subr.bf16.mxu0 0
    %760 = vmatpush1.bf16.msra.mxu0 0
    %761 = vmatprep.subr.bf16.mxu0 0
    %762 = vmatpush1.bf16.msra.mxu0 0
    %763 = vmatprep.subr.bf16.mxu0 0
    %764 = vmatpush1.bf16.msra.mxu0 0
    %765 = vmatprep.subr.bf16.mxu0 0
    %766 = vmatpush1.bf16.msra.mxu0 0
    %767 = vmatprep.subr.bf16.mxu0 0
    %768 = vmatpush1.bf16.msra.mxu0 0
    %769 = vmatprep.subr.bf16.mxu0 0
    %770 = vmatpush1.bf16.msra.mxu0 0
    %771 = vmatprep.subr.bf16.mxu0 0
    %772 = vmatpush1.bf16.msra.mxu0 0
    %773 = vmatprep.subr.bf16.mxu0 0
    %774 = vmatpush1.bf16.msra.mxu0 0
    %775 = vmatprep.mubr.bf16.mxu0 0
    %776 = vmatmul.mubr.bf16.gmra.mrb[0].mxu0 %v741
    %v777 = vpop.f32.mrb[0].mxu0
    %v778 = vadd.f32 %v717, %v777
    %v779 = vpop.f32.mrb[0].mxu0
    %v780 = vpop.f32.mrb[0].mxu0
    %v781 = vadd.f32 %v720, %v780
    %v782 = vpop.f32.mrb[0].mxu0
    %783 = vdwg.mxu0
    %v784 = vlaneseq
    %v785 = vshrl.u32 %v784, 7
    %v786 = vsub.s32 0, %v785
    %v787 = vrot.slane %v646, %v786
    %v788 = vadd.f32 %v778, %v787
    %v789 = vadd.f32 %v781, %v787
    %791 = vset.pattern.permute.xlu0 0
    %792 = vperm.xlu0 %791, %v480
    %v793 = vpop.permute.xlu0 %792
    %796 = vset.pattern.permute.xlu0 0
    %797 = vperm.xlu0 %796, %v481
    %v798 = vpop.permute.xlu0 %797
    %v800 = vmul.f32 %v788, %v793
    %v801 = vmul.f32 %v789, %v798
    %v802 = vmax.f32 %v800, 0.0
    %v803 = vmax.f32 %v801, 0.0
    %v804 = vsel %vm678, %v802, 0.0
    %v805 = vsel %vm678, %v803, 0.0
    %v806 = vadd.f32 %v804, %v805
    %v807 = vrot.slane %v806, 4
    %v808 = vadd.f32 %v806, %v807
    %v809 = vrot.slane %v808, 2
    %v810 = vadd.f32 %v808, %v809
    %v811 = vrot.slane %v810, 1
    %v812 = vadd.f32 %v810, %v811
    %v813 = vrcp.pop 16.0
    %v814 = vmul.f32 %v812, %v813
    %v815 = vmul.f32 %v802, %v802
    %v816 = vmul.f32 %v803, %v803
    %v817 = vsel %vm678, %v815, 0.0
    %v818 = vsel %vm678, %v816, 0.0
    %v819 = vadd.f32 %v817, %v818
    %v820 = vrot.slane %v819, 4
    %v821 = vadd.f32 %v819, %v820
    %v822 = vrot.slane %v821, 2
    %v823 = vadd.f32 %v821, %v822
    %v824 = vrot.slane %v823, 1
    %v825 = vadd.f32 %v823, %v824
    %v826 = vmul.f32 %v825, %v813
    %v827 = vmul.f32 %v814, %v814
    %v828 = vsub.f32 %v826, %v827
    %v829 = vmax.f32 %v828, 0.0
    %v830 = vadd.f32 %v829, 1e-05
    %v831 = vrsqrt.pop %v830
    %v832 = vmul.f32 %v831, %v646
    %v833 = vlaneseq
    %v834 = vshrl.u32 %v833, 7
    %v835 = vsub.s32 1, %v834
    %v836 = vrot.slane %v832, %v835
    %v837 = vmul.f32 %v802, %v836
    %v838 = vmul.f32 %v803, %v836
    %v839 = vmul.f32 %v814, %v832
    %v841 = vrot.slane %v839, 7
    %v843 = vsub.f32 %v646, %v841
    %v844 = vlaneseq
    %v845 = vshrl.u32 %v844, 7
    %v846 = vsub.s32 2, %v845
    %v847 = vrot.slane %v843, %v846
    %v848 = vadd.f32 %v837, %v847
    %v849 = vadd.f32 %v838, %v847
    %v850 = vpack.c.bf16 %v848, %v848
    %v851 = vpack.c.bf16 %v849, %v849
    %v853 = vsel %vm491, %v850, 0
    %855 = vmatprep.subr.bf16.mxu0 0
    %856 = vmatpush1.bf16.msra.mxu0 %v853
    %857 = vmatprep.subr.bf16.mxu0 0
    %858 = vmatpush1.bf16.msra.mxu0 0
    %859 = vmatprep.subr.bf16.mxu0 0
    %860 = vmatpush1.bf16.msra.mxu0 0
    %861 = vmatprep.subr.bf16.mxu0 0
    %862 = vmatpush1.bf16.msra.mxu0 0
    %863 = vmatprep.subr.bf16.mxu0 0
    %864 = vmatpush1.bf16.msra.mxu0 0
    %865 = vmatprep.subr.bf16.mxu0 0
    %866 = vmatpush1.bf16.msra.mxu0 0
    %867 = vmatprep.subr.bf16.mxu0 0
    %868 = vmatpush1.bf16.msra.mxu0 0
    %869 = vmatprep.subr.bf16.mxu0 0
    %870 = vmatpush1.bf16.msra.mxu0 0
    %871 = vmatprep.subr.bf16.mxu0 0
    %872 = vmatpush1.bf16.msra.mxu0 0
    %873 = vmatprep.subr.bf16.mxu0 0
    %874 = vmatpush1.bf16.msra.mxu0 0
    %875 = vmatprep.subr.bf16.mxu0 0
    %876 = vmatpush1.bf16.msra.mxu0 0
    %877 = vmatprep.subr.bf16.mxu0 0
    %878 = vmatpush1.bf16.msra.mxu0 0
    %879 = vmatprep.subr.bf16.mxu0 0
    %880 = vmatpush1.bf16.msra.mxu0 0
    %881 = vmatprep.subr.bf16.mxu0 0
    %882 = vmatpush1.bf16.msra.mxu0 0
    %883 = vmatprep.subr.bf16.mxu0 0
    %884 = vmatpush1.bf16.msra.mxu0 0
    %885 = vmatprep.subr.bf16.mxu0 0
    %886 = vmatpush1.bf16.msra.mxu0 0
    %887 = vmatprep.mubr.bf16.mxu0 0
    %888 = vmatmul.mubr.bf16.gmra.mrb[0].mxu0 %v543
    %v889 = vpop.f32.mrb[0].mxu0
    %v890 = vadd.f32 0.0, %v889
    %v891 = vpop.f32.mrb[0].mxu0
    %v892 = vpop.f32.mrb[0].mxu0
    %v893 = vpop.f32.mrb[0].mxu0
    %894 = vdwg.mxu0
    %v896 = vsel %vm491, %v851, 0
    %898 = vmatprep.subr.bf16.mxu0 0
    %899 = vmatpush1.bf16.msra.mxu0 %v896
    %900 = vmatprep.subr.bf16.mxu0 0
    %901 = vmatpush1.bf16.msra.mxu0 0
    %902 = vmatprep.subr.bf16.mxu0 0
    %903 = vmatpush1.bf16.msra.mxu0 0
    %904 = vmatprep.subr.bf16.mxu0 0
    %905 = vmatpush1.bf16.msra.mxu0 0
    %906 = vmatprep.subr.bf16.mxu0 0
    %907 = vmatpush1.bf16.msra.mxu0 0
    %908 = vmatprep.subr.bf16.mxu0 0
    %909 = vmatpush1.bf16.msra.mxu0 0
    %910 = vmatprep.subr.bf16.mxu0 0
    %911 = vmatpush1.bf16.msra.mxu0 0
    %912 = vmatprep.subr.bf16.mxu0 0
    %913 = vmatpush1.bf16.msra.mxu0 0
    %914 = vmatprep.subr.bf16.mxu0 0
    %915 = vmatpush1.bf16.msra.mxu0 0
    %916 = vmatprep.subr.bf16.mxu0 0
    %917 = vmatpush1.bf16.msra.mxu0 0
    %918 = vmatprep.subr.bf16.mxu0 0
    %919 = vmatpush1.bf16.msra.mxu0 0
    %920 = vmatprep.subr.bf16.mxu0 0
    %921 = vmatpush1.bf16.msra.mxu0 0
    %922 = vmatprep.subr.bf16.mxu0 0
    %923 = vmatpush1.bf16.msra.mxu0 0
    %924 = vmatprep.subr.bf16.mxu0 0
    %925 = vmatpush1.bf16.msra.mxu0 0
    %926 = vmatprep.subr.bf16.mxu0 0
    %927 = vmatpush1.bf16.msra.mxu0 0
    %928 = vmatprep.subr.bf16.mxu0 0
    %929 = vmatpush1.bf16.msra.mxu0 0
    %930 = vmatprep.mubr.bf16.mxu0 0
    %931 = vmatmul.mubr.bf16.gmra.mrb[0].mxu0 %v589
    %v932 = vpop.f32.mrb[0].mxu0
    %v933 = vadd.f32 0.0, %v932
    %v934 = vpop.f32.mrb[0].mxu0
    %v935 = vpop.f32.mrb[0].mxu0
    %v936 = vpop.f32.mrb[0].mxu0
    %937 = vdwg.mxu0
    %v938 = vmul.f32 %v890, %v637
    %v939 = vmul.f32 %v933, %v642
    %v940 = vld [vmem:[#allocation6] sm:$0xf]
    %v941 = vld [vmem:[#allocation6 + $0x4] sm:$0xf]
    %v942 = vld [vmem:[#allocation6 + $0x8] sm:$0xf]
    %v943 = vld [vmem:[#allocation6 + $0xc] sm:$0xf]
    %v944 = vpack.c.bf16 %v938, %v938
    %v945 = vpack.c.bf16 %v939, %v939
    %s946 = scalar_lea.vmem [#allocation6], 16
    %v947 = vld [vmem:[%s946] sm:$0xf]
    %v948 = vld [vmem:[%s946 + $0x4] sm:$0xf]
    %v949 = vld [vmem:[%s946 + $0x8] sm:$0xf]
    %v950 = vld [vmem:[%s946 + $0xc] sm:$0xf]
    %v953 = vunpack.c.l.b16 %v850
    %v954 = vunpack.c.l.b16 %v851
    %v955 = vpack.c.b16 %v954, %v953
    %v960 = vunpack.c.l.b16 %v947
    %v961 = vunpack.c.l.b16 %v948
    %v962 = vunpack.c.l.b16 %v949
    %v963 = vunpack.c.l.b16 %v950
    %v964 = vpack.c.b16 %v961, %v960
    %v965 = vpack.c.b16 %v963, %v962
    %v969 = vsel %vm678, %v955, 0
    %971 = vmatprep.subr.bf16.mxu0 0
    %972 = vmatpush1.bf16.msra.mxu0 %v964
    %973 = vmatprep.subr.bf16.mxu0 0
    %974 = vmatpush1.bf16.msra.mxu0 %v965
    %975 = vmatprep.subr.bf16.mxu0 0
    %976 = vmatpush1.bf16.msra.mxu0 0
    %977 = vmatprep.subr.bf16.mxu0 0
    %978 = vmatpush1.bf16.msra.mxu0 0
    %979 = vmatprep.subr.bf16.mxu0 0
    %980 = vmatpush1.bf16.msra.mxu0 0
    %981 = vmatprep.subr.bf16.mxu0 0
    %982 = vmatpush1.bf16.msra.mxu0 0
    %983 = vmatprep.subr.bf16.mxu0 0
    %984 = vmatpush1.bf16.msra.mxu0 0
    %985 = vmatprep.subr.bf16.mxu0 0
    %986 = vmatpush1.bf16.msra.mxu0 0
    %987 = vmatprep.subr.bf16.mxu0 0
    %988 = vmatpush1.bf16.msra.mxu0 0
    %989 = vmatprep.subr.bf16.mxu0 0
    %990 = vmatpush1.bf16.msra.mxu0 0
    %991 = vmatprep.subr.bf16.mxu0 0
    %992 = vmatpush1.bf16.msra.mxu0 0
    %993 = vmatprep.subr.bf16.mxu0 0
    %994 = vmatpush1.bf16.msra.mxu0 0
    %995 = vmatprep.subr.bf16.mxu0 0
    %996 = vmatpush1.bf16.msra.mxu0 0
    %997 = vmatprep.subr.bf16.mxu0 0
    %998 = vmatpush1.bf16.msra.mxu0 0
    %999 = vmatprep.subr.bf16.mxu0 0
    %1000 = vmatpush1.bf16.msra.mxu0 0
    %1001 = vmatprep.subr.bf16.mxu0 0
    %1002 = vmatpush1.bf16.msra.mxu0 0
    %1003 = vmatprep.mubr.bf16.mxu0 0
    %1004 = vmatmul.mubr.bf16.gmra.mrb[0].mxu0 %v969
    %v1005 = vpop.f32.mrb[0].mxu0
    %v1006 = vadd.f32 0.0, %v1005
    %v1007 = vpop.f32.mrb[0].mxu0
    %v1008 = vpop.f32.mrb[0].mxu0
    %v1009 = vadd.f32 0.0, %v1008
    %v1010 = vpop.f32.mrb[0].mxu0
    %1011 = vdwg.mxu0
    %v1014 = vunpack.c.l.b16 %v944
    %v1015 = vunpack.c.l.b16 %v945
    %v1016 = vpack.c.b16 %v1015, %v1014
    %v1021 = vunpack.c.l.b16 %v940
    %v1022 = vunpack.c.l.b16 %v941
    %v1023 = vunpack.c.l.b16 %v942
    %v1024 = vunpack.c.l.b16 %v943
    %v1025 = vpack.c.b16 %v1022, %v1021
    %v1026 = vpack.c.b16 %v1024, %v1023
    %v1030 = vsel %vm678, %v1016, 0
    %1032 = vmatprep.subr.bf16.mxu0 0
    %1033 = vmatpush1.bf16.msra.mxu0 %v1025
    %1034 = vmatprep.subr.bf16.mxu0 0
    %1035 = vmatpush1.bf16.msra.mxu0 %v1026
    %1036 = vmatprep.subr.bf16.mxu0 0
    %1037 = vmatpush1.bf16.msra.mxu0 0
    %1038 = vmatprep.subr.bf16.mxu0 0
    %1039 = vmatpush1.bf16.msra.mxu0 0
    %1040 = vmatprep.subr.bf16.mxu0 0
    %1041 = vmatpush1.bf16.msra.mxu0 0
    %1042 = vmatprep.subr.bf16.mxu0 0
    %1043 = vmatpush1.bf16.msra.mxu0 0
    %1044 = vmatprep.subr.bf16.mxu0 0
    %1045 = vmatpush1.bf16.msra.mxu0 0
    %1046 = vmatprep.subr.bf16.mxu0 0
    %1047 = vmatpush1.bf16.msra.mxu0 0
    %1048 = vmatprep.subr.bf16.mxu0 0
    %1049 = vmatpush1.bf16.msra.mxu0 0
    %1050 = vmatprep.subr.bf16.mxu0 0
    %1051 = vmatpush1.bf16.msra.mxu0 0
    %1052 = vmatprep.subr.bf16.mxu0 0
    %1053 = vmatpush1.bf16.msra.mxu0 0
    %1054 = vmatprep.subr.bf16.mxu0 0
    %1055 = vmatpush1.bf16.msra.mxu0 0
    %1056 = vmatprep.subr.bf16.mxu0 0
    %1057 = vmatpush1.bf16.msra.mxu0 0
    %1058 = vmatprep.subr.bf16.mxu0 0
    %1059 = vmatpush1.bf16.msra.mxu0 0
    %1060 = vmatprep.subr.bf16.mxu0 0
    %1061 = vmatpush1.bf16.msra.mxu0 0
    %1062 = vmatprep.subr.bf16.mxu0 0
    %1063 = vmatpush1.bf16.msra.mxu0 0
    %1064 = vmatprep.mubr.bf16.mxu0 0
    %1065 = vmatmul.mubr.bf16.gmra.mrb[0].mxu0 %v1030
    %v1066 = vpop.f32.mrb[0].mxu0
    %v1067 = vadd.f32 %v1006, %v1066
    %v1068 = vpop.f32.mrb[0].mxu0
    %v1069 = vpop.f32.mrb[0].mxu0
    %v1070 = vadd.f32 %v1009, %v1069
    %v1071 = vpop.f32.mrb[0].mxu0
    %1072 = vdwg.mxu0
    %v1073 = vlaneseq
    %v1074 = vshrl.u32 %v1073, 7
    %v1075 = vsub.s32 0, %v1074
    %v1076 = vrot.slane %v648, %v1075
    %v1077 = vadd.f32 %v1067, %v1076
    %v1078 = vadd.f32 %v1070, %v1076
    %v1079 = vmul.f32 %v1077, %v793
    %v1080 = vmul.f32 %v1078, %v798
    %v1081 = vmax.f32 %v1079, 0.0
    %v1082 = vmax.f32 %v1080, 0.0
    %v1083 = vsel %vm678, %v1081, 0.0
    %v1084 = vsel %vm678, %v1082, 0.0
    %v1085 = vadd.f32 %v1083, %v1084
    %v1086 = vrot.slane %v1085, 4
    %v1087 = vadd.f32 %v1085, %v1086
    %v1088 = vrot.slane %v1087, 2
    %v1089 = vadd.f32 %v1087, %v1088
    %v1090 = vrot.slane %v1089, 1
    %v1091 = vadd.f32 %v1089, %v1090
    %v1092 = vmul.f32 %v1091, %v813
    %v1093 = vmul.f32 %v1081, %v1081
    %v1094 = vmul.f32 %v1082, %v1082
    %v1095 = vsel %vm678, %v1093, 0.0
    %v1096 = vsel %vm678, %v1094, 0.0
    %v1097 = vadd.f32 %v1095, %v1096
    %v1098 = vrot.slane %v1097, 4
    %v1099 = vadd.f32 %v1097, %v1098
    %v1100 = vrot.slane %v1099, 2
    %v1101 = vadd.f32 %v1099, %v1100
    %v1102 = vrot.slane %v1101, 1
    %v1103 = vadd.f32 %v1101, %v1102
    %v1104 = vmul.f32 %v1103, %v813
    %v1105 = vmul.f32 %v1092, %v1092
    %v1106 = vsub.f32 %v1104, %v1105
    %v1107 = vmax.f32 %v1106, 0.0
    %v1108 = vadd.f32 %v1107, 1e-05
    %v1109 = vrsqrt.pop %v1108
    %v1110 = vmul.f32 %v1109, %v648
    %v1111 = vlaneseq
    %v1112 = vshrl.u32 %v1111, 7
    %v1113 = vsub.s32 1, %v1112
    %v1114 = vrot.slane %v1110, %v1113
    %v1115 = vmul.f32 %v1081, %v1114
    %v1116 = vmul.f32 %v1082, %v1114
    %v1117 = vmul.f32 %v1092, %v1110
    %v1119 = vrot.slane %v1117, 7
    %v1121 = vsub.f32 %v648, %v1119
    %v1122 = vlaneseq
    %v1123 = vshrl.u32 %v1122, 7
    %v1124 = vsub.s32 2, %v1123
    %v1125 = vrot.slane %v1121, %v1124
    %v1126 = vadd.f32 %v1115, %v1125
    %v1127 = vadd.f32 %v1116, %v1125
    %v1128 = vpack.c.bf16 %v1126, %v1126
    %v1129 = vpack.c.bf16 %v1127, %v1127
    %v1131 = vsel %vm491, %v1128, 0
    %1133 = vmatprep.subr.bf16.mxu0 0
    %1134 = vmatpush1.bf16.msra.mxu0 %v1131
    %1135 = vmatprep.subr.bf16.mxu0 0
    %1136 = vmatpush1.bf16.msra.mxu0 0
    %1137 = vmatprep.subr.bf16.mxu0 0
    %1138 = vmatpush1.bf16.msra.mxu0 0
    %1139 = vmatprep.subr.bf16.mxu0 0
    %1140 = vmatpush1.bf16.msra.mxu0 0
    %1141 = vmatprep.subr.bf16.mxu0 0
    %1142 = vmatpush1.bf16.msra.mxu0 0
    %1143 = vmatprep.subr.bf16.mxu0 0
    %1144 = vmatpush1.bf16.msra.mxu0 0
    %1145 = vmatprep.subr.bf16.mxu0 0
    %1146 = vmatpush1.bf16.msra.mxu0 0
    %1147 = vmatprep.subr.bf16.mxu0 0
    %1148 = vmatpush1.bf16.msra.mxu0 0
    %1149 = vmatprep.subr.bf16.mxu0 0
    %1150 = vmatpush1.bf16.msra.mxu0 0
    %1151 = vmatprep.subr.bf16.mxu0 0
    %1152 = vmatpush1.bf16.msra.mxu0 0
    %1153 = vmatprep.subr.bf16.mxu0 0
    %1154 = vmatpush1.bf16.msra.mxu0 0
    %1155 = vmatprep.subr.bf16.mxu0 0
    %1156 = vmatpush1.bf16.msra.mxu0 0
    %1157 = vmatprep.subr.bf16.mxu0 0
    %1158 = vmatpush1.bf16.msra.mxu0 0
    %1159 = vmatprep.subr.bf16.mxu0 0
    %1160 = vmatpush1.bf16.msra.mxu0 0
    %1161 = vmatprep.subr.bf16.mxu0 0
    %1162 = vmatpush1.bf16.msra.mxu0 0
    %1163 = vmatprep.subr.bf16.mxu0 0
    %1164 = vmatpush1.bf16.msra.mxu0 0
    %1165 = vmatprep.mubr.bf16.mxu0 0
    %1166 = vmatmul.mubr.bf16.gmra.mrb[0].mxu0 %v543
    %v1167 = vpop.f32.mrb[0].mxu0
    %v1168 = vadd.f32 0.0, %v1167
    %v1169 = vpop.f32.mrb[0].mxu0
    %v1170 = vpop.f32.mrb[0].mxu0
    %v1171 = vpop.f32.mrb[0].mxu0
    %1172 = vdwg.mxu0
    %v1174 = vsel %vm491, %v1129, 0
    %1176 = vmatprep.subr.bf16.mxu0 0
    %1177 = vmatpush1.bf16.msra.mxu0 %v1174
    %1178 = vmatprep.subr.bf16.mxu0 0
    %1179 = vmatpush1.bf16.msra.mxu0 0
    %1180 = vmatprep.subr.bf16.mxu0 0
    %1181 = vmatpush1.bf16.msra.mxu0 0
    %1182 = vmatprep.subr.bf16.mxu0 0
    %1183 = vmatpush1.bf16.msra.mxu0 0
    %1184 = vmatprep.subr.bf16.mxu0 0
    %1185 = vmatpush1.bf16.msra.mxu0 0
    %1186 = vmatprep.subr.bf16.mxu0 0
    %1187 = vmatpush1.bf16.msra.mxu0 0
    %1188 = vmatprep.subr.bf16.mxu0 0
    %1189 = vmatpush1.bf16.msra.mxu0 0
    %1190 = vmatprep.subr.bf16.mxu0 0
    %1191 = vmatpush1.bf16.msra.mxu0 0
    %1192 = vmatprep.subr.bf16.mxu0 0
    %1193 = vmatpush1.bf16.msra.mxu0 0
    %1194 = vmatprep.subr.bf16.mxu0 0
    %1195 = vmatpush1.bf16.msra.mxu0 0
    %1196 = vmatprep.subr.bf16.mxu0 0
    %1197 = vmatpush1.bf16.msra.mxu0 0
    %1198 = vmatprep.subr.bf16.mxu0 0
    %1199 = vmatpush1.bf16.msra.mxu0 0
    %1200 = vmatprep.subr.bf16.mxu0 0
    %1201 = vmatpush1.bf16.msra.mxu0 0
    %1202 = vmatprep.subr.bf16.mxu0 0
    %1203 = vmatpush1.bf16.msra.mxu0 0
    %1204 = vmatprep.subr.bf16.mxu0 0
    %1205 = vmatpush1.bf16.msra.mxu0 0
    %1206 = vmatprep.subr.bf16.mxu0 0
    %1207 = vmatpush1.bf16.msra.mxu0 0
    %1208 = vmatprep.mubr.bf16.mxu0 0
    %1209 = vmatmul.mubr.bf16.gmra.mrb[0].mxu0 %v589
    %v1210 = vpop.f32.mrb[0].mxu0
    %v1211 = vadd.f32 0.0, %v1210
    %v1212 = vpop.f32.mrb[0].mxu0
    %v1213 = vpop.f32.mrb[0].mxu0
    %v1214 = vpop.f32.mrb[0].mxu0
    %1215 = vdwg.mxu0
    %v1216 = vmul.f32 %v1168, %v637
    %v1217 = vmul.f32 %v1211, %v642
    %v1218 = vld [vmem:[#allocation7] sm:$0xf]
    %v1219 = vld [vmem:[#allocation7 + $0x4] sm:$0xf]
    %v1220 = vld [vmem:[#allocation7 + $0x8] sm:$0xf]
    %v1221 = vld [vmem:[#allocation7 + $0xc] sm:$0xf]
    %v1222 = vpack.c.bf16 %v1216, %v1216
    %v1223 = vpack.c.bf16 %v1217, %v1217
    %s1224 = scalar_lea.vmem [#allocation7], 16
    %v1225 = vld [vmem:[%s1224] sm:$0xf]
    %v1226 = vld [vmem:[%s1224 + $0x4] sm:$0xf]
    %v1227 = vld [vmem:[%s1224 + $0x8] sm:$0xf]
    %v1228 = vld [vmem:[%s1224 + $0xc] sm:$0xf]
    %v1231 = vunpack.c.l.b16 %v1128
    %v1232 = vunpack.c.l.b16 %v1129
    %v1233 = vpack.c.b16 %v1232, %v1231
    %v1238 = vunpack.c.l.b16 %v1225
    %v1239 = vunpack.c.l.b16 %v1226
    %v1240 = vunpack.c.l.b16 %v1227
    %v1241 = vunpack.c.l.b16 %v1228
    %v1242 = vpack.c.b16 %v1239, %v1238
    %v1243 = vpack.c.b16 %v1241, %v1240
    %v1247 = vsel %vm678, %v1233, 0
    %1249 = vmatprep.subr.bf16.mxu0 0
    %1250 = vmatpush1.bf16.msra.mxu0 %v1242
    %1251 = vmatprep.subr.bf16.mxu0 0
    %1252 = vmatpush1.bf16.msra.mxu0 %v1243
    %1253 = vmatprep.subr.bf16.mxu0 0
    %1254 = vmatpush1.bf16.msra.mxu0 0
    %1255 = vmatprep.subr.bf16.mxu0 0
    %1256 = vmatpush1.bf16.msra.mxu0 0
    %1257 = vmatprep.subr.bf16.mxu0 0
    %1258 = vmatpush1.bf16.msra.mxu0 0
    %1259 = vmatprep.subr.bf16.mxu0 0
    %1260 = vmatpush1.bf16.msra.mxu0 0
    %1261 = vmatprep.subr.bf16.mxu0 0
    %1262 = vmatpush1.bf16.msra.mxu0 0
    %1263 = vmatprep.subr.bf16.mxu0 0
    %1264 = vmatpush1.bf16.msra.mxu0 0
    %1265 = vmatprep.subr.bf16.mxu0 0
    %1266 = vmatpush1.bf16.msra.mxu0 0
    %1267 = vmatprep.subr.bf16.mxu0 0
    %1268 = vmatpush1.bf16.msra.mxu0 0
    %1269 = vmatprep.subr.bf16.mxu0 0
    %1270 = vmatpush1.bf16.msra.mxu0 0
    %1271 = vmatprep.subr.bf16.mxu0 0
    %1272 = vmatpush1.bf16.msra.mxu0 0
    %1273 = vmatprep.subr.bf16.mxu0 0
    %1274 = vmatpush1.bf16.msra.mxu0 0
    %1275 = vmatprep.subr.bf16.mxu0 0
    %1276 = vmatpush1.bf16.msra.mxu0 0
    %1277 = vmatprep.subr.bf16.mxu0 0
    %1278 = vmatpush1.bf16.msra.mxu0 0
    %1279 = vmatprep.subr.bf16.mxu0 0
    %1280 = vmatpush1.bf16.msra.mxu0 0
    %1281 = vmatprep.mubr.bf16.mxu0 0
    %1282 = vmatmul.mubr.bf16.gmra.mrb[0].mxu0 %v1247
    %v1283 = vpop.f32.mrb[0].mxu0
    %v1284 = vadd.f32 0.0, %v1283
    %v1285 = vpop.f32.mrb[0].mxu0
    %v1286 = vpop.f32.mrb[0].mxu0
    %v1287 = vadd.f32 0.0, %v1286
    %v1288 = vpop.f32.mrb[0].mxu0
    %1289 = vdwg.mxu0
    %v1292 = vunpack.c.l.b16 %v1222
    %v1293 = vunpack.c.l.b16 %v1223
    %v1294 = vpack.c.b16 %v1293, %v1292
    %v1299 = vunpack.c.l.b16 %v1218
    %v1300 = vunpack.c.l.b16 %v1219
    %v1301 = vunpack.c.l.b16 %v1220
    %v1302 = vunpack.c.l.b16 %v1221
    %v1303 = vpack.c.b16 %v1300, %v1299
    %v1304 = vpack.c.b16 %v1302, %v1301
    %v1308 = vsel %vm678, %v1294, 0
    %1310 = vmatprep.subr.bf16.mxu0 0
    %1311 = vmatpush1.bf16.msra.mxu0 %v1303
    %1312 = vmatprep.subr.bf16.mxu0 0
    %1313 = vmatpush1.bf16.msra.mxu0 %v1304
    %1314 = vmatprep.subr.bf16.mxu0 0
    %1315 = vmatpush1.bf16.msra.mxu0 0
    %1316 = vmatprep.subr.bf16.mxu0 0
    %1317 = vmatpush1.bf16.msra.mxu0 0
    %1318 = vmatprep.subr.bf16.mxu0 0
    %1319 = vmatpush1.bf16.msra.mxu0 0
    %1320 = vmatprep.subr.bf16.mxu0 0
    %1321 = vmatpush1.bf16.msra.mxu0 0
    %1322 = vmatprep.subr.bf16.mxu0 0
    %1323 = vmatpush1.bf16.msra.mxu0 0
    %1324 = vmatprep.subr.bf16.mxu0 0
    %1325 = vmatpush1.bf16.msra.mxu0 0
    %1326 = vmatprep.subr.bf16.mxu0 0
    %1327 = vmatpush1.bf16.msra.mxu0 0
    %1328 = vmatprep.subr.bf16.mxu0 0
    %1329 = vmatpush1.bf16.msra.mxu0 0
    %1330 = vmatprep.subr.bf16.mxu0 0
    %1331 = vmatpush1.bf16.msra.mxu0 0
    %1332 = vmatprep.subr.bf16.mxu0 0
    %1333 = vmatpush1.bf16.msra.mxu0 0
    %1334 = vmatprep.subr.bf16.mxu0 0
    %1335 = vmatpush1.bf16.msra.mxu0 0
    %1336 = vmatprep.subr.bf16.mxu0 0
    %1337 = vmatpush1.bf16.msra.mxu0 0
    %1338 = vmatprep.subr.bf16.mxu0 0
    %1339 = vmatpush1.bf16.msra.mxu0 0
    %1340 = vmatprep.subr.bf16.mxu0 0
    %1341 = vmatpush1.bf16.msra.mxu0 0
    %1342 = vmatprep.mubr.bf16.mxu0 0
    %1343 = vmatmul.mubr.bf16.gmra.mrb[0].mxu0 %v1308
    %v1344 = vpop.f32.mrb[0].mxu0
    %v1345 = vadd.f32 %v1284, %v1344
    %v1346 = vpop.f32.mrb[0].mxu0
    %v1347 = vpop.f32.mrb[0].mxu0
    %v1348 = vadd.f32 %v1287, %v1347
    %v1349 = vpop.f32.mrb[0].mxu0
    %1350 = vdwg.mxu0
    %v1351 = vlaneseq
    %v1352 = vshrl.u32 %v1351, 7
    %v1353 = vsub.s32 0, %v1352
    %v1354 = vrot.slane %v649, %v1353
    %v1355 = vadd.f32 %v1345, %v1354
    %v1356 = vadd.f32 %v1348, %v1354
    %v1357 = vmul.f32 %v1355, %v793
    %v1358 = vmul.f32 %v1356, %v798
    %v1359 = vmax.f32 %v1357, 0.0
    %v1360 = vmax.f32 %v1358, 0.0
    %v1361 = vsel %vm487, %v1359, 0.0
    %v1362 = vsel %vm487, %v1360, 0.0
    %v1363 = vadd.f32 %v1361, %v1362
    %v1364 = vrot.slane %v1363, 4
    %v1365 = vadd.f32 %v1363, %v1364
    %v1366 = vrot.slane %v1365, 2
    %v1367 = vadd.f32 %v1365, %v1366
    %v1368 = vrot.slane %v1367, 1
    %v1369 = vadd.f32 %v1367, %v1368
    %v1370 = vmul.f32 %v1369, %v813
    %v1371 = vmul.f32 %v1359, %v1359
    %v1372 = vmul.f32 %v1360, %v1360
    %v1373 = vsel %vm487, %v1371, 0.0
    %v1374 = vsel %vm487, %v1372, 0.0
    %v1375 = vadd.f32 %v1373, %v1374
    %v1376 = vrot.slane %v1375, 4
    %v1377 = vadd.f32 %v1375, %v1376
    %v1378 = vrot.slane %v1377, 2
    %v1379 = vadd.f32 %v1377, %v1378
    %v1380 = vrot.slane %v1379, 1
    %v1381 = vadd.f32 %v1379, %v1380
    %v1382 = vmul.f32 %v1381, %v813
    %v1383 = vmul.f32 %v1370, %v1370
    %v1384 = vsub.f32 %v1382, %v1383
    %v1385 = vmax.f32 %v1384, 0.0
    %v1386 = vadd.f32 %v1385, 1e-05
    %v1387 = vrsqrt.pop %v1386
    %v1388 = vmul.f32 %v1387, %v649
    %v1389 = vlaneseq
    %v1390 = vshrl.u32 %v1389, 7
    %v1391 = vsub.s32 1, %v1390
    %v1392 = vrot.slane %v1388, %v1391
    %v1393 = vmul.f32 %v1359, %v1392
    %v1394 = vmul.f32 %v1360, %v1392
    %v1395 = vmul.f32 %v1370, %v1388
    %v1397 = vrot.slane %v1395, 7
    %v1399 = vsub.f32 %v649, %v1397
    %v1400 = vlaneseq
    %v1401 = vshrl.u32 %v1400, 7
    %v1402 = vsub.s32 2, %v1401
    %v1403 = vrot.slane %v1399, %v1402
    %v1404 = vadd.f32 %v1393, %v1403
    %v1405 = vadd.f32 %v1394, %v1403
    %v1406 = vld [vmem:[#allocation9] sm:$0xf]
    %v1407 = vld [vmem:[#allocation9 + $0x4] sm:$0xf]
    %v1408 = vld [vmem:[#allocation9 + $0x8] sm:$0xf]
    %v1409 = vld [vmem:[#allocation9 + $0xc] sm:$0xf]
    %v1410 = vld [vmem:[#allocation9 + $0x10] sm:$0xf]
    %v1411 = vld [vmem:[#allocation9 + $0x14] sm:$0xf]
    %v1412 = vld [vmem:[#allocation9 + $0x18] sm:$0xf]
    %v1413 = vld [vmem:[#allocation9 + $0x1c] sm:$0xf]
    %v1418 = vunpack.c.l.b16 %v1410
    %v1419 = vunpack.c.l.b16 %v1411
    %v1420 = vunpack.c.l.b16 %v1412
    %v1421 = vunpack.c.l.b16 %v1413
    %v1422 = vpack.c.b16 %v1419, %v1418
    %v1423 = vpack.c.b16 %v1421, %v1420
    %1426 = vmatprep.subr.bf16.mxu0 0
    %1427 = vmatpush1.bf16.msra.mxu0 %v1422
    %1428 = vmatprep.subr.bf16.mxu0 0
    %1429 = vmatpush1.bf16.msra.mxu0 %v1423
    %1430 = vmatprep.subr.bf16.mxu0 0
    %1431 = vmatpush1.bf16.msra.mxu0 0
    %1432 = vmatprep.subr.bf16.mxu0 0
    %1433 = vmatpush1.bf16.msra.mxu0 0
    %1434 = vmatprep.subr.bf16.mxu0 0
    %1435 = vmatpush1.bf16.msra.mxu0 0
    %1436 = vmatprep.subr.bf16.mxu0 0
    %1437 = vmatpush1.bf16.msra.mxu0 0
    %1438 = vmatprep.subr.bf16.mxu0 0
    %1439 = vmatpush1.bf16.msra.mxu0 0
    %1440 = vmatprep.subr.bf16.mxu0 0
    %1441 = vmatpush1.bf16.msra.mxu0 0
    %1442 = vmatprep.subr.bf16.mxu0 0
    %1443 = vmatpush1.bf16.msra.mxu0 0
    %1444 = vmatprep.subr.bf16.mxu0 0
    %1445 = vmatpush1.bf16.msra.mxu0 0
    %1446 = vmatprep.subr.bf16.mxu0 0
    %1447 = vmatpush1.bf16.msra.mxu0 0
    %1448 = vmatprep.subr.bf16.mxu0 0
    %1449 = vmatpush1.bf16.msra.mxu0 0
    %1450 = vmatprep.subr.bf16.mxu0 0
    %1451 = vmatpush1.bf16.msra.mxu0 0
    %1452 = vmatprep.subr.bf16.mxu0 0
    %1453 = vmatpush1.bf16.msra.mxu0 0
    %1454 = vmatprep.subr.bf16.mxu0 0
    %1455 = vmatpush1.bf16.msra.mxu0 0
    %1456 = vmatprep.subr.bf16.mxu0 0
    %1457 = vmatpush1.bf16.msra.mxu0 0
    %1458 = vmatprep.mubr.bf16.mxu0 0
    %1459 = vmatmul.mubr.bf16.gmra.mrb[0].mxu0 %v1247
    %v1460 = vpop.f32.mrb[0].mxu0
    %v1461 = vadd.f32 0.0, %v1460
    %v1462 = vpop.f32.mrb[0].mxu0
    %v1463 = vpop.f32.mrb[0].mxu0
    %v1464 = vadd.f32 0.0, %v1463
    %v1465 = vpop.f32.mrb[0].mxu0
    %1466 = vdwg.mxu0
    %v1471 = vunpack.c.l.b16 %v1406
    %v1472 = vunpack.c.l.b16 %v1407
    %v1473 = vunpack.c.l.b16 %v1408
    %v1474 = vunpack.c.l.b16 %v1409
    %v1475 = vpack.c.b16 %v1472, %v1471
    %v1476 = vpack.c.b16 %v1474, %v1473
    %1479 = vmatprep.subr.bf16.mxu0 0
    %1480 = vmatpush1.bf16.msra.mxu0 %v1475
    %1481 = vmatprep.subr.bf16.mxu0 0
    %1482 = vmatpush1.bf16.msra.mxu0 %v1476
    %1483 = vmatprep.subr.bf16.mxu0 0
    %1484 = vmatpush1.bf16.msra.mxu0 0
    %1485 = vmatprep.subr.bf16.mxu0 0
    %1486 = vmatpush1.bf16.msra.mxu0 0
    %1487 = vmatprep.subr.bf16.mxu0 0
    %1488 = vmatpush1.bf16.msra.mxu0 0
    %1489 = vmatprep.subr.bf16.mxu0 0
    %1490 = vmatpush1.bf16.msra.mxu0 0
    %1491 = vmatprep.subr.bf16.mxu0 0
    %1492 = vmatpush1.bf16.msra.mxu0 0
    %1493 = vmatprep.subr.bf16.mxu0 0
    %1494 = vmatpush1.bf16.msra.mxu0 0
    %1495 = vmatprep.subr.bf16.mxu0 0
    %1496 = vmatpush1.bf16.msra.mxu0 0
    %1497 = vmatprep.subr.bf16.mxu0 0
    %1498 = vmatpush1.bf16.msra.mxu0 0
    %1499 = vmatprep.subr.bf16.mxu0 0
    %1500 = vmatpush1.bf16.msra.mxu0 0
    %1501 = vmatprep.subr.bf16.mxu0 0
    %1502 = vmatpush1.bf16.msra.mxu0 0
    %1503 = vmatprep.subr.bf16.mxu0 0
    %1504 = vmatpush1.bf16.msra.mxu0 0
    %1505 = vmatprep.subr.bf16.mxu0 0
    %1506 = vmatpush1.bf16.msra.mxu0 0
    %1507 = vmatprep.subr.bf16.mxu0 0
    %1508 = vmatpush1.bf16.msra.mxu0 0
    %1509 = vmatprep.subr.bf16.mxu0 0
    %1510 = vmatpush1.bf16.msra.mxu0 0
    %1511 = vmatprep.mubr.bf16.mxu0 0
    %1512 = vmatmul.mubr.bf16.gmra.mrb[0].mxu0 %v969
    %v1513 = vpop.f32.mrb[0].mxu0
    %v1514 = vadd.f32 %v1461, %v1513
    %v1515 = vpop.f32.mrb[0].mxu0
    %v1516 = vpop.f32.mrb[0].mxu0
    %v1517 = vadd.f32 %v1464, %v1516
    %v1518 = vpop.f32.mrb[0].mxu0
    %1519 = vdwg.mxu0
    %v1520 = vld [vmem:[#allocation9 + $0x20] sm:$0xf]
    %v1521 = vpack.c.bf16 %v1404, %v1404
    %v1522 = vpack.c.bf16 %v1405, %v1405
    %v1525 = vunpack.c.l.b16 %v1521
    %v1526 = vunpack.c.l.b16 %v1522
    %v1527 = vpack.c.b16 %v1526, %v1525
    %v1529 = vsel %vm487, %v1527, 0
    %v1532 = vsel %vm491, %v1520, 0
    %1534 = vmatprep.subr.bf16.mxu0 0
    %1535 = vmatpush1.bf16.msra.mxu0 %v1532
    %1536 = vmatprep.subr.bf16.mxu0 0
    %1537 = vmatpush1.bf16.msra.mxu0 0
    %1538 = vmatprep.subr.bf16.mxu0 0
    %1539 = vmatpush1.bf16.msra.mxu0 0
    %1540 = vmatprep.subr.bf16.mxu0 0
    %1541 = vmatpush1.bf16.msra.mxu0 0
    %1542 = vmatprep.subr.bf16.mxu0 0
    %1543 = vmatpush1.bf16.msra.mxu0 0
    %1544 = vmatprep.subr.bf16.mxu0 0
    %1545 = vmatpush1.bf16.msra.mxu0 0
    %1546 = vmatprep.subr.bf16.mxu0 0
    %1547 = vmatpush1.bf16.msra.mxu0 0
    %1548 = vmatprep.subr.bf16.mxu0 0
    %1549 = vmatpush1.bf16.msra.mxu0 0
    %1550 = vmatprep.subr.bf16.mxu0 0
    %1551 = vmatpush1.bf16.msra.mxu0 0
    %1552 = vmatprep.subr.bf16.mxu0 0
    %1553 = vmatpush1.bf16.msra.mxu0 0
    %1554 = vmatprep.subr.bf16.mxu0 0
    %1555 = vmatpush1.bf16.msra.mxu0 0
    %1556 = vmatprep.subr.bf16.mxu0 0
    %1557 = vmatpush1.bf16.msra.mxu0 0
    %1558 = vmatprep.subr.bf16.mxu0 0
    %1559 = vmatpush1.bf16.msra.mxu0 0
    %1560 = vmatprep.subr.bf16.mxu0 0
    %1561 = vmatpush1.bf16.msra.mxu0 0
    %1562 = vmatprep.subr.bf16.mxu0 0
    %1563 = vmatpush1.bf16.msra.mxu0 0
    %1564 = vmatprep.subr.bf16.mxu0 0
    %1565 = vmatpush1.bf16.msra.mxu0 0
    %1566 = vmatprep.mubr.bf16.mxu0 0
    %1567 = vmatmul.mubr.bf16.gmra.mrb[0].mxu0 %v1529
    %v1568 = vpop.f32.mrb[0].mxu0
    %v1569 = vadd.f32 0.0, %v1568
    %v1570 = vpop.f32.mrb[0].mxu0
    %v1571 = vpop.f32.mrb[0].mxu0
    %v1572 = vadd.f32 0.0, %v1571
    %v1573 = vpop.f32.mrb[0].mxu0
    %1574 = vdwg.mxu0
    %v1575 = vadd.f32 %v1514, %v1569
    %v1576 = vadd.f32 %v1517, %v1572
    %v1577 = vld [vmem:[#allocation12 + $0x3] sm:$0x1]
    %v1578 = vlaneseq
    %v1579 = vshrl.u32 %v1578, 7
    %v1580 = vsub.s32 0, %v1579
    %v1581 = vrot.slane %v1577, %v1580
    %v1582 = vadd.f32 %v1575, %v1581
    %v1583 = vadd.f32 %v1576, %v1581
    %v1584 = vmax.f32 %v1582, 0.0
    %v1585 = vmax.f32 %v1583, 0.0
    %v1586 = vld [vmem:[#allocation18] sm:$0x7]
    %s1587 = scalar_lea.vmem [#allocation18], 4
    %v1588 = vld [vmem:[%s1587] sm:$0x7]
    %s1589 = scalar_lea.vmem [#allocation18], 8
    %v1590 = vld [vmem:[%s1589] sm:$0x7]
    %v1591 = vld [vmem:[#allocation13] sm:$0xf]
    %v1592 = vld [vmem:[#allocation13 + $0x4] sm:$0xf]
    %v1593 = vld [vmem:[#allocation13 + $0x8] sm:$0xf]
    %v1594 = vld [vmem:[#allocation13 + $0xc] sm:$0xf]
    %s1595 = scalar_lea.vmem [#allocation13], 16
    %v1596 = vld [vmem:[%s1595] sm:$0xf]
    %v1597 = vld [vmem:[%s1595 + $0x4] sm:$0xf]
    %v1598 = vld [vmem:[%s1595 + $0x8] sm:$0xf]
    %v1599 = vld [vmem:[%s1595 + $0xc] sm:$0xf]
    %v1604 = vunpack.c.l.b16 %v1596
    %v1605 = vunpack.c.l.b16 %v1597
    %v1606 = vunpack.c.l.b16 %v1598
    %v1607 = vunpack.c.l.b16 %v1599
    %v1608 = vpack.c.b16 %v1605, %v1604
    %v1609 = vpack.c.b16 %v1607, %v1606
    %1612 = vmatprep.subr.bf16.mxu0 0
    %1613 = vmatpush1.bf16.msra.mxu0 %v1608
    %1614 = vmatprep.subr.bf16.mxu0 0
    %1615 = vmatpush1.bf16.msra.mxu0 %v1609
    %1616 = vmatprep.subr.bf16.mxu0 0
    %1617 = vmatpush1.bf16.msra.mxu0 0
    %1618 = vmatprep.subr.bf16.mxu0 0
    %1619 = vmatpush1.bf16.msra.mxu0 0
    %1620 = vmatprep.subr.bf16.mxu0 0
    %1621 = vmatpush1.bf16.msra.mxu0 0
    %1622 = vmatprep.subr.bf16.mxu0 0
    %1623 = vmatpush1.bf16.msra.mxu0 0
    %1624 = vmatprep.subr.bf16.mxu0 0
    %1625 = vmatpush1.bf16.msra.mxu0 0
    %1626 = vmatprep.subr.bf16.mxu0 0
    %1627 = vmatpush1.bf16.msra.mxu0 0
    %1628 = vmatprep.subr.bf16.mxu0 0
    %1629 = vmatpush1.bf16.msra.mxu0 0
    %1630 = vmatprep.subr.bf16.mxu0 0
    %1631 = vmatpush1.bf16.msra.mxu0 0
    %1632 = vmatprep.subr.bf16.mxu0 0
    %1633 = vmatpush1.bf16.msra.mxu0 0
    %1634 = vmatprep.subr.bf16.mxu0 0
    %1635 = vmatpush1.bf16.msra.mxu0 0
    %1636 = vmatprep.subr.bf16.mxu0 0
    %1637 = vmatpush1.bf16.msra.mxu0 0
    %1638 = vmatprep.subr.bf16.mxu0 0
    %1639 = vmatpush1.bf16.msra.mxu0 0
    %1640 = vmatprep.subr.bf16.mxu0 0
    %1641 = vmatpush1.bf16.msra.mxu0 0
    %1642 = vmatprep.subr.bf16.mxu0 0
    %1643 = vmatpush1.bf16.msra.mxu0 0
    %1644 = vmatprep.mubr.bf16.mxu0 0
    %1645 = vmatmul.mubr.bf16.gmra.mrb[0].mxu0 %v680
    %v1646 = vpop.f32.mrb[0].mxu0
    %v1647 = vadd.f32 0.0, %v1646
    %v1648 = vpop.f32.mrb[0].mxu0
    %v1649 = vpop.f32.mrb[0].mxu0
    %v1650 = vadd.f32 0.0, %v1649
    %v1651 = vpop.f32.mrb[0].mxu0
    %1652 = vdwg.mxu0
    %v1657 = vunpack.c.l.b16 %v1591
    %v1658 = vunpack.c.l.b16 %v1592
    %v1659 = vunpack.c.l.b16 %v1593
    %v1660 = vunpack.c.l.b16 %v1594
    %v1661 = vpack.c.b16 %v1658, %v1657
    %v1662 = vpack.c.b16 %v1660, %v1659
    %1665 = vmatprep.subr.bf16.mxu0 0
    %1666 = vmatpush1.bf16.msra.mxu0 %v1661
    %1667 = vmatprep.subr.bf16.mxu0 0
    %1668 = vmatpush1.bf16.msra.mxu0 %v1662
    %1669 = vmatprep.subr.bf16.mxu0 0
    %1670 = vmatpush1.bf16.msra.mxu0 0
    %1671 = vmatprep.subr.bf16.mxu0 0
    %1672 = vmatpush1.bf16.msra.mxu0 0
    %1673 = vmatprep.subr.bf16.mxu0 0
    %1674 = vmatpush1.bf16.msra.mxu0 0
    %1675 = vmatprep.subr.bf16.mxu0 0
    %1676 = vmatpush1.bf16.msra.mxu0 0
    %1677 = vmatprep.subr.bf16.mxu0 0
    %1678 = vmatpush1.bf16.msra.mxu0 0
    %1679 = vmatprep.subr.bf16.mxu0 0
    %1680 = vmatpush1.bf16.msra.mxu0 0
    %1681 = vmatprep.subr.bf16.mxu0 0
    %1682 = vmatpush1.bf16.msra.mxu0 0
    %1683 = vmatprep.subr.bf16.mxu0 0
    %1684 = vmatpush1.bf16.msra.mxu0 0
    %1685 = vmatprep.subr.bf16.mxu0 0
    %1686 = vmatpush1.bf16.msra.mxu0 0
    %1687 = vmatprep.subr.bf16.mxu0 0
    %1688 = vmatpush1.bf16.msra.mxu0 0
    %1689 = vmatprep.subr.bf16.mxu0 0
    %1690 = vmatpush1.bf16.msra.mxu0 0
    %1691 = vmatprep.subr.bf16.mxu0 0
    %1692 = vmatpush1.bf16.msra.mxu0 0
    %1693 = vmatprep.subr.bf16.mxu0 0
    %1694 = vmatpush1.bf16.msra.mxu0 0
    %1695 = vmatprep.subr.bf16.mxu0 0
    %1696 = vmatpush1.bf16.msra.mxu0 0
    %1697 = vmatprep.mubr.bf16.mxu0 0
    %1698 = vmatmul.mubr.bf16.gmra.mrb[0].mxu0 %v741
    %v1699 = vpop.f32.mrb[0].mxu0
    %v1700 = vadd.f32 %v1647, %v1699
    %v1701 = vpop.f32.mrb[0].mxu0
    %v1702 = vpop.f32.mrb[0].mxu0
    %v1703 = vadd.f32 %v1650, %v1702
    %v1704 = vpop.f32.mrb[0].mxu0
    %1705 = vdwg.mxu0
    %v1706 = vlaneseq
    %v1707 = vshrl.u32 %v1706, 7
    %v1708 = vsub.s32 0, %v1707
    %v1709 = vrot.slane %v1586, %v1708
    %v1710 = vadd.f32 %v1700, %v1709
    %v1711 = vadd.f32 %v1703, %v1709
    %v1712 = vmul.f32 %v1710, %v793
    %v1713 = vmul.f32 %v1711, %v798
    %v1714 = vmax.f32 %v1712, 0.0
    %v1715 = vmax.f32 %v1713, 0.0
    %v1716 = vsel %vm678, %v1714, 0.0
    %v1717 = vsel %vm678, %v1715, 0.0
    %v1718 = vadd.f32 %v1716, %v1717
    %v1719 = vrot.slane %v1718, 4
    %v1720 = vadd.f32 %v1718, %v1719
    %v1721 = vrot.slane %v1720, 2
    %v1722 = vadd.f32 %v1720, %v1721
    %v1723 = vrot.slane %v1722, 1
    %v1724 = vadd.f32 %v1722, %v1723
    %v1725 = vmul.f32 %v1724, %v813
    %v1726 = vmul.f32 %v1714, %v1714
    %v1727 = vmul.f32 %v1715, %v1715
    %v1728 = vsel %vm678, %v1726, 0.0
    %v1729 = vsel %vm678, %v1727, 0.0
    %v1730 = vadd.f32 %v1728, %v1729
    %v1731 = vrot.slane %v1730, 4
    %v1732 = vadd.f32 %v1730, %v1731
    %v1733 = vrot.slane %v1732, 2
    %v1734 = vadd.f32 %v1732, %v1733
    %v1735 = vrot.slane %v1734, 1
    %v1736 = vadd.f32 %v1734, %v1735
    %v1737 = vmul.f32 %v1736, %v813
    %v1738 = vmul.f32 %v1725, %v1725
    %v1739 = vsub.f32 %v1737, %v1738
    %v1740 = vmax.f32 %v1739, 0.0
    %v1741 = vadd.f32 %v1740, 1e-05
    %v1742 = vrsqrt.pop %v1741
    %v1743 = vmul.f32 %v1742, %v1586
    %v1744 = vlaneseq
    %v1745 = vshrl.u32 %v1744, 7
    %v1746 = vsub.s32 1, %v1745
    %v1747 = vrot.slane %v1743, %v1746
    %v1748 = vmul.f32 %v1714, %v1747
    %v1749 = vmul.f32 %v1715, %v1747
    %v1750 = vmul.f32 %v1725, %v1743
    %v1752 = vrot.slane %v1750, 7
    %v1754 = vsub.f32 %v1586, %v1752
    %v1755 = vlaneseq
    %v1756 = vshrl.u32 %v1755, 7
    %v1757 = vsub.s32 2, %v1756
    %v1758 = vrot.slane %v1754, %v1757
    %v1759 = vadd.f32 %v1748, %v1758
    %v1760 = vadd.f32 %v1749, %v1758
    %v1761 = vpack.c.bf16 %v1759, %v1759
    %v1762 = vpack.c.bf16 %v1760, %v1760
    %v1764 = vsel %vm491, %v1761, 0
    %1766 = vmatprep.subr.bf16.mxu0 0
    %1767 = vmatpush1.bf16.msra.mxu0 %v1764
    %1768 = vmatprep.subr.bf16.mxu0 0
    %1769 = vmatpush1.bf16.msra.mxu0 0
    %1770 = vmatprep.subr.bf16.mxu0 0
    %1771 = vmatpush1.bf16.msra.mxu0 0
    %1772 = vmatprep.subr.bf16.mxu0 0
    %1773 = vmatpush1.bf16.msra.mxu0 0
    %1774 = vmatprep.subr.bf16.mxu0 0
    %1775 = vmatpush1.bf16.msra.mxu0 0
    %1776 = vmatprep.subr.bf16.mxu0 0
    %1777 = vmatpush1.bf16.msra.mxu0 0
    %1778 = vmatprep.subr.bf16.mxu0 0
    %1779 = vmatpush1.bf16.msra.mxu0 0
    %1780 = vmatprep.subr.bf16.mxu0 0
    %1781 = vmatpush1.bf16.msra.mxu0 0
    %1782 = vmatprep.subr.bf16.mxu0 0
    %1783 = vmatpush1.bf16.msra.mxu0 0
    %1784 = vmatprep.subr.bf16.mxu0 0
    %1785 = vmatpush1.bf16.msra.mxu0 0
    %1786 = vmatprep.subr.bf16.mxu0 0
    %1787 = vmatpush1.bf16.msra.mxu0 0
    %1788 = vmatprep.subr.bf16.mxu0 0
    %1789 = vmatpush1.bf16.msra.mxu0 0
    %1790 = vmatprep.subr.bf16.mxu0 0
    %1791 = vmatpush1.bf16.msra.mxu0 0
    %1792 = vmatprep.subr.bf16.mxu0 0
    %1793 = vmatpush1.bf16.msra.mxu0 0
    %1794 = vmatprep.subr.bf16.mxu0 0
    %1795 = vmatpush1.bf16.msra.mxu0 0
    %1796 = vmatprep.subr.bf16.mxu0 0
    %1797 = vmatpush1.bf16.msra.mxu0 0
    %1798 = vmatprep.mubr.bf16.mxu0 0
    %1799 = vmatmul.mubr.bf16.gmra.mrb[0].mxu0 %v543
    %v1800 = vpop.f32.mrb[0].mxu0
    %v1801 = vadd.f32 0.0, %v1800
    %v1802 = vpop.f32.mrb[0].mxu0
    %v1803 = vpop.f32.mrb[0].mxu0
    %v1804 = vpop.f32.mrb[0].mxu0
    %1805 = vdwg.mxu0
    %v1807 = vsel %vm491, %v1762, 0
    %1809 = vmatprep.subr.bf16.mxu0 0
    %1810 = vmatpush1.bf16.msra.mxu0 %v1807
    %1811 = vmatprep.subr.bf16.mxu0 0
    %1812 = vmatpush1.bf16.msra.mxu0 0
    %1813 = vmatprep.subr.bf16.mxu0 0
    %1814 = vmatpush1.bf16.msra.mxu0 0
    %1815 = vmatprep.subr.bf16.mxu0 0
    %1816 = vmatpush1.bf16.msra.mxu0 0
    %1817 = vmatprep.subr.bf16.mxu0 0
    %1818 = vmatpush1.bf16.msra.mxu0 0
    %1819 = vmatprep.subr.bf16.mxu0 0
    %1820 = vmatpush1.bf16.msra.mxu0 0
    %1821 = vmatprep.subr.bf16.mxu0 0
    %1822 = vmatpush1.bf16.msra.mxu0 0
    %1823 = vmatprep.subr.bf16.mxu0 0
    %1824 = vmatpush1.bf16.msra.mxu0 0
    %1825 = vmatprep.subr.bf16.mxu0 0
    %1826 = vmatpush1.bf16.msra.mxu0 0
    %1827 = vmatprep.subr.bf16.mxu0 0
    %1828 = vmatpush1.bf16.msra.mxu0 0
    %1829 = vmatprep.subr.bf16.mxu0 0
    %1830 = vmatpush1.bf16.msra.mxu0 0
    %1831 = vmatprep.subr.bf16.mxu0 0
    %1832 = vmatpush1.bf16.msra.mxu0 0
    %1833 = vmatprep.subr.bf16.mxu0 0
    %1834 = vmatpush1.bf16.msra.mxu0 0
    %1835 = vmatprep.subr.bf16.mxu0 0
    %1836 = vmatpush1.bf16.msra.mxu0 0
    %1837 = vmatprep.subr.bf16.mxu0 0
    %1838 = vmatpush1.bf16.msra.mxu0 0
    %1839 = vmatprep.subr.bf16.mxu0 0
    %1840 = vmatpush1.bf16.msra.mxu0 0
    %1841 = vmatprep.mubr.bf16.mxu0 0
    %1842 = vmatmul.mubr.bf16.gmra.mrb[0].mxu0 %v589
    %v1843 = vpop.f32.mrb[0].mxu0
    %v1844 = vadd.f32 0.0, %v1843
    %v1845 = vpop.f32.mrb[0].mxu0
    %v1846 = vpop.f32.mrb[0].mxu0
    %v1847 = vpop.f32.mrb[0].mxu0
    %1848 = vdwg.mxu0
    %v1849 = vmul.f32 %v1801, %v637
    %v1850 = vmul.f32 %v1844, %v642
    %v1851 = vld [vmem:[#allocation15] sm:$0xf]
    %v1852 = vld [vmem:[#allocation15 + $0x4] sm:$0xf]
    %v1853 = vld [vmem:[#allocation15 + $0x8] sm:$0xf]
    %v1854 = vld [vmem:[#allocation15 + $0xc] sm:$0xf]
    %v1855 = vpack.c.bf16 %v1849, %v1849
    %v1856 = vpack.c.bf16 %v1850, %v1850
    %s1857 = scalar_lea.vmem [#allocation15], 16
    %v1858 = vld [vmem:[%s1857] sm:$0xf]
    %v1859 = vld [vmem:[%s1857 + $0x4] sm:$0xf]
    %v1860 = vld [vmem:[%s1857 + $0x8] sm:$0xf]
    %v1861 = vld [vmem:[%s1857 + $0xc] sm:$0xf]
    %v1864 = vunpack.c.l.b16 %v1761
    %v1865 = vunpack.c.l.b16 %v1762
    %v1866 = vpack.c.b16 %v1865, %v1864
    %v1871 = vunpack.c.l.b16 %v1858
    %v1872 = vunpack.c.l.b16 %v1859
    %v1873 = vunpack.c.l.b16 %v1860
    %v1874 = vunpack.c.l.b16 %v1861
    %v1875 = vpack.c.b16 %v1872, %v1871
    %v1876 = vpack.c.b16 %v1874, %v1873
    %v1880 = vsel %vm678, %v1866, 0
    %1882 = vmatprep.subr.bf16.mxu0 0
    %1883 = vmatpush1.bf16.msra.mxu0 %v1875
    %1884 = vmatprep.subr.bf16.mxu0 0
    %1885 = vmatpush1.bf16.msra.mxu0 %v1876
    %1886 = vmatprep.subr.bf16.mxu0 0
    %1887 = vmatpush1.bf16.msra.mxu0 0
    %1888 = vmatprep.subr.bf16.mxu0 0
    %1889 = vmatpush1.bf16.msra.mxu0 0
    %1890 = vmatprep.subr.bf16.mxu0 0
    %1891 = vmatpush1.bf16.msra.mxu0 0
    %1892 = vmatprep.subr.bf16.mxu0 0
    %1893 = vmatpush1.bf16.msra.mxu0 0
    %1894 = vmatprep.subr.bf16.mxu0 0
    %1895 = vmatpush1.bf16.msra.mxu0 0
    %1896 = vmatprep.subr.bf16.mxu0 0
    %1897 = vmatpush1.bf16.msra.mxu0 0
    %1898 = vmatprep.subr.bf16.mxu0 0
    %1899 = vmatpush1.bf16.msra.mxu0 0
    %1900 = vmatprep.subr.bf16.mxu0 0
    %1901 = vmatpush1.bf16.msra.mxu0 0
    %1902 = vmatprep.subr.bf16.mxu0 0
    %1903 = vmatpush1.bf16.msra.mxu0 0
    %1904 = vmatprep.subr.bf16.mxu0 0
    %1905 = vmatpush1.bf16.msra.mxu0 0
    %1906 = vmatprep.subr.bf16.mxu0 0
    %1907 = vmatpush1.bf16.msra.mxu0 0
    %1908 = vmatprep.subr.bf16.mxu0 0
    %1909 = vmatpush1.bf16.msra.mxu0 0
    %1910 = vmatprep.subr.bf16.mxu0 0
    %1911 = vmatpush1.bf16.msra.mxu0 0
    %1912 = vmatprep.subr.bf16.mxu0 0
    %1913 = vmatpush1.bf16.msra.mxu0 0
    %1914 = vmatprep.mubr.bf16.mxu0 0
    %1915 = vmatmul.mubr.bf16.gmra.mrb[0].mxu0 %v1880
    %v1916 = vpop.f32.mrb[0].mxu0
    %v1917 = vadd.f32 0.0, %v1916
    %v1918 = vpop.f32.mrb[0].mxu0
    %v1919 = vpop.f32.mrb[0].mxu0
    %v1920 = vadd.f32 0.0, %v1919
    %v1921 = vpop.f32.mrb[0].mxu0
    %1922 = vdwg.mxu0
    %v1925 = vunpack.c.l.b16 %v1855
    %v1926 = vunpack.c.l.b16 %v1856
    %v1927 = vpack.c.b16 %v1926, %v1925
    %v1932 = vunpack.c.l.b16 %v1851
    %v1933 = vunpack.c.l.b16 %v1852
    %v1934 = vunpack.c.l.b16 %v1853
    %v1935 = vunpack.c.l.b16 %v1854
    %v1936 = vpack.c.b16 %v1933, %v1932
    %v1937 = vpack.c.b16 %v1935, %v1934
    %v1941 = vsel %vm678, %v1927, 0
    %1943 = vmatprep.subr.bf16.mxu0 0
    %1944 = vmatpush1.bf16.msra.mxu0 %v1936
    %1945 = vmatprep.subr.bf16.mxu0 0
    %1946 = vmatpush1.bf16.msra.mxu0 %v1937
    %1947 = vmatprep.subr.bf16.mxu0 0
    %1948 = vmatpush1.bf16.msra.mxu0 0
    %1949 = vmatprep.subr.bf16.mxu0 0
    %1950 = vmatpush1.bf16.msra.mxu0 0
    %1951 = vmatprep.subr.bf16.mxu0 0
    %1952 = vmatpush1.bf16.msra.mxu0 0
    %1953 = vmatprep.subr.bf16.mxu0 0
    %1954 = vmatpush1.bf16.msra.mxu0 0
    %1955 = vmatprep.subr.bf16.mxu0 0
    %1956 = vmatpush1.bf16.msra.mxu0 0
    %1957 = vmatprep.subr.bf16.mxu0 0
    %1958 = vmatpush1.bf16.msra.mxu0 0
    %1959 = vmatprep.subr.bf16.mxu0 0
    %1960 = vmatpush1.bf16.msra.mxu0 0
    %1961 = vmatprep.subr.bf16.mxu0 0
    %1962 = vmatpush1.bf16.msra.mxu0 0
    %1963 = vmatprep.subr.bf16.mxu0 0
    %1964 = vmatpush1.bf16.msra.mxu0 0
    %1965 = vmatprep.subr.bf16.mxu0 0
    %1966 = vmatpush1.bf16.msra.mxu0 0
    %1967 = vmatprep.subr.bf16.mxu0 0
    %1968 = vmatpush1.bf16.msra.mxu0 0
    %1969 = vmatprep.subr.bf16.mxu0 0
    %1970 = vmatpush1.bf16.msra.mxu0 0
    %1971 = vmatprep.subr.bf16.mxu0 0
    %1972 = vmatpush1.bf16.msra.mxu0 0
    %1973 = vmatprep.subr.bf16.mxu0 0
    %1974 = vmatpush1.bf16.msra.mxu0 0
    %1975 = vmatprep.mubr.bf16.mxu0 0
    %1976 = vmatmul.mubr.bf16.gmra.mrb[0].mxu0 %v1941
    %v1977 = vpop.f32.mrb[0].mxu0
    %v1978 = vadd.f32 %v1917, %v1977
    %v1979 = vpop.f32.mrb[0].mxu0
    %v1980 = vpop.f32.mrb[0].mxu0
    %v1981 = vadd.f32 %v1920, %v1980
    %v1982 = vpop.f32.mrb[0].mxu0
    %1983 = vdwg.mxu0
    %v1984 = vlaneseq
    %v1985 = vshrl.u32 %v1984, 7
    %v1986 = vsub.s32 0, %v1985
    %v1987 = vrot.slane %v1588, %v1986
    %v1988 = vadd.f32 %v1978, %v1987
    %v1989 = vadd.f32 %v1981, %v1987
    %v1990 = vmul.f32 %v1988, %v793
    %v1991 = vmul.f32 %v1989, %v798
    %v1992 = vmax.f32 %v1990, 0.0
    %v1993 = vmax.f32 %v1991, 0.0
    %v1994 = vsel %vm678, %v1992, 0.0
    %v1995 = vsel %vm678, %v1993, 0.0
    %v1996 = vadd.f32 %v1994, %v1995
    %v1997 = vrot.slane %v1996, 4
    %v1998 = vadd.f32 %v1996, %v1997
    %v1999 = vrot.slane %v1998, 2
    %v2000 = vadd.f32 %v1998, %v1999
    %v2001 = vrot.slane %v2000, 1
    %v2002 = vadd.f32 %v2000, %v2001
    %v2003 = vmul.f32 %v2002, %v813
    %v2004 = vmul.f32 %v1992, %v1992
    %v2005 = vmul.f32 %v1993, %v1993
    %v2006 = vsel %vm678, %v2004, 0.0
    %v2007 = vsel %vm678, %v2005, 0.0
    %v2008 = vadd.f32 %v2006, %v2007
    %v2009 = vrot.slane %v2008, 4
    %v2010 = vadd.f32 %v2008, %v2009
    %v2011 = vrot.slane %v2010, 2
    %v2012 = vadd.f32 %v2010, %v2011
    %v2013 = vrot.slane %v2012, 1
    %v2014 = vadd.f32 %v2012, %v2013
    %v2015 = vmul.f32 %v2014, %v813
    %v2016 = vmul.f32 %v2003, %v2003
    %v2017 = vsub.f32 %v2015, %v2016
    %v2018 = vmax.f32 %v2017, 0.0
    %v2019 = vadd.f32 %v2018, 1e-05
    %v2020 = vrsqrt.pop %v2019
    %v2021 = vmul.f32 %v2020, %v1588
    %v2022 = vlaneseq
    %v2023 = vshrl.u32 %v2022, 7
    %v2024 = vsub.s32 1, %v2023
    %v2025 = vrot.slane %v2021, %v2024
    %v2026 = vmul.f32 %v1992, %v2025
    %v2027 = vmul.f32 %v1993, %v2025
    %v2028 = vmul.f32 %v2003, %v2021
    %v2030 = vrot.slane %v2028, 7
    %v2032 = vsub.f32 %v1588, %v2030
    %v2033 = vlaneseq
    %v2034 = vshrl.u32 %v2033, 7
    %v2035 = vsub.s32 2, %v2034
    %v2036 = vrot.slane %v2032, %v2035
    %v2037 = vadd.f32 %v2026, %v2036
    %v2038 = vadd.f32 %v2027, %v2036
    %v2039 = vpack.c.bf16 %v2037, %v2037
    %v2040 = vpack.c.bf16 %v2038, %v2038
    %v2042 = vsel %vm491, %v2039, 0
    %2044 = vmatprep.subr.bf16.mxu0 0
    %2045 = vmatpush1.bf16.msra.mxu0 %v2042
    %2046 = vmatprep.subr.bf16.mxu0 0
    %2047 = vmatpush1.bf16.msra.mxu0 0
    %2048 = vmatprep.subr.bf16.mxu0 0
    %2049 = vmatpush1.bf16.msra.mxu0 0
    %2050 = vmatprep.subr.bf16.mxu0 0
    %2051 = vmatpush1.bf16.msra.mxu0 0
    %2052 = vmatprep.subr.bf16.mxu0 0
    %2053 = vmatpush1.bf16.msra.mxu0 0
    %2054 = vmatprep.subr.bf16.mxu0 0
    %2055 = vmatpush1.bf16.msra.mxu0 0
    %2056 = vmatprep.subr.bf16.mxu0 0
    %2057 = vmatpush1.bf16.msra.mxu0 0
    %2058 = vmatprep.subr.bf16.mxu0 0
    %2059 = vmatpush1.bf16.msra.mxu0 0
    %2060 = vmatprep.subr.bf16.mxu0 0
    %2061 = vmatpush1.bf16.msra.mxu0 0
    %2062 = vmatprep.subr.bf16.mxu0 0
    %2063 = vmatpush1.bf16.msra.mxu0 0
    %2064 = vmatprep.subr.bf16.mxu0 0
    %2065 = vmatpush1.bf16.msra.mxu0 0
    %2066 = vmatprep.subr.bf16.mxu0 0
    %2067 = vmatpush1.bf16.msra.mxu0 0
    %2068 = vmatprep.subr.bf16.mxu0 0
    %2069 = vmatpush1.bf16.msra.mxu0 0
    %2070 = vmatprep.subr.bf16.mxu0 0
    %2071 = vmatpush1.bf16.msra.mxu0 0
    %2072 = vmatprep.subr.bf16.mxu0 0
    %2073 = vmatpush1.bf16.msra.mxu0 0
    %2074 = vmatprep.subr.bf16.mxu0 0
    %2075 = vmatpush1.bf16.msra.mxu0 0
    %2076 = vmatprep.mubr.bf16.mxu0 0
    %2077 = vmatmul.mubr.bf16.gmra.mrb[0].mxu0 %v543
    %v2078 = vpop.f32.mrb[0].mxu0
    %v2079 = vadd.f32 0.0, %v2078
    %v2080 = vpop.f32.mrb[0].mxu0
    %v2081 = vpop.f32.mrb[0].mxu0
    %v2082 = vpop.f32.mrb[0].mxu0
    %2083 = vdwg.mxu0
    %v2085 = vsel %vm491, %v2040, 0
    %2087 = vmatprep.subr.bf16.mxu0 0
    %2088 = vmatpush1.bf16.msra.mxu0 %v2085
    %2089 = vmatprep.subr.bf16.mxu0 0
    %2090 = vmatpush1.bf16.msra.mxu0 0
    %2091 = vmatprep.subr.bf16.mxu0 0
    %2092 = vmatpush1.bf16.msra.mxu0 0
    %2093 = vmatprep.subr.bf16.mxu0 0
    %2094 = vmatpush1.bf16.msra.mxu0 0
    %2095 = vmatprep.subr.bf16.mxu0 0
    %2096 = vmatpush1.bf16.msra.mxu0 0
    %2097 = vmatprep.subr.bf16.mxu0 0
    %2098 = vmatpush1.bf16.msra.mxu0 0
    %2099 = vmatprep.subr.bf16.mxu0 0
    %2100 = vmatpush1.bf16.msra.mxu0 0
    %2101 = vmatprep.subr.bf16.mxu0 0
    %2102 = vmatpush1.bf16.msra.mxu0 0
    %2103 = vmatprep.subr.bf16.mxu0 0
    %2104 = vmatpush1.bf16.msra.mxu0 0
    %2105 = vmatprep.subr.bf16.mxu0 0
    %2106 = vmatpush1.bf16.msra.mxu0 0
    %2107 = vmatprep.subr.bf16.mxu0 0
    %2108 = vmatpush1.bf16.msra.mxu0 0
    %2109 = vmatprep.subr.bf16.mxu0 0
    %2110 = vmatpush1.bf16.msra.mxu0 0
    %2111 = vmatprep.subr.bf16.mxu0 0
    %2112 = vmatpush1.bf16.msra.mxu0 0
    %2113 = vmatprep.subr.bf16.mxu0 0
    %2114 = vmatpush1.bf16.msra.mxu0 0
    %2115 = vmatprep.subr.bf16.mxu0 0
    %2116 = vmatpush1.bf16.msra.mxu0 0
    %2117 = vmatprep.subr.bf16.mxu0 0
    %2118 = vmatpush1.bf16.msra.mxu0 0
    %2119 = vmatprep.mubr.bf16.mxu0 0
    %2120 = vmatmul.mubr.bf16.gmra.mrb[0].mxu0 %v589
    %v2121 = vpop.f32.mrb[0].mxu0
    %v2122 = vadd.f32 0.0, %v2121
    %v2123 = vpop.f32.mrb[0].mxu0
    %v2124 = vpop.f32.mrb[0].mxu0
    %v2125 = vpop.f32.mrb[0].mxu0
    %2126 = vdwg.mxu0
    %v2127 = vmul.f32 %v2079, %v637
    %v2128 = vmul.f32 %v2122, %v642
    %v2129 = vld [vmem:[#allocation16] sm:$0xf]
    %v2130 = vld [vmem:[#allocation16 + $0x4] sm:$0xf]
    %v2131 = vld [vmem:[#allocation16 + $0x8] sm:$0xf]
    %v2132 = vld [vmem:[#allocation16 + $0xc] sm:$0xf]
    %v2133 = vpack.c.bf16 %v2127, %v2127
    %v2134 = vpack.c.bf16 %v2128, %v2128
    %s2135 = scalar_lea.vmem [#allocation16], 16
    %v2136 = vld [vmem:[%s2135] sm:$0xf]
    %v2137 = vld [vmem:[%s2135 + $0x4] sm:$0xf]
    %v2138 = vld [vmem:[%s2135 + $0x8] sm:$0xf]
    %v2139 = vld [vmem:[%s2135 + $0xc] sm:$0xf]
    %v2142 = vunpack.c.l.b16 %v2039
    %v2143 = vunpack.c.l.b16 %v2040
    %v2144 = vpack.c.b16 %v2143, %v2142
    %v2149 = vunpack.c.l.b16 %v2136
    %v2150 = vunpack.c.l.b16 %v2137
    %v2151 = vunpack.c.l.b16 %v2138
    %v2152 = vunpack.c.l.b16 %v2139
    %v2153 = vpack.c.b16 %v2150, %v2149
    %v2154 = vpack.c.b16 %v2152, %v2151
    %v2158 = vsel %vm678, %v2144, 0
    %2160 = vmatprep.subr.bf16.mxu0 0
    %2161 = vmatpush1.bf16.msra.mxu0 %v2153
    %2162 = vmatprep.subr.bf16.mxu0 0
    %2163 = vmatpush1.bf16.msra.mxu0 %v2154
    %2164 = vmatprep.subr.bf16.mxu0 0
    %2165 = vmatpush1.bf16.msra.mxu0 0
    %2166 = vmatprep.subr.bf16.mxu0 0
    %2167 = vmatpush1.bf16.msra.mxu0 0
    %2168 = vmatprep.subr.bf16.mxu0 0
    %2169 = vmatpush1.bf16.msra.mxu0 0
    %2170 = vmatprep.subr.bf16.mxu0 0
    %2171 = vmatpush1.bf16.msra.mxu0 0
    %2172 = vmatprep.subr.bf16.mxu0 0
    %2173 = vmatpush1.bf16.msra.mxu0 0
    %2174 = vmatprep.subr.bf16.mxu0 0
    %2175 = vmatpush1.bf16.msra.mxu0 0
    %2176 = vmatprep.subr.bf16.mxu0 0
    %2177 = vmatpush1.bf16.msra.mxu0 0
    %2178 = vmatprep.subr.bf16.mxu0 0
    %2179 = vmatpush1.bf16.msra.mxu0 0
    %2180 = vmatprep.subr.bf16.mxu0 0
    %2181 = vmatpush1.bf16.msra.mxu0 0
    %2182 = vmatprep.subr.bf16.mxu0 0
    %2183 = vmatpush1.bf16.msra.mxu0 0
    %2184 = vmatprep.subr.bf16.mxu0 0
    %2185 = vmatpush1.bf16.msra.mxu0 0
    %2186 = vmatprep.subr.bf16.mxu0 0
    %2187 = vmatpush1.bf16.msra.mxu0 0
    %2188 = vmatprep.subr.bf16.mxu0 0
    %2189 = vmatpush1.bf16.msra.mxu0 0
    %2190 = vmatprep.subr.bf16.mxu0 0
    %2191 = vmatpush1.bf16.msra.mxu0 0
    %2192 = vmatprep.mubr.bf16.mxu0 0
    %2193 = vmatmul.mubr.bf16.gmra.mrb[0].mxu0 %v2158
    %v2194 = vpop.f32.mrb[0].mxu0
    %v2195 = vadd.f32 0.0, %v2194
    %v2196 = vpop.f32.mrb[0].mxu0
    %v2197 = vpop.f32.mrb[0].mxu0
    %v2198 = vadd.f32 0.0, %v2197
    %v2199 = vpop.f32.mrb[0].mxu0
    %2200 = vdwg.mxu0
    %v2203 = vunpack.c.l.b16 %v2133
    %v2204 = vunpack.c.l.b16 %v2134
    %v2205 = vpack.c.b16 %v2204, %v2203
    %v2210 = vunpack.c.l.b16 %v2129
    %v2211 = vunpack.c.l.b16 %v2130
    %v2212 = vunpack.c.l.b16 %v2131
    %v2213 = vunpack.c.l.b16 %v2132
    %v2214 = vpack.c.b16 %v2211, %v2210
    %v2215 = vpack.c.b16 %v2213, %v2212
    %v2219 = vsel %vm678, %v2205, 0
    %2221 = vmatprep.subr.bf16.mxu0 0
    %2222 = vmatpush1.bf16.msra.mxu0 %v2214
    %2223 = vmatprep.subr.bf16.mxu0 0
    %2224 = vmatpush1.bf16.msra.mxu0 %v2215
    %2225 = vmatprep.subr.bf16.mxu0 0
    %2226 = vmatpush1.bf16.msra.mxu0 0
    %2227 = vmatprep.subr.bf16.mxu0 0
    %2228 = vmatpush1.bf16.msra.mxu0 0
    %2229 = vmatprep.subr.bf16.mxu0 0
    %2230 = vmatpush1.bf16.msra.mxu0 0
    %2231 = vmatprep.subr.bf16.mxu0 0
    %2232 = vmatpush1.bf16.msra.mxu0 0
    %2233 = vmatprep.subr.bf16.mxu0 0
    %2234 = vmatpush1.bf16.msra.mxu0 0
    %2235 = vmatprep.subr.bf16.mxu0 0
    %2236 = vmatpush1.bf16.msra.mxu0 0
    %2237 = vmatprep.subr.bf16.mxu0 0
    %2238 = vmatpush1.bf16.msra.mxu0 0
    %2239 = vmatprep.subr.bf16.mxu0 0
    %2240 = vmatpush1.bf16.msra.mxu0 0
    %2241 = vmatprep.subr.bf16.mxu0 0
    %2242 = vmatpush1.bf16.msra.mxu0 0
    %2243 = vmatprep.subr.bf16.mxu0 0
    %2244 = vmatpush1.bf16.msra.mxu0 0
    %2245 = vmatprep.subr.bf16.mxu0 0
    %2246 = vmatpush1.bf16.msra.mxu0 0
    %2247 = vmatprep.subr.bf16.mxu0 0
    %2248 = vmatpush1.bf16.msra.mxu0 0
    %2249 = vmatprep.subr.bf16.mxu0 0
    %2250 = vmatpush1.bf16.msra.mxu0 0
    %2251 = vmatprep.subr.bf16.mxu0 0
    %2252 = vmatpush1.bf16.msra.mxu0 0
    %2253 = vmatprep.mubr.bf16.mxu0 0
    %2254 = vmatmul.mubr.bf16.gmra.mrb[0].mxu0 %v2219
    %v2255 = vpop.f32.mrb[0].mxu0
    %v2256 = vadd.f32 %v2195, %v2255
    %v2257 = vpop.f32.mrb[0].mxu0
    %v2258 = vpop.f32.mrb[0].mxu0
    %v2259 = vadd.f32 %v2198, %v2258
    %v2260 = vpop.f32.mrb[0].mxu0
    %2261 = vdwg.mxu0
    %v2262 = vlaneseq
    %v2263 = vshrl.u32 %v2262, 7
    %v2264 = vsub.s32 0, %v2263
    %v2265 = vrot.slane %v1590, %v2264
    %v2266 = vadd.f32 %v2256, %v2265
    %v2267 = vadd.f32 %v2259, %v2265
    %v2268 = vmul.f32 %v2266, %v793
    %v2269 = vmul.f32 %v2267, %v798
    %v2270 = vmax.f32 %v2268, 0.0
    %v2271 = vmax.f32 %v2269, 0.0
    %v2272 = vsel %vm678, %v2270, 0.0
    %v2273 = vsel %vm678, %v2271, 0.0
    %v2274 = vadd.f32 %v2272, %v2273
    %v2275 = vrot.slane %v2274, 4
    %v2276 = vadd.f32 %v2274, %v2275
    %v2277 = vrot.slane %v2276, 2
    %v2278 = vadd.f32 %v2276, %v2277
    %v2279 = vrot.slane %v2278, 1
    %v2280 = vadd.f32 %v2278, %v2279
    %v2281 = vmul.f32 %v2280, %v813
    %v2282 = vmul.f32 %v2270, %v2270
    %v2283 = vmul.f32 %v2271, %v2271
    %v2284 = vsel %vm678, %v2282, 0.0
    %v2285 = vsel %vm678, %v2283, 0.0
    %v2286 = vadd.f32 %v2284, %v2285
    %v2287 = vrot.slane %v2286, 4
    %v2288 = vadd.f32 %v2286, %v2287
    %v2289 = vrot.slane %v2288, 2
    %v2290 = vadd.f32 %v2288, %v2289
    %v2291 = vrot.slane %v2290, 1
    %v2292 = vadd.f32 %v2290, %v2291
    %v2293 = vmul.f32 %v2292, %v813
    %v2294 = vmul.f32 %v2281, %v2281
    %v2295 = vsub.f32 %v2293, %v2294
    %v2296 = vmax.f32 %v2295, 0.0
    %v2297 = vadd.f32 %v2296, 1e-05
    %v2298 = vrsqrt.pop %v2297
    %v2299 = vmul.f32 %v2298, %v1590
    %v2300 = vlaneseq
    %v2301 = vshrl.u32 %v2300, 7
    %v2302 = vsub.s32 1, %v2301
    %v2303 = vrot.slane %v2299, %v2302
    %v2304 = vmul.f32 %v2270, %v2303
    %v2305 = vmul.f32 %v2271, %v2303
    %v2306 = vmul.f32 %v2281, %v2299
    %v2308 = vrot.slane %v2306, 7
    %v2310 = vsub.f32 %v1590, %v2308
    %v2311 = vlaneseq
    %v2312 = vshrl.u32 %v2311, 7
    %v2313 = vsub.s32 2, %v2312
    %v2314 = vrot.slane %v2310, %v2313
    %v2315 = vadd.f32 %v2304, %v2314
    %v2316 = vadd.f32 %v2305, %v2314
    %v2317 = vsel %vm487, %v1584, -inf
    %2318 = vmax.xlane.f32.xlu0 %v2317
    %v2319 = vpop.xlane.xlu0 %2318
    %v2320 = vsel %vm487, %v1585, -inf
    %2321 = vmax.xlane.f32.xlu0 %v2320
    %v2322 = vpop.xlane.xlu0 %2321
    %v2323 = vsub.f32 %v1584, %v2319
    %v2324 = vsub.f32 %v1585, %v2322
    %v2325 = vmul.f32 %v2323, 1.442695
    %v2326 = vpow.pop %v2325
    %v2327 = vmul.f32 %v2324, 1.442695
    %v2328 = vpow.pop %v2327
    %v2329 = vsel %vm487, %v2326, 0.0
    %2330 = vadd.xlane.f32.xlu0 %v2329
    %v2331 = vpop.xlane.xlu0 %2330
    %v2332 = vsel %vm487, %v2328, 0.0
    %2333 = vadd.xlane.f32.xlu0 %v2332
    %v2334 = vpop.xlane.xlu0 %2333
    %v2335 = vrcp.pop %v2331
    %v2336 = vmul.f32 %v2326, %v2335
    %v2337 = vrcp.pop %v2334
    %v2338 = vmul.f32 %v2328, %v2337
    %v2339 = vmul.f32 %v2336, %v793
    %v2340 = vmul.f32 %v2338, %v798
    %v2341 = vpack.c.bf16 %v2339, %v2339
    %v2342 = vpack.c.bf16 %v2340, %v2340
    %2343 = vxpose.xlu0.c.b16.start [1/8] %v2341, 128
    %2344 = vxpose.xlu0.c.b16.cont [2/8] 0, 128
    %2345 = vxpose.xlu0.c.b16.cont [3/8] 0, 128
    %2346 = vxpose.xlu0.c.b16.cont [4/8] 0, 128
    %2347 = vxpose.xlu0.c.b16.cont [5/8] 0, 128
    %2348 = vxpose.xlu0.c.b16.cont [6/8] 0, 128
    %2349 = vxpose.xlu0.c.b16.cont [7/8] 0, 128
    %2350 = vxpose.xlu0.c.b16.end [8/8] 0, 128
    %v2351 = vpop.trf.xlu0
    %v2352 = vpop.trf.xlu0
    %v2353 = vpop.trf.xlu0
    %v2354 = vpop.trf.xlu0
    %v2355 = vpop.trf.xlu0
    %v2356 = vpop.trf.xlu0
    %v2357 = vpop.trf.xlu0
    %v2358 = vpop.trf.xlu0
    %v2360 = vsel %vm487, %v2351, 0
    %2362 = vmatprep.subr.bf16.mxu0 0
    %2363 = vmatpush1.bf16.msra.mxu0 %v1764
    %2364 = vmatprep.subr.bf16.mxu0 0
    %2365 = vmatpush1.bf16.msra.mxu0 0
    %2366 = vmatprep.subr.bf16.mxu0 0
    %2367 = vmatpush1.bf16.msra.mxu0 0
    %2368 = vmatprep.subr.bf16.mxu0 0
    %2369 = vmatpush1.bf16.msra.mxu0 0
    %2370 = vmatprep.subr.bf16.mxu0 0
    %2371 = vmatpush1.bf16.msra.mxu0 0
    %2372 = vmatprep.subr.bf16.mxu0 0
    %2373 = vmatpush1.bf16.msra.mxu0 0
    %2374 = vmatprep.subr.bf16.mxu0 0
    %2375 = vmatpush1.bf16.msra.mxu0 0
    %2376 = vmatprep.subr.bf16.mxu0 0
    %2377 = vmatpush1.bf16.msra.mxu0 0
    %2378 = vmatprep.subr.bf16.mxu0 0
    %2379 = vmatpush1.bf16.msra.mxu0 0
    %2380 = vmatprep.subr.bf16.mxu0 0
    %2381 = vmatpush1.bf16.msra.mxu0 0
    %2382 = vmatprep.subr.bf16.mxu0 0
    %2383 = vmatpush1.bf16.msra.mxu0 0
    %2384 = vmatprep.subr.bf16.mxu0 0
    %2385 = vmatpush1.bf16.msra.mxu0 0
    %2386 = vmatprep.subr.bf16.mxu0 0
    %2387 = vmatpush1.bf16.msra.mxu0 0
    %2388 = vmatprep.subr.bf16.mxu0 0
    %2389 = vmatpush1.bf16.msra.mxu0 0
    %2390 = vmatprep.subr.bf16.mxu0 0
    %2391 = vmatpush1.bf16.msra.mxu0 0
    %2392 = vmatprep.subr.bf16.mxu0 0
    %2393 = vmatpush1.bf16.msra.mxu0 0
    %2394 = vmatprep.mubr.bf16.mxu0 0
    %2395 = vmatmul.mubr.bf16.gmra.mrb[0].mxu0 %v2360
    %v2396 = vpop.f32.mrb[0].mxu0
    %v2397 = vadd.f32 0.0, %v2396
    %v2398 = vpop.f32.mrb[0].mxu0
    %v2399 = vpop.f32.mrb[0].mxu0
    %v2400 = vpop.f32.mrb[0].mxu0
    %2401 = vdwg.mxu0
    %2402 = vxpose.xlu0.c.b16.start [1/8] %v2342, 128
    %2403 = vxpose.xlu0.c.b16.cont [2/8] 0, 128
    %2404 = vxpose.xlu0.c.b16.cont [3/8] 0, 128
    %2405 = vxpose.xlu0.c.b16.cont [4/8] 0, 128
    %2406 = vxpose.xlu0.c.b16.cont [5/8] 0, 128
    %2407 = vxpose.xlu0.c.b16.cont [6/8] 0, 128
    %2408 = vxpose.xlu0.c.b16.cont [7/8] 0, 128
    %2409 = vxpose.xlu0.c.b16.end [8/8] 0, 128
    %v2410 = vpop.trf.xlu0
    %v2411 = vpop.trf.xlu0
    %v2412 = vpop.trf.xlu0
    %v2413 = vpop.trf.xlu0
    %v2414 = vpop.trf.xlu0
    %v2415 = vpop.trf.xlu0
    %v2416 = vpop.trf.xlu0
    %v2417 = vpop.trf.xlu0
    %v2419 = vsel %vm487, %v2410, 0
    %2421 = vmatprep.subr.bf16.mxu0 0
    %2422 = vmatpush1.bf16.msra.mxu0 %v1807
    %2423 = vmatprep.subr.bf16.mxu0 0
    %2424 = vmatpush1.bf16.msra.mxu0 0
    %2425 = vmatprep.subr.bf16.mxu0 0
    %2426 = vmatpush1.bf16.msra.mxu0 0
    %2427 = vmatprep.subr.bf16.mxu0 0
    %2428 = vmatpush1.bf16.msra.mxu0 0
    %2429 = vmatprep.subr.bf16.mxu0 0
    %2430 = vmatpush1.bf16.msra.mxu0 0
    %2431 = vmatprep.subr.bf16.mxu0 0
    %2432 = vmatpush1.bf16.msra.mxu0 0
    %2433 = vmatprep.subr.bf16.mxu0 0
    %2434 = vmatpush1.bf16.msra.mxu0 0
    %2435 = vmatprep.subr.bf16.mxu0 0
    %2436 = vmatpush1.bf16.msra.mxu0 0
    %2437 = vmatprep.subr.bf16.mxu0 0
    %2438 = vmatpush1.bf16.msra.mxu0 0
    %2439 = vmatprep.subr.bf16.mxu0 0
    %2440 = vmatpush1.bf16.msra.mxu0 0
    %2441 = vmatprep.subr.bf16.mxu0 0
    %2442 = vmatpush1.bf16.msra.mxu0 0
    %2443 = vmatprep.subr.bf16.mxu0 0
    %2444 = vmatpush1.bf16.msra.mxu0 0
    %2445 = vmatprep.subr.bf16.mxu0 0
    %2446 = vmatpush1.bf16.msra.mxu0 0
    %2447 = vmatprep.subr.bf16.mxu0 0
    %2448 = vmatpush1.bf16.msra.mxu0 0
    %2449 = vmatprep.subr.bf16.mxu0 0
    %2450 = vmatpush1.bf16.msra.mxu0 0
    %2451 = vmatprep.subr.bf16.mxu0 0
    %2452 = vmatpush1.bf16.msra.mxu0 0
    %2453 = vmatprep.mubr.bf16.mxu0 0
    %2454 = vmatmul.mubr.bf16.gmra.mrb[0].mxu0 %v2419
    %v2455 = vpop.f32.mrb[0].mxu0
    %v2456 = vadd.f32 0.0, %v2455
    %v2457 = vpop.f32.mrb[0].mxu0
    %v2458 = vpop.f32.mrb[0].mxu0
    %v2459 = vpop.f32.mrb[0].mxu0
    %2460 = vdwg.mxu0
    %2461 = vmatprep.subr.bf16.mxu0 0
    %2462 = vmatpush1.bf16.msra.mxu0 %v2042
    %2463 = vmatprep.subr.bf16.mxu0 0
    %2464 = vmatpush1.bf16.msra.mxu0 0
    %2465 = vmatprep.subr.bf16.mxu0 0
    %2466 = vmatpush1.bf16.msra.mxu0 0
    %2467 = vmatprep.subr.bf16.mxu0 0
    %2468 = vmatpush1.bf16.msra.mxu0 0
    %2469 = vmatprep.subr.bf16.mxu0 0
    %2470 = vmatpush1.bf16.msra.mxu0 0
    %2471 = vmatprep.subr.bf16.mxu0 0
    %2472 = vmatpush1.bf16.msra.mxu0 0
    %2473 = vmatprep.subr.bf16.mxu0 0
    %2474 = vmatpush1.bf16.msra.mxu0 0
    %2475 = vmatprep.subr.bf16.mxu0 0
    %2476 = vmatpush1.bf16.msra.mxu0 0
    %2477 = vmatprep.subr.bf16.mxu0 0
    %2478 = vmatpush1.bf16.msra.mxu0 0
    %2479 = vmatprep.subr.bf16.mxu0 0
    %2480 = vmatpush1.bf16.msra.mxu0 0
    %2481 = vmatprep.subr.bf16.mxu0 0
    %2482 = vmatpush1.bf16.msra.mxu0 0
    %2483 = vmatprep.subr.bf16.mxu0 0
    %2484 = vmatpush1.bf16.msra.mxu0 0
    %2485 = vmatprep.subr.bf16.mxu0 0
    %2486 = vmatpush1.bf16.msra.mxu0 0
    %2487 = vmatprep.subr.bf16.mxu0 0
    %2488 = vmatpush1.bf16.msra.mxu0 0
    %2489 = vmatprep.subr.bf16.mxu0 0
    %2490 = vmatpush1.bf16.msra.mxu0 0
    %2491 = vmatprep.subr.bf16.mxu0 0
    %2492 = vmatpush1.bf16.msra.mxu0 0
    %2493 = vmatprep.mubr.bf16.mxu0 0
    %2494 = vmatmul.mubr.bf16.gmra.mrb[0].mxu0 %v2360
    %v2495 = vpop.f32.mrb[0].mxu0
    %v2496 = vadd.f32 0.0, %v2495
    %v2497 = vpop.f32.mrb[0].mxu0
    %v2498 = vpop.f32.mrb[0].mxu0
    %v2499 = vpop.f32.mrb[0].mxu0
    %2500 = vdwg.mxu0
    %2501 = vmatprep.subr.bf16.mxu0 0
    %2502 = vmatpush1.bf16.msra.mxu0 %v2085
    %2503 = vmatprep.subr.bf16.mxu0 0
    %2504 = vmatpush1.bf16.msra.mxu0 0
    %2505 = vmatprep.subr.bf16.mxu0 0
    %2506 = vmatpush1.bf16.msra.mxu0 0
    %2507 = vmatprep.subr.bf16.mxu0 0
    %2508 = vmatpush1.bf16.msra.mxu0 0
    %2509 = vmatprep.subr.bf16.mxu0 0
    %2510 = vmatpush1.bf16.msra.mxu0 0
    %2511 = vmatprep.subr.bf16.mxu0 0
    %2512 = vmatpush1.bf16.msra.mxu0 0
    %2513 = vmatprep.subr.bf16.mxu0 0
    %2514 = vmatpush1.bf16.msra.mxu0 0
    %2515 = vmatprep.subr.bf16.mxu0 0
    %2516 = vmatpush1.bf16.msra.mxu0 0
    %2517 = vmatprep.subr.bf16.mxu0 0
    %2518 = vmatpush1.bf16.msra.mxu0 0
    %2519 = vmatprep.subr.bf16.mxu0 0
    %2520 = vmatpush1.bf16.msra.mxu0 0
    %2521 = vmatprep.subr.bf16.mxu0 0
    %2522 = vmatpush1.bf16.msra.mxu0 0
    %2523 = vmatprep.subr.bf16.mxu0 0
    %2524 = vmatpush1.bf16.msra.mxu0 0
    %2525 = vmatprep.subr.bf16.mxu0 0
    %2526 = vmatpush1.bf16.msra.mxu0 0
    %2527 = vmatprep.subr.bf16.mxu0 0
    %2528 = vmatpush1.bf16.msra.mxu0 0
    %2529 = vmatprep.subr.bf16.mxu0 0
    %2530 = vmatpush1.bf16.msra.mxu0 0
    %2531 = vmatprep.subr.bf16.mxu0 0
    %2532 = vmatpush1.bf16.msra.mxu0 0
    %2533 = vmatprep.mubr.bf16.mxu0 0
    %2534 = vmatmul.mubr.bf16.gmra.mrb[0].mxu0 %v2419
    %v2535 = vpop.f32.mrb[0].mxu0
    %v2536 = vadd.f32 0.0, %v2535
    %v2537 = vpop.f32.mrb[0].mxu0
    %v2538 = vpop.f32.mrb[0].mxu0
    %v2539 = vpop.f32.mrb[0].mxu0
    %2540 = vdwg.mxu0
    %v2541 = vpack.c.bf16 %v2315, %v2315
    %v2542 = vpack.c.bf16 %v2316, %v2316
    %v2544 = vsel %vm491, %v2541, 0
    %2546 = vmatprep.subr.bf16.mxu0 0
    %2547 = vmatpush1.bf16.msra.mxu0 %v2544
    %2548 = vmatprep.subr.bf16.mxu0 0
    %2549 = vmatpush1.bf16.msra.mxu0 0
    %2550 = vmatprep.subr.bf16.mxu0 0
    %2551 = vmatpush1.bf16.msra.mxu0 0
    %2552 = vmatprep.subr.bf16.mxu0 0
    %2553 = vmatpush1.bf16.msra.mxu0 0
    %2554 = vmatprep.subr.bf16.mxu0 0
    %2555 = vmatpush1.bf16.msra.mxu0 0
    %2556 = vmatprep.subr.bf16.mxu0 0
    %2557 = vmatpush1.bf16.msra.mxu0 0
    %2558 = vmatprep.subr.bf16.mxu0 0
    %2559 = vmatpush1.bf16.msra.mxu0 0
    %2560 = vmatprep.subr.bf16.mxu0 0
    %2561 = vmatpush1.bf16.msra.mxu0 0
    %2562 = vmatprep.subr.bf16.mxu0 0
    %2563 = vmatpush1.bf16.msra.mxu0 0
    %2564 = vmatprep.subr.bf16.mxu0 0
    %2565 = vmatpush1.bf16.msra.mxu0 0
    %2566 = vmatprep.subr.bf16.mxu0 0
    %2567 = vmatpush1.bf16.msra.mxu0 0
    %2568 = vmatprep.subr.bf16.mxu0 0
    %2569 = vmatpush1.bf16.msra.mxu0 0
    %2570 = vmatprep.subr.bf16.mxu0 0
    %2571 = vmatpush1.bf16.msra.mxu0 0
    %2572 = vmatprep.subr.bf16.mxu0 0
    %2573 = vmatpush1.bf16.msra.mxu0 0
    %2574 = vmatprep.subr.bf16.mxu0 0
    %2575 = vmatpush1.bf16.msra.mxu0 0
    %2576 = vmatprep.subr.bf16.mxu0 0
    %2577 = vmatpush1.bf16.msra.mxu0 0
    %2578 = vmatprep.mubr.bf16.mxu0 0
    %2579 = vmatmul.mubr.bf16.gmra.mrb[0].mxu0 %v2360
    %v2580 = vpop.f32.mrb[0].mxu0
    %v2581 = vadd.f32 0.0, %v2580
    %v2582 = vpop.f32.mrb[0].mxu0
    %v2583 = vpop.f32.mrb[0].mxu0
    %v2584 = vpop.f32.mrb[0].mxu0
    %2585 = vdwg.mxu0
    %v2587 = vsel %vm491, %v2542, 0
    %2589 = vmatprep.subr.bf16.mxu0 0
    %2590 = vmatpush1.bf16.msra.mxu0 %v2587
    %2591 = vmatprep.subr.bf16.mxu0 0
    %2592 = vmatpush1.bf16.msra.mxu0 0
    %2593 = vmatprep.subr.bf16.mxu0 0
    %2594 = vmatpush1.bf16.msra.mxu0 0
    %2595 = vmatprep.subr.bf16.mxu0 0
    %2596 = vmatpush1.bf16.msra.mxu0 0
    %2597 = vmatprep.subr.bf16.mxu0 0
    %2598 = vmatpush1.bf16.msra.mxu0 0
    %2599 = vmatprep.subr.bf16.mxu0 0
    %2600 = vmatpush1.bf16.msra.mxu0 0
    %2601 = vmatprep.subr.bf16.mxu0 0
    %2602 = vmatpush1.bf16.msra.mxu0 0
    %2603 = vmatprep.subr.bf16.mxu0 0
    %2604 = vmatpush1.bf16.msra.mxu0 0
    %2605 = vmatprep.subr.bf16.mxu0 0
    %2606 = vmatpush1.bf16.msra.mxu0 0
    %2607 = vmatprep.subr.bf16.mxu0 0
    %2608 = vmatpush1.bf16.msra.mxu0 0
    %2609 = vmatprep.subr.bf16.mxu0 0
    %2610 = vmatpush1.bf16.msra.mxu0 0
    %2611 = vmatprep.subr.bf16.mxu0 0
    %2612 = vmatpush1.bf16.msra.mxu0 0
    %2613 = vmatprep.subr.bf16.mxu0 0
    %2614 = vmatpush1.bf16.msra.mxu0 0
    %2615 = vmatprep.subr.bf16.mxu0 0
    %2616 = vmatpush1.bf16.msra.mxu0 0
    %2617 = vmatprep.subr.bf16.mxu0 0
    %2618 = vmatpush1.bf16.msra.mxu0 0
    %2619 = vmatprep.subr.bf16.mxu0 0
    %2620 = vmatpush1.bf16.msra.mxu0 0
    %2621 = vmatprep.mubr.bf16.mxu0 0
    %2622 = vmatmul.mubr.bf16.gmra.mrb[0].mxu0 %v2419
    %v2623 = vpop.f32.mrb[0].mxu0
    %v2624 = vadd.f32 0.0, %v2623
    %v2625 = vpop.f32.mrb[0].mxu0
    %v2626 = vpop.f32.mrb[0].mxu0
    %v2627 = vpop.f32.mrb[0].mxu0
    %2628 = vdwg.mxu0
    %v2629 = vsel %vm491, %v478, 0
    %2631 = vmatprep.subr.bf16.mxu0 0
    %2632 = vmatpush1.bf16.msra.mxu0 %v2629
    %2633 = vmatprep.subr.bf16.mxu0 0
    %2634 = vmatpush1.bf16.msra.mxu0 0
    %2635 = vmatprep.subr.bf16.mxu0 0
    %2636 = vmatpush1.bf16.msra.mxu0 0
    %2637 = vmatprep.subr.bf16.mxu0 0
    %2638 = vmatpush1.bf16.msra.mxu0 0
    %2639 = vmatprep.subr.bf16.mxu0 0
    %2640 = vmatpush1.bf16.msra.mxu0 0
    %2641 = vmatprep.subr.bf16.mxu0 0
    %2642 = vmatpush1.bf16.msra.mxu0 0
    %2643 = vmatprep.subr.bf16.mxu0 0
    %2644 = vmatpush1.bf16.msra.mxu0 0
    %2645 = vmatprep.subr.bf16.mxu0 0
    %2646 = vmatpush1.bf16.msra.mxu0 0
    %2647 = vmatprep.subr.bf16.mxu0 0
    %2648 = vmatpush1.bf16.msra.mxu0 0
    %2649 = vmatprep.subr.bf16.mxu0 0
    %2650 = vmatpush1.bf16.msra.mxu0 0
    %2651 = vmatprep.subr.bf16.mxu0 0
    %2652 = vmatpush1.bf16.msra.mxu0 0
    %2653 = vmatprep.subr.bf16.mxu0 0
    %2654 = vmatpush1.bf16.msra.mxu0 0
    %2655 = vmatprep.subr.bf16.mxu0 0
    %2656 = vmatpush1.bf16.msra.mxu0 0
    %2657 = vmatprep.subr.bf16.mxu0 0
    %2658 = vmatpush1.bf16.msra.mxu0 0
    %2659 = vmatprep.subr.bf16.mxu0 0
    %2660 = vmatpush1.bf16.msra.mxu0 0
    %2661 = vmatprep.subr.bf16.mxu0 0
    %2662 = vmatpush1.bf16.msra.mxu0 0
    %2663 = vmatprep.mubr.bf16.mxu0 0
    %2664 = vmatmul.mubr.bf16.gmra.mrb[0].mxu0 %v2360
    %v2665 = vpop.f32.mrb[0].mxu0
    %v2666 = vadd.f32 0.0, %v2665
    %v2667 = vpop.f32.mrb[0].mxu0
    %v2668 = vpop.f32.mrb[0].mxu0
    %v2669 = vpop.f32.mrb[0].mxu0
    %2670 = vdwg.mxu0
    %v2671 = vsel %vm491, %v479, 0
    %2673 = vmatprep.subr.bf16.mxu0 0
    %2674 = vmatpush1.bf16.msra.mxu0 %v2671
    %2675 = vmatprep.subr.bf16.mxu0 0
    %2676 = vmatpush1.bf16.msra.mxu0 0
    %2677 = vmatprep.subr.bf16.mxu0 0
    %2678 = vmatpush1.bf16.msra.mxu0 0
    %2679 = vmatprep.subr.bf16.mxu0 0
    %2680 = vmatpush1.bf16.msra.mxu0 0
    %2681 = vmatprep.subr.bf16.mxu0 0
    %2682 = vmatpush1.bf16.msra.mxu0 0
    %2683 = vmatprep.subr.bf16.mxu0 0
    %2684 = vmatpush1.bf16.msra.mxu0 0
    %2685 = vmatprep.subr.bf16.mxu0 0
    %2686 = vmatpush1.bf16.msra.mxu0 0
    %2687 = vmatprep.subr.bf16.mxu0 0
    %2688 = vmatpush1.bf16.msra.mxu0 0
    %2689 = vmatprep.subr.bf16.mxu0 0
    %2690 = vmatpush1.bf16.msra.mxu0 0
    %2691 = vmatprep.subr.bf16.mxu0 0
    %2692 = vmatpush1.bf16.msra.mxu0 0
    %2693 = vmatprep.subr.bf16.mxu0 0
    %2694 = vmatpush1.bf16.msra.mxu0 0
    %2695 = vmatprep.subr.bf16.mxu0 0
    %2696 = vmatpush1.bf16.msra.mxu0 0
    %2697 = vmatprep.subr.bf16.mxu0 0
    %2698 = vmatpush1.bf16.msra.mxu0 0
    %2699 = vmatprep.subr.bf16.mxu0 0
    %2700 = vmatpush1.bf16.msra.mxu0 0
    %2701 = vmatprep.subr.bf16.mxu0 0
    %2702 = vmatpush1.bf16.msra.mxu0 0
    %2703 = vmatprep.subr.bf16.mxu0 0
    %2704 = vmatpush1.bf16.msra.mxu0 0
    %2705 = vmatprep.mubr.bf16.mxu0 0
    %2706 = vmatmul.mubr.bf16.gmra.mrb[0].mxu0 %v2419
    %v2707 = vpop.f32.mrb[0].mxu0
    %v2708 = vadd.f32 0.0, %v2707
    %v2709 = vpop.f32.mrb[0].mxu0
    %v2710 = vpop.f32.mrb[0].mxu0
    %v2711 = vpop.f32.mrb[0].mxu0
    %2712 = vdwg.mxu0
    %v2713 = vpack.c.bf16 %v2666, %v2666
    %v2714 = vpack.c.bf16 %v2708, %v2708
    %v2716 = vsel %vm487, %v2713, 0
    %v2719 = vsel %vm491, %v2341, 0
    %2721 = vmatprep.subr.bf16.mxu0 0
    %2722 = vmatpush1.bf16.msra.mxu0 %v2719
    %2723 = vmatprep.subr.bf16.mxu0 0
    %2724 = vmatpush1.bf16.msra.mxu0 0
    %2725 = vmatprep.subr.bf16.mxu0 0
    %2726 = vmatpush1.bf16.msra.mxu0 0
    %2727 = vmatprep.subr.bf16.mxu0 0
    %2728 = vmatpush1.bf16.msra.mxu0 0
    %2729 = vmatprep.subr.bf16.mxu0 0
    %2730 = vmatpush1.bf16.msra.mxu0 0
    %2731 = vmatprep.subr.bf16.mxu0 0
    %2732 = vmatpush1.bf16.msra.mxu0 0
    %2733 = vmatprep.subr.bf16.mxu0 0
    %2734 = vmatpush1.bf16.msra.mxu0 0
    %2735 = vmatprep.subr.bf16.mxu0 0
    %2736 = vmatpush1.bf16.msra.mxu0 0
    %2737 = vmatprep.subr.bf16.mxu0 0
    %2738 = vmatpush1.bf16.msra.mxu0 0
    %2739 = vmatprep.subr.bf16.mxu0 0
    %2740 = vmatpush1.bf16.msra.mxu0 0
    %2741 = vmatprep.subr.bf16.mxu0 0
    %2742 = vmatpush1.bf16.msra.mxu0 0
    %2743 = vmatprep.subr.bf16.mxu0 0
    %2744 = vmatpush1.bf16.msra.mxu0 0
    %2745 = vmatprep.subr.bf16.mxu0 0
    %2746 = vmatpush1.bf16.msra.mxu0 0
    %2747 = vmatprep.subr.bf16.mxu0 0
    %2748 = vmatpush1.bf16.msra.mxu0 0
    %2749 = vmatprep.subr.bf16.mxu0 0
    %2750 = vmatpush1.bf16.msra.mxu0 0
    %2751 = vmatprep.subr.bf16.mxu0 0
    %2752 = vmatpush1.bf16.msra.mxu0 0
    %2753 = vmatprep.mubr.bf16.mxu0 0
    %2754 = vmatmul.mubr.bf16.gmra.mrb[0].mxu0 %v2716
    %v2755 = vpop.f32.mrb[0].mxu0
    %v2756 = vadd.f32 0.0, %v2755
    %v2757 = vpop.f32.mrb[0].mxu0
    %v2758 = vpop.f32.mrb[0].mxu0
    %v2759 = vpop.f32.mrb[0].mxu0
    %2760 = vdwg.mxu0
    %v2762 = vsel %vm487, %v2714, 0
    %v2765 = vsel %vm491, %v2342, 0
    %2767 = vmatprep.subr.bf16.mxu0 0
    %2768 = vmatpush1.bf16.msra.mxu0 %v2765
    %2769 = vmatprep.subr.bf16.mxu0 0
    %2770 = vmatpush1.bf16.msra.mxu0 0
    %2771 = vmatprep.subr.bf16.mxu0 0
    %2772 = vmatpush1.bf16.msra.mxu0 0
    %2773 = vmatprep.subr.bf16.mxu0 0
    %2774 = vmatpush1.bf16.msra.mxu0 0
    %2775 = vmatprep.subr.bf16.mxu0 0
    %2776 = vmatpush1.bf16.msra.mxu0 0
    %2777 = vmatprep.subr.bf16.mxu0 0
    %2778 = vmatpush1.bf16.msra.mxu0 0
    %2779 = vmatprep.subr.bf16.mxu0 0
    %2780 = vmatpush1.bf16.msra.mxu0 0
    %2781 = vmatprep.subr.bf16.mxu0 0
    %2782 = vmatpush1.bf16.msra.mxu0 0
    %2783 = vmatprep.subr.bf16.mxu0 0
    %2784 = vmatpush1.bf16.msra.mxu0 0
    %2785 = vmatprep.subr.bf16.mxu0 0
    %2786 = vmatpush1.bf16.msra.mxu0 0
    %2787 = vmatprep.subr.bf16.mxu0 0
    %2788 = vmatpush1.bf16.msra.mxu0 0
    %2789 = vmatprep.subr.bf16.mxu0 0
    %2790 = vmatpush1.bf16.msra.mxu0 0
    %2791 = vmatprep.subr.bf16.mxu0 0
    %2792 = vmatpush1.bf16.msra.mxu0 0
    %2793 = vmatprep.subr.bf16.mxu0 0
    %2794 = vmatpush1.bf16.msra.mxu0 0
    %2795 = vmatprep.subr.bf16.mxu0 0
    %2796 = vmatpush1.bf16.msra.mxu0 0
    %2797 = vmatprep.subr.bf16.mxu0 0
    %2798 = vmatpush1.bf16.msra.mxu0 0
    %2799 = vmatprep.mubr.bf16.mxu0 0
    %2800 = vmatmul.mubr.bf16.gmra.mrb[0].mxu0 %v2762
    %v2801 = vpop.f32.mrb[0].mxu0
    %v2802 = vadd.f32 0.0, %v2801
    %v2803 = vpop.f32.mrb[0].mxu0
    %v2804 = vpop.f32.mrb[0].mxu0
    %v2805 = vpop.f32.mrb[0].mxu0
    %2806 = vdwg.mxu0
    %v2807 = vpack.c.bf16 %v2756, %v2756
    %v2808 = vpack.c.bf16 %v2802, %v2802
    %v2811 = vunpack.c.l.b16 %v2807
    %v2812 = vunpack.c.l.b16 %v2808
    %v2813 = vpack.c.b16 %v2812, %v2811
    %v2815 = vsel %vm487, %v2813, 0
    %2817 = vmatprep.subr.bf16.mxu0 0
    %2818 = vmatpush1.bf16.msra.mxu0 %v493
    %2819 = vmatprep.subr.bf16.mxu0 0
    %2820 = vmatpush1.bf16.msra.mxu0 0
    %2821 = vmatprep.subr.bf16.mxu0 0
    %2822 = vmatpush1.bf16.msra.mxu0 0
    %2823 = vmatprep.subr.bf16.mxu0 0
    %2824 = vmatpush1.bf16.msra.mxu0 0
    %2825 = vmatprep.subr.bf16.mxu0 0
    %2826 = vmatpush1.bf16.msra.mxu0 0
    %2827 = vmatprep.subr.bf16.mxu0 0
    %2828 = vmatpush1.bf16.msra.mxu0 0
    %2829 = vmatprep.subr.bf16.mxu0 0
    %2830 = vmatpush1.bf16.msra.mxu0 0
    %2831 = vmatprep.subr.bf16.mxu0 0
    %2832 = vmatpush1.bf16.msra.mxu0 0
    %2833 = vmatprep.subr.bf16.mxu0 0
    %2834 = vmatpush1.bf16.msra.mxu0 0
    %2835 = vmatprep.subr.bf16.mxu0 0
    %2836 = vmatpush1.bf16.msra.mxu0 0
    %2837 = vmatprep.subr.bf16.mxu0 0
    %2838 = vmatpush1.bf16.msra.mxu0 0
    %2839 = vmatprep.subr.bf16.mxu0 0
    %2840 = vmatpush1.bf16.msra.mxu0 0
    %2841 = vmatprep.subr.bf16.mxu0 0
    %2842 = vmatpush1.bf16.msra.mxu0 0
    %2843 = vmatprep.subr.bf16.mxu0 0
    %2844 = vmatpush1.bf16.msra.mxu0 0
    %2845 = vmatprep.subr.bf16.mxu0 0
    %2846 = vmatpush1.bf16.msra.mxu0 0
    %2847 = vmatprep.subr.bf16.mxu0 0
    %2848 = vmatpush1.bf16.msra.mxu0 0
    %2849 = vmatprep.mubr.bf16.mxu0 0
    %2850 = vmatmul.mubr.bf16.gmra.mrb[0].mxu0 %v2815
    %v2851 = vpop.f32.mrb[0].mxu0
    %v2852 = vadd.f32 0.0, %v2851
    %v2853 = vpop.f32.mrb[0].mxu0
    %v2854 = vpop.f32.mrb[0].mxu0
    %v2855 = vadd.f32 0.0, %v2854
    %v2856 = vpop.f32.mrb[0].mxu0
    %2857 = vdwg.mxu0
    %v2858 = vmax.f32 %v2852, 1.0
    %v2859 = vmax.f32 %v2855, 1.0
    %v2860 = vrcp.pop %v2858
    %v2861 = vrcp.pop %v2859
    %v2862 = vpack.c.bf16 %v2397, %v2397
    %v2863 = vpack.c.bf16 %v2456, %v2456
    %v2865 = vsel %vm487, %v2807, 0
    %v2868 = vsel %vm491, %v2862, 0
    %2870 = vmatprep.subr.bf16.mxu0 0
    %2871 = vmatpush1.bf16.msra.mxu0 %v2868
    %2872 = vmatprep.subr.bf16.mxu0 0
    %2873 = vmatpush1.bf16.msra.mxu0 0
    %2874 = vmatprep.subr.bf16.mxu0 0
    %2875 = vmatpush1.bf16.msra.mxu0 0
    %2876 = vmatprep.subr.bf16.mxu0 0
    %2877 = vmatpush1.bf16.msra.mxu0 0
    %2878 = vmatprep.subr.bf16.mxu0 0
    %2879 = vmatpush1.bf16.msra.mxu0 0
    %2880 = vmatprep.subr.bf16.mxu0 0
    %2881 = vmatpush1.bf16.msra.mxu0 0
    %2882 = vmatprep.subr.bf16.mxu0 0
    %2883 = vmatpush1.bf16.msra.mxu0 0
    %2884 = vmatprep.subr.bf16.mxu0 0
    %2885 = vmatpush1.bf16.msra.mxu0 0
    %2886 = vmatprep.subr.bf16.mxu0 0
    %2887 = vmatpush1.bf16.msra.mxu0 0
    %2888 = vmatprep.subr.bf16.mxu0 0
    %2889 = vmatpush1.bf16.msra.mxu0 0
    %2890 = vmatprep.subr.bf16.mxu0 0
    %2891 = vmatpush1.bf16.msra.mxu0 0
    %2892 = vmatprep.subr.bf16.mxu0 0
    %2893 = vmatpush1.bf16.msra.mxu0 0
    %2894 = vmatprep.subr.bf16.mxu0 0
    %2895 = vmatpush1.bf16.msra.mxu0 0
    %2896 = vmatprep.subr.bf16.mxu0 0
    %2897 = vmatpush1.bf16.msra.mxu0 0
    %2898 = vmatprep.subr.bf16.mxu0 0
    %2899 = vmatpush1.bf16.msra.mxu0 0
    %2900 = vmatprep.subr.bf16.mxu0 0
    %2901 = vmatpush1.bf16.msra.mxu0 0
    %2902 = vmatprep.mubr.bf16.mxu0 0
    %2903 = vmatmul.mubr.bf16.gmra.mrb[0].mxu0 %v2865
    %v2904 = vpop.f32.mrb[0].mxu0
    %v2905 = vadd.f32 0.0, %v2904
    %v2906 = vpop.f32.mrb[0].mxu0
    %v2907 = vpop.f32.mrb[0].mxu0
    %v2908 = vpop.f32.mrb[0].mxu0
    %2909 = vdwg.mxu0
    %v2911 = vsel %vm487, %v2808, 0
    %v2914 = vsel %vm491, %v2863, 0
    %2916 = vmatprep.subr.bf16.mxu0 0
    %2917 = vmatpush1.bf16.msra.mxu0 %v2914
    %2918 = vmatprep.subr.bf16.mxu0 0
    %2919 = vmatpush1.bf16.msra.mxu0 0
    %2920 = vmatprep.subr.bf16.mxu0 0
    %2921 = vmatpush1.bf16.msra.mxu0 0
    %2922 = vmatprep.subr.bf16.mxu0 0
    %2923 = vmatpush1.bf16.msra.mxu0 0
    %2924 = vmatprep.subr.bf16.mxu0 0
    %2925 = vmatpush1.bf16.msra.mxu0 0
    %2926 = vmatprep.subr.bf16.mxu0 0
    %2927 = vmatpush1.bf16.msra.mxu0 0
    %2928 = vmatprep.subr.bf16.mxu0 0
    %2929 = vmatpush1.bf16.msra.mxu0 0
    %2930 = vmatprep.subr.bf16.mxu0 0
    %2931 = vmatpush1.bf16.msra.mxu0 0
    %2932 = vmatprep.subr.bf16.mxu0 0
    %2933 = vmatpush1.bf16.msra.mxu0 0
    %2934 = vmatprep.subr.bf16.mxu0 0
    %2935 = vmatpush1.bf16.msra.mxu0 0
    %2936 = vmatprep.subr.bf16.mxu0 0
    %2937 = vmatpush1.bf16.msra.mxu0 0
    %2938 = vmatprep.subr.bf16.mxu0 0
    %2939 = vmatpush1.bf16.msra.mxu0 0
    %2940 = vmatprep.subr.bf16.mxu0 0
    %2941 = vmatpush1.bf16.msra.mxu0 0
    %2942 = vmatprep.subr.bf16.mxu0 0
    %2943 = vmatpush1.bf16.msra.mxu0 0
    %2944 = vmatprep.subr.bf16.mxu0 0
    %2945 = vmatpush1.bf16.msra.mxu0 0
    %2946 = vmatprep.subr.bf16.mxu0 0
    %2947 = vmatpush1.bf16.msra.mxu0 0
    %2948 = vmatprep.mubr.bf16.mxu0 0
    %2949 = vmatmul.mubr.bf16.gmra.mrb[0].mxu0 %v2911
    %v2950 = vpop.f32.mrb[0].mxu0
    %v2951 = vadd.f32 0.0, %v2950
    %v2952 = vpop.f32.mrb[0].mxu0
    %v2953 = vpop.f32.mrb[0].mxu0
    %v2954 = vpop.f32.mrb[0].mxu0
    %2955 = vdwg.mxu0
    %2957 = vset.pattern.permute.xlu0 0
    %2958 = vperm.xlu0 %2957, %v2860
    %v2959 = vpop.permute.xlu0 %2958
    %2962 = vset.pattern.permute.xlu0 0
    %2963 = vperm.xlu0 %2962, %v2861
    %v2964 = vpop.permute.xlu0 %2963
    %v2966 = vmul.f32 %v2905, %v2959
    %v2967 = vmul.f32 %v2951, %v2964
    %v2968 = vpack.c.bf16 %v2496, %v2496
    %v2969 = vpack.c.bf16 %v2536, %v2536
    %v2971 = vsel %vm491, %v2968, 0
    %2973 = vmatprep.subr.bf16.mxu0 0
    %2974 = vmatpush1.bf16.msra.mxu0 %v2971
    %2975 = vmatprep.subr.bf16.mxu0 0
    %2976 = vmatpush1.bf16.msra.mxu0 0
    %2977 = vmatprep.subr.bf16.mxu0 0
    %2978 = vmatpush1.bf16.msra.mxu0 0
    %2979 = vmatprep.subr.bf16.mxu0 0
    %2980 = vmatpush1.bf16.msra.mxu0 0
    %2981 = vmatprep.subr.bf16.mxu0 0
    %2982 = vmatpush1.bf16.msra.mxu0 0
    %2983 = vmatprep.subr.bf16.mxu0 0
    %2984 = vmatpush1.bf16.msra.mxu0 0
    %2985 = vmatprep.subr.bf16.mxu0 0
    %2986 = vmatpush1.bf16.msra.mxu0 0
    %2987 = vmatprep.subr.bf16.mxu0 0
    %2988 = vmatpush1.bf16.msra.mxu0 0
    %2989 = vmatprep.subr.bf16.mxu0 0
    %2990 = vmatpush1.bf16.msra.mxu0 0
    %2991 = vmatprep.subr.bf16.mxu0 0
    %2992 = vmatpush1.bf16.msra.mxu0 0
    %2993 = vmatprep.subr.bf16.mxu0 0
    %2994 = vmatpush1.bf16.msra.mxu0 0
    %2995 = vmatprep.subr.bf16.mxu0 0
    %2996 = vmatpush1.bf16.msra.mxu0 0
    %2997 = vmatprep.subr.bf16.mxu0 0
    %2998 = vmatpush1.bf16.msra.mxu0 0
    %2999 = vmatprep.subr.bf16.mxu0 0
    %3000 = vmatpush1.bf16.msra.mxu0 0
    %3001 = vmatprep.subr.bf16.mxu0 0
    %3002 = vmatpush1.bf16.msra.mxu0 0
    %3003 = vmatprep.subr.bf16.mxu0 0
    %3004 = vmatpush1.bf16.msra.mxu0 0
    %3005 = vmatprep.mubr.bf16.mxu0 0
    %3006 = vmatmul.mubr.bf16.gmra.mrb[0].mxu0 %v2865
    %v3007 = vpop.f32.mrb[0].mxu0
    %v3008 = vadd.f32 0.0, %v3007
    %v3009 = vpop.f32.mrb[0].mxu0
    %v3010 = vpop.f32.mrb[0].mxu0
    %v3011 = vpop.f32.mrb[0].mxu0
    %3012 = vdwg.mxu0
    %v3014 = vsel %vm491, %v2969, 0
    %3016 = vmatprep.subr.bf16.mxu0 0
    %3017 = vmatpush1.bf16.msra.mxu0 %v3014
    %3018 = vmatprep.subr.bf16.mxu0 0
    %3019 = vmatpush1.bf16.msra.mxu0 0
    %3020 = vmatprep.subr.bf16.mxu0 0
    %3021 = vmatpush1.bf16.msra.mxu0 0
    %3022 = vmatprep.subr.bf16.mxu0 0
    %3023 = vmatpush1.bf16.msra.mxu0 0
    %3024 = vmatprep.subr.bf16.mxu0 0
    %3025 = vmatpush1.bf16.msra.mxu0 0
    %3026 = vmatprep.subr.bf16.mxu0 0
    %3027 = vmatpush1.bf16.msra.mxu0 0
    %3028 = vmatprep.subr.bf16.mxu0 0
    %3029 = vmatpush1.bf16.msra.mxu0 0
    %3030 = vmatprep.subr.bf16.mxu0 0
    %3031 = vmatpush1.bf16.msra.mxu0 0
    %3032 = vmatprep.subr.bf16.mxu0 0
    %3033 = vmatpush1.bf16.msra.mxu0 0
    %3034 = vmatprep.subr.bf16.mxu0 0
    %3035 = vmatpush1.bf16.msra.mxu0 0
    %3036 = vmatprep.subr.bf16.mxu0 0
    %3037 = vmatpush1.bf16.msra.mxu0 0
    %3038 = vmatprep.subr.bf16.mxu0 0
    %3039 = vmatpush1.bf16.msra.mxu0 0
    %3040 = vmatprep.subr.bf16.mxu0 0
    %3041 = vmatpush1.bf16.msra.mxu0 0
    %3042 = vmatprep.subr.bf16.mxu0 0
    %3043 = vmatpush1.bf16.msra.mxu0 0
    %3044 = vmatprep.subr.bf16.mxu0 0
    %3045 = vmatpush1.bf16.msra.mxu0 0
    %3046 = vmatprep.subr.bf16.mxu0 0
    %3047 = vmatpush1.bf16.msra.mxu0 0
    %3048 = vmatprep.mubr.bf16.mxu0 0
    %3049 = vmatmul.mubr.bf16.gmra.mrb[0].mxu0 %v2911
    %v3050 = vpop.f32.mrb[0].mxu0
    %v3051 = vadd.f32 0.0, %v3050
    %v3052 = vpop.f32.mrb[0].mxu0
    %v3053 = vpop.f32.mrb[0].mxu0
    %v3054 = vpop.f32.mrb[0].mxu0
    %3055 = vdwg.mxu0
    %v3056 = vmul.f32 %v3008, %v2959
    %v3057 = vmul.f32 %v3051, %v2964
    %v3058 = vpack.c.bf16 %v2581, %v2581
    %v3059 = vpack.c.bf16 %v2624, %v2624
    %v3061 = vsel %vm491, %v3058, 0
    %3063 = vmatprep.subr.bf16.mxu0 0
    %3064 = vmatpush1.bf16.msra.mxu0 %v3061
    %3065 = vmatprep.subr.bf16.mxu0 0
    %3066 = vmatpush1.bf16.msra.mxu0 0
    %3067 = vmatprep.subr.bf16.mxu0 0
    %3068 = vmatpush1.bf16.msra.mxu0 0
    %3069 = vmatprep.subr.bf16.mxu0 0
    %3070 = vmatpush1.bf16.msra.mxu0 0
    %3071 = vmatprep.subr.bf16.mxu0 0
    %3072 = vmatpush1.bf16.msra.mxu0 0
    %3073 = vmatprep.subr.bf16.mxu0 0
    %3074 = vmatpush1.bf16.msra.mxu0 0
    %3075 = vmatprep.subr.bf16.mxu0 0
    %3076 = vmatpush1.bf16.msra.mxu0 0
    %3077 = vmatprep.subr.bf16.mxu0 0
    %3078 = vmatpush1.bf16.msra.mxu0 0
    %3079 = vmatprep.subr.bf16.mxu0 0
    %3080 = vmatpush1.bf16.msra.mxu0 0
    %3081 = vmatprep.subr.bf16.mxu0 0
    %3082 = vmatpush1.bf16.msra.mxu0 0
    %3083 = vmatprep.subr.bf16.mxu0 0
    %3084 = vmatpush1.bf16.msra.mxu0 0
    %3085 = vmatprep.subr.bf16.mxu0 0
    %3086 = vmatpush1.bf16.msra.mxu0 0
    %3087 = vmatprep.subr.bf16.mxu0 0
    %3088 = vmatpush1.bf16.msra.mxu0 0
    %3089 = vmatprep.subr.bf16.mxu0 0
    %3090 = vmatpush1.bf16.msra.mxu0 0
    %3091 = vmatprep.subr.bf16.mxu0 0
    %3092 = vmatpush1.bf16.msra.mxu0 0
    %3093 = vmatprep.subr.bf16.mxu0 0
    %3094 = vmatpush1.bf16.msra.mxu0 0
    %3095 = vmatprep.mubr.bf16.mxu0 0
    %3096 = vmatmul.mubr.bf16.gmra.mrb[0].mxu0 %v2865
    %v3097 = vpop.f32.mrb[0].mxu0
    %v3098 = vadd.f32 0.0, %v3097
    %v3099 = vpop.f32.mrb[0].mxu0
    %v3100 = vpop.f32.mrb[0].mxu0
    %v3101 = vpop.f32.mrb[0].mxu0
    %3102 = vdwg.mxu0
    %v3104 = vsel %vm491, %v3059, 0
    %3106 = vmatprep.subr.bf16.mxu0 0
    %3107 = vmatpush1.bf16.msra.mxu0 %v3104
    %3108 = vmatprep.subr.bf16.mxu0 0
    %3109 = vmatpush1.bf16.msra.mxu0 0
    %3110 = vmatprep.subr.bf16.mxu0 0
    %3111 = vmatpush1.bf16.msra.mxu0 0
    %3112 = vmatprep.subr.bf16.mxu0 0
    %3113 = vmatpush1.bf16.msra.mxu0 0
    %3114 = vmatprep.subr.bf16.mxu0 0
    %3115 = vmatpush1.bf16.msra.mxu0 0
    %3116 = vmatprep.subr.bf16.mxu0 0
    %3117 = vmatpush1.bf16.msra.mxu0 0
    %3118 = vmatprep.subr.bf16.mxu0 0
    %3119 = vmatpush1.bf16.msra.mxu0 0
    %3120 = vmatprep.subr.bf16.mxu0 0
    %3121 = vmatpush1.bf16.msra.mxu0 0
    %3122 = vmatprep.subr.bf16.mxu0 0
    %3123 = vmatpush1.bf16.msra.mxu0 0
    %3124 = vmatprep.subr.bf16.mxu0 0
    %3125 = vmatpush1.bf16.msra.mxu0 0
    %3126 = vmatprep.subr.bf16.mxu0 0
    %3127 = vmatpush1.bf16.msra.mxu0 0
    %3128 = vmatprep.subr.bf16.mxu0 0
    %3129 = vmatpush1.bf16.msra.mxu0 0
    %3130 = vmatprep.subr.bf16.mxu0 0
    %3131 = vmatpush1.bf16.msra.mxu0 0
    %3132 = vmatprep.subr.bf16.mxu0 0
    %3133 = vmatpush1.bf16.msra.mxu0 0
    %3134 = vmatprep.subr.bf16.mxu0 0
    %3135 = vmatpush1.bf16.msra.mxu0 0
    %3136 = vmatprep.subr.bf16.mxu0 0
    %3137 = vmatpush1.bf16.msra.mxu0 0
    %3138 = vmatprep.mubr.bf16.mxu0 0
    %3139 = vmatmul.mubr.bf16.gmra.mrb[0].mxu0 %v2911
    %v3140 = vpop.f32.mrb[0].mxu0
    %v3141 = vadd.f32 0.0, %v3140
    %v3142 = vpop.f32.mrb[0].mxu0
    %v3143 = vpop.f32.mrb[0].mxu0
    %v3144 = vpop.f32.mrb[0].mxu0
    %3145 = vdwg.mxu0
    %v3146 = vmul.f32 %v3098, %v2959
    %v3147 = vmul.f32 %v3141, %v2964
    %v3148 = vld [vmem:[#allocation25] sm:$0x7]
    %s3149 = scalar_lea.vmem [#allocation25], 4
    %v3150 = vld [vmem:[%s3149] sm:$0x7]
    %v3151 = vld [vmem:[#allocation27] sm:$0x7]
    %v3152 = vld [vmem:[#allocation19] sm:$0xf]
    %v3153 = vld [vmem:[#allocation19 + $0x4] sm:$0xf]
    %v3154 = vld [vmem:[#allocation19 + $0x8] sm:$0xf]
    %v3155 = vld [vmem:[#allocation19 + $0xc] sm:$0xf]
    %v3156 = vpack.c.bf16 %v2966, %v2966
    %v3157 = vpack.c.bf16 %v2967, %v2967
    %s3158 = scalar_lea.vmem [#allocation19], 48
    %v3159 = vld [vmem:[%s3158] sm:$0xf]
    %v3160 = vld [vmem:[%s3158 + $0x4] sm:$0xf]
    %v3161 = vld [vmem:[%s3158 + $0x8] sm:$0xf]
    %v3162 = vld [vmem:[%s3158 + $0xc] sm:$0xf]
    %v3165 = vunpack.c.l.b16 %v2862
    %v3166 = vunpack.c.l.b16 %v2863
    %v3167 = vpack.c.b16 %v3166, %v3165
    %v3172 = vunpack.c.l.b16 %v3159
    %v3173 = vunpack.c.l.b16 %v3160
    %v3174 = vunpack.c.l.b16 %v3161
    %v3175 = vunpack.c.l.b16 %v3162
    %v3176 = vpack.c.b16 %v3173, %v3172
    %v3177 = vpack.c.b16 %v3175, %v3174
    %v3181 = vsel %vm678, %v3167, 0
    %3183 = vmatprep.subr.bf16.mxu0 0
    %3184 = vmatpush1.bf16.msra.mxu0 %v3176
    %3185 = vmatprep.subr.bf16.mxu0 0
    %3186 = vmatpush1.bf16.msra.mxu0 %v3177
    %3187 = vmatprep.subr.bf16.mxu0 0
    %3188 = vmatpush1.bf16.msra.mxu0 0
    %3189 = vmatprep.subr.bf16.mxu0 0
    %3190 = vmatpush1.bf16.msra.mxu0 0
    %3191 = vmatprep.subr.bf16.mxu0 0
    %3192 = vmatpush1.bf16.msra.mxu0 0
    %3193 = vmatprep.subr.bf16.mxu0 0
    %3194 = vmatpush1.bf16.msra.mxu0 0
    %3195 = vmatprep.subr.bf16.mxu0 0
    %3196 = vmatpush1.bf16.msra.mxu0 0
    %3197 = vmatprep.subr.bf16.mxu0 0
    %3198 = vmatpush1.bf16.msra.mxu0 0
    %3199 = vmatprep.subr.bf16.mxu0 0
    %3200 = vmatpush1.bf16.msra.mxu0 0
    %3201 = vmatprep.subr.bf16.mxu0 0
    %3202 = vmatpush1.bf16.msra.mxu0 0
    %3203 = vmatprep.subr.bf16.mxu0 0
    %3204 = vmatpush1.bf16.msra.mxu0 0
    %3205 = vmatprep.subr.bf16.mxu0 0
    %3206 = vmatpush1.bf16.msra.mxu0 0
    %3207 = vmatprep.subr.bf16.mxu0 0
    %3208 = vmatpush1.bf16.msra.mxu0 0
    %3209 = vmatprep.subr.bf16.mxu0 0
    %3210 = vmatpush1.bf16.msra.mxu0 0
    %3211 = vmatprep.subr.bf16.mxu0 0
    %3212 = vmatpush1.bf16.msra.mxu0 0
    %3213 = vmatprep.subr.bf16.mxu0 0
    %3214 = vmatpush1.bf16.msra.mxu0 0
    %3215 = vmatprep.mubr.bf16.mxu0 0
    %3216 = vmatmul.mubr.bf16.gmra.mrb[0].mxu0 %v3181
    %v3217 = vpop.f32.mrb[0].mxu0
    %v3218 = vadd.f32 0.0, %v3217
    %v3219 = vpop.f32.mrb[0].mxu0
    %v3220 = vpop.f32.mrb[0].mxu0
    %v3221 = vadd.f32 0.0, %v3220
    %v3222 = vpop.f32.mrb[0].mxu0
    %3223 = vdwg.mxu0
    %v3226 = vunpack.c.l.b16 %v3156
    %v3227 = vunpack.c.l.b16 %v3157
    %v3228 = vpack.c.b16 %v3227, %v3226
    %v3233 = vunpack.c.l.b16 %v3152
    %v3234 = vunpack.c.l.b16 %v3153
    %v3235 = vunpack.c.l.b16 %v3154
    %v3236 = vunpack.c.l.b16 %v3155
    %v3237 = vpack.c.b16 %v3234, %v3233
    %v3238 = vpack.c.b16 %v3236, %v3235
    %v3242 = vsel %vm678, %v3228, 0
    %3244 = vmatprep.subr.bf16.mxu0 0
    %3245 = vmatpush1.bf16.msra.mxu0 %v3237
    %3246 = vmatprep.subr.bf16.mxu0 0
    %3247 = vmatpush1.bf16.msra.mxu0 %v3238
    %3248 = vmatprep.subr.bf16.mxu0 0
    %3249 = vmatpush1.bf16.msra.mxu0 0
    %3250 = vmatprep.subr.bf16.mxu0 0
    %3251 = vmatpush1.bf16.msra.mxu0 0
    %3252 = vmatprep.subr.bf16.mxu0 0
    %3253 = vmatpush1.bf16.msra.mxu0 0
    %3254 = vmatprep.subr.bf16.mxu0 0
    %3255 = vmatpush1.bf16.msra.mxu0 0
    %3256 = vmatprep.subr.bf16.mxu0 0
    %3257 = vmatpush1.bf16.msra.mxu0 0
    %3258 = vmatprep.subr.bf16.mxu0 0
    %3259 = vmatpush1.bf16.msra.mxu0 0
    %3260 = vmatprep.subr.bf16.mxu0 0
    %3261 = vmatpush1.bf16.msra.mxu0 0
    %3262 = vmatprep.subr.bf16.mxu0 0
    %3263 = vmatpush1.bf16.msra.mxu0 0
    %3264 = vmatprep.subr.bf16.mxu0 0
    %3265 = vmatpush1.bf16.msra.mxu0 0
    %3266 = vmatprep.subr.bf16.mxu0 0
    %3267 = vmatpush1.bf16.msra.mxu0 0
    %3268 = vmatprep.subr.bf16.mxu0 0
    %3269 = vmatpush1.bf16.msra.mxu0 0
    %3270 = vmatprep.subr.bf16.mxu0 0
    %3271 = vmatpush1.bf16.msra.mxu0 0
    %3272 = vmatprep.subr.bf16.mxu0 0
    %3273 = vmatpush1.bf16.msra.mxu0 0
    %3274 = vmatprep.subr.bf16.mxu0 0
    %3275 = vmatpush1.bf16.msra.mxu0 0
    %3276 = vmatprep.mubr.bf16.mxu0 0
    %3277 = vmatmul.mubr.bf16.gmra.mrb[0].mxu0 %v3242
    %v3278 = vpop.f32.mrb[0].mxu0
    %v3279 = vadd.f32 %v3218, %v3278
    %v3280 = vpop.f32.mrb[0].mxu0
    %v3281 = vpop.f32.mrb[0].mxu0
    %v3282 = vadd.f32 %v3221, %v3281
    %v3283 = vpop.f32.mrb[0].mxu0
    %3284 = vdwg.mxu0
    %v3285 = vld [vmem:[#allocation19 + $0x10] sm:$0xf]
    %v3286 = vld [vmem:[#allocation19 + $0x14] sm:$0xf]
    %v3287 = vld [vmem:[#allocation19 + $0x18] sm:$0xf]
    %v3288 = vld [vmem:[#allocation19 + $0x1c] sm:$0xf]
    %v3289 = vpack.c.bf16 %v3056, %v3056
    %v3290 = vpack.c.bf16 %v3057, %v3057
    %v3291 = vld [vmem:[%s3158 + $0x10] sm:$0xf]
    %v3292 = vld [vmem:[%s3158 + $0x14] sm:$0xf]
    %v3293 = vld [vmem:[%s3158 + $0x18] sm:$0xf]
    %v3294 = vld [vmem:[%s3158 + $0x1c] sm:$0xf]
    %v3297 = vunpack.c.l.b16 %v2968
    %v3298 = vunpack.c.l.b16 %v2969
    %v3299 = vpack.c.b16 %v3298, %v3297
    %v3304 = vunpack.c.l.b16 %v3291
    %v3305 = vunpack.c.l.b16 %v3292
    %v3306 = vunpack.c.l.b16 %v3293
    %v3307 = vunpack.c.l.b16 %v3294
    %v3308 = vpack.c.b16 %v3305, %v3304
    %v3309 = vpack.c.b16 %v3307, %v3306
    %v3313 = vsel %vm678, %v3299, 0
    %3315 = vmatprep.subr.bf16.mxu0 0
    %3316 = vmatpush1.bf16.msra.mxu0 %v3308
    %3317 = vmatprep.subr.bf16.mxu0 0
    %3318 = vmatpush1.bf16.msra.mxu0 %v3309
    %3319 = vmatprep.subr.bf16.mxu0 0
    %3320 = vmatpush1.bf16.msra.mxu0 0
    %3321 = vmatprep.subr.bf16.mxu0 0
    %3322 = vmatpush1.bf16.msra.mxu0 0
    %3323 = vmatprep.subr.bf16.mxu0 0
    %3324 = vmatpush1.bf16.msra.mxu0 0
    %3325 = vmatprep.subr.bf16.mxu0 0
    %3326 = vmatpush1.bf16.msra.mxu0 0
    %3327 = vmatprep.subr.bf16.mxu0 0
    %3328 = vmatpush1.bf16.msra.mxu0 0
    %3329 = vmatprep.subr.bf16.mxu0 0
    %3330 = vmatpush1.bf16.msra.mxu0 0
    %3331 = vmatprep.subr.bf16.mxu0 0
    %3332 = vmatpush1.bf16.msra.mxu0 0
    %3333 = vmatprep.subr.bf16.mxu0 0
    %3334 = vmatpush1.bf16.msra.mxu0 0
    %3335 = vmatprep.subr.bf16.mxu0 0
    %3336 = vmatpush1.bf16.msra.mxu0 0
    %3337 = vmatprep.subr.bf16.mxu0 0
    %3338 = vmatpush1.bf16.msra.mxu0 0
    %3339 = vmatprep.subr.bf16.mxu0 0
    %3340 = vmatpush1.bf16.msra.mxu0 0
    %3341 = vmatprep.subr.bf16.mxu0 0
    %3342 = vmatpush1.bf16.msra.mxu0 0
    %3343 = vmatprep.subr.bf16.mxu0 0
    %3344 = vmatpush1.bf16.msra.mxu0 0
    %3345 = vmatprep.subr.bf16.mxu0 0
    %3346 = vmatpush1.bf16.msra.mxu0 0
    %3347 = vmatprep.mubr.bf16.mxu0 0
    %3348 = vmatmul.mubr.bf16.gmra.mrb[0].mxu0 %v3313
    %v3349 = vpop.f32.mrb[0].mxu0
    %v3350 = vadd.f32 0.0, %v3349
    %v3351 = vpop.f32.mrb[0].mxu0
    %v3352 = vpop.f32.mrb[0].mxu0
    %v3353 = vadd.f32 0.0, %v3352
    %v3354 = vpop.f32.mrb[0].mxu0
    %3355 = vdwg.mxu0
    %v3358 = vunpack.c.l.b16 %v3289
    %v3359 = vunpack.c.l.b16 %v3290
    %v3360 = vpack.c.b16 %v3359, %v3358
    %v3365 = vunpack.c.l.b16 %v3285
    %v3366 = vunpack.c.l.b16 %v3286
    %v3367 = vunpack.c.l.b16 %v3287
    %v3368 = vunpack.c.l.b16 %v3288
    %v3369 = vpack.c.b16 %v3366, %v3365
    %v3370 = vpack.c.b16 %v3368, %v3367
    %v3374 = vsel %vm678, %v3360, 0
    %3376 = vmatprep.subr.bf16.mxu0 0
    %3377 = vmatpush1.bf16.msra.mxu0 %v3369
    %3378 = vmatprep.subr.bf16.mxu0 0
    %3379 = vmatpush1.bf16.msra.mxu0 %v3370
    %3380 = vmatprep.subr.bf16.mxu0 0
    %3381 = vmatpush1.bf16.msra.mxu0 0
    %3382 = vmatprep.subr.bf16.mxu0 0
    %3383 = vmatpush1.bf16.msra.mxu0 0
    %3384 = vmatprep.subr.bf16.mxu0 0
    %3385 = vmatpush1.bf16.msra.mxu0 0
    %3386 = vmatprep.subr.bf16.mxu0 0
    %3387 = vmatpush1.bf16.msra.mxu0 0
    %3388 = vmatprep.subr.bf16.mxu0 0
    %3389 = vmatpush1.bf16.msra.mxu0 0
    %3390 = vmatprep.subr.bf16.mxu0 0
    %3391 = vmatpush1.bf16.msra.mxu0 0
    %3392 = vmatprep.subr.bf16.mxu0 0
    %3393 = vmatpush1.bf16.msra.mxu0 0
    %3394 = vmatprep.subr.bf16.mxu0 0
    %3395 = vmatpush1.bf16.msra.mxu0 0
    %3396 = vmatprep.subr.bf16.mxu0 0
    %3397 = vmatpush1.bf16.msra.mxu0 0
    %3398 = vmatprep.subr.bf16.mxu0 0
    %3399 = vmatpush1.bf16.msra.mxu0 0
    %3400 = vmatprep.subr.bf16.mxu0 0
    %3401 = vmatpush1.bf16.msra.mxu0 0
    %3402 = vmatprep.subr.bf16.mxu0 0
    %3403 = vmatpush1.bf16.msra.mxu0 0
    %3404 = vmatprep.subr.bf16.mxu0 0
    %3405 = vmatpush1.bf16.msra.mxu0 0
    %3406 = vmatprep.subr.bf16.mxu0 0
    %3407 = vmatpush1.bf16.msra.mxu0 0
    %3408 = vmatprep.mubr.bf16.mxu0 0
    %3409 = vmatmul.mubr.bf16.gmra.mrb[0].mxu0 %v3374
    %v3410 = vpop.f32.mrb[0].mxu0
    %v3411 = vadd.f32 %v3350, %v3410
    %v3412 = vpop.f32.mrb[0].mxu0
    %v3413 = vpop.f32.mrb[0].mxu0
    %v3414 = vadd.f32 %v3353, %v3413
    %v3415 = vpop.f32.mrb[0].mxu0
    %3416 = vdwg.mxu0
    %v3417 = vadd.f32 %v3279, %v3411
    %v3418 = vadd.f32 %v3282, %v3414
    %v3419 = vld [vmem:[#allocation19 + $0x20] sm:$0xf]
    %v3420 = vld [vmem:[#allocation19 + $0x24] sm:$0xf]
    %v3421 = vld [vmem:[#allocation19 + $0x28] sm:$0xf]
    %v3422 = vld [vmem:[#allocation19 + $0x2c] sm:$0xf]
    %v3423 = vpack.c.bf16 %v3146, %v3146
    %v3424 = vpack.c.bf16 %v3147, %v3147
    %v3425 = vld [vmem:[%s3158 + $0x20] sm:$0xf]
    %v3426 = vld [vmem:[%s3158 + $0x24] sm:$0xf]
    %v3427 = vld [vmem:[%s3158 + $0x28] sm:$0xf]
    %v3428 = vld [vmem:[%s3158 + $0x2c] sm:$0xf]
    %v3431 = vunpack.c.l.b16 %v3058
    %v3432 = vunpack.c.l.b16 %v3059
    %v3433 = vpack.c.b16 %v3432, %v3431
    %v3438 = vunpack.c.l.b16 %v3425
    %v3439 = vunpack.c.l.b16 %v3426
    %v3440 = vunpack.c.l.b16 %v3427
    %v3441 = vunpack.c.l.b16 %v3428
    %v3442 = vpack.c.b16 %v3439, %v3438
    %v3443 = vpack.c.b16 %v3441, %v3440
    %v3447 = vsel %vm678, %v3433, 0
    %3449 = vmatprep.subr.bf16.mxu0 0
    %3450 = vmatpush1.bf16.msra.mxu0 %v3442
    %3451 = vmatprep.subr.bf16.mxu0 0
    %3452 = vmatpush1.bf16.msra.mxu0 %v3443
    %3453 = vmatprep.subr.bf16.mxu0 0
    %3454 = vmatpush1.bf16.msra.mxu0 0
    %3455 = vmatprep.subr.bf16.mxu0 0
    %3456 = vmatpush1.bf16.msra.mxu0 0
    %3457 = vmatprep.subr.bf16.mxu0 0
    %3458 = vmatpush1.bf16.msra.mxu0 0
    %3459 = vmatprep.subr.bf16.mxu0 0
    %3460 = vmatpush1.bf16.msra.mxu0 0
    %3461 = vmatprep.subr.bf16.mxu0 0
    %3462 = vmatpush1.bf16.msra.mxu0 0
    %3463 = vmatprep.subr.bf16.mxu0 0
    %3464 = vmatpush1.bf16.msra.mxu0 0
    %3465 = vmatprep.subr.bf16.mxu0 0
    %3466 = vmatpush1.bf16.msra.mxu0 0
    %3467 = vmatprep.subr.bf16.mxu0 0
    %3468 = vmatpush1.bf16.msra.mxu0 0
    %3469 = vmatprep.subr.bf16.mxu0 0
    %3470 = vmatpush1.bf16.msra.mxu0 0
    %3471 = vmatprep.subr.bf16.mxu0 0
    %3472 = vmatpush1.bf16.msra.mxu0 0
    %3473 = vmatprep.subr.bf16.mxu0 0
    %3474 = vmatpush1.bf16.msra.mxu0 0
    %3475 = vmatprep.subr.bf16.mxu0 0
    %3476 = vmatpush1.bf16.msra.mxu0 0
    %3477 = vmatprep.subr.bf16.mxu0 0
    %3478 = vmatpush1.bf16.msra.mxu0 0
    %3479 = vmatprep.subr.bf16.mxu0 0
    %3480 = vmatpush1.bf16.msra.mxu0 0
    %3481 = vmatprep.mubr.bf16.mxu0 0
    %3482 = vmatmul.mubr.bf16.gmra.mrb[0].mxu0 %v3447
    %v3483 = vpop.f32.mrb[0].mxu0
    %v3484 = vadd.f32 0.0, %v3483
    %v3485 = vpop.f32.mrb[0].mxu0
    %v3486 = vpop.f32.mrb[0].mxu0
    %v3487 = vadd.f32 0.0, %v3486
    %v3488 = vpop.f32.mrb[0].mxu0
    %3489 = vdwg.mxu0
    %v3492 = vunpack.c.l.b16 %v3423
    %v3493 = vunpack.c.l.b16 %v3424
    %v3494 = vpack.c.b16 %v3493, %v3492
    %v3499 = vunpack.c.l.b16 %v3419
    %v3500 = vunpack.c.l.b16 %v3420
    %v3501 = vunpack.c.l.b16 %v3421
    %v3502 = vunpack.c.l.b16 %v3422
    %v3503 = vpack.c.b16 %v3500, %v3499
    %v3504 = vpack.c.b16 %v3502, %v3501
    %v3508 = vsel %vm678, %v3494, 0
    %3510 = vmatprep.subr.bf16.mxu0 0
    %3511 = vmatpush1.bf16.msra.mxu0 %v3503
    %3512 = vmatprep.subr.bf16.mxu0 0
    %3513 = vmatpush1.bf16.msra.mxu0 %v3504
    %3514 = vmatprep.subr.bf16.mxu0 0
    %3515 = vmatpush1.bf16.msra.mxu0 0
    %3516 = vmatprep.subr.bf16.mxu0 0
    %3517 = vmatpush1.bf16.msra.mxu0 0
    %3518 = vmatprep.subr.bf16.mxu0 0
    %3519 = vmatpush1.bf16.msra.mxu0 0
    %3520 = vmatprep.subr.bf16.mxu0 0
    %3521 = vmatpush1.bf16.msra.mxu0 0
    %3522 = vmatprep.subr.bf16.mxu0 0
    %3523 = vmatpush1.bf16.msra.mxu0 0
    %3524 = vmatprep.subr.bf16.mxu0 0
    %3525 = vmatpush1.bf16.msra.mxu0 0
    %3526 = vmatprep.subr.bf16.mxu0 0
    %3527 = vmatpush1.bf16.msra.mxu0 0
    %3528 = vmatprep.subr.bf16.mxu0 0
    %3529 = vmatpush1.bf16.msra.mxu0 0
    %3530 = vmatprep.subr.bf16.mxu0 0
    %3531 = vmatpush1.bf16.msra.mxu0 0
    %3532 = vmatprep.subr.bf16.mxu0 0
    %3533 = vmatpush1.bf16.msra.mxu0 0
    %3534 = vmatprep.subr.bf16.mxu0 0
    %3535 = vmatpush1.bf16.msra.mxu0 0
    %3536 = vmatprep.subr.bf16.mxu0 0
    %3537 = vmatpush1.bf16.msra.mxu0 0
    %3538 = vmatprep.subr.bf16.mxu0 0
    %3539 = vmatpush1.bf16.msra.mxu0 0
    %3540 = vmatprep.subr.bf16.mxu0 0
    %3541 = vmatpush1.bf16.msra.mxu0 0
    %3542 = vmatprep.mubr.bf16.mxu0 0
    %3543 = vmatmul.mubr.bf16.gmra.mrb[0].mxu0 %v3508
    %v3544 = vpop.f32.mrb[0].mxu0
    %v3545 = vadd.f32 %v3484, %v3544
    %v3546 = vpop.f32.mrb[0].mxu0
    %v3547 = vpop.f32.mrb[0].mxu0
    %v3548 = vadd.f32 %v3487, %v3547
    %v3549 = vpop.f32.mrb[0].mxu0
    %3550 = vdwg.mxu0
    %v3551 = vadd.f32 %v3417, %v3545
    %v3552 = vadd.f32 %v3418, %v3548
    %v3553 = vlaneseq
    %v3554 = vshrl.u32 %v3553, 7
    %v3555 = vsub.s32 0, %v3554
    %v3556 = vrot.slane %v3148, %v3555
    %v3557 = vadd.f32 %v3551, %v3556
    %v3558 = vadd.f32 %v3552, %v3556
    %v3559 = vmax.f32 %v3557, 0.0
    %v3560 = vmax.f32 %v3558, 0.0
    %v3561 = vsel %vm678, %v3559, 0.0
    %v3562 = vsel %vm678, %v3560, 0.0
    %v3563 = vadd.f32 %v3561, %v3562
    %v3564 = vrot.slane %v3563, 4
    %v3565 = vadd.f32 %v3563, %v3564
    %v3566 = vrot.slane %v3565, 2
    %v3567 = vadd.f32 %v3565, %v3566
    %v3568 = vrot.slane %v3567, 1
    %v3569 = vadd.f32 %v3567, %v3568
    %v3570 = vmul.f32 %v3569, %v813
    %v3571 = vmul.f32 %v3559, %v3559
    %v3572 = vmul.f32 %v3560, %v3560
    %v3573 = vsel %vm678, %v3571, 0.0
    %v3574 = vsel %vm678, %v3572, 0.0
    %v3575 = vadd.f32 %v3573, %v3574
    %v3576 = vrot.slane %v3575, 4
    %v3577 = vadd.f32 %v3575, %v3576
    %v3578 = vrot.slane %v3577, 2
    %v3579 = vadd.f32 %v3577, %v3578
    %v3580 = vrot.slane %v3579, 1
    %v3581 = vadd.f32 %v3579, %v3580
    %v3582 = vmul.f32 %v3581, %v813
    %v3583 = vmul.f32 %v3570, %v3570
    %v3584 = vsub.f32 %v3582, %v3583
    %v3585 = vmax.f32 %v3584, 0.0
    %v3586 = vadd.f32 %v3585, 1e-05
    %v3587 = vrsqrt.pop %v3586
    %v3588 = vmul.f32 %v3587, %v3148
    %v3589 = vlaneseq
    %v3590 = vshrl.u32 %v3589, 7
    %v3591 = vsub.s32 1, %v3590
    %v3592 = vrot.slane %v3588, %v3591
    %v3593 = vmul.f32 %v3559, %v3592
    %v3594 = vmul.f32 %v3560, %v3592
    %v3595 = vmul.f32 %v3570, %v3588
    %v3597 = vrot.slane %v3595, 7
    %v3599 = vsub.f32 %v3148, %v3597
    %v3600 = vlaneseq
    %v3601 = vshrl.u32 %v3600, 7
    %v3602 = vsub.s32 2, %v3601
    %v3603 = vrot.slane %v3599, %v3602
    %v3604 = vadd.f32 %v3593, %v3603
    %v3605 = vadd.f32 %v3594, %v3603
    %v3606 = vpack.c.bf16 %v3604, %v3604
    %v3607 = vpack.c.bf16 %v3605, %v3605
    %v3609 = vsel %vm491, %v3606, 0
    %3611 = vmatprep.subr.bf16.mxu0 0
    %3612 = vmatpush1.bf16.msra.mxu0 %v3609
    %3613 = vmatprep.subr.bf16.mxu0 0
    %3614 = vmatpush1.bf16.msra.mxu0 0
    %3615 = vmatprep.subr.bf16.mxu0 0
    %3616 = vmatpush1.bf16.msra.mxu0 0
    %3617 = vmatprep.subr.bf16.mxu0 0
    %3618 = vmatpush1.bf16.msra.mxu0 0
    %3619 = vmatprep.subr.bf16.mxu0 0
    %3620 = vmatpush1.bf16.msra.mxu0 0
    %3621 = vmatprep.subr.bf16.mxu0 0
    %3622 = vmatpush1.bf16.msra.mxu0 0
    %3623 = vmatprep.subr.bf16.mxu0 0
    %3624 = vmatpush1.bf16.msra.mxu0 0
    %3625 = vmatprep.subr.bf16.mxu0 0
    %3626 = vmatpush1.bf16.msra.mxu0 0
    %3627 = vmatprep.subr.bf16.mxu0 0
    %3628 = vmatpush1.bf16.msra.mxu0 0
    %3629 = vmatprep.subr.bf16.mxu0 0
    %3630 = vmatpush1.bf16.msra.mxu0 0
    %3631 = vmatprep.subr.bf16.mxu0 0
    %3632 = vmatpush1.bf16.msra.mxu0 0
    %3633 = vmatprep.subr.bf16.mxu0 0
    %3634 = vmatpush1.bf16.msra.mxu0 0
    %3635 = vmatprep.subr.bf16.mxu0 0
    %3636 = vmatpush1.bf16.msra.mxu0 0
    %3637 = vmatprep.subr.bf16.mxu0 0
    %3638 = vmatpush1.bf16.msra.mxu0 0
    %3639 = vmatprep.subr.bf16.mxu0 0
    %3640 = vmatpush1.bf16.msra.mxu0 0
    %3641 = vmatprep.subr.bf16.mxu0 0
    %3642 = vmatpush1.bf16.msra.mxu0 0
    %3643 = vmatprep.mubr.bf16.mxu0 0
    %3644 = vmatmul.mubr.bf16.gmra.mrb[0].mxu0 %v2865
    %v3645 = vpop.f32.mrb[0].mxu0
    %v3646 = vadd.f32 0.0, %v3645
    %v3647 = vpop.f32.mrb[0].mxu0
    %v3648 = vpop.f32.mrb[0].mxu0
    %v3649 = vpop.f32.mrb[0].mxu0
    %3650 = vdwg.mxu0
    %v3652 = vsel %vm491, %v3607, 0
    %3654 = vmatprep.subr.bf16.mxu0 0
    %3655 = vmatpush1.bf16.msra.mxu0 %v3652
    %3656 = vmatprep.subr.bf16.mxu0 0
    %3657 = vmatpush1.bf16.msra.mxu0 0
    %3658 = vmatprep.subr.bf16.mxu0 0
    %3659 = vmatpush1.bf16.msra.mxu0 0
    %3660 = vmatprep.subr.bf16.mxu0 0
    %3661 = vmatpush1.bf16.msra.mxu0 0
    %3662 = vmatprep.subr.bf16.mxu0 0
    %3663 = vmatpush1.bf16.msra.mxu0 0
    %3664 = vmatprep.subr.bf16.mxu0 0
    %3665 = vmatpush1.bf16.msra.mxu0 0
    %3666 = vmatprep.subr.bf16.mxu0 0
    %3667 = vmatpush1.bf16.msra.mxu0 0
    %3668 = vmatprep.subr.bf16.mxu0 0
    %3669 = vmatpush1.bf16.msra.mxu0 0
    %3670 = vmatprep.subr.bf16.mxu0 0
    %3671 = vmatpush1.bf16.msra.mxu0 0
    %3672 = vmatprep.subr.bf16.mxu0 0
    %3673 = vmatpush1.bf16.msra.mxu0 0
    %3674 = vmatprep.subr.bf16.mxu0 0
    %3675 = vmatpush1.bf16.msra.mxu0 0
    %3676 = vmatprep.subr.bf16.mxu0 0
    %3677 = vmatpush1.bf16.msra.mxu0 0
    %3678 = vmatprep.subr.bf16.mxu0 0
    %3679 = vmatpush1.bf16.msra.mxu0 0
    %3680 = vmatprep.subr.bf16.mxu0 0
    %3681 = vmatpush1.bf16.msra.mxu0 0
    %3682 = vmatprep.subr.bf16.mxu0 0
    %3683 = vmatpush1.bf16.msra.mxu0 0
    %3684 = vmatprep.subr.bf16.mxu0 0
    %3685 = vmatpush1.bf16.msra.mxu0 0
    %3686 = vmatprep.mubr.bf16.mxu0 0
    %3687 = vmatmul.mubr.bf16.gmra.mrb[0].mxu0 %v2911
    %v3688 = vpop.f32.mrb[0].mxu0
    %v3689 = vadd.f32 0.0, %v3688
    %v3690 = vpop.f32.mrb[0].mxu0
    %v3691 = vpop.f32.mrb[0].mxu0
    %v3692 = vpop.f32.mrb[0].mxu0
    %3693 = vdwg.mxu0
    %v3694 = vmul.f32 %v3646, %v2959
    %v3695 = vmul.f32 %v3689, %v2964
    %v3696 = vld [vmem:[#allocation21] sm:$0xf]
    %v3697 = vld [vmem:[#allocation21 + $0x4] sm:$0xf]
    %v3698 = vld [vmem:[#allocation21 + $0x8] sm:$0xf]
    %v3699 = vld [vmem:[#allocation21 + $0xc] sm:$0xf]
    %v3700 = vpack.c.bf16 %v3694, %v3694
    %v3701 = vpack.c.bf16 %v3695, %v3695
    %s3702 = scalar_lea.vmem [#allocation21], 16
    %v3703 = vld [vmem:[%s3702] sm:$0xf]
    %v3704 = vld [vmem:[%s3702 + $0x4] sm:$0xf]
    %v3705 = vld [vmem:[%s3702 + $0x8] sm:$0xf]
    %v3706 = vld [vmem:[%s3702 + $0xc] sm:$0xf]
    %v3709 = vunpack.c.l.b16 %v3606
    %v3710 = vunpack.c.l.b16 %v3607
    %v3711 = vpack.c.b16 %v3710, %v3709
    %v3716 = vunpack.c.l.b16 %v3703
    %v3717 = vunpack.c.l.b16 %v3704
    %v3718 = vunpack.c.l.b16 %v3705
    %v3719 = vunpack.c.l.b16 %v3706
    %v3720 = vpack.c.b16 %v3717, %v3716
    %v3721 = vpack.c.b16 %v3719, %v3718
    %v3725 = vsel %vm678, %v3711, 0
    %3727 = vmatprep.subr.bf16.mxu0 0
    %3728 = vmatpush1.bf16.msra.mxu0 %v3720
    %3729 = vmatprep.subr.bf16.mxu0 0
    %3730 = vmatpush1.bf16.msra.mxu0 %v3721
    %3731 = vmatprep.subr.bf16.mxu0 0
    %3732 = vmatpush1.bf16.msra.mxu0 0
    %3733 = vmatprep.subr.bf16.mxu0 0
    %3734 = vmatpush1.bf16.msra.mxu0 0
    %3735 = vmatprep.subr.bf16.mxu0 0
    %3736 = vmatpush1.bf16.msra.mxu0 0
    %3737 = vmatprep.subr.bf16.mxu0 0
    %3738 = vmatpush1.bf16.msra.mxu0 0
    %3739 = vmatprep.subr.bf16.mxu0 0
    %3740 = vmatpush1.bf16.msra.mxu0 0
    %3741 = vmatprep.subr.bf16.mxu0 0
    %3742 = vmatpush1.bf16.msra.mxu0 0
    %3743 = vmatprep.subr.bf16.mxu0 0
    %3744 = vmatpush1.bf16.msra.mxu0 0
    %3745 = vmatprep.subr.bf16.mxu0 0
    %3746 = vmatpush1.bf16.msra.mxu0 0
    %3747 = vmatprep.subr.bf16.mxu0 0
    %3748 = vmatpush1.bf16.msra.mxu0 0
    %3749 = vmatprep.subr.bf16.mxu0 0
    %3750 = vmatpush1.bf16.msra.mxu0 0
    %3751 = vmatprep.subr.bf16.mxu0 0
    %3752 = vmatpush1.bf16.msra.mxu0 0
    %3753 = vmatprep.subr.bf16.mxu0 0
    %3754 = vmatpush1.bf16.msra.mxu0 0
    %3755 = vmatprep.subr.bf16.mxu0 0
    %3756 = vmatpush1.bf16.msra.mxu0 0
    %3757 = vmatprep.subr.bf16.mxu0 0
    %3758 = vmatpush1.bf16.msra.mxu0 0
    %3759 = vmatprep.mubr.bf16.mxu0 0
    %3760 = vmatmul.mubr.bf16.gmra.mrb[0].mxu0 %v3725
    %v3761 = vpop.f32.mrb[0].mxu0
    %v3762 = vadd.f32 0.0, %v3761
    %v3763 = vpop.f32.mrb[0].mxu0
    %v3764 = vpop.f32.mrb[0].mxu0
    %v3765 = vadd.f32 0.0, %v3764
    %v3766 = vpop.f32.mrb[0].mxu0
    %3767 = vdwg.mxu0
    %v3770 = vunpack.c.l.b16 %v3700
    %v3771 = vunpack.c.l.b16 %v3701
    %v3772 = vpack.c.b16 %v3771, %v3770
    %v3777 = vunpack.c.l.b16 %v3696
    %v3778 = vunpack.c.l.b16 %v3697
    %v3779 = vunpack.c.l.b16 %v3698
    %v3780 = vunpack.c.l.b16 %v3699
    %v3781 = vpack.c.b16 %v3778, %v3777
    %v3782 = vpack.c.b16 %v3780, %v3779
    %v3786 = vsel %vm678, %v3772, 0
    %3788 = vmatprep.subr.bf16.mxu0 0
    %3789 = vmatpush1.bf16.msra.mxu0 %v3781
    %3790 = vmatprep.subr.bf16.mxu0 0
    %3791 = vmatpush1.bf16.msra.mxu0 %v3782
    %3792 = vmatprep.subr.bf16.mxu0 0
    %3793 = vmatpush1.bf16.msra.mxu0 0
    %3794 = vmatprep.subr.bf16.mxu0 0
    %3795 = vmatpush1.bf16.msra.mxu0 0
    %3796 = vmatprep.subr.bf16.mxu0 0
    %3797 = vmatpush1.bf16.msra.mxu0 0
    %3798 = vmatprep.subr.bf16.mxu0 0
    %3799 = vmatpush1.bf16.msra.mxu0 0
    %3800 = vmatprep.subr.bf16.mxu0 0
    %3801 = vmatpush1.bf16.msra.mxu0 0
    %3802 = vmatprep.subr.bf16.mxu0 0
    %3803 = vmatpush1.bf16.msra.mxu0 0
    %3804 = vmatprep.subr.bf16.mxu0 0
    %3805 = vmatpush1.bf16.msra.mxu0 0
    %3806 = vmatprep.subr.bf16.mxu0 0
    %3807 = vmatpush1.bf16.msra.mxu0 0
    %3808 = vmatprep.subr.bf16.mxu0 0
    %3809 = vmatpush1.bf16.msra.mxu0 0
    %3810 = vmatprep.subr.bf16.mxu0 0
    %3811 = vmatpush1.bf16.msra.mxu0 0
    %3812 = vmatprep.subr.bf16.mxu0 0
    %3813 = vmatpush1.bf16.msra.mxu0 0
    %3814 = vmatprep.subr.bf16.mxu0 0
    %3815 = vmatpush1.bf16.msra.mxu0 0
    %3816 = vmatprep.subr.bf16.mxu0 0
    %3817 = vmatpush1.bf16.msra.mxu0 0
    %3818 = vmatprep.subr.bf16.mxu0 0
    %3819 = vmatpush1.bf16.msra.mxu0 0
    %3820 = vmatprep.mubr.bf16.mxu0 0
    %3821 = vmatmul.mubr.bf16.gmra.mrb[0].mxu0 %v3786
    %v3822 = vpop.f32.mrb[0].mxu0
    %v3823 = vadd.f32 %v3762, %v3822
    %v3824 = vpop.f32.mrb[0].mxu0
    %v3825 = vpop.f32.mrb[0].mxu0
    %v3826 = vadd.f32 %v3765, %v3825
    %v3827 = vpop.f32.mrb[0].mxu0
    %3828 = vdwg.mxu0
    %v3829 = vlaneseq
    %v3830 = vshrl.u32 %v3829, 7
    %v3831 = vsub.s32 0, %v3830
    %v3832 = vrot.slane %v3150, %v3831
    %v3833 = vadd.f32 %v3823, %v3832
    %v3834 = vadd.f32 %v3826, %v3832
    %v3835 = vmax.f32 %v3833, 0.0
    %v3836 = vmax.f32 %v3834, 0.0
    %v3837 = vsel %vm678, %v3835, 0.0
    %v3838 = vsel %vm678, %v3836, 0.0
    %v3839 = vadd.f32 %v3837, %v3838
    %v3840 = vrot.slane %v3839, 4
    %v3841 = vadd.f32 %v3839, %v3840
    %v3842 = vrot.slane %v3841, 2
    %v3843 = vadd.f32 %v3841, %v3842
    %v3844 = vrot.slane %v3843, 1
    %v3845 = vadd.f32 %v3843, %v3844
    %v3846 = vmul.f32 %v3845, %v813
    %v3847 = vmul.f32 %v3835, %v3835
    %v3848 = vmul.f32 %v3836, %v3836
    %v3849 = vsel %vm678, %v3847, 0.0
    %v3850 = vsel %vm678, %v3848, 0.0
    %v3851 = vadd.f32 %v3849, %v3850
    %v3852 = vrot.slane %v3851, 4
    %v3853 = vadd.f32 %v3851, %v3852
    %v3854 = vrot.slane %v3853, 2
    %v3855 = vadd.f32 %v3853, %v3854
    %v3856 = vrot.slane %v3855, 1
    %v3857 = vadd.f32 %v3855, %v3856
    %v3858 = vmul.f32 %v3857, %v813
    %v3859 = vmul.f32 %v3846, %v3846
    %v3860 = vsub.f32 %v3858, %v3859
    %v3861 = vmax.f32 %v3860, 0.0
    %v3862 = vadd.f32 %v3861, 1e-05
    %v3863 = vrsqrt.pop %v3862
    %v3864 = vmul.f32 %v3863, %v3150
    %v3865 = vlaneseq
    %v3866 = vshrl.u32 %v3865, 7
    %v3867 = vsub.s32 1, %v3866
    %v3868 = vrot.slane %v3864, %v3867
    %v3869 = vmul.f32 %v3835, %v3868
    %v3870 = vmul.f32 %v3836, %v3868
    %v3871 = vmul.f32 %v3846, %v3864
    %v3873 = vrot.slane %v3871, 7
    %v3875 = vsub.f32 %v3150, %v3873
    %v3876 = vlaneseq
    %v3877 = vshrl.u32 %v3876, 7
    %v3878 = vsub.s32 2, %v3877
    %v3879 = vrot.slane %v3875, %v3878
    %v3880 = vadd.f32 %v3869, %v3879
    %v3881 = vadd.f32 %v3870, %v3879
    %v3882 = vpack.c.bf16 %v3880, %v3880
    %v3883 = vpack.c.bf16 %v3881, %v3881
    %v3885 = vsel %vm491, %v3882, 0
    %3887 = vmatprep.subr.bf16.mxu0 0
    %3888 = vmatpush1.bf16.msra.mxu0 %v3885
    %3889 = vmatprep.subr.bf16.mxu0 0
    %3890 = vmatpush1.bf16.msra.mxu0 0
    %3891 = vmatprep.subr.bf16.mxu0 0
    %3892 = vmatpush1.bf16.msra.mxu0 0
    %3893 = vmatprep.subr.bf16.mxu0 0
    %3894 = vmatpush1.bf16.msra.mxu0 0
    %3895 = vmatprep.subr.bf16.mxu0 0
    %3896 = vmatpush1.bf16.msra.mxu0 0
    %3897 = vmatprep.subr.bf16.mxu0 0
    %3898 = vmatpush1.bf16.msra.mxu0 0
    %3899 = vmatprep.subr.bf16.mxu0 0
    %3900 = vmatpush1.bf16.msra.mxu0 0
    %3901 = vmatprep.subr.bf16.mxu0 0
    %3902 = vmatpush1.bf16.msra.mxu0 0
    %3903 = vmatprep.subr.bf16.mxu0 0
    %3904 = vmatpush1.bf16.msra.mxu0 0
    %3905 = vmatprep.subr.bf16.mxu0 0
    %3906 = vmatpush1.bf16.msra.mxu0 0
    %3907 = vmatprep.subr.bf16.mxu0 0
    %3908 = vmatpush1.bf16.msra.mxu0 0
    %3909 = vmatprep.subr.bf16.mxu0 0
    %3910 = vmatpush1.bf16.msra.mxu0 0
    %3911 = vmatprep.subr.bf16.mxu0 0
    %3912 = vmatpush1.bf16.msra.mxu0 0
    %3913 = vmatprep.subr.bf16.mxu0 0
    %3914 = vmatpush1.bf16.msra.mxu0 0
    %3915 = vmatprep.subr.bf16.mxu0 0
    %3916 = vmatpush1.bf16.msra.mxu0 0
    %3917 = vmatprep.subr.bf16.mxu0 0
    %3918 = vmatpush1.bf16.msra.mxu0 0
    %3919 = vmatprep.mubr.bf16.mxu0 0
    %3920 = vmatmul.mubr.bf16.gmra.mrb[0].mxu0 %v2865
    %v3921 = vpop.f32.mrb[0].mxu0
    %v3922 = vadd.f32 0.0, %v3921
    %v3923 = vpop.f32.mrb[0].mxu0
    %v3924 = vpop.f32.mrb[0].mxu0
    %v3925 = vpop.f32.mrb[0].mxu0
    %3926 = vdwg.mxu0
    %v3928 = vsel %vm491, %v3883, 0
    %3930 = vmatprep.subr.bf16.mxu0 0
    %3931 = vmatpush1.bf16.msra.mxu0 %v3928
    %3932 = vmatprep.subr.bf16.mxu0 0
    %3933 = vmatpush1.bf16.msra.mxu0 0
    %3934 = vmatprep.subr.bf16.mxu0 0
    %3935 = vmatpush1.bf16.msra.mxu0 0
    %3936 = vmatprep.subr.bf16.mxu0 0
    %3937 = vmatpush1.bf16.msra.mxu0 0
    %3938 = vmatprep.subr.bf16.mxu0 0
    %3939 = vmatpush1.bf16.msra.mxu0 0
    %3940 = vmatprep.subr.bf16.mxu0 0
    %3941 = vmatpush1.bf16.msra.mxu0 0
    %3942 = vmatprep.subr.bf16.mxu0 0
    %3943 = vmatpush1.bf16.msra.mxu0 0
    %3944 = vmatprep.subr.bf16.mxu0 0
    %3945 = vmatpush1.bf16.msra.mxu0 0
    %3946 = vmatprep.subr.bf16.mxu0 0
    %3947 = vmatpush1.bf16.msra.mxu0 0
    %3948 = vmatprep.subr.bf16.mxu0 0
    %3949 = vmatpush1.bf16.msra.mxu0 0
    %3950 = vmatprep.subr.bf16.mxu0 0
    %3951 = vmatpush1.bf16.msra.mxu0 0
    %3952 = vmatprep.subr.bf16.mxu0 0
    %3953 = vmatpush1.bf16.msra.mxu0 0
    %3954 = vmatprep.subr.bf16.mxu0 0
    %3955 = vmatpush1.bf16.msra.mxu0 0
    %3956 = vmatprep.subr.bf16.mxu0 0
    %3957 = vmatpush1.bf16.msra.mxu0 0
    %3958 = vmatprep.subr.bf16.mxu0 0
    %3959 = vmatpush1.bf16.msra.mxu0 0
    %3960 = vmatprep.subr.bf16.mxu0 0
    %3961 = vmatpush1.bf16.msra.mxu0 0
    %3962 = vmatprep.mubr.bf16.mxu0 0
    %3963 = vmatmul.mubr.bf16.gmra.mrb[0].mxu0 %v2911
    %v3964 = vpop.f32.mrb[0].mxu0
    %v3965 = vadd.f32 0.0, %v3964
    %v3966 = vpop.f32.mrb[0].mxu0
    %v3967 = vpop.f32.mrb[0].mxu0
    %v3968 = vpop.f32.mrb[0].mxu0
    %3969 = vdwg.mxu0
    %v3970 = vmul.f32 %v3922, %v2959
    %v3971 = vmul.f32 %v3965, %v2964
    %v3972 = vld [vmem:[#allocation22] sm:$0xf]
    %v3973 = vld [vmem:[#allocation22 + $0x4] sm:$0xf]
    %v3974 = vld [vmem:[#allocation22 + $0x8] sm:$0xf]
    %v3975 = vld [vmem:[#allocation22 + $0xc] sm:$0xf]
    %v3976 = vpack.c.bf16 %v3970, %v3970
    %v3977 = vpack.c.bf16 %v3971, %v3971
    %s3978 = scalar_lea.vmem [#allocation22], 16
    %v3979 = vld [vmem:[%s3978] sm:$0xf]
    %v3980 = vld [vmem:[%s3978 + $0x4] sm:$0xf]
    %v3981 = vld [vmem:[%s3978 + $0x8] sm:$0xf]
    %v3982 = vld [vmem:[%s3978 + $0xc] sm:$0xf]
    %v3985 = vunpack.c.l.b16 %v3882
    %v3986 = vunpack.c.l.b16 %v3883
    %v3987 = vpack.c.b16 %v3986, %v3985
    %v3992 = vunpack.c.l.b16 %v3979
    %v3993 = vunpack.c.l.b16 %v3980
    %v3994 = vunpack.c.l.b16 %v3981
    %v3995 = vunpack.c.l.b16 %v3982
    %v3996 = vpack.c.b16 %v3993, %v3992
    %v3997 = vpack.c.b16 %v3995, %v3994
    %v4001 = vsel %vm678, %v3987, 0
    %4003 = vmatprep.subr.bf16.mxu0 0
    %4004 = vmatpush1.bf16.msra.mxu0 %v3996
    %4005 = vmatprep.subr.bf16.mxu0 0
    %4006 = vmatpush1.bf16.msra.mxu0 %v3997
    %4007 = vmatprep.subr.bf16.mxu0 0
    %4008 = vmatpush1.bf16.msra.mxu0 0
    %4009 = vmatprep.subr.bf16.mxu0 0
    %4010 = vmatpush1.bf16.msra.mxu0 0
    %4011 = vmatprep.subr.bf16.mxu0 0
    %4012 = vmatpush1.bf16.msra.mxu0 0
    %4013 = vmatprep.subr.bf16.mxu0 0
    %4014 = vmatpush1.bf16.msra.mxu0 0
    %4015 = vmatprep.subr.bf16.mxu0 0
    %4016 = vmatpush1.bf16.msra.mxu0 0
    %4017 = vmatprep.subr.bf16.mxu0 0
    %4018 = vmatpush1.bf16.msra.mxu0 0
    %4019 = vmatprep.subr.bf16.mxu0 0
    %4020 = vmatpush1.bf16.msra.mxu0 0
    %4021 = vmatprep.subr.bf16.mxu0 0
    %4022 = vmatpush1.bf16.msra.mxu0 0
    %4023 = vmatprep.subr.bf16.mxu0 0
    %4024 = vmatpush1.bf16.msra.mxu0 0
    %4025 = vmatprep.subr.bf16.mxu0 0
    %4026 = vmatpush1.bf16.msra.mxu0 0
    %4027 = vmatprep.subr.bf16.mxu0 0
    %4028 = vmatpush1.bf16.msra.mxu0 0
    %4029 = vmatprep.subr.bf16.mxu0 0
    %4030 = vmatpush1.bf16.msra.mxu0 0
    %4031 = vmatprep.subr.bf16.mxu0 0
    %4032 = vmatpush1.bf16.msra.mxu0 0
    %4033 = vmatprep.subr.bf16.mxu0 0
    %4034 = vmatpush1.bf16.msra.mxu0 0
    %4035 = vmatprep.mubr.bf16.mxu0 0
    %4036 = vmatmul.mubr.bf16.gmra.mrb[0].mxu0 %v4001
    %v4037 = vpop.f32.mrb[0].mxu0
    %v4038 = vadd.f32 0.0, %v4037
    %v4039 = vpop.f32.mrb[0].mxu0
    %v4040 = vpop.f32.mrb[0].mxu0
    %v4041 = vadd.f32 0.0, %v4040
    %v4042 = vpop.f32.mrb[0].mxu0
    %4043 = vdwg.mxu0
    %v4046 = vunpack.c.l.b16 %v3976
    %v4047 = vunpack.c.l.b16 %v3977
    %v4048 = vpack.c.b16 %v4047, %v4046
    %v4053 = vunpack.c.l.b16 %v3972
    %v4054 = vunpack.c.l.b16 %v3973
    %v4055 = vunpack.c.l.b16 %v3974
    %v4056 = vunpack.c.l.b16 %v3975
    %v4057 = vpack.c.b16 %v4054, %v4053
    %v4058 = vpack.c.b16 %v4056, %v4055
    %v4062 = vsel %vm678, %v4048, 0
    %4064 = vmatprep.subr.bf16.mxu0 0
    %4065 = vmatpush1.bf16.msra.mxu0 %v4057
    %4066 = vmatprep.subr.bf16.mxu0 0
    %4067 = vmatpush1.bf16.msra.mxu0 %v4058
    %4068 = vmatprep.subr.bf16.mxu0 0
    %4069 = vmatpush1.bf16.msra.mxu0 0
    %4070 = vmatprep.subr.bf16.mxu0 0
    %4071 = vmatpush1.bf16.msra.mxu0 0
    %4072 = vmatprep.subr.bf16.mxu0 0
    %4073 = vmatpush1.bf16.msra.mxu0 0
    %4074 = vmatprep.subr.bf16.mxu0 0
    %4075 = vmatpush1.bf16.msra.mxu0 0
    %4076 = vmatprep.subr.bf16.mxu0 0
    %4077 = vmatpush1.bf16.msra.mxu0 0
    %4078 = vmatprep.subr.bf16.mxu0 0
    %4079 = vmatpush1.bf16.msra.mxu0 0
    %4080 = vmatprep.subr.bf16.mxu0 0
    %4081 = vmatpush1.bf16.msra.mxu0 0
    %4082 = vmatprep.subr.bf16.mxu0 0
    %4083 = vmatpush1.bf16.msra.mxu0 0
    %4084 = vmatprep.subr.bf16.mxu0 0
    %4085 = vmatpush1.bf16.msra.mxu0 0
    %4086 = vmatprep.subr.bf16.mxu0 0
    %4087 = vmatpush1.bf16.msra.mxu0 0
    %4088 = vmatprep.subr.bf16.mxu0 0
    %4089 = vmatpush1.bf16.msra.mxu0 0
    %4090 = vmatprep.subr.bf16.mxu0 0
    %4091 = vmatpush1.bf16.msra.mxu0 0
    %4092 = vmatprep.subr.bf16.mxu0 0
    %4093 = vmatpush1.bf16.msra.mxu0 0
    %4094 = vmatprep.subr.bf16.mxu0 0
    %4095 = vmatpush1.bf16.msra.mxu0 0
    %4096 = vmatprep.mubr.bf16.mxu0 0
    %4097 = vmatmul.mubr.bf16.gmra.mrb[0].mxu0 %v4062
    %v4098 = vpop.f32.mrb[0].mxu0
    %v4099 = vadd.f32 %v4038, %v4098
    %v4100 = vpop.f32.mrb[0].mxu0
    %v4101 = vpop.f32.mrb[0].mxu0
    %v4102 = vadd.f32 %v4041, %v4101
    %v4103 = vpop.f32.mrb[0].mxu0
    %4104 = vdwg.mxu0
    %v4105 = vlaneseq
    %v4106 = vshrl.u32 %v4105, 7
    %v4107 = vsub.s32 0, %v4106
    %v4108 = vrot.slane %v3151, %v4107
    %v4109 = vadd.f32 %v4099, %v4108
    %v4110 = vadd.f32 %v4102, %v4108
    %v4111 = vmax.f32 %v4109, 0.0
    %v4112 = vmax.f32 %v4110, 0.0
    %vm4113 = vcmask 15360
    %v4114 = vsel %vm4113, %v4111, 0.0
    %v4115 = vsel %vm4113, %v4112, 0.0
    %v4116 = vadd.f32 %v4114, %v4115
    %v4117 = vrot.slane %v4116, 4
    %v4118 = vadd.f32 %v4116, %v4117
    %v4119 = vrot.slane %v4118, 2
    %v4120 = vadd.f32 %v4118, %v4119
    %v4121 = vrot.slane %v4120, 1
    %v4122 = vadd.f32 %v4120, %v4121
    %v4123 = vmul.f32 %v4122, %v813
    %v4124 = vmul.f32 %v4111, %v4111
    %v4125 = vmul.f32 %v4112, %v4112
    %v4126 = vsel %vm4113, %v4124, 0.0
    %v4127 = vsel %vm4113, %v4125, 0.0
    %v4128 = vadd.f32 %v4126, %v4127
    %v4129 = vrot.slane %v4128, 4
    %v4130 = vadd.f32 %v4128, %v4129
    %v4131 = vrot.slane %v4130, 2
    %v4132 = vadd.f32 %v4130, %v4131
    %v4133 = vrot.slane %v4132, 1
    %v4134 = vadd.f32 %v4132, %v4133
    %v4135 = vmul.f32 %v4134, %v813
    %v4136 = vmul.f32 %v4123, %v4123
    %v4137 = vsub.f32 %v4135, %v4136
    %v4138 = vmax.f32 %v4137, 0.0
    %v4139 = vadd.f32 %v4138, 1e-05
    %v4140 = vrsqrt.pop %v4139
    %v4141 = vmul.f32 %v4140, %v3151
    %v4142 = vlaneseq
    %v4143 = vshrl.u32 %v4142, 7
    %v4144 = vsub.s32 1, %v4143
    %v4145 = vrot.slane %v4141, %v4144
    %v4146 = vmul.f32 %v4111, %v4145
    %v4147 = vmul.f32 %v4112, %v4145
    %v4148 = vmul.f32 %v4123, %v4141
    %v4150 = vrot.slane %v4148, 7
    %v4152 = vsub.f32 %v3151, %v4150
    %v4153 = vlaneseq
    %v4154 = vshrl.u32 %v4153, 7
    %v4155 = vsub.s32 2, %v4154
    %v4156 = vrot.slane %v4152, %v4155
    %v4157 = vadd.f32 %v4146, %v4156
    %v4158 = vadd.f32 %v4147, %v4156
    %v4159 = vld [vmem:[#allocation24] sm:$0xf]
    %v4160 = vld [vmem:[#allocation24 + $0x4] sm:$0xf]
    %v4161 = vld [vmem:[#allocation24 + $0x8] sm:$0xf]
    %v4162 = vld [vmem:[#allocation24 + $0xc] sm:$0xf]
    %v4163 = vld [vmem:[#allocation24 + $0x10] sm:$0xf]
    %v4164 = vld [vmem:[#allocation24 + $0x14] sm:$0xf]
    %v4165 = vld [vmem:[#allocation24 + $0x18] sm:$0xf]
    %v4166 = vld [vmem:[#allocation24 + $0x1c] sm:$0xf]
    %v4171 = vunpack.c.l.b16 %v4163
    %v4172 = vunpack.c.l.b16 %v4164
    %v4173 = vunpack.c.l.b16 %v4165
    %v4174 = vunpack.c.l.b16 %v4166
    %v4175 = vpack.c.b16 %v4172, %v4171
    %v4176 = vpack.c.b16 %v4174, %v4173
    %4179 = vmatprep.subr.bf16.mxu0 0
    %4180 = vmatpush1.bf16.msra.mxu0 %v4175
    %4181 = vmatprep.subr.bf16.mxu0 0
    %4182 = vmatpush1.bf16.msra.mxu0 %v4176
    %4183 = vmatprep.subr.bf16.mxu0 0
    %4184 = vmatpush1.bf16.msra.mxu0 0
    %4185 = vmatprep.subr.bf16.mxu0 0
    %4186 = vmatpush1.bf16.msra.mxu0 0
    %4187 = vmatprep.subr.bf16.mxu0 0
    %4188 = vmatpush1.bf16.msra.mxu0 0
    %4189 = vmatprep.subr.bf16.mxu0 0
    %4190 = vmatpush1.bf16.msra.mxu0 0
    %4191 = vmatprep.subr.bf16.mxu0 0
    %4192 = vmatpush1.bf16.msra.mxu0 0
    %4193 = vmatprep.subr.bf16.mxu0 0
    %4194 = vmatpush1.bf16.msra.mxu0 0
    %4195 = vmatprep.subr.bf16.mxu0 0
    %4196 = vmatpush1.bf16.msra.mxu0 0
    %4197 = vmatprep.subr.bf16.mxu0 0
    %4198 = vmatpush1.bf16.msra.mxu0 0
    %4199 = vmatprep.subr.bf16.mxu0 0
    %4200 = vmatpush1.bf16.msra.mxu0 0
    %4201 = vmatprep.subr.bf16.mxu0 0
    %4202 = vmatpush1.bf16.msra.mxu0 0
    %4203 = vmatprep.subr.bf16.mxu0 0
    %4204 = vmatpush1.bf16.msra.mxu0 0
    %4205 = vmatprep.subr.bf16.mxu0 0
    %4206 = vmatpush1.bf16.msra.mxu0 0
    %4207 = vmatprep.subr.bf16.mxu0 0
    %4208 = vmatpush1.bf16.msra.mxu0 0
    %4209 = vmatprep.subr.bf16.mxu0 0
    %4210 = vmatpush1.bf16.msra.mxu0 0
    %4211 = vmatprep.mubr.bf16.mxu0 0
    %4212 = vmatmul.mubr.bf16.gmra.mrb[0].mxu0 %v4001
    %v4213 = vpop.f32.mrb[0].mxu0
    %v4214 = vadd.f32 0.0, %v4213
    %v4215 = vpop.f32.mrb[0].mxu0
    %v4216 = vpop.f32.mrb[0].mxu0
    %v4217 = vadd.f32 0.0, %v4216
    %v4218 = vpop.f32.mrb[0].mxu0
    %4219 = vdwg.mxu0
    %v4224 = vunpack.c.l.b16 %v4159
    %v4225 = vunpack.c.l.b16 %v4160
    %v4226 = vunpack.c.l.b16 %v4161
    %v4227 = vunpack.c.l.b16 %v4162
    %v4228 = vpack.c.b16 %v4225, %v4224
    %v4229 = vpack.c.b16 %v4227, %v4226
    %4232 = vmatprep.subr.bf16.mxu0 0
    %4233 = vmatpush1.bf16.msra.mxu0 %v4228
    %4234 = vmatprep.subr.bf16.mxu0 0
    %4235 = vmatpush1.bf16.msra.mxu0 %v4229
    %4236 = vmatprep.subr.bf16.mxu0 0
    %4237 = vmatpush1.bf16.msra.mxu0 0
    %4238 = vmatprep.subr.bf16.mxu0 0
    %4239 = vmatpush1.bf16.msra.mxu0 0
    %4240 = vmatprep.subr.bf16.mxu0 0
    %4241 = vmatpush1.bf16.msra.mxu0 0
    %4242 = vmatprep.subr.bf16.mxu0 0
    %4243 = vmatpush1.bf16.msra.mxu0 0
    %4244 = vmatprep.subr.bf16.mxu0 0
    %4245 = vmatpush1.bf16.msra.mxu0 0
    %4246 = vmatprep.subr.bf16.mxu0 0
    %4247 = vmatpush1.bf16.msra.mxu0 0
    %4248 = vmatprep.subr.bf16.mxu0 0
    %4249 = vmatpush1.bf16.msra.mxu0 0
    %4250 = vmatprep.subr.bf16.mxu0 0
    %4251 = vmatpush1.bf16.msra.mxu0 0
    %4252 = vmatprep.subr.bf16.mxu0 0
    %4253 = vmatpush1.bf16.msra.mxu0 0
    %4254 = vmatprep.subr.bf16.mxu0 0
    %4255 = vmatpush1.bf16.msra.mxu0 0
    %4256 = vmatprep.subr.bf16.mxu0 0
    %4257 = vmatpush1.bf16.msra.mxu0 0
    %4258 = vmatprep.subr.bf16.mxu0 0
    %4259 = vmatpush1.bf16.msra.mxu0 0
    %4260 = vmatprep.subr.bf16.mxu0 0
    %4261 = vmatpush1.bf16.msra.mxu0 0
    %4262 = vmatprep.subr.bf16.mxu0 0
    %4263 = vmatpush1.bf16.msra.mxu0 0
    %4264 = vmatprep.mubr.bf16.mxu0 0
    %4265 = vmatmul.mubr.bf16.gmra.mrb[0].mxu0 %v3725
    %v4266 = vpop.f32.mrb[0].mxu0
    %v4267 = vadd.f32 %v4214, %v4266
    %v4268 = vpop.f32.mrb[0].mxu0
    %v4269 = vpop.f32.mrb[0].mxu0
    %v4270 = vadd.f32 %v4217, %v4269
    %v4271 = vpop.f32.mrb[0].mxu0
    %4272 = vdwg.mxu0
    %v4273 = vld [vmem:[#allocation24 + $0x20] sm:$0x1]
    %v4274 = vpack.c.bf16 %v4157, %v4157
    %v4275 = vpack.c.bf16 %v4158, %v4158
    %v4278 = vunpack.c.l.b16 %v4274
    %v4279 = vunpack.c.l.b16 %v4275
    %v4280 = vpack.c.b16 %v4279, %v4278
    %v4282 = vsel %vm4113, %v4280, 0
    %vm4284 = vcmask 1040384
    %v4286 = vsel %vm4284, %v4273, 0
    %4288 = vmatprep.subr.bf16.mxu0 0
    %4289 = vmatpush1.bf16.msra.mxu0 %v4286
    %4290 = vmatprep.subr.bf16.mxu0 0
    %4291 = vmatpush1.bf16.msra.mxu0 0
    %4292 = vmatprep.subr.bf16.mxu0 0
    %4293 = vmatpush1.bf16.msra.mxu0 0
    %4294 = vmatprep.subr.bf16.mxu0 0
    %4295 = vmatpush1.bf16.msra.mxu0 0
    %4296 = vmatprep.subr.bf16.mxu0 0
    %4297 = vmatpush1.bf16.msra.mxu0 0
    %4298 = vmatprep.subr.bf16.mxu0 0
    %4299 = vmatpush1.bf16.msra.mxu0 0
    %4300 = vmatprep.subr.bf16.mxu0 0
    %4301 = vmatpush1.bf16.msra.mxu0 0
    %4302 = vmatprep.subr.bf16.mxu0 0
    %4303 = vmatpush1.bf16.msra.mxu0 0
    %4304 = vmatprep.subr.bf16.mxu0 0
    %4305 = vmatpush1.bf16.msra.mxu0 0
    %4306 = vmatprep.subr.bf16.mxu0 0
    %4307 = vmatpush1.bf16.msra.mxu0 0
    %4308 = vmatprep.subr.bf16.mxu0 0
    %4309 = vmatpush1.bf16.msra.mxu0 0
    %4310 = vmatprep.subr.bf16.mxu0 0
    %4311 = vmatpush1.bf16.msra.mxu0 0
    %4312 = vmatprep.subr.bf16.mxu0 0
    %4313 = vmatpush1.bf16.msra.mxu0 0
    %4314 = vmatprep.subr.bf16.mxu0 0
    %4315 = vmatpush1.bf16.msra.mxu0 0
    %4316 = vmatprep.subr.bf16.mxu0 0
    %4317 = vmatpush1.bf16.msra.mxu0 0
    %4318 = vmatprep.subr.bf16.mxu0 0
    %4319 = vmatpush1.bf16.msra.mxu0 0
    %4320 = vmatprep.mubr.bf16.mxu0 0
    %4321 = vmatmul.mubr.bf16.gmra.mrb[0].mxu0 %v4282
    %v4322 = vpop.f32.mrb[0].mxu0
    %v4323 = vadd.f32 0.0, %v4322
    %v4324 = vpop.f32.mrb[0].mxu0
    %v4325 = vpop.f32.mrb[0].mxu0
    %v4326 = vadd.f32 0.0, %v4325
    %v4327 = vpop.f32.mrb[0].mxu0
    %4328 = vdwg.mxu0
    %v4329 = vadd.f32 %v4267, %v4323
    %v4330 = vadd.f32 %v4270, %v4326
    %v4331 = vld [vmem:[#allocation27 + $0x3] sm:$0x1]
    %v4332 = vlaneseq
    %v4333 = vshrl.u32 %v4332, 7
    %v4334 = vsub.s32 0, %v4333
    %v4335 = vrot.slane %v4331, %v4334
    %v4336 = vadd.f32 %v4329, %v4335
    %v4337 = vadd.f32 %v4330, %v4335
    %v4338 = vmax.f32 %v4336, 0.0
    %v4339 = vmax.f32 %v4337, 0.0
    %v4340 = vld [vmem:[#allocation31] sm:$0x7]
    %s4341 = scalar_lea.vmem [#allocation31], 4
    %v4342 = vld [vmem:[%s4341] sm:$0x7]
    %s4343 = scalar_lea.vmem [#allocation31], 8
    %v4344 = vld [vmem:[%s4343] sm:$0x7]
    %v4345 = vld [vmem:[%s39] sm:$0xf]
    %v4346 = vld [vmem:[%s39 + $0x4] sm:$0xf]
    %v4347 = vld [vmem:[%s39 + $0x8] sm:$0xf]
    %v4348 = vld [vmem:[%s39 + $0xc] sm:$0xf]
    %s4349 = scalar_lea.vmem %s39, 48
    %v4350 = vld [vmem:[%s4349] sm:$0xf]
    %v4351 = vld [vmem:[%s4349 + $0x4] sm:$0xf]
    %v4352 = vld [vmem:[%s4349 + $0x8] sm:$0xf]
    %v4353 = vld [vmem:[%s4349 + $0xc] sm:$0xf]
    %v4358 = vunpack.c.l.b16 %v4350
    %v4359 = vunpack.c.l.b16 %v4351
    %v4360 = vunpack.c.l.b16 %v4352
    %v4361 = vunpack.c.l.b16 %v4353
    %v4362 = vpack.c.b16 %v4359, %v4358
    %v4363 = vpack.c.b16 %v4361, %v4360
    %4366 = vmatprep.subr.bf16.mxu0 0
    %4367 = vmatpush1.bf16.msra.mxu0 %v4362
    %4368 = vmatprep.subr.bf16.mxu0 0
    %4369 = vmatpush1.bf16.msra.mxu0 %v4363
    %4370 = vmatprep.subr.bf16.mxu0 0
    %4371 = vmatpush1.bf16.msra.mxu0 0
    %4372 = vmatprep.subr.bf16.mxu0 0
    %4373 = vmatpush1.bf16.msra.mxu0 0
    %4374 = vmatprep.subr.bf16.mxu0 0
    %4375 = vmatpush1.bf16.msra.mxu0 0
    %4376 = vmatprep.subr.bf16.mxu0 0
    %4377 = vmatpush1.bf16.msra.mxu0 0
    %4378 = vmatprep.subr.bf16.mxu0 0
    %4379 = vmatpush1.bf16.msra.mxu0 0
    %4380 = vmatprep.subr.bf16.mxu0 0
    %4381 = vmatpush1.bf16.msra.mxu0 0
    %4382 = vmatprep.subr.bf16.mxu0 0
    %4383 = vmatpush1.bf16.msra.mxu0 0
    %4384 = vmatprep.subr.bf16.mxu0 0
    %4385 = vmatpush1.bf16.msra.mxu0 0
    %4386 = vmatprep.subr.bf16.mxu0 0
    %4387 = vmatpush1.bf16.msra.mxu0 0
    %4388 = vmatprep.subr.bf16.mxu0 0
    %4389 = vmatpush1.bf16.msra.mxu0 0
    %4390 = vmatprep.subr.bf16.mxu0 0
    %4391 = vmatpush1.bf16.msra.mxu0 0
    %4392 = vmatprep.subr.bf16.mxu0 0
    %4393 = vmatpush1.bf16.msra.mxu0 0
    %4394 = vmatprep.subr.bf16.mxu0 0
    %4395 = vmatpush1.bf16.msra.mxu0 0
    %4396 = vmatprep.subr.bf16.mxu0 0
    %4397 = vmatpush1.bf16.msra.mxu0 0
    %4398 = vmatprep.mubr.bf16.mxu0 0
    %4399 = vmatmul.mubr.bf16.gmra.mrb[0].mxu0 %v3181
    %v4400 = vpop.f32.mrb[0].mxu0
    %v4401 = vadd.f32 0.0, %v4400
    %v4402 = vpop.f32.mrb[0].mxu0
    %v4403 = vpop.f32.mrb[0].mxu0
    %v4404 = vadd.f32 0.0, %v4403
    %v4405 = vpop.f32.mrb[0].mxu0
    %4406 = vdwg.mxu0
    %v4411 = vunpack.c.l.b16 %v4345
    %v4412 = vunpack.c.l.b16 %v4346
    %v4413 = vunpack.c.l.b16 %v4347
    %v4414 = vunpack.c.l.b16 %v4348
    %v4415 = vpack.c.b16 %v4412, %v4411
    %v4416 = vpack.c.b16 %v4414, %v4413
    %4419 = vmatprep.subr.bf16.mxu0 0
    %4420 = vmatpush1.bf16.msra.mxu0 %v4415
    %4421 = vmatprep.subr.bf16.mxu0 0
    %4422 = vmatpush1.bf16.msra.mxu0 %v4416
    %4423 = vmatprep.subr.bf16.mxu0 0
    %4424 = vmatpush1.bf16.msra.mxu0 0
    %4425 = vmatprep.subr.bf16.mxu0 0
    %4426 = vmatpush1.bf16.msra.mxu0 0
    %4427 = vmatprep.subr.bf16.mxu0 0
    %4428 = vmatpush1.bf16.msra.mxu0 0
    %4429 = vmatprep.subr.bf16.mxu0 0
    %4430 = vmatpush1.bf16.msra.mxu0 0
    %4431 = vmatprep.subr.bf16.mxu0 0
    %4432 = vmatpush1.bf16.msra.mxu0 0
    %4433 = vmatprep.subr.bf16.mxu0 0
    %4434 = vmatpush1.bf16.msra.mxu0 0
    %4435 = vmatprep.subr.bf16.mxu0 0
    %4436 = vmatpush1.bf16.msra.mxu0 0
    %4437 = vmatprep.subr.bf16.mxu0 0
    %4438 = vmatpush1.bf16.msra.mxu0 0
    %4439 = vmatprep.subr.bf16.mxu0 0
    %4440 = vmatpush1.bf16.msra.mxu0 0
    %4441 = vmatprep.subr.bf16.mxu0 0
    %4442 = vmatpush1.bf16.msra.mxu0 0
    %4443 = vmatprep.subr.bf16.mxu0 0
    %4444 = vmatpush1.bf16.msra.mxu0 0
    %4445 = vmatprep.subr.bf16.mxu0 0
    %4446 = vmatpush1.bf16.msra.mxu0 0
    %4447 = vmatprep.subr.bf16.mxu0 0
    %4448 = vmatpush1.bf16.msra.mxu0 0
    %4449 = vmatprep.subr.bf16.mxu0 0
    %4450 = vmatpush1.bf16.msra.mxu0 0
    %4451 = vmatprep.mubr.bf16.mxu0 0
    %4452 = vmatmul.mubr.bf16.gmra.mrb[0].mxu0 %v3242
    %v4453 = vpop.f32.mrb[0].mxu0
    %v4454 = vadd.f32 %v4401, %v4453
    %v4455 = vpop.f32.mrb[0].mxu0
    %v4456 = vpop.f32.mrb[0].mxu0
    %v4457 = vadd.f32 %v4404, %v4456
    %v4458 = vpop.f32.mrb[0].mxu0
    %4459 = vdwg.mxu0
    %v4460 = vld [vmem:[%s39 + $0x10] sm:$0xf]
    %v4461 = vld [vmem:[%s39 + $0x14] sm:$0xf]
    %v4462 = vld [vmem:[%s39 + $0x18] sm:$0xf]
    %v4463 = vld [vmem:[%s39 + $0x1c] sm:$0xf]
    %v4464 = vld [vmem:[%s4349 + $0x10] sm:$0xf]
    %v4465 = vld [vmem:[%s4349 + $0x14] sm:$0xf]
    %v4466 = vld [vmem:[%s4349 + $0x18] sm:$0xf]
    %v4467 = vld [vmem:[%s4349 + $0x1c] sm:$0xf]
    %v4472 = vunpack.c.l.b16 %v4464
    %v4473 = vunpack.c.l.b16 %v4465
    %v4474 = vunpack.c.l.b16 %v4466
    %v4475 = vunpack.c.l.b16 %v4467
    %v4476 = vpack.c.b16 %v4473, %v4472
    %v4477 = vpack.c.b16 %v4475, %v4474
    %4480 = vmatprep.subr.bf16.mxu0 0
    %4481 = vmatpush1.bf16.msra.mxu0 %v4476
    %4482 = vmatprep.subr.bf16.mxu0 0
    %4483 = vmatpush1.bf16.msra.mxu0 %v4477
    %4484 = vmatprep.subr.bf16.mxu0 0
    %4485 = vmatpush1.bf16.msra.mxu0 0
    %4486 = vmatprep.subr.bf16.mxu0 0
    %4487 = vmatpush1.bf16.msra.mxu0 0
    %4488 = vmatprep.subr.bf16.mxu0 0
    %4489 = vmatpush1.bf16.msra.mxu0 0
    %4490 = vmatprep.subr.bf16.mxu0 0
    %4491 = vmatpush1.bf16.msra.mxu0 0
    %4492 = vmatprep.subr.bf16.mxu0 0
    %4493 = vmatpush1.bf16.msra.mxu0 0
    %4494 = vmatprep.subr.bf16.mxu0 0
    %4495 = vmatpush1.bf16.msra.mxu0 0
    %4496 = vmatprep.subr.bf16.mxu0 0
    %4497 = vmatpush1.bf16.msra.mxu0 0
    %4498 = vmatprep.subr.bf16.mxu0 0
    %4499 = vmatpush1.bf16.msra.mxu0 0
    %4500 = vmatprep.subr.bf16.mxu0 0
    %4501 = vmatpush1.bf16.msra.mxu0 0
    %4502 = vmatprep.subr.bf16.mxu0 0
    %4503 = vmatpush1.bf16.msra.mxu0 0
    %4504 = vmatprep.subr.bf16.mxu0 0
    %4505 = vmatpush1.bf16.msra.mxu0 0
    %4506 = vmatprep.subr.bf16.mxu0 0
    %4507 = vmatpush1.bf16.msra.mxu0 0
    %4508 = vmatprep.subr.bf16.mxu0 0
    %4509 = vmatpush1.bf16.msra.mxu0 0
    %4510 = vmatprep.subr.bf16.mxu0 0
    %4511 = vmatpush1.bf16.msra.mxu0 0
    %4512 = vmatprep.mubr.bf16.mxu0 0
    %4513 = vmatmul.mubr.bf16.gmra.mrb[0].mxu0 %v3313
    %v4514 = vpop.f32.mrb[0].mxu0
    %v4515 = vadd.f32 0.0, %v4514
    %v4516 = vpop.f32.mrb[0].mxu0
    %v4517 = vpop.f32.mrb[0].mxu0
    %v4518 = vadd.f32 0.0, %v4517
    %v4519 = vpop.f32.mrb[0].mxu0
    %4520 = vdwg.mxu0
    %v4525 = vunpack.c.l.b16 %v4460
    %v4526 = vunpack.c.l.b16 %v4461
    %v4527 = vunpack.c.l.b16 %v4462
    %v4528 = vunpack.c.l.b16 %v4463
    %v4529 = vpack.c.b16 %v4526, %v4525
    %v4530 = vpack.c.b16 %v4528, %v4527
    %4533 = vmatprep.subr.bf16.mxu0 0
    %4534 = vmatpush1.bf16.msra.mxu0 %v4529
    %4535 = vmatprep.subr.bf16.mxu0 0
    %4536 = vmatpush1.bf16.msra.mxu0 %v4530
    %4537 = vmatprep.subr.bf16.mxu0 0
    %4538 = vmatpush1.bf16.msra.mxu0 0
    %4539 = vmatprep.subr.bf16.mxu0 0
    %4540 = vmatpush1.bf16.msra.mxu0 0
    %4541 = vmatprep.subr.bf16.mxu0 0
    %4542 = vmatpush1.bf16.msra.mxu0 0
    %4543 = vmatprep.subr.bf16.mxu0 0
    %4544 = vmatpush1.bf16.msra.mxu0 0
    %4545 = vmatprep.subr.bf16.mxu0 0
    %4546 = vmatpush1.bf16.msra.mxu0 0
    %4547 = vmatprep.subr.bf16.mxu0 0
    %4548 = vmatpush1.bf16.msra.mxu0 0
    %4549 = vmatprep.subr.bf16.mxu0 0
    %4550 = vmatpush1.bf16.msra.mxu0 0
    %4551 = vmatprep.subr.bf16.mxu0 0
    %4552 = vmatpush1.bf16.msra.mxu0 0
    %4553 = vmatprep.subr.bf16.mxu0 0
    %4554 = vmatpush1.bf16.msra.mxu0 0
    %4555 = vmatprep.subr.bf16.mxu0 0
    %4556 = vmatpush1.bf16.msra.mxu0 0
    %4557 = vmatprep.subr.bf16.mxu0 0
    %4558 = vmatpush1.bf16.msra.mxu0 0
    %4559 = vmatprep.subr.bf16.mxu0 0
    %4560 = vmatpush1.bf16.msra.mxu0 0
    %4561 = vmatprep.subr.bf16.mxu0 0
    %4562 = vmatpush1.bf16.msra.mxu0 0
    %4563 = vmatprep.subr.bf16.mxu0 0
    %4564 = vmatpush1.bf16.msra.mxu0 0
    %4565 = vmatprep.mubr.bf16.mxu0 0
    %4566 = vmatmul.mubr.bf16.gmra.mrb[0].mxu0 %v3374
    %v4567 = vpop.f32.mrb[0].mxu0
    %v4568 = vadd.f32 %v4515, %v4567
    %v4569 = vpop.f32.mrb[0].mxu0
    %v4570 = vpop.f32.mrb[0].mxu0
    %v4571 = vadd.f32 %v4518, %v4570
    %v4572 = vpop.f32.mrb[0].mxu0
    %4573 = vdwg.mxu0
    %v4574 = vadd.f32 %v4454, %v4568
    %v4575 = vadd.f32 %v4457, %v4571
    %v4576 = vld [vmem:[%s39 + $0x20] sm:$0xf]
    %v4577 = vld [vmem:[%s39 + $0x24] sm:$0xf]
    %v4578 = vld [vmem:[%s39 + $0x28] sm:$0xf]
    %v4579 = vld [vmem:[%s39 + $0x2c] sm:$0xf]
    %v4580 = vld [vmem:[%s4349 + $0x20] sm:$0xf]
    %v4581 = vld [vmem:[%s4349 + $0x24] sm:$0xf]
    %v4582 = vld [vmem:[%s4349 + $0x28] sm:$0xf]
    %v4583 = vld [vmem:[%s4349 + $0x2c] sm:$0xf]
    %v4588 = vunpack.c.l.b16 %v4580
    %v4589 = vunpack.c.l.b16 %v4581
    %v4590 = vunpack.c.l.b16 %v4582
    %v4591 = vunpack.c.l.b16 %v4583
    %v4592 = vpack.c.b16 %v4589, %v4588
    %v4593 = vpack.c.b16 %v4591, %v4590
    %4596 = vmatprep.subr.bf16.mxu0 0
    %4597 = vmatpush1.bf16.msra.mxu0 %v4592
    %4598 = vmatprep.subr.bf16.mxu0 0
    %4599 = vmatpush1.bf16.msra.mxu0 %v4593
    %4600 = vmatprep.subr.bf16.mxu0 0
    %4601 = vmatpush1.bf16.msra.mxu0 0
    %4602 = vmatprep.subr.bf16.mxu0 0
    %4603 = vmatpush1.bf16.msra.mxu0 0
    %4604 = vmatprep.subr.bf16.mxu0 0
    %4605 = vmatpush1.bf16.msra.mxu0 0
    %4606 = vmatprep.subr.bf16.mxu0 0
    %4607 = vmatpush1.bf16.msra.mxu0 0
    %4608 = vmatprep.subr.bf16.mxu0 0
    %4609 = vmatpush1.bf16.msra.mxu0 0
    %4610 = vmatprep.subr.bf16.mxu0 0
    %4611 = vmatpush1.bf16.msra.mxu0 0
    %4612 = vmatprep.subr.bf16.mxu0 0
    %4613 = vmatpush1.bf16.msra.mxu0 0
    %4614 = vmatprep.subr.bf16.mxu0 0
    %4615 = vmatpush1.bf16.msra.mxu0 0
    %4616 = vmatprep.subr.bf16.mxu0 0
    %4617 = vmatpush1.bf16.msra.mxu0 0
    %4618 = vmatprep.subr.bf16.mxu0 0
    %4619 = vmatpush1.bf16.msra.mxu0 0
    %4620 = vmatprep.subr.bf16.mxu0 0
    %4621 = vmatpush1.bf16.msra.mxu0 0
    %4622 = vmatprep.subr.bf16.mxu0 0
    %4623 = vmatpush1.bf16.msra.mxu0 0
    %4624 = vmatprep.subr.bf16.mxu0 0
    %4625 = vmatpush1.bf16.msra.mxu0 0
    %4626 = vmatprep.subr.bf16.mxu0 0
    %4627 = vmatpush1.bf16.msra.mxu0 0
    %4628 = vmatprep.mubr.bf16.mxu0 0
    %4629 = vmatmul.mubr.bf16.gmra.mrb[0].mxu0 %v3447
    %v4630 = vpop.f32.mrb[0].mxu0
    %v4631 = vadd.f32 0.0, %v4630
    %v4632 = vpop.f32.mrb[0].mxu0
    %v4633 = vpop.f32.mrb[0].mxu0
    %v4634 = vadd.f32 0.0, %v4633
    %v4635 = vpop.f32.mrb[0].mxu0
    %4636 = vdwg.mxu0
    %v4641 = vunpack.c.l.b16 %v4576
    %v4642 = vunpack.c.l.b16 %v4577
    %v4643 = vunpack.c.l.b16 %v4578
    %v4644 = vunpack.c.l.b16 %v4579
    %v4645 = vpack.c.b16 %v4642, %v4641
    %v4646 = vpack.c.b16 %v4644, %v4643
    %4649 = vmatprep.subr.bf16.mxu0 0
    %4650 = vmatpush1.bf16.msra.mxu0 %v4645
    %4651 = vmatprep.subr.bf16.mxu0 0
    %4652 = vmatpush1.bf16.msra.mxu0 %v4646
    %4653 = vmatprep.subr.bf16.mxu0 0
    %4654 = vmatpush1.bf16.msra.mxu0 0
    %4655 = vmatprep.subr.bf16.mxu0 0
    %4656 = vmatpush1.bf16.msra.mxu0 0
    %4657 = vmatprep.subr.bf16.mxu0 0
    %4658 = vmatpush1.bf16.msra.mxu0 0
    %4659 = vmatprep.subr.bf16.mxu0 0
    %4660 = vmatpush1.bf16.msra.mxu0 0
    %4661 = vmatprep.subr.bf16.mxu0 0
    %4662 = vmatpush1.bf16.msra.mxu0 0
    %4663 = vmatprep.subr.bf16.mxu0 0
    %4664 = vmatpush1.bf16.msra.mxu0 0
    %4665 = vmatprep.subr.bf16.mxu0 0
    %4666 = vmatpush1.bf16.msra.mxu0 0
    %4667 = vmatprep.subr.bf16.mxu0 0
    %4668 = vmatpush1.bf16.msra.mxu0 0
    %4669 = vmatprep.subr.bf16.mxu0 0
    %4670 = vmatpush1.bf16.msra.mxu0 0
    %4671 = vmatprep.subr.bf16.mxu0 0
    %4672 = vmatpush1.bf16.msra.mxu0 0
    %4673 = vmatprep.subr.bf16.mxu0 0
    %4674 = vmatpush1.bf16.msra.mxu0 0
    %4675 = vmatprep.subr.bf16.mxu0 0
    %4676 = vmatpush1.bf16.msra.mxu0 0
    %4677 = vmatprep.subr.bf16.mxu0 0
    %4678 = vmatpush1.bf16.msra.mxu0 0
    %4679 = vmatprep.subr.bf16.mxu0 0
    %4680 = vmatpush1.bf16.msra.mxu0 0
    %4681 = vmatprep.mubr.bf16.mxu0 0
    %4682 = vmatmul.mubr.bf16.gmra.mrb[0].mxu0 %v3508
    %v4683 = vpop.f32.mrb[0].mxu0
    %v4684 = vadd.f32 %v4631, %v4683
    %v4685 = vpop.f32.mrb[0].mxu0
    %v4686 = vpop.f32.mrb[0].mxu0
    %v4687 = vadd.f32 %v4634, %v4686
    %v4688 = vpop.f32.mrb[0].mxu0
    %4689 = vdwg.mxu0
    %v4690 = vadd.f32 %v4574, %v4684
    %v4691 = vadd.f32 %v4575, %v4687
    %v4692 = vlaneseq
    %v4693 = vshrl.u32 %v4692, 7
    %v4694 = vsub.s32 0, %v4693
    %v4695 = vrot.slane %v4340, %v4694
    %v4696 = vadd.f32 %v4690, %v4695
    %v4697 = vadd.f32 %v4691, %v4695
    %v4698 = vmax.f32 %v4696, 0.0
    %v4699 = vmax.f32 %v4697, 0.0
    %v4700 = vsel %vm678, %v4698, 0.0
    %v4701 = vsel %vm678, %v4699, 0.0
    %v4702 = vadd.f32 %v4700, %v4701
    %v4703 = vrot.slane %v4702, 4
    %v4704 = vadd.f32 %v4702, %v4703
    %v4705 = vrot.slane %v4704, 2
    %v4706 = vadd.f32 %v4704, %v4705
    %v4707 = vrot.slane %v4706, 1
    %v4708 = vadd.f32 %v4706, %v4707
    %v4709 = vmul.f32 %v4708, %v813
    %v4710 = vmul.f32 %v4698, %v4698
    %v4711 = vmul.f32 %v4699, %v4699
    %v4712 = vsel %vm678, %v4710, 0.0
    %v4713 = vsel %vm678, %v4711, 0.0
    %v4714 = vadd.f32 %v4712, %v4713
    %v4715 = vrot.slane %v4714, 4
    %v4716 = vadd.f32 %v4714, %v4715
    %v4717 = vrot.slane %v4716, 2
    %v4718 = vadd.f32 %v4716, %v4717
    %v4719 = vrot.slane %v4718, 1
    %v4720 = vadd.f32 %v4718, %v4719
    %v4721 = vmul.f32 %v4720, %v813
    %v4722 = vmul.f32 %v4709, %v4709
    %v4723 = vsub.f32 %v4721, %v4722
    %v4724 = vmax.f32 %v4723, 0.0
    %v4725 = vadd.f32 %v4724, 1e-05
    %v4726 = vrsqrt.pop %v4725
    %v4727 = vmul.f32 %v4726, %v4340
    %v4728 = vlaneseq
    %v4729 = vshrl.u32 %v4728, 7
    %v4730 = vsub.s32 1, %v4729
    %v4731 = vrot.slane %v4727, %v4730
    %v4732 = vmul.f32 %v4698, %v4731
    %v4733 = vmul.f32 %v4699, %v4731
    %v4734 = vmul.f32 %v4709, %v4727
    %v4736 = vrot.slane %v4734, 7
    %v4738 = vsub.f32 %v4340, %v4736
    %v4739 = vlaneseq
    %v4740 = vshrl.u32 %v4739, 7
    %v4741 = vsub.s32 2, %v4740
    %v4742 = vrot.slane %v4738, %v4741
    %v4743 = vadd.f32 %v4732, %v4742
    %v4744 = vadd.f32 %v4733, %v4742
    %v4745 = vpack.c.bf16 %v4743, %v4743
    %v4746 = vpack.c.bf16 %v4744, %v4744
    %v4748 = vsel %vm491, %v4745, 0
    %4750 = vmatprep.subr.bf16.mxu0 0
    %4751 = vmatpush1.bf16.msra.mxu0 %v4748
    %4752 = vmatprep.subr.bf16.mxu0 0
    %4753 = vmatpush1.bf16.msra.mxu0 0
    %4754 = vmatprep.subr.bf16.mxu0 0
    %4755 = vmatpush1.bf16.msra.mxu0 0
    %4756 = vmatprep.subr.bf16.mxu0 0
    %4757 = vmatpush1.bf16.msra.mxu0 0
    %4758 = vmatprep.subr.bf16.mxu0 0
    %4759 = vmatpush1.bf16.msra.mxu0 0
    %4760 = vmatprep.subr.bf16.mxu0 0
    %4761 = vmatpush1.bf16.msra.mxu0 0
    %4762 = vmatprep.subr.bf16.mxu0 0
    %4763 = vmatpush1.bf16.msra.mxu0 0
    %4764 = vmatprep.subr.bf16.mxu0 0
    %4765 = vmatpush1.bf16.msra.mxu0 0
    %4766 = vmatprep.subr.bf16.mxu0 0
    %4767 = vmatpush1.bf16.msra.mxu0 0
    %4768 = vmatprep.subr.bf16.mxu0 0
    %4769 = vmatpush1.bf16.msra.mxu0 0
    %4770 = vmatprep.subr.bf16.mxu0 0
    %4771 = vmatpush1.bf16.msra.mxu0 0
    %4772 = vmatprep.subr.bf16.mxu0 0
    %4773 = vmatpush1.bf16.msra.mxu0 0
    %4774 = vmatprep.subr.bf16.mxu0 0
    %4775 = vmatpush1.bf16.msra.mxu0 0
    %4776 = vmatprep.subr.bf16.mxu0 0
    %4777 = vmatpush1.bf16.msra.mxu0 0
    %4778 = vmatprep.subr.bf16.mxu0 0
    %4779 = vmatpush1.bf16.msra.mxu0 0
    %4780 = vmatprep.subr.bf16.mxu0 0
    %4781 = vmatpush1.bf16.msra.mxu0 0
    %4782 = vmatprep.mubr.bf16.mxu0 0
    %4783 = vmatmul.mubr.bf16.gmra.mrb[0].mxu0 %v2865
    %v4784 = vpop.f32.mrb[0].mxu0
    %v4785 = vadd.f32 0.0, %v4784
    %v4786 = vpop.f32.mrb[0].mxu0
    %v4787 = vpop.f32.mrb[0].mxu0
    %v4788 = vpop.f32.mrb[0].mxu0
    %4789 = vdwg.mxu0
    %v4791 = vsel %vm491, %v4746, 0
    %4793 = vmatprep.subr.bf16.mxu0 0
    %4794 = vmatpush1.bf16.msra.mxu0 %v4791
    %4795 = vmatprep.subr.bf16.mxu0 0
    %4796 = vmatpush1.bf16.msra.mxu0 0
    %4797 = vmatprep.subr.bf16.mxu0 0
    %4798 = vmatpush1.bf16.msra.mxu0 0
    %4799 = vmatprep.subr.bf16.mxu0 0
    %4800 = vmatpush1.bf16.msra.mxu0 0
    %4801 = vmatprep.subr.bf16.mxu0 0
    %4802 = vmatpush1.bf16.msra.mxu0 0
    %4803 = vmatprep.subr.bf16.mxu0 0
    %4804 = vmatpush1.bf16.msra.mxu0 0
    %4805 = vmatprep.subr.bf16.mxu0 0
    %4806 = vmatpush1.bf16.msra.mxu0 0
    %4807 = vmatprep.subr.bf16.mxu0 0
    %4808 = vmatpush1.bf16.msra.mxu0 0
    %4809 = vmatprep.subr.bf16.mxu0 0
    %4810 = vmatpush1.bf16.msra.mxu0 0
    %4811 = vmatprep.subr.bf16.mxu0 0
    %4812 = vmatpush1.bf16.msra.mxu0 0
    %4813 = vmatprep.subr.bf16.mxu0 0
    %4814 = vmatpush1.bf16.msra.mxu0 0
    %4815 = vmatprep.subr.bf16.mxu0 0
    %4816 = vmatpush1.bf16.msra.mxu0 0
    %4817 = vmatprep.subr.bf16.mxu0 0
    %4818 = vmatpush1.bf16.msra.mxu0 0
    %4819 = vmatprep.subr.bf16.mxu0 0
    %4820 = vmatpush1.bf16.msra.mxu0 0
    %4821 = vmatprep.subr.bf16.mxu0 0
    %4822 = vmatpush1.bf16.msra.mxu0 0
    %4823 = vmatprep.subr.bf16.mxu0 0
    %4824 = vmatpush1.bf16.msra.mxu0 0
    %4825 = vmatprep.mubr.bf16.mxu0 0
    %4826 = vmatmul.mubr.bf16.gmra.mrb[0].mxu0 %v2911
    %v4827 = vpop.f32.mrb[0].mxu0
    %v4828 = vadd.f32 0.0, %v4827
    %v4829 = vpop.f32.mrb[0].mxu0
    %v4830 = vpop.f32.mrb[0].mxu0
    %v4831 = vpop.f32.mrb[0].mxu0
    %4832 = vdwg.mxu0
    %v4833 = vmul.f32 %v4785, %v2959
    %v4834 = vmul.f32 %v4828, %v2964
    %v4835 = vld [vmem:[#allocation28] sm:$0xf]
    %v4836 = vld [vmem:[#allocation28 + $0x4] sm:$0xf]
    %v4837 = vld [vmem:[#allocation28 + $0x8] sm:$0xf]
    %v4838 = vld [vmem:[#allocation28 + $0xc] sm:$0xf]
    %v4839 = vpack.c.bf16 %v4833, %v4833
    %v4840 = vpack.c.bf16 %v4834, %v4834
    %s4841 = scalar_lea.vmem [#allocation28], 16
    %v4842 = vld [vmem:[%s4841] sm:$0xf]
    %v4843 = vld [vmem:[%s4841 + $0x4] sm:$0xf]
    %v4844 = vld [vmem:[%s4841 + $0x8] sm:$0xf]
    %v4845 = vld [vmem:[%s4841 + $0xc] sm:$0xf]
    %v4848 = vunpack.c.l.b16 %v4745
    %v4849 = vunpack.c.l.b16 %v4746
    %v4850 = vpack.c.b16 %v4849, %v4848
    %v4855 = vunpack.c.l.b16 %v4842
    %v4856 = vunpack.c.l.b16 %v4843
    %v4857 = vunpack.c.l.b16 %v4844
    %v4858 = vunpack.c.l.b16 %v4845
    %v4859 = vpack.c.b16 %v4856, %v4855
    %v4860 = vpack.c.b16 %v4858, %v4857
    %v4864 = vsel %vm678, %v4850, 0
    %4866 = vmatprep.subr.bf16.mxu0 0
    %4867 = vmatpush1.bf16.msra.mxu0 %v4859
    %4868 = vmatprep.subr.bf16.mxu0 0
    %4869 = vmatpush1.bf16.msra.mxu0 %v4860
    %4870 = vmatprep.subr.bf16.mxu0 0
    %4871 = vmatpush1.bf16.msra.mxu0 0
    %4872 = vmatprep.subr.bf16.mxu0 0
    %4873 = vmatpush1.bf16.msra.mxu0 0
    %4874 = vmatprep.subr.bf16.mxu0 0
    %4875 = vmatpush1.bf16.msra.mxu0 0
    %4876 = vmatprep.subr.bf16.mxu0 0
    %4877 = vmatpush1.bf16.msra.mxu0 0
    %4878 = vmatprep.subr.bf16.mxu0 0
    %4879 = vmatpush1.bf16.msra.mxu0 0
    %4880 = vmatprep.subr.bf16.mxu0 0
    %4881 = vmatpush1.bf16.msra.mxu0 0
    %4882 = vmatprep.subr.bf16.mxu0 0
    %4883 = vmatpush1.bf16.msra.mxu0 0
    %4884 = vmatprep.subr.bf16.mxu0 0
    %4885 = vmatpush1.bf16.msra.mxu0 0
    %4886 = vmatprep.subr.bf16.mxu0 0
    %4887 = vmatpush1.bf16.msra.mxu0 0
    %4888 = vmatprep.subr.bf16.mxu0 0
    %4889 = vmatpush1.bf16.msra.mxu0 0
    %4890 = vmatprep.subr.bf16.mxu0 0
    %4891 = vmatpush1.bf16.msra.mxu0 0
    %4892 = vmatprep.subr.bf16.mxu0 0
    %4893 = vmatpush1.bf16.msra.mxu0 0
    %4894 = vmatprep.subr.bf16.mxu0 0
    %4895 = vmatpush1.bf16.msra.mxu0 0
    %4896 = vmatprep.subr.bf16.mxu0 0
    %4897 = vmatpush1.bf16.msra.mxu0 0
    %4898 = vmatprep.mubr.bf16.mxu0 0
    %4899 = vmatmul.mubr.bf16.gmra.mrb[0].mxu0 %v4864
    %v4900 = vpop.f32.mrb[0].mxu0
    %v4901 = vadd.f32 0.0, %v4900
    %v4902 = vpop.f32.mrb[0].mxu0
    %v4903 = vpop.f32.mrb[0].mxu0
    %v4904 = vadd.f32 0.0, %v4903
    %v4905 = vpop.f32.mrb[0].mxu0
    %4906 = vdwg.mxu0
    %v4909 = vunpack.c.l.b16 %v4839
    %v4910 = vunpack.c.l.b16 %v4840
    %v4911 = vpack.c.b16 %v4910, %v4909
    %v4916 = vunpack.c.l.b16 %v4835
    %v4917 = vunpack.c.l.b16 %v4836
    %v4918 = vunpack.c.l.b16 %v4837
    %v4919 = vunpack.c.l.b16 %v4838
    %v4920 = vpack.c.b16 %v4917, %v4916
    %v4921 = vpack.c.b16 %v4919, %v4918
    %v4925 = vsel %vm678, %v4911, 0
    %4927 = vmatprep.subr.bf16.mxu0 0
    %4928 = vmatpush1.bf16.msra.mxu0 %v4920
    %4929 = vmatprep.subr.bf16.mxu0 0
    %4930 = vmatpush1.bf16.msra.mxu0 %v4921
    %4931 = vmatprep.subr.bf16.mxu0 0
    %4932 = vmatpush1.bf16.msra.mxu0 0
    %4933 = vmatprep.subr.bf16.mxu0 0
    %4934 = vmatpush1.bf16.msra.mxu0 0
    %4935 = vmatprep.subr.bf16.mxu0 0
    %4936 = vmatpush1.bf16.msra.mxu0 0
    %4937 = vmatprep.subr.bf16.mxu0 0
    %4938 = vmatpush1.bf16.msra.mxu0 0
    %4939 = vmatprep.subr.bf16.mxu0 0
    %4940 = vmatpush1.bf16.msra.mxu0 0
    %4941 = vmatprep.subr.bf16.mxu0 0
    %4942 = vmatpush1.bf16.msra.mxu0 0
    %4943 = vmatprep.subr.bf16.mxu0 0
    %4944 = vmatpush1.bf16.msra.mxu0 0
    %4945 = vmatprep.subr.bf16.mxu0 0
    %4946 = vmatpush1.bf16.msra.mxu0 0
    %4947 = vmatprep.subr.bf16.mxu0 0
    %4948 = vmatpush1.bf16.msra.mxu0 0
    %4949 = vmatprep.subr.bf16.mxu0 0
    %4950 = vmatpush1.bf16.msra.mxu0 0
    %4951 = vmatprep.subr.bf16.mxu0 0
    %4952 = vmatpush1.bf16.msra.mxu0 0
    %4953 = vmatprep.subr.bf16.mxu0 0
    %4954 = vmatpush1.bf16.msra.mxu0 0
    %4955 = vmatprep.subr.bf16.mxu0 0
    %4956 = vmatpush1.bf16.msra.mxu0 0
    %4957 = vmatprep.subr.bf16.mxu0 0
    %4958 = vmatpush1.bf16.msra.mxu0 0
    %4959 = vmatprep.mubr.bf16.mxu0 0
    %4960 = vmatmul.mubr.bf16.gmra.mrb[0].mxu0 %v4925
    %v4961 = vpop.f32.mrb[0].mxu0
    %v4962 = vadd.f32 %v4901, %v4961
    %v4963 = vpop.f32.mrb[0].mxu0
    %v4964 = vpop.f32.mrb[0].mxu0
    %v4965 = vadd.f32 %v4904, %v4964
    %v4966 = vpop.f32.mrb[0].mxu0
    %4967 = vdwg.mxu0
    %v4968 = vlaneseq
    %v4969 = vshrl.u32 %v4968, 7
    %v4970 = vsub.s32 0, %v4969
    %v4971 = vrot.slane %v4342, %v4970
    %v4972 = vadd.f32 %v4962, %v4971
    %v4973 = vadd.f32 %v4965, %v4971
    %v4974 = vmax.f32 %v4972, 0.0
    %v4975 = vmax.f32 %v4973, 0.0
    %v4976 = vsel %vm678, %v4974, 0.0
    %v4977 = vsel %vm678, %v4975, 0.0
    %v4978 = vadd.f32 %v4976, %v4977
    %v4979 = vrot.slane %v4978, 4
    %v4980 = vadd.f32 %v4978, %v4979
    %v4981 = vrot.slane %v4980, 2
    %v4982 = vadd.f32 %v4980, %v4981
    %v4983 = vrot.slane %v4982, 1
    %v4984 = vadd.f32 %v4982, %v4983
    %v4985 = vmul.f32 %v4984, %v813
    %v4986 = vmul.f32 %v4974, %v4974
    %v4987 = vmul.f32 %v4975, %v4975
    %v4988 = vsel %vm678, %v4986, 0.0
    %v4989 = vsel %vm678, %v4987, 0.0
    %v4990 = vadd.f32 %v4988, %v4989
    %v4991 = vrot.slane %v4990, 4
    %v4992 = vadd.f32 %v4990, %v4991
    %v4993 = vrot.slane %v4992, 2
    %v4994 = vadd.f32 %v4992, %v4993
    %v4995 = vrot.slane %v4994, 1
    %v4996 = vadd.f32 %v4994, %v4995
    %v4997 = vmul.f32 %v4996, %v813
    %v4998 = vmul.f32 %v4985, %v4985
    %v4999 = vsub.f32 %v4997, %v4998
    %v5000 = vmax.f32 %v4999, 0.0
    %v5001 = vadd.f32 %v5000, 1e-05
    %v5002 = vrsqrt.pop %v5001
    %v5003 = vmul.f32 %v5002, %v4342
    %v5004 = vlaneseq
    %v5005 = vshrl.u32 %v5004, 7
    %v5006 = vsub.s32 1, %v5005
    %v5007 = vrot.slane %v5003, %v5006
    %v5008 = vmul.f32 %v4974, %v5007
    %v5009 = vmul.f32 %v4975, %v5007
    %v5010 = vmul.f32 %v4985, %v5003
    %v5012 = vrot.slane %v5010, 7
    %v5014 = vsub.f32 %v4342, %v5012
    %v5015 = vlaneseq
    %v5016 = vshrl.u32 %v5015, 7
    %v5017 = vsub.s32 2, %v5016
    %v5018 = vrot.slane %v5014, %v5017
    %v5019 = vadd.f32 %v5008, %v5018
    %v5020 = vadd.f32 %v5009, %v5018
    %v5021 = vpack.c.bf16 %v5019, %v5019
    %v5022 = vpack.c.bf16 %v5020, %v5020
    %v5024 = vsel %vm491, %v5021, 0
    %5026 = vmatprep.subr.bf16.mxu0 0
    %5027 = vmatpush1.bf16.msra.mxu0 %v5024
    %5028 = vmatprep.subr.bf16.mxu0 0
    %5029 = vmatpush1.bf16.msra.mxu0 0
    %5030 = vmatprep.subr.bf16.mxu0 0
    %5031 = vmatpush1.bf16.msra.mxu0 0
    %5032 = vmatprep.subr.bf16.mxu0 0
    %5033 = vmatpush1.bf16.msra.mxu0 0
    %5034 = vmatprep.subr.bf16.mxu0 0
    %5035 = vmatpush1.bf16.msra.mxu0 0
    %5036 = vmatprep.subr.bf16.mxu0 0
    %5037 = vmatpush1.bf16.msra.mxu0 0
    %5038 = vmatprep.subr.bf16.mxu0 0
    %5039 = vmatpush1.bf16.msra.mxu0 0
    %5040 = vmatprep.subr.bf16.mxu0 0
    %5041 = vmatpush1.bf16.msra.mxu0 0
    %5042 = vmatprep.subr.bf16.mxu0 0
    %5043 = vmatpush1.bf16.msra.mxu0 0
    %5044 = vmatprep.subr.bf16.mxu0 0
    %5045 = vmatpush1.bf16.msra.mxu0 0
    %5046 = vmatprep.subr.bf16.mxu0 0
    %5047 = vmatpush1.bf16.msra.mxu0 0
    %5048 = vmatprep.subr.bf16.mxu0 0
    %5049 = vmatpush1.bf16.msra.mxu0 0
    %5050 = vmatprep.subr.bf16.mxu0 0
    %5051 = vmatpush1.bf16.msra.mxu0 0
    %5052 = vmatprep.subr.bf16.mxu0 0
    %5053 = vmatpush1.bf16.msra.mxu0 0
    %5054 = vmatprep.subr.bf16.mxu0 0
    %5055 = vmatpush1.bf16.msra.mxu0 0
    %5056 = vmatprep.subr.bf16.mxu0 0
    %5057 = vmatpush1.bf16.msra.mxu0 0
    %5058 = vmatprep.mubr.bf16.mxu0 0
    %5059 = vmatmul.mubr.bf16.gmra.mrb[0].mxu0 %v2865
    %v5060 = vpop.f32.mrb[0].mxu0
    %v5061 = vadd.f32 0.0, %v5060
    %v5062 = vpop.f32.mrb[0].mxu0
    %v5063 = vpop.f32.mrb[0].mxu0
    %v5064 = vpop.f32.mrb[0].mxu0
    %5065 = vdwg.mxu0
    %v5067 = vsel %vm491, %v5022, 0
    %5069 = vmatprep.subr.bf16.mxu0 0
    %5070 = vmatpush1.bf16.msra.mxu0 %v5067
    %5071 = vmatprep.subr.bf16.mxu0 0
    %5072 = vmatpush1.bf16.msra.mxu0 0
    %5073 = vmatprep.subr.bf16.mxu0 0
    %5074 = vmatpush1.bf16.msra.mxu0 0
    %5075 = vmatprep.subr.bf16.mxu0 0
    %5076 = vmatpush1.bf16.msra.mxu0 0
    %5077 = vmatprep.subr.bf16.mxu0 0
    %5078 = vmatpush1.bf16.msra.mxu0 0
    %5079 = vmatprep.subr.bf16.mxu0 0
    %5080 = vmatpush1.bf16.msra.mxu0 0
    %5081 = vmatprep.subr.bf16.mxu0 0
    %5082 = vmatpush1.bf16.msra.mxu0 0
    %5083 = vmatprep.subr.bf16.mxu0 0
    %5084 = vmatpush1.bf16.msra.mxu0 0
    %5085 = vmatprep.subr.bf16.mxu0 0
    %5086 = vmatpush1.bf16.msra.mxu0 0
    %5087 = vmatprep.subr.bf16.mxu0 0
    %5088 = vmatpush1.bf16.msra.mxu0 0
    %5089 = vmatprep.subr.bf16.mxu0 0
    %5090 = vmatpush1.bf16.msra.mxu0 0
    %5091 = vmatprep.subr.bf16.mxu0 0
    %5092 = vmatpush1.bf16.msra.mxu0 0
    %5093 = vmatprep.subr.bf16.mxu0 0
    %5094 = vmatpush1.bf16.msra.mxu0 0
    %5095 = vmatprep.subr.bf16.mxu0 0
    %5096 = vmatpush1.bf16.msra.mxu0 0
    %5097 = vmatprep.subr.bf16.mxu0 0
    %5098 = vmatpush1.bf16.msra.mxu0 0
    %5099 = vmatprep.subr.bf16.mxu0 0
    %5100 = vmatpush1.bf16.msra.mxu0 0
    %5101 = vmatprep.mubr.bf16.mxu0 0
    %5102 = vmatmul.mubr.bf16.gmra.mrb[0].mxu0 %v2911
    %v5103 = vpop.f32.mrb[0].mxu0
    %v5104 = vadd.f32 0.0, %v5103
    %v5105 = vpop.f32.mrb[0].mxu0
    %v5106 = vpop.f32.mrb[0].mxu0
    %v5107 = vpop.f32.mrb[0].mxu0
    %5108 = vdwg.mxu0
    %v5109 = vmul.f32 %v5061, %v2959
    %v5110 = vmul.f32 %v5104, %v2964
    %v5111 = vld [vmem:[#allocation30] sm:$0xf]
    %v5112 = vld [vmem:[#allocation30 + $0x4] sm:$0xf]
    %v5113 = vld [vmem:[#allocation30 + $0x8] sm:$0xf]
    %v5114 = vld [vmem:[#allocation30 + $0xc] sm:$0xf]
    %v5115 = vpack.c.bf16 %v5109, %v5109
    %v5116 = vpack.c.bf16 %v5110, %v5110
    %s5117 = scalar_lea.vmem [#allocation30], 16
    %v5118 = vld [vmem:[%s5117] sm:$0xf]
    %v5119 = vld [vmem:[%s5117 + $0x4] sm:$0xf]
    %v5120 = vld [vmem:[%s5117 + $0x8] sm:$0xf]
    %v5121 = vld [vmem:[%s5117 + $0xc] sm:$0xf]
    %v5124 = vunpack.c.l.b16 %v5021
    %v5125 = vunpack.c.l.b16 %v5022
    %v5126 = vpack.c.b16 %v5125, %v5124
    %v5131 = vunpack.c.l.b16 %v5118
    %v5132 = vunpack.c.l.b16 %v5119
    %v5133 = vunpack.c.l.b16 %v5120
    %v5134 = vunpack.c.l.b16 %v5121
    %v5135 = vpack.c.b16 %v5132, %v5131
    %v5136 = vpack.c.b16 %v5134, %v5133
    %v5140 = vsel %vm678, %v5126, 0
    %5142 = vmatprep.subr.bf16.mxu0 0
    %5143 = vmatpush1.bf16.msra.mxu0 %v5135
    %5144 = vmatprep.subr.bf16.mxu0 0
    %5145 = vmatpush1.bf16.msra.mxu0 %v5136
    %5146 = vmatprep.subr.bf16.mxu0 0
    %5147 = vmatpush1.bf16.msra.mxu0 0
    %5148 = vmatprep.subr.bf16.mxu0 0
    %5149 = vmatpush1.bf16.msra.mxu0 0
    %5150 = vmatprep.subr.bf16.mxu0 0
    %5151 = vmatpush1.bf16.msra.mxu0 0
    %5152 = vmatprep.subr.bf16.mxu0 0
    %5153 = vmatpush1.bf16.msra.mxu0 0
    %5154 = vmatprep.subr.bf16.mxu0 0
    %5155 = vmatpush1.bf16.msra.mxu0 0
    %5156 = vmatprep.subr.bf16.mxu0 0
    %5157 = vmatpush1.bf16.msra.mxu0 0
    %5158 = vmatprep.subr.bf16.mxu0 0
    %5159 = vmatpush1.bf16.msra.mxu0 0
    %5160 = vmatprep.subr.bf16.mxu0 0
    %5161 = vmatpush1.bf16.msra.mxu0 0
    %5162 = vmatprep.subr.bf16.mxu0 0
    %5163 = vmatpush1.bf16.msra.mxu0 0
    %5164 = vmatprep.subr.bf16.mxu0 0
    %5165 = vmatpush1.bf16.msra.mxu0 0
    %5166 = vmatprep.subr.bf16.mxu0 0
    %5167 = vmatpush1.bf16.msra.mxu0 0
    %5168 = vmatprep.subr.bf16.mxu0 0
    %5169 = vmatpush1.bf16.msra.mxu0 0
    %5170 = vmatprep.subr.bf16.mxu0 0
    %5171 = vmatpush1.bf16.msra.mxu0 0
    %5172 = vmatprep.subr.bf16.mxu0 0
    %5173 = vmatpush1.bf16.msra.mxu0 0
    %5174 = vmatprep.mubr.bf16.mxu0 0
    %5175 = vmatmul.mubr.bf16.gmra.mrb[0].mxu0 %v5140
    %v5176 = vpop.f32.mrb[0].mxu0
    %v5177 = vadd.f32 0.0, %v5176
    %v5178 = vpop.f32.mrb[0].mxu0
    %v5179 = vpop.f32.mrb[0].mxu0
    %v5180 = vadd.f32 0.0, %v5179
    %v5181 = vpop.f32.mrb[0].mxu0
    %5182 = vdwg.mxu0
    %v5185 = vunpack.c.l.b16 %v5115
    %v5186 = vunpack.c.l.b16 %v5116
    %v5187 = vpack.c.b16 %v5186, %v5185
    %v5192 = vunpack.c.l.b16 %v5111
    %v5193 = vunpack.c.l.b16 %v5112
    %v5194 = vunpack.c.l.b16 %v5113
    %v5195 = vunpack.c.l.b16 %v5114
    %v5196 = vpack.c.b16 %v5193, %v5192
    %v5197 = vpack.c.b16 %v5195, %v5194
    %v5201 = vsel %vm678, %v5187, 0
    %5203 = vmatprep.subr.bf16.mxu0 0
    %5204 = vmatpush1.bf16.msra.mxu0 %v5196
    %5205 = vmatprep.subr.bf16.mxu0 0
    %5206 = vmatpush1.bf16.msra.mxu0 %v5197
    %5207 = vmatprep.subr.bf16.mxu0 0
    %5208 = vmatpush1.bf16.msra.mxu0 0
    %5209 = vmatprep.subr.bf16.mxu0 0
    %5210 = vmatpush1.bf16.msra.mxu0 0
    %5211 = vmatprep.subr.bf16.mxu0 0
    %5212 = vmatpush1.bf16.msra.mxu0 0
    %5213 = vmatprep.subr.bf16.mxu0 0
    %5214 = vmatpush1.bf16.msra.mxu0 0
    %5215 = vmatprep.subr.bf16.mxu0 0
    %5216 = vmatpush1.bf16.msra.mxu0 0
    %5217 = vmatprep.subr.bf16.mxu0 0
    %5218 = vmatpush1.bf16.msra.mxu0 0
    %5219 = vmatprep.subr.bf16.mxu0 0
    %5220 = vmatpush1.bf16.msra.mxu0 0
    %5221 = vmatprep.subr.bf16.mxu0 0
    %5222 = vmatpush1.bf16.msra.mxu0 0
    %5223 = vmatprep.subr.bf16.mxu0 0
    %5224 = vmatpush1.bf16.msra.mxu0 0
    %5225 = vmatprep.subr.bf16.mxu0 0
    %5226 = vmatpush1.bf16.msra.mxu0 0
    %5227 = vmatprep.subr.bf16.mxu0 0
    %5228 = vmatpush1.bf16.msra.mxu0 0
    %5229 = vmatprep.subr.bf16.mxu0 0
    %5230 = vmatpush1.bf16.msra.mxu0 0
    %5231 = vmatprep.subr.bf16.mxu0 0
    %5232 = vmatpush1.bf16.msra.mxu0 0
    %5233 = vmatprep.subr.bf16.mxu0 0
    %5234 = vmatpush1.bf16.msra.mxu0 0
    %5235 = vmatprep.mubr.bf16.mxu0 0
    %5236 = vmatmul.mubr.bf16.gmra.mrb[0].mxu0 %v5201
    %v5237 = vpop.f32.mrb[0].mxu0
    %v5238 = vadd.f32 %v5177, %v5237
    %v5239 = vpop.f32.mrb[0].mxu0
    %v5240 = vpop.f32.mrb[0].mxu0
    %v5241 = vadd.f32 %v5180, %v5240
    %v5242 = vpop.f32.mrb[0].mxu0
    %5243 = vdwg.mxu0
    %v5244 = vlaneseq
    %v5245 = vshrl.u32 %v5244, 7
    %v5246 = vsub.s32 0, %v5245
    %v5247 = vrot.slane %v4344, %v5246
    %v5248 = vadd.f32 %v5238, %v5247
    %v5249 = vadd.f32 %v5241, %v5247
    %v5250 = vmax.f32 %v5248, 0.0
    %v5251 = vmax.f32 %v5249, 0.0
    %v5252 = vsel %vm678, %v5250, 0.0
    %v5253 = vsel %vm678, %v5251, 0.0
    %v5254 = vadd.f32 %v5252, %v5253
    %v5255 = vrot.slane %v5254, 4
    %v5256 = vadd.f32 %v5254, %v5255
    %v5257 = vrot.slane %v5256, 2
    %v5258 = vadd.f32 %v5256, %v5257
    %v5259 = vrot.slane %v5258, 1
    %v5260 = vadd.f32 %v5258, %v5259
    %v5261 = vmul.f32 %v5260, %v813
    %v5262 = vmul.f32 %v5250, %v5250
    %v5263 = vmul.f32 %v5251, %v5251
    %v5264 = vsel %vm678, %v5262, 0.0
    %v5265 = vsel %vm678, %v5263, 0.0
    %v5266 = vadd.f32 %v5264, %v5265
    %v5267 = vrot.slane %v5266, 4
    %v5268 = vadd.f32 %v5266, %v5267
    %v5269 = vrot.slane %v5268, 2
    %v5270 = vadd.f32 %v5268, %v5269
    %v5271 = vrot.slane %v5270, 1
    %v5272 = vadd.f32 %v5270, %v5271
    %v5273 = vmul.f32 %v5272, %v813
    %v5274 = vmul.f32 %v5261, %v5261
    %v5275 = vsub.f32 %v5273, %v5274
    %v5276 = vmax.f32 %v5275, 0.0
    %v5277 = vadd.f32 %v5276, 1e-05
    %v5278 = vrsqrt.pop %v5277
    %v5279 = vmul.f32 %v5278, %v4344
    %v5280 = vlaneseq
    %v5281 = vshrl.u32 %v5280, 7
    %v5282 = vsub.s32 1, %v5281
    %v5283 = vrot.slane %v5279, %v5282
    %v5284 = vmul.f32 %v5250, %v5283
    %v5285 = vmul.f32 %v5251, %v5283
    %v5286 = vmul.f32 %v5261, %v5279
    %v5288 = vrot.slane %v5286, 7
    %v5290 = vsub.f32 %v4344, %v5288
    %v5291 = vlaneseq
    %v5292 = vshrl.u32 %v5291, 7
    %v5293 = vsub.s32 2, %v5292
    %v5294 = vrot.slane %v5290, %v5293
    %v5295 = vadd.f32 %v5284, %v5294
    %v5296 = vadd.f32 %v5285, %v5294
    %v5297 = vsel %vm4113, %v4338, -inf
    %5298 = vmax.xlane.f32.xlu0 %v5297
    %v5299 = vpop.xlane.xlu0 %5298
    %v5300 = vsel %vm4113, %v4339, -inf
    %5301 = vmax.xlane.f32.xlu0 %v5300
    %v5302 = vpop.xlane.xlu0 %5301
    %v5303 = vsub.f32 %v4338, %v5299
    %v5304 = vsub.f32 %v4339, %v5302
    %v5305 = vmul.f32 %v5303, 1.442695
    %v5306 = vpow.pop %v5305
    %v5307 = vmul.f32 %v5304, 1.442695
    %v5308 = vpow.pop %v5307
    %v5309 = vsel %vm4113, %v5306, 0.0
    %5310 = vadd.xlane.f32.xlu0 %v5309
    %v5311 = vpop.xlane.xlu0 %5310
    %v5312 = vsel %vm4113, %v5308, 0.0
    %5313 = vadd.xlane.f32.xlu0 %v5312
    %v5314 = vpop.xlane.xlu0 %5313
    %v5315 = vrcp.pop %v5311
    %v5316 = vmul.f32 %v5306, %v5315
    %v5317 = vrcp.pop %v5314
    %v5318 = vmul.f32 %v5308, %v5317
    %v5319 = vpack.c.bf16 %v5316, %v5316
    %v5320 = vpack.c.bf16 %v5318, %v5318
    %5321 = vxpose.xlu0.c.b16.start [1/8] %v5319, 128
    %5322 = vxpose.xlu0.c.b16.cont [2/8] 0, 128
    %5323 = vxpose.xlu0.c.b16.cont [3/8] 0, 128
    %5324 = vxpose.xlu0.c.b16.cont [4/8] 0, 128
    %5325 = vxpose.xlu0.c.b16.cont [5/8] 0, 128
    %5326 = vxpose.xlu0.c.b16.cont [6/8] 0, 128
    %5327 = vxpose.xlu0.c.b16.cont [7/8] 0, 128
    %5328 = vxpose.xlu0.c.b16.end [8/8] 0, 128
    %v5329 = vpop.trf.xlu0
    %v5330 = vpop.trf.xlu0
    %v5331 = vpop.trf.xlu0
    %v5332 = vpop.trf.xlu0
    %v5333 = vpop.trf.xlu0
    %v5334 = vpop.trf.xlu0
    %v5335 = vpop.trf.xlu0
    %v5336 = vpop.trf.xlu0
    %v5338 = vsel %vm487, %v5329, 0
    %5340 = vmatprep.subr.bf16.mxu0 0
    %5341 = vmatpush1.bf16.msra.mxu0 %v4748
    %5342 = vmatprep.subr.bf16.mxu0 0
    %5343 = vmatpush1.bf16.msra.mxu0 0
    %5344 = vmatprep.subr.bf16.mxu0 0
    %5345 = vmatpush1.bf16.msra.mxu0 0
    %5346 = vmatprep.subr.bf16.mxu0 0
    %5347 = vmatpush1.bf16.msra.mxu0 0
    %5348 = vmatprep.subr.bf16.mxu0 0
    %5349 = vmatpush1.bf16.msra.mxu0 0
    %5350 = vmatprep.subr.bf16.mxu0 0
    %5351 = vmatpush1.bf16.msra.mxu0 0
    %5352 = vmatprep.subr.bf16.mxu0 0
    %5353 = vmatpush1.bf16.msra.mxu0 0
    %5354 = vmatprep.subr.bf16.mxu0 0
    %5355 = vmatpush1.bf16.msra.mxu0 0
    %5356 = vmatprep.subr.bf16.mxu0 0
    %5357 = vmatpush1.bf16.msra.mxu0 0
    %5358 = vmatprep.subr.bf16.mxu0 0
    %5359 = vmatpush1.bf16.msra.mxu0 0
    %5360 = vmatprep.subr.bf16.mxu0 0
    %5361 = vmatpush1.bf16.msra.mxu0 0
    %5362 = vmatprep.subr.bf16.mxu0 0
    %5363 = vmatpush1.bf16.msra.mxu0 0
    %5364 = vmatprep.subr.bf16.mxu0 0
    %5365 = vmatpush1.bf16.msra.mxu0 0
    %5366 = vmatprep.subr.bf16.mxu0 0
    %5367 = vmatpush1.bf16.msra.mxu0 0
    %5368 = vmatprep.subr.bf16.mxu0 0
    %5369 = vmatpush1.bf16.msra.mxu0 0
    %5370 = vmatprep.subr.bf16.mxu0 0
    %5371 = vmatpush1.bf16.msra.mxu0 0
    %5372 = vmatprep.mubr.bf16.mxu0 0
    %5373 = vmatmul.mubr.bf16.gmra.mrb[0].mxu0 %v5338
    %v5374 = vpop.f32.mrb[0].mxu0
    %v5375 = vadd.f32 0.0, %v5374
    %v5376 = vpop.f32.mrb[0].mxu0
    %v5377 = vpop.f32.mrb[0].mxu0
    %v5378 = vpop.f32.mrb[0].mxu0
    %5379 = vdwg.mxu0
    %5380 = vxpose.xlu0.c.b16.start [1/8] %v5320, 128
    %5381 = vxpose.xlu0.c.b16.cont [2/8] 0, 128
    %5382 = vxpose.xlu0.c.b16.cont [3/8] 0, 128
    %5383 = vxpose.xlu0.c.b16.cont [4/8] 0, 128
    %5384 = vxpose.xlu0.c.b16.cont [5/8] 0, 128
    %5385 = vxpose.xlu0.c.b16.cont [6/8] 0, 128
    %5386 = vxpose.xlu0.c.b16.cont [7/8] 0, 128
    %5387 = vxpose.xlu0.c.b16.end [8/8] 0, 128
    %v5388 = vpop.trf.xlu0
    %v5389 = vpop.trf.xlu0
    %v5390 = vpop.trf.xlu0
    %v5391 = vpop.trf.xlu0
    %v5392 = vpop.trf.xlu0
    %v5393 = vpop.trf.xlu0
    %v5394 = vpop.trf.xlu0
    %v5395 = vpop.trf.xlu0
    %v5397 = vsel %vm487, %v5388, 0
    %5399 = vmatprep.subr.bf16.mxu0 0
    %5400 = vmatpush1.bf16.msra.mxu0 %v4791
    %5401 = vmatprep.subr.bf16.mxu0 0
    %5402 = vmatpush1.bf16.msra.mxu0 0
    %5403 = vmatprep.subr.bf16.mxu0 0
    %5404 = vmatpush1.bf16.msra.mxu0 0
    %5405 = vmatprep.subr.bf16.mxu0 0
    %5406 = vmatpush1.bf16.msra.mxu0 0
    %5407 = vmatprep.subr.bf16.mxu0 0
    %5408 = vmatpush1.bf16.msra.mxu0 0
    %5409 = vmatprep.subr.bf16.mxu0 0
    %5410 = vmatpush1.bf16.msra.mxu0 0
    %5411 = vmatprep.subr.bf16.mxu0 0
    %5412 = vmatpush1.bf16.msra.mxu0 0
    %5413 = vmatprep.subr.bf16.mxu0 0
    %5414 = vmatpush1.bf16.msra.mxu0 0
    %5415 = vmatprep.subr.bf16.mxu0 0
    %5416 = vmatpush1.bf16.msra.mxu0 0
    %5417 = vmatprep.subr.bf16.mxu0 0
    %5418 = vmatpush1.bf16.msra.mxu0 0
    %5419 = vmatprep.subr.bf16.mxu0 0
    %5420 = vmatpush1.bf16.msra.mxu0 0
    %5421 = vmatprep.subr.bf16.mxu0 0
    %5422 = vmatpush1.bf16.msra.mxu0 0
    %5423 = vmatprep.subr.bf16.mxu0 0
    %5424 = vmatpush1.bf16.msra.mxu0 0
    %5425 = vmatprep.subr.bf16.mxu0 0
    %5426 = vmatpush1.bf16.msra.mxu0 0
    %5427 = vmatprep.subr.bf16.mxu0 0
    %5428 = vmatpush1.bf16.msra.mxu0 0
    %5429 = vmatprep.subr.bf16.mxu0 0
    %5430 = vmatpush1.bf16.msra.mxu0 0
    %5431 = vmatprep.mubr.bf16.mxu0 0
    %5432 = vmatmul.mubr.bf16.gmra.mrb[0].mxu0 %v5397
    %v5433 = vpop.f32.mrb[0].mxu0
    %v5434 = vadd.f32 0.0, %v5433
    %v5435 = vpop.f32.mrb[0].mxu0
    %v5436 = vpop.f32.mrb[0].mxu0
    %v5437 = vpop.f32.mrb[0].mxu0
    %5438 = vdwg.mxu0
    %5439 = vmatprep.subr.bf16.mxu0 0
    %5440 = vmatpush1.bf16.msra.mxu0 %v5024
    %5441 = vmatprep.subr.bf16.mxu0 0
    %5442 = vmatpush1.bf16.msra.mxu0 0
    %5443 = vmatprep.subr.bf16.mxu0 0
    %5444 = vmatpush1.bf16.msra.mxu0 0
    %5445 = vmatprep.subr.bf16.mxu0 0
    %5446 = vmatpush1.bf16.msra.mxu0 0
    %5447 = vmatprep.subr.bf16.mxu0 0
    %5448 = vmatpush1.bf16.msra.mxu0 0
    %5449 = vmatprep.subr.bf16.mxu0 0
    %5450 = vmatpush1.bf16.msra.mxu0 0
    %5451 = vmatprep.subr.bf16.mxu0 0
    %5452 = vmatpush1.bf16.msra.mxu0 0
    %5453 = vmatprep.subr.bf16.mxu0 0
    %5454 = vmatpush1.bf16.msra.mxu0 0
    %5455 = vmatprep.subr.bf16.mxu0 0
    %5456 = vmatpush1.bf16.msra.mxu0 0
    %5457 = vmatprep.subr.bf16.mxu0 0
    %5458 = vmatpush1.bf16.msra.mxu0 0
    %5459 = vmatprep.subr.bf16.mxu0 0
    %5460 = vmatpush1.bf16.msra.mxu0 0
    %5461 = vmatprep.subr.bf16.mxu0 0
    %5462 = vmatpush1.bf16.msra.mxu0 0
    %5463 = vmatprep.subr.bf16.mxu0 0
    %5464 = vmatpush1.bf16.msra.mxu0 0
    %5465 = vmatprep.subr.bf16.mxu0 0
    %5466 = vmatpush1.bf16.msra.mxu0 0
    %5467 = vmatprep.subr.bf16.mxu0 0
    %5468 = vmatpush1.bf16.msra.mxu0 0
    %5469 = vmatprep.subr.bf16.mxu0 0
    %5470 = vmatpush1.bf16.msra.mxu0 0
    %5471 = vmatprep.mubr.bf16.mxu0 0
    %5472 = vmatmul.mubr.bf16.gmra.mrb[0].mxu0 %v5338
    %v5473 = vpop.f32.mrb[0].mxu0
    %v5474 = vadd.f32 0.0, %v5473
    %v5475 = vpop.f32.mrb[0].mxu0
    %v5476 = vpop.f32.mrb[0].mxu0
    %v5477 = vpop.f32.mrb[0].mxu0
    %5478 = vdwg.mxu0
    %5479 = vmatprep.subr.bf16.mxu0 0
    %5480 = vmatpush1.bf16.msra.mxu0 %v5067
    %5481 = vmatprep.subr.bf16.mxu0 0
    %5482 = vmatpush1.bf16.msra.mxu0 0
    %5483 = vmatprep.subr.bf16.mxu0 0
    %5484 = vmatpush1.bf16.msra.mxu0 0
    %5485 = vmatprep.subr.bf16.mxu0 0
    %5486 = vmatpush1.bf16.msra.mxu0 0
    %5487 = vmatprep.subr.bf16.mxu0 0
    %5488 = vmatpush1.bf16.msra.mxu0 0
    %5489 = vmatprep.subr.bf16.mxu0 0
    %5490 = vmatpush1.bf16.msra.mxu0 0
    %5491 = vmatprep.subr.bf16.mxu0 0
    %5492 = vmatpush1.bf16.msra.mxu0 0
    %5493 = vmatprep.subr.bf16.mxu0 0
    %5494 = vmatpush1.bf16.msra.mxu0 0
    %5495 = vmatprep.subr.bf16.mxu0 0
    %5496 = vmatpush1.bf16.msra.mxu0 0
    %5497 = vmatprep.subr.bf16.mxu0 0
    %5498 = vmatpush1.bf16.msra.mxu0 0
    %5499 = vmatprep.subr.bf16.mxu0 0
    %5500 = vmatpush1.bf16.msra.mxu0 0
    %5501 = vmatprep.subr.bf16.mxu0 0
    %5502 = vmatpush1.bf16.msra.mxu0 0
    %5503 = vmatprep.subr.bf16.mxu0 0
    %5504 = vmatpush1.bf16.msra.mxu0 0
    %5505 = vmatprep.subr.bf16.mxu0 0
    %5506 = vmatpush1.bf16.msra.mxu0 0
    %5507 = vmatprep.subr.bf16.mxu0 0
    %5508 = vmatpush1.bf16.msra.mxu0 0
    %5509 = vmatprep.subr.bf16.mxu0 0
    %5510 = vmatpush1.bf16.msra.mxu0 0
    %5511 = vmatprep.mubr.bf16.mxu0 0
    %5512 = vmatmul.mubr.bf16.gmra.mrb[0].mxu0 %v5397
    %v5513 = vpop.f32.mrb[0].mxu0
    %v5514 = vadd.f32 0.0, %v5513
    %v5515 = vpop.f32.mrb[0].mxu0
    %v5516 = vpop.f32.mrb[0].mxu0
    %v5517 = vpop.f32.mrb[0].mxu0
    %5518 = vdwg.mxu0
    %v5519 = vpack.c.bf16 %v5295, %v5295
    %v5520 = vpack.c.bf16 %v5296, %v5296
    %v5522 = vsel %vm491, %v5519, 0
    %5524 = vmatprep.subr.bf16.mxu0 0
    %5525 = vmatpush1.bf16.msra.mxu0 %v5522
    %5526 = vmatprep.subr.bf16.mxu0 0
    %5527 = vmatpush1.bf16.msra.mxu0 0
    %5528 = vmatprep.subr.bf16.mxu0 0
    %5529 = vmatpush1.bf16.msra.mxu0 0
    %5530 = vmatprep.subr.bf16.mxu0 0
    %5531 = vmatpush1.bf16.msra.mxu0 0
    %5532 = vmatprep.subr.bf16.mxu0 0
    %5533 = vmatpush1.bf16.msra.mxu0 0
    %5534 = vmatprep.subr.bf16.mxu0 0
    %5535 = vmatpush1.bf16.msra.mxu0 0
    %5536 = vmatprep.subr.bf16.mxu0 0
    %5537 = vmatpush1.bf16.msra.mxu0 0
    %5538 = vmatprep.subr.bf16.mxu0 0
    %5539 = vmatpush1.bf16.msra.mxu0 0
    %5540 = vmatprep.subr.bf16.mxu0 0
    %5541 = vmatpush1.bf16.msra.mxu0 0
    %5542 = vmatprep.subr.bf16.mxu0 0
    %5543 = vmatpush1.bf16.msra.mxu0 0
    %5544 = vmatprep.subr.bf16.mxu0 0
    %5545 = vmatpush1.bf16.msra.mxu0 0
    %5546 = vmatprep.subr.bf16.mxu0 0
    %5547 = vmatpush1.bf16.msra.mxu0 0
    %5548 = vmatprep.subr.bf16.mxu0 0
    %5549 = vmatpush1.bf16.msra.mxu0 0
    %5550 = vmatprep.subr.bf16.mxu0 0
    %5551 = vmatpush1.bf16.msra.mxu0 0
    %5552 = vmatprep.subr.bf16.mxu0 0
    %5553 = vmatpush1.bf16.msra.mxu0 0
    %5554 = vmatprep.subr.bf16.mxu0 0
    %5555 = vmatpush1.bf16.msra.mxu0 0
    %5556 = vmatprep.mubr.bf16.mxu0 0
    %5557 = vmatmul.mubr.bf16.gmra.mrb[0].mxu0 %v5338
    %v5558 = vpop.f32.mrb[0].mxu0
    %v5559 = vadd.f32 0.0, %v5558
    %v5560 = vpop.f32.mrb[0].mxu0
    %v5561 = vpop.f32.mrb[0].mxu0
    %v5562 = vpop.f32.mrb[0].mxu0
    %5563 = vdwg.mxu0
    %v5565 = vsel %vm491, %v5520, 0
    %5567 = vmatprep.subr.bf16.mxu0 0
    %5568 = vmatpush1.bf16.msra.mxu0 %v5565
    %5569 = vmatprep.subr.bf16.mxu0 0
    %5570 = vmatpush1.bf16.msra.mxu0 0
    %5571 = vmatprep.subr.bf16.mxu0 0
    %5572 = vmatpush1.bf16.msra.mxu0 0
    %5573 = vmatprep.subr.bf16.mxu0 0
    %5574 = vmatpush1.bf16.msra.mxu0 0
    %5575 = vmatprep.subr.bf16.mxu0 0
    %5576 = vmatpush1.bf16.msra.mxu0 0
    %5577 = vmatprep.subr.bf16.mxu0 0
    %5578 = vmatpush1.bf16.msra.mxu0 0
    %5579 = vmatprep.subr.bf16.mxu0 0
    %5580 = vmatpush1.bf16.msra.mxu0 0
    %5581 = vmatprep.subr.bf16.mxu0 0
    %5582 = vmatpush1.bf16.msra.mxu0 0
    %5583 = vmatprep.subr.bf16.mxu0 0
    %5584 = vmatpush1.bf16.msra.mxu0 0
    %5585 = vmatprep.subr.bf16.mxu0 0
    %5586 = vmatpush1.bf16.msra.mxu0 0
    %5587 = vmatprep.subr.bf16.mxu0 0
    %5588 = vmatpush1.bf16.msra.mxu0 0
    %5589 = vmatprep.subr.bf16.mxu0 0
    %5590 = vmatpush1.bf16.msra.mxu0 0
    %5591 = vmatprep.subr.bf16.mxu0 0
    %5592 = vmatpush1.bf16.msra.mxu0 0
    %5593 = vmatprep.subr.bf16.mxu0 0
    %5594 = vmatpush1.bf16.msra.mxu0 0
    %5595 = vmatprep.subr.bf16.mxu0 0
    %5596 = vmatpush1.bf16.msra.mxu0 0
    %5597 = vmatprep.subr.bf16.mxu0 0
    %5598 = vmatpush1.bf16.msra.mxu0 0
    %5599 = vmatprep.mubr.bf16.mxu0 0
    %5600 = vmatmul.mubr.bf16.gmra.mrb[0].mxu0 %v5397
    %v5601 = vpop.f32.mrb[0].mxu0
    %v5602 = vadd.f32 0.0, %v5601
    %v5603 = vpop.f32.mrb[0].mxu0
    %v5604 = vpop.f32.mrb[0].mxu0
    %v5605 = vpop.f32.mrb[0].mxu0
    %5606 = vdwg.mxu0
    %v5607 = vsel %vm491, %v2807, 0
    %5609 = vmatprep.subr.bf16.mxu0 0
    %5610 = vmatpush1.bf16.msra.mxu0 %v5607
    %5611 = vmatprep.subr.bf16.mxu0 0
    %5612 = vmatpush1.bf16.msra.mxu0 0
    %5613 = vmatprep.subr.bf16.mxu0 0
    %5614 = vmatpush1.bf16.msra.mxu0 0
    %5615 = vmatprep.subr.bf16.mxu0 0
    %5616 = vmatpush1.bf16.msra.mxu0 0
    %5617 = vmatprep.subr.bf16.mxu0 0
    %5618 = vmatpush1.bf16.msra.mxu0 0
    %5619 = vmatprep.subr.bf16.mxu0 0
    %5620 = vmatpush1.bf16.msra.mxu0 0
    %5621 = vmatprep.subr.bf16.mxu0 0
    %5622 = vmatpush1.bf16.msra.mxu0 0
    %5623 = vmatprep.subr.bf16.mxu0 0
    %5624 = vmatpush1.bf16.msra.mxu0 0
    %5625 = vmatprep.subr.bf16.mxu0 0
    %5626 = vmatpush1.bf16.msra.mxu0 0
    %5627 = vmatprep.subr.bf16.mxu0 0
    %5628 = vmatpush1.bf16.msra.mxu0 0
    %5629 = vmatprep.subr.bf16.mxu0 0
    %5630 = vmatpush1.bf16.msra.mxu0 0
    %5631 = vmatprep.subr.bf16.mxu0 0
    %5632 = vmatpush1.bf16.msra.mxu0 0
    %5633 = vmatprep.subr.bf16.mxu0 0
    %5634 = vmatpush1.bf16.msra.mxu0 0
    %5635 = vmatprep.subr.bf16.mxu0 0
    %5636 = vmatpush1.bf16.msra.mxu0 0
    %5637 = vmatprep.subr.bf16.mxu0 0
    %5638 = vmatpush1.bf16.msra.mxu0 0
    %5639 = vmatprep.subr.bf16.mxu0 0
    %5640 = vmatpush1.bf16.msra.mxu0 0
    %5641 = vmatprep.mubr.bf16.mxu0 0
    %5642 = vmatmul.mubr.bf16.gmra.mrb[0].mxu0 %v5338
    %v5643 = vpop.f32.mrb[0].mxu0
    %v5644 = vadd.f32 0.0, %v5643
    %v5645 = vpop.f32.mrb[0].mxu0
    %v5646 = vpop.f32.mrb[0].mxu0
    %v5647 = vpop.f32.mrb[0].mxu0
    %5648 = vdwg.mxu0
    %v5649 = vsel %vm491, %v2808, 0
    %5651 = vmatprep.subr.bf16.mxu0 0
    %5652 = vmatpush1.bf16.msra.mxu0 %v5649
    %5653 = vmatprep.subr.bf16.mxu0 0
    %5654 = vmatpush1.bf16.msra.mxu0 0
    %5655 = vmatprep.subr.bf16.mxu0 0
    %5656 = vmatpush1.bf16.msra.mxu0 0
    %5657 = vmatprep.subr.bf16.mxu0 0
    %5658 = vmatpush1.bf16.msra.mxu0 0
    %5659 = vmatprep.subr.bf16.mxu0 0
    %5660 = vmatpush1.bf16.msra.mxu0 0
    %5661 = vmatprep.subr.bf16.mxu0 0
    %5662 = vmatpush1.bf16.msra.mxu0 0
    %5663 = vmatprep.subr.bf16.mxu0 0
    %5664 = vmatpush1.bf16.msra.mxu0 0
    %5665 = vmatprep.subr.bf16.mxu0 0
    %5666 = vmatpush1.bf16.msra.mxu0 0
    %5667 = vmatprep.subr.bf16.mxu0 0
    %5668 = vmatpush1.bf16.msra.mxu0 0
    %5669 = vmatprep.subr.bf16.mxu0 0
    %5670 = vmatpush1.bf16.msra.mxu0 0
    %5671 = vmatprep.subr.bf16.mxu0 0
    %5672 = vmatpush1.bf16.msra.mxu0 0
    %5673 = vmatprep.subr.bf16.mxu0 0
    %5674 = vmatpush1.bf16.msra.mxu0 0
    %5675 = vmatprep.subr.bf16.mxu0 0
    %5676 = vmatpush1.bf16.msra.mxu0 0
    %5677 = vmatprep.subr.bf16.mxu0 0
    %5678 = vmatpush1.bf16.msra.mxu0 0
    %5679 = vmatprep.subr.bf16.mxu0 0
    %5680 = vmatpush1.bf16.msra.mxu0 0
    %5681 = vmatprep.subr.bf16.mxu0 0
    %5682 = vmatpush1.bf16.msra.mxu0 0
    %5683 = vmatprep.mubr.bf16.mxu0 0
    %5684 = vmatmul.mubr.bf16.gmra.mrb[0].mxu0 %v5397
    %v5685 = vpop.f32.mrb[0].mxu0
    %v5686 = vadd.f32 0.0, %v5685
    %v5687 = vpop.f32.mrb[0].mxu0
    %v5688 = vpop.f32.mrb[0].mxu0
    %v5689 = vpop.f32.mrb[0].mxu0
    %5690 = vdwg.mxu0
    %v5691 = vpack.c.bf16 %v5644, %v5644
    %v5692 = vpack.c.bf16 %v5686, %v5686
    %v5694 = vsel %vm487, %v5691, 0
    %v5697 = vsel %vm491, %v5319, 0
    %5699 = vmatprep.subr.bf16.mxu0 0
    %5700 = vmatpush1.bf16.msra.mxu0 %v5697
    %5701 = vmatprep.subr.bf16.mxu0 0
    %5702 = vmatpush1.bf16.msra.mxu0 0
    %5703 = vmatprep.subr.bf16.mxu0 0
    %5704 = vmatpush1.bf16.msra.mxu0 0
    %5705 = vmatprep.subr.bf16.mxu0 0
    %5706 = vmatpush1.bf16.msra.mxu0 0
    %5707 = vmatprep.subr.bf16.mxu0 0
    %5708 = vmatpush1.bf16.msra.mxu0 0
    %5709 = vmatprep.subr.bf16.mxu0 0
    %5710 = vmatpush1.bf16.msra.mxu0 0
    %5711 = vmatprep.subr.bf16.mxu0 0
    %5712 = vmatpush1.bf16.msra.mxu0 0
    %5713 = vmatprep.subr.bf16.mxu0 0
    %5714 = vmatpush1.bf16.msra.mxu0 0
    %5715 = vmatprep.subr.bf16.mxu0 0
    %5716 = vmatpush1.bf16.msra.mxu0 0
    %5717 = vmatprep.subr.bf16.mxu0 0
    %5718 = vmatpush1.bf16.msra.mxu0 0
    %5719 = vmatprep.subr.bf16.mxu0 0
    %5720 = vmatpush1.bf16.msra.mxu0 0
    %5721 = vmatprep.subr.bf16.mxu0 0
    %5722 = vmatpush1.bf16.msra.mxu0 0
    %5723 = vmatprep.subr.bf16.mxu0 0
    %5724 = vmatpush1.bf16.msra.mxu0 0
    %5725 = vmatprep.subr.bf16.mxu0 0
    %5726 = vmatpush1.bf16.msra.mxu0 0
    %5727 = vmatprep.subr.bf16.mxu0 0
    %5728 = vmatpush1.bf16.msra.mxu0 0
    %5729 = vmatprep.subr.bf16.mxu0 0
    %5730 = vmatpush1.bf16.msra.mxu0 0
    %5731 = vmatprep.mubr.bf16.mxu0 0
    %5732 = vmatmul.mubr.bf16.gmra.mrb[0].mxu0 %v5694
    %v5733 = vpop.f32.mrb[0].mxu0
    %v5734 = vadd.f32 0.0, %v5733
    %v5735 = vpop.f32.mrb[0].mxu0
    %v5736 = vpop.f32.mrb[0].mxu0
    %v5737 = vpop.f32.mrb[0].mxu0
    %5738 = vdwg.mxu0
    %v5740 = vsel %vm487, %v5692, 0
    %v5743 = vsel %vm491, %v5320, 0
    %5745 = vmatprep.subr.bf16.mxu0 0
    %5746 = vmatpush1.bf16.msra.mxu0 %v5743
    %5747 = vmatprep.subr.bf16.mxu0 0
    %5748 = vmatpush1.bf16.msra.mxu0 0
    %5749 = vmatprep.subr.bf16.mxu0 0
    %5750 = vmatpush1.bf16.msra.mxu0 0
    %5751 = vmatprep.subr.bf16.mxu0 0
    %5752 = vmatpush1.bf16.msra.mxu0 0
    %5753 = vmatprep.subr.bf16.mxu0 0
    %5754 = vmatpush1.bf16.msra.mxu0 0
    %5755 = vmatprep.subr.bf16.mxu0 0
    %5756 = vmatpush1.bf16.msra.mxu0 0
    %5757 = vmatprep.subr.bf16.mxu0 0
    %5758 = vmatpush1.bf16.msra.mxu0 0
    %5759 = vmatprep.subr.bf16.mxu0 0
    %5760 = vmatpush1.bf16.msra.mxu0 0
    %5761 = vmatprep.subr.bf16.mxu0 0
    %5762 = vmatpush1.bf16.msra.mxu0 0
    %5763 = vmatprep.subr.bf16.mxu0 0
    %5764 = vmatpush1.bf16.msra.mxu0 0
    %5765 = vmatprep.subr.bf16.mxu0 0
    %5766 = vmatpush1.bf16.msra.mxu0 0
    %5767 = vmatprep.subr.bf16.mxu0 0
    %5768 = vmatpush1.bf16.msra.mxu0 0
    %5769 = vmatprep.subr.bf16.mxu0 0
    %5770 = vmatpush1.bf16.msra.mxu0 0
    %5771 = vmatprep.subr.bf16.mxu0 0
    %5772 = vmatpush1.bf16.msra.mxu0 0
    %5773 = vmatprep.subr.bf16.mxu0 0
    %5774 = vmatpush1.bf16.msra.mxu0 0
    %5775 = vmatprep.subr.bf16.mxu0 0
    %5776 = vmatpush1.bf16.msra.mxu0 0
    %5777 = vmatprep.mubr.bf16.mxu0 0
    %5778 = vmatmul.mubr.bf16.gmra.mrb[0].mxu0 %v5740
    %v5779 = vpop.f32.mrb[0].mxu0
    %v5780 = vadd.f32 0.0, %v5779
    %v5781 = vpop.f32.mrb[0].mxu0
    %v5782 = vpop.f32.mrb[0].mxu0
    %v5783 = vpop.f32.mrb[0].mxu0
    %5784 = vdwg.mxu0
    %v5785 = vpack.c.bf16 %v5734, %v5734
    %v5786 = vpack.c.bf16 %v5780, %v5780
    %v5789 = vcombine.low %v5785, %v5786
    %v5791 = vunpack.c.l.s4 1966171168
    %v5792 = vunpack.c.0.s8 %v5791
    %v5793 = vlaneseq
    %v5794 = vshrl.u32 %v5793, 7
    %v5795 = vsub.s32 %v5792, %v5794
    %v5796 = vrot.slane %v5789, %v5795
    %v5798 = vunpack.c.l.s4 1966171168
    %v5799 = vunpack.c.0.s8 %v5798
    %v5800 = vlaneseq
    %v5801 = vshrl.u32 %v5800, 7
    %v5802 = vsub.s32 %v5799, %v5801
    %v5803 = vrot.slane %v5796, %v5802
    %v5805 = vsel %vm4113, %v5803, 0
    %v5807 = vsel %vm4284, 1065369472, 0
    %5809 = vmatprep.subr.bf16.mxu0 0
    %5810 = vmatpush1.bf16.msra.mxu0 %v5807
    %5811 = vmatprep.subr.bf16.mxu0 0
    %5812 = vmatpush1.bf16.msra.mxu0 0
    %5813 = vmatprep.subr.bf16.mxu0 0
    %5814 = vmatpush1.bf16.msra.mxu0 0
    %5815 = vmatprep.subr.bf16.mxu0 0
    %5816 = vmatpush1.bf16.msra.mxu0 0
    %5817 = vmatprep.subr.bf16.mxu0 0
    %5818 = vmatpush1.bf16.msra.mxu0 0
    %5819 = vmatprep.subr.bf16.mxu0 0
    %5820 = vmatpush1.bf16.msra.mxu0 0
    %5821 = vmatprep.subr.bf16.mxu0 0
    %5822 = vmatpush1.bf16.msra.mxu0 0
    %5823 = vmatprep.subr.bf16.mxu0 0
    %5824 = vmatpush1.bf16.msra.mxu0 0
    %5825 = vmatprep.subr.bf16.mxu0 0
    %5826 = vmatpush1.bf16.msra.mxu0 0
    %5827 = vmatprep.subr.bf16.mxu0 0
    %5828 = vmatpush1.bf16.msra.mxu0 0
    %5829 = vmatprep.subr.bf16.mxu0 0
    %5830 = vmatpush1.bf16.msra.mxu0 0
    %5831 = vmatprep.subr.bf16.mxu0 0
    %5832 = vmatpush1.bf16.msra.mxu0 0
    %5833 = vmatprep.subr.bf16.mxu0 0
    %5834 = vmatpush1.bf16.msra.mxu0 0
    %5835 = vmatprep.subr.bf16.mxu0 0
    %5836 = vmatpush1.bf16.msra.mxu0 0
    %5837 = vmatprep.subr.bf16.mxu0 0
    %5838 = vmatpush1.bf16.msra.mxu0 0
    %5839 = vmatprep.subr.bf16.mxu0 0
    %5840 = vmatpush1.bf16.msra.mxu0 0
    %5841 = vmatprep.mubr.bf16.mxu0 0
    %5842 = vmatmul.mubr.bf16.gmra.mrb[0].mxu0 %v5805
    %v5843 = vpop.f32.mrb[0].mxu0
    %v5844 = vadd.f32 0.0, %v5843
    %v5845 = vpop.f32.mrb[0].mxu0
    %v5846 = vpop.f32.mrb[0].mxu0
    %v5847 = vpop.f32.mrb[0].mxu0
    %5848 = vdwg.mxu0
    %v5851 = vunpack.c.l.s4 1983009808
    %v5852 = vunpack.c.0.s8 %v5851
    %v5853 = vlaneseq
    %v5854 = vshrl.u32 %v5853, 7
    %v5855 = vsub.s32 %v5852, %v5854
    %v5856 = vrot.slane %v5844, %v5855
    %v5857 = vcombine.high %v5856, %v5856
    %v5860 = vmax.f32 %v5856, 1.0
    %v5861 = vmax.f32 %v5857, 1.0
    %v5862 = vrcp.pop %v5860
    %v5863 = vrcp.pop %v5861
    %v5864 = vpack.c.bf16 %v5375, %v5375
    %v5865 = vpack.c.bf16 %v5434, %v5434
    %v5867 = vsel %vm4113, %v5785, 0
    %v5870 = vsel %vm4284, %v5864, 0
    %5872 = vmatprep.subr.bf16.mxu0 0
    %5873 = vmatpush1.bf16.msra.mxu0 %v5870
    %5874 = vmatprep.subr.bf16.mxu0 0
    %5875 = vmatpush1.bf16.msra.mxu0 0
    %5876 = vmatprep.subr.bf16.mxu0 0
    %5877 = vmatpush1.bf16.msra.mxu0 0
    %5878 = vmatprep.subr.bf16.mxu0 0
    %5879 = vmatpush1.bf16.msra.mxu0 0
    %5880 = vmatprep.subr.bf16.mxu0 0
    %5881 = vmatpush1.bf16.msra.mxu0 0
    %5882 = vmatprep.subr.bf16.mxu0 0
    %5883 = vmatpush1.bf16.msra.mxu0 0
    %5884 = vmatprep.subr.bf16.mxu0 0
    %5885 = vmatpush1.bf16.msra.mxu0 0
    %5886 = vmatprep.subr.bf16.mxu0 0
    %5887 = vmatpush1.bf16.msra.mxu0 0
    %5888 = vmatprep.subr.bf16.mxu0 0
    %5889 = vmatpush1.bf16.msra.mxu0 0
    %5890 = vmatprep.subr.bf16.mxu0 0
    %5891 = vmatpush1.bf16.msra.mxu0 0
    %5892 = vmatprep.subr.bf16.mxu0 0
    %5893 = vmatpush1.bf16.msra.mxu0 0
    %5894 = vmatprep.subr.bf16.mxu0 0
    %5895 = vmatpush1.bf16.msra.mxu0 0
    %5896 = vmatprep.subr.bf16.mxu0 0
    %5897 = vmatpush1.bf16.msra.mxu0 0
    %5898 = vmatprep.subr.bf16.mxu0 0
    %5899 = vmatpush1.bf16.msra.mxu0 0
    %5900 = vmatprep.subr.bf16.mxu0 0
    %5901 = vmatpush1.bf16.msra.mxu0 0
    %5902 = vmatprep.subr.bf16.mxu0 0
    %5903 = vmatpush1.bf16.msra.mxu0 0
    %5904 = vmatprep.mubr.bf16.mxu0 0
    %5905 = vmatmul.mubr.bf16.gmra.mrb[0].mxu0 %v5867
    %v5906 = vpop.f32.mrb[0].mxu0
    %v5907 = vadd.f32 0.0, %v5906
    %v5908 = vpop.f32.mrb[0].mxu0
    %v5909 = vpop.f32.mrb[0].mxu0
    %v5910 = vpop.f32.mrb[0].mxu0
    %5911 = vdwg.mxu0
    %v5913 = vsel %vm4113, %v5786, 0
    %v5916 = vsel %vm4284, %v5865, 0
    %5918 = vmatprep.subr.bf16.mxu0 0
    %5919 = vmatpush1.bf16.msra.mxu0 %v5916
    %5920 = vmatprep.subr.bf16.mxu0 0
    %5921 = vmatpush1.bf16.msra.mxu0 0
    %5922 = vmatprep.subr.bf16.mxu0 0
    %5923 = vmatpush1.bf16.msra.mxu0 0
    %5924 = vmatprep.subr.bf16.mxu0 0
    %5925 = vmatpush1.bf16.msra.mxu0 0
    %5926 = vmatprep.subr.bf16.mxu0 0
    %5927 = vmatpush1.bf16.msra.mxu0 0
    %5928 = vmatprep.subr.bf16.mxu0 0
    %5929 = vmatpush1.bf16.msra.mxu0 0
    %5930 = vmatprep.subr.bf16.mxu0 0
    %5931 = vmatpush1.bf16.msra.mxu0 0
    %5932 = vmatprep.subr.bf16.mxu0 0
    %5933 = vmatpush1.bf16.msra.mxu0 0
    %5934 = vmatprep.subr.bf16.mxu0 0
    %5935 = vmatpush1.bf16.msra.mxu0 0
    %5936 = vmatprep.subr.bf16.mxu0 0
    %5937 = vmatpush1.bf16.msra.mxu0 0
    %5938 = vmatprep.subr.bf16.mxu0 0
    %5939 = vmatpush1.bf16.msra.mxu0 0
    %5940 = vmatprep.subr.bf16.mxu0 0
    %5941 = vmatpush1.bf16.msra.mxu0 0
    %5942 = vmatprep.subr.bf16.mxu0 0
    %5943 = vmatpush1.bf16.msra.mxu0 0
    %5944 = vmatprep.subr.bf16.mxu0 0
    %5945 = vmatpush1.bf16.msra.mxu0 0
    %5946 = vmatprep.subr.bf16.mxu0 0
    %5947 = vmatpush1.bf16.msra.mxu0 0
    %5948 = vmatprep.subr.bf16.mxu0 0
    %5949 = vmatpush1.bf16.msra.mxu0 0
    %5950 = vmatprep.mubr.bf16.mxu0 0
    %5951 = vmatmul.mubr.bf16.gmra.mrb[0].mxu0 %v5913
    %v5952 = vpop.f32.mrb[0].mxu0
    %v5953 = vadd.f32 0.0, %v5952
    %v5954 = vpop.f32.mrb[0].mxu0
    %v5955 = vpop.f32.mrb[0].mxu0
    %v5956 = vpop.f32.mrb[0].mxu0
    %5957 = vdwg.mxu0
    %5959 = vset.pattern.permute.xlu0 0
    %5960 = vperm.xlu0 %5959, %v5862
    %v5961 = vpop.permute.xlu0 %5960
    %v5964 = vunpack.c.l.s4 269488144
    %v5965 = vunpack.c.0.s8 %v5964
    %v5966 = vlaneseq
    %v5967 = vshrl.u32 %v5966, 7
    %v5968 = vsub.s32 %v5965, %v5967
    %v5969 = vrot.slane %v5961, %v5968
    %5971 = vset.pattern.permute.xlu0 0
    %5972 = vperm.xlu0 %5971, %v5863
    %v5973 = vpop.permute.xlu0 %5972
    %v5976 = vunpack.c.l.s4 269488144
    %v5977 = vunpack.c.0.s8 %v5976
    %v5978 = vlaneseq
    %v5979 = vshrl.u32 %v5978, 7
    %v5980 = vsub.s32 %v5977, %v5979
    %v5981 = vrot.slane %v5973, %v5980
    %v5982 = vmul.f32 %v5907, %v5969
    %v5983 = vmul.f32 %v5953, %v5981
    %v5984 = vpack.c.bf16 %v5474, %v5474
    %v5985 = vpack.c.bf16 %v5514, %v5514
    %v5987 = vsel %vm4284, %v5984, 0
    %5989 = vmatprep.subr.bf16.mxu0 0
    %5990 = vmatpush1.bf16.msra.mxu0 %v5987
    %5991 = vmatprep.subr.bf16.mxu0 0
    %5992 = vmatpush1.bf16.msra.mxu0 0
    %5993 = vmatprep.subr.bf16.mxu0 0
    %5994 = vmatpush1.bf16.msra.mxu0 0
    %5995 = vmatprep.subr.bf16.mxu0 0
    %5996 = vmatpush1.bf16.msra.mxu0 0
    %5997 = vmatprep.subr.bf16.mxu0 0
    %5998 = vmatpush1.bf16.msra.mxu0 0
    %5999 = vmatprep.subr.bf16.mxu0 0
    %6000 = vmatpush1.bf16.msra.mxu0 0
    %6001 = vmatprep.subr.bf16.mxu0 0
    %6002 = vmatpush1.bf16.msra.mxu0 0
    %6003 = vmatprep.subr.bf16.mxu0 0
    %6004 = vmatpush1.bf16.msra.mxu0 0
    %6005 = vmatprep.subr.bf16.mxu0 0
    %6006 = vmatpush1.bf16.msra.mxu0 0
    %6007 = vmatprep.subr.bf16.mxu0 0
    %6008 = vmatpush1.bf16.msra.mxu0 0
    %6009 = vmatprep.subr.bf16.mxu0 0
    %6010 = vmatpush1.bf16.msra.mxu0 0
    %6011 = vmatprep.subr.bf16.mxu0 0
    %6012 = vmatpush1.bf16.msra.mxu0 0
    %6013 = vmatprep.subr.bf16.mxu0 0
    %6014 = vmatpush1.bf16.msra.mxu0 0
    %6015 = vmatprep.subr.bf16.mxu0 0
    %6016 = vmatpush1.bf16.msra.mxu0 0
    %6017 = vmatprep.subr.bf16.mxu0 0
    %6018 = vmatpush1.bf16.msra.mxu0 0
    %6019 = vmatprep.subr.bf16.mxu0 0
    %6020 = vmatpush1.bf16.msra.mxu0 0
    %6021 = vmatprep.mubr.bf16.mxu0 0
    %6022 = vmatmul.mubr.bf16.gmra.mrb[0].mxu0 %v5867
    %v6023 = vpop.f32.mrb[0].mxu0
    %v6024 = vadd.f32 0.0, %v6023
    %v6025 = vpop.f32.mrb[0].mxu0
    %v6026 = vpop.f32.mrb[0].mxu0
    %v6027 = vpop.f32.mrb[0].mxu0
    %6028 = vdwg.mxu0
    %v6030 = vsel %vm4284, %v5985, 0
    %6032 = vmatprep.subr.bf16.mxu0 0
    %6033 = vmatpush1.bf16.msra.mxu0 %v6030
    %6034 = vmatprep.subr.bf16.mxu0 0
    %6035 = vmatpush1.bf16.msra.mxu0 0
    %6036 = vmatprep.subr.bf16.mxu0 0
    %6037 = vmatpush1.bf16.msra.mxu0 0
    %6038 = vmatprep.subr.bf16.mxu0 0
    %6039 = vmatpush1.bf16.msra.mxu0 0
    %6040 = vmatprep.subr.bf16.mxu0 0
    %6041 = vmatpush1.bf16.msra.mxu0 0
    %6042 = vmatprep.subr.bf16.mxu0 0
    %6043 = vmatpush1.bf16.msra.mxu0 0
    %6044 = vmatprep.subr.bf16.mxu0 0
    %6045 = vmatpush1.bf16.msra.mxu0 0
    %6046 = vmatprep.subr.bf16.mxu0 0
    %6047 = vmatpush1.bf16.msra.mxu0 0
    %6048 = vmatprep.subr.bf16.mxu0 0
    %6049 = vmatpush1.bf16.msra.mxu0 0
    %6050 = vmatprep.subr.bf16.mxu0 0
    %6051 = vmatpush1.bf16.msra.mxu0 0
    %6052 = vmatprep.subr.bf16.mxu0 0
    %6053 = vmatpush1.bf16.msra.mxu0 0
    %6054 = vmatprep.subr.bf16.mxu0 0
    %6055 = vmatpush1.bf16.msra.mxu0 0
    %6056 = vmatprep.subr.bf16.mxu0 0
    %6057 = vmatpush1.bf16.msra.mxu0 0
    %6058 = vmatprep.subr.bf16.mxu0 0
    %6059 = vmatpush1.bf16.msra.mxu0 0
    %6060 = vmatprep.subr.bf16.mxu0 0
    %6061 = vmatpush1.bf16.msra.mxu0 0
    %6062 = vmatprep.subr.bf16.mxu0 0
    %6063 = vmatpush1.bf16.msra.mxu0 0
    %6064 = vmatprep.mubr.bf16.mxu0 0
    %6065 = vmatmul.mubr.bf16.gmra.mrb[0].mxu0 %v5913
    %v6066 = vpop.f32.mrb[0].mxu0
    %v6067 = vadd.f32 0.0, %v6066
    %v6068 = vpop.f32.mrb[0].mxu0
    %v6069 = vpop.f32.mrb[0].mxu0
    %v6070 = vpop.f32.mrb[0].mxu0
    %6071 = vdwg.mxu0
    %v6072 = vmul.f32 %v6024, %v5969
    %v6073 = vmul.f32 %v6067, %v5981
    %v6074 = vpack.c.bf16 %v5559, %v5559
    %v6075 = vpack.c.bf16 %v5602, %v5602
    %v6077 = vsel %vm4284, %v6074, 0
    %6079 = vmatprep.subr.bf16.mxu0 0
    %6080 = vmatpush1.bf16.msra.mxu0 %v6077
    %6081 = vmatprep.subr.bf16.mxu0 0
    %6082 = vmatpush1.bf16.msra.mxu0 0
    %6083 = vmatprep.subr.bf16.mxu0 0
    %6084 = vmatpush1.bf16.msra.mxu0 0
    %6085 = vmatprep.subr.bf16.mxu0 0
    %6086 = vmatpush1.bf16.msra.mxu0 0
    %6087 = vmatprep.subr.bf16.mxu0 0
    %6088 = vmatpush1.bf16.msra.mxu0 0
    %6089 = vmatprep.subr.bf16.mxu0 0
    %6090 = vmatpush1.bf16.msra.mxu0 0
    %6091 = vmatprep.subr.bf16.mxu0 0
    %6092 = vmatpush1.bf16.msra.mxu0 0
    %6093 = vmatprep.subr.bf16.mxu0 0
    %6094 = vmatpush1.bf16.msra.mxu0 0
    %6095 = vmatprep.subr.bf16.mxu0 0
    %6096 = vmatpush1.bf16.msra.mxu0 0
    %6097 = vmatprep.subr.bf16.mxu0 0
    %6098 = vmatpush1.bf16.msra.mxu0 0
    %6099 = vmatprep.subr.bf16.mxu0 0
    %6100 = vmatpush1.bf16.msra.mxu0 0
    %6101 = vmatprep.subr.bf16.mxu0 0
    %6102 = vmatpush1.bf16.msra.mxu0 0
    %6103 = vmatprep.subr.bf16.mxu0 0
    %6104 = vmatpush1.bf16.msra.mxu0 0
    %6105 = vmatprep.subr.bf16.mxu0 0
    %6106 = vmatpush1.bf16.msra.mxu0 0
    %6107 = vmatprep.subr.bf16.mxu0 0
    %6108 = vmatpush1.bf16.msra.mxu0 0
    %6109 = vmatprep.subr.bf16.mxu0 0
    %6110 = vmatpush1.bf16.msra.mxu0 0
    %6111 = vmatprep.mubr.bf16.mxu0 0
    %6112 = vmatmul.mubr.bf16.gmra.mrb[0].mxu0 %v5867
    %v6113 = vpop.f32.mrb[0].mxu0
    %v6114 = vadd.f32 0.0, %v6113
    %v6115 = vpop.f32.mrb[0].mxu0
    %v6116 = vpop.f32.mrb[0].mxu0
    %v6117 = vpop.f32.mrb[0].mxu0
    %6118 = vdwg.mxu0
    %v6120 = vsel %vm4284, %v6075, 0
    %6122 = vmatprep.subr.bf16.mxu0 0
    %6123 = vmatpush1.bf16.msra.mxu0 %v6120
    %6124 = vmatprep.subr.bf16.mxu0 0
    %6125 = vmatpush1.bf16.msra.mxu0 0
    %6126 = vmatprep.subr.bf16.mxu0 0
    %6127 = vmatpush1.bf16.msra.mxu0 0
    %6128 = vmatprep.subr.bf16.mxu0 0
    %6129 = vmatpush1.bf16.msra.mxu0 0
    %6130 = vmatprep.subr.bf16.mxu0 0
    %6131 = vmatpush1.bf16.msra.mxu0 0
    %6132 = vmatprep.subr.bf16.mxu0 0
    %6133 = vmatpush1.bf16.msra.mxu0 0
    %6134 = vmatprep.subr.bf16.mxu0 0
    %6135 = vmatpush1.bf16.msra.mxu0 0
    %6136 = vmatprep.subr.bf16.mxu0 0
    %6137 = vmatpush1.bf16.msra.mxu0 0
    %6138 = vmatprep.subr.bf16.mxu0 0
    %6139 = vmatpush1.bf16.msra.mxu0 0
    %6140 = vmatprep.subr.bf16.mxu0 0
    %6141 = vmatpush1.bf16.msra.mxu0 0
    %6142 = vmatprep.subr.bf16.mxu0 0
    %6143 = vmatpush1.bf16.msra.mxu0 0
    %6144 = vmatprep.subr.bf16.mxu0 0
    %6145 = vmatpush1.bf16.msra.mxu0 0
    %6146 = vmatprep.subr.bf16.mxu0 0
    %6147 = vmatpush1.bf16.msra.mxu0 0
    %6148 = vmatprep.subr.bf16.mxu0 0
    %6149 = vmatpush1.bf16.msra.mxu0 0
    %6150 = vmatprep.subr.bf16.mxu0 0
    %6151 = vmatpush1.bf16.msra.mxu0 0
    %6152 = vmatprep.subr.bf16.mxu0 0
    %6153 = vmatpush1.bf16.msra.mxu0 0
    %6154 = vmatprep.mubr.bf16.mxu0 0
    %6155 = vmatmul.mubr.bf16.gmra.mrb[0].mxu0 %v5913
    %v6156 = vpop.f32.mrb[0].mxu0
    %v6157 = vadd.f32 0.0, %v6156
    %v6158 = vpop.f32.mrb[0].mxu0
    %v6159 = vpop.f32.mrb[0].mxu0
    %v6160 = vpop.f32.mrb[0].mxu0
    %6161 = vdwg.mxu0
    %v6162 = vmul.f32 %v6114, %v5969
    %v6163 = vmul.f32 %v6157, %v5981
    %v6164 = vld [vmem:[#allocation36] sm:$0x7]
    %s6165 = scalar_lea.vmem [#allocation36], 4
    %v6166 = vld [vmem:[%s6165] sm:$0x7]
    %s6167 = scalar_lea.vmem [#allocation36], 8
    %v6168 = vld [vmem:[%s6167] sm:$0x7]
    %v6169 = vld [vmem:[%s47] sm:$0xf]
    %v6170 = vld [vmem:[%s47 + $0x4] sm:$0xf]
    %v6171 = vld [vmem:[%s47 + $0x8] sm:$0xf]
    %v6172 = vld [vmem:[%s47 + $0xc] sm:$0xf]
    %v6173 = vpack.c.bf16 %v5982, %v5982
    %v6174 = vpack.c.bf16 %v5983, %v5983
    %s6175 = scalar_lea.vmem %s47, 48
    %v6176 = vld [vmem:[%s6175] sm:$0xf]
    %v6177 = vld [vmem:[%s6175 + $0x4] sm:$0xf]
    %v6178 = vld [vmem:[%s6175 + $0x8] sm:$0xf]
    %v6179 = vld [vmem:[%s6175 + $0xc] sm:$0xf]
    %v6182 = vcombine.low %v5864, %v5865
    %v6184 = vunpack.c.l.s4 1966171168
    %v6185 = vunpack.c.0.s8 %v6184
    %v6186 = vlaneseq
    %v6187 = vshrl.u32 %v6186, 7
    %v6188 = vsub.s32 %v6185, %v6187
    %v6189 = vrot.slane %v6182, %v6188
    %v6191 = vunpack.c.l.s4 1966171168
    %v6192 = vunpack.c.0.s8 %v6191
    %v6193 = vlaneseq
    %v6194 = vshrl.u32 %v6193, 7
    %v6195 = vsub.s32 %v6192, %v6194
    %v6196 = vrot.slane %v6189, %v6195
    %v6201 = vunpack.c.l.b16 %v6176
    %v6202 = vunpack.c.l.b16 %v6177
    %v6203 = vunpack.c.l.b16 %v6178
    %v6204 = vunpack.c.l.b16 %v6179
    %v6205 = vpack.c.b16 %v6202, %v6201
    %v6206 = vpack.c.b16 %v6204, %v6203
    %v6210 = vsel %vm678, %v6196, 0
    %6212 = vmatprep.subr.bf16.mxu0 0
    %6213 = vmatpush1.bf16.msra.mxu0 %v6205
    %6214 = vmatprep.subr.bf16.mxu0 0
    %6215 = vmatpush1.bf16.msra.mxu0 %v6206
    %6216 = vmatprep.subr.bf16.mxu0 0
    %6217 = vmatpush1.bf16.msra.mxu0 0
    %6218 = vmatprep.subr.bf16.mxu0 0
    %6219 = vmatpush1.bf16.msra.mxu0 0
    %6220 = vmatprep.subr.bf16.mxu0 0
    %6221 = vmatpush1.bf16.msra.mxu0 0
    %6222 = vmatprep.subr.bf16.mxu0 0
    %6223 = vmatpush1.bf16.msra.mxu0 0
    %6224 = vmatprep.subr.bf16.mxu0 0
    %6225 = vmatpush1.bf16.msra.mxu0 0
    %6226 = vmatprep.subr.bf16.mxu0 0
    %6227 = vmatpush1.bf16.msra.mxu0 0
    %6228 = vmatprep.subr.bf16.mxu0 0
    %6229 = vmatpush1.bf16.msra.mxu0 0
    %6230 = vmatprep.subr.bf16.mxu0 0
    %6231 = vmatpush1.bf16.msra.mxu0 0
    %6232 = vmatprep.subr.bf16.mxu0 0
    %6233 = vmatpush1.bf16.msra.mxu0 0
    %6234 = vmatprep.subr.bf16.mxu0 0
    %6235 = vmatpush1.bf16.msra.mxu0 0
    %6236 = vmatprep.subr.bf16.mxu0 0
    %6237 = vmatpush1.bf16.msra.mxu0 0
    %6238 = vmatprep.subr.bf16.mxu0 0
    %6239 = vmatpush1.bf16.msra.mxu0 0
    %6240 = vmatprep.subr.bf16.mxu0 0
    %6241 = vmatpush1.bf16.msra.mxu0 0
    %6242 = vmatprep.subr.bf16.mxu0 0
    %6243 = vmatpush1.bf16.msra.mxu0 0
    %6244 = vmatprep.mubr.bf16.mxu0 0
    %6245 = vmatmul.mubr.bf16.gmra.mrb[0].mxu0 %v6210
    %v6246 = vpop.f32.mrb[0].mxu0
    %v6247 = vadd.f32 0.0, %v6246
    %v6248 = vpop.f32.mrb[0].mxu0
    %v6249 = vpop.f32.mrb[0].mxu0
    %v6250 = vpop.f32.mrb[0].mxu0
    %6251 = vdwg.mxu0
    %v6254 = vcombine.low %v6173, %v6174
    %v6256 = vunpack.c.l.s4 1966171168
    %v6257 = vunpack.c.0.s8 %v6256
    %v6258 = vlaneseq
    %v6259 = vshrl.u32 %v6258, 7
    %v6260 = vsub.s32 %v6257, %v6259
    %v6261 = vrot.slane %v6254, %v6260
    %v6263 = vunpack.c.l.s4 1966171168
    %v6264 = vunpack.c.0.s8 %v6263
    %v6265 = vlaneseq
    %v6266 = vshrl.u32 %v6265, 7
    %v6267 = vsub.s32 %v6264, %v6266
    %v6268 = vrot.slane %v6261, %v6267
    %v6273 = vunpack.c.l.b16 %v6169
    %v6274 = vunpack.c.l.b16 %v6170
    %v6275 = vunpack.c.l.b16 %v6171
    %v6276 = vunpack.c.l.b16 %v6172
    %v6277 = vpack.c.b16 %v6274, %v6273
    %v6278 = vpack.c.b16 %v6276, %v6275
    %v6282 = vsel %vm678, %v6268, 0
    %6284 = vmatprep.subr.bf16.mxu0 0
    %6285 = vmatpush1.bf16.msra.mxu0 %v6277
    %6286 = vmatprep.subr.bf16.mxu0 0
    %6287 = vmatpush1.bf16.msra.mxu0 %v6278
    %6288 = vmatprep.subr.bf16.mxu0 0
    %6289 = vmatpush1.bf16.msra.mxu0 0
    %6290 = vmatprep.subr.bf16.mxu0 0
    %6291 = vmatpush1.bf16.msra.mxu0 0
    %6292 = vmatprep.subr.bf16.mxu0 0
    %6293 = vmatpush1.bf16.msra.mxu0 0
    %6294 = vmatprep.subr.bf16.mxu0 0
    %6295 = vmatpush1.bf16.msra.mxu0 0
    %6296 = vmatprep.subr.bf16.mxu0 0
    %6297 = vmatpush1.bf16.msra.mxu0 0
    %6298 = vmatprep.subr.bf16.mxu0 0
    %6299 = vmatpush1.bf16.msra.mxu0 0
    %6300 = vmatprep.subr.bf16.mxu0 0
    %6301 = vmatpush1.bf16.msra.mxu0 0
    %6302 = vmatprep.subr.bf16.mxu0 0
    %6303 = vmatpush1.bf16.msra.mxu0 0
    %6304 = vmatprep.subr.bf16.mxu0 0
    %6305 = vmatpush1.bf16.msra.mxu0 0
    %6306 = vmatprep.subr.bf16.mxu0 0
    %6307 = vmatpush1.bf16.msra.mxu0 0
    %6308 = vmatprep.subr.bf16.mxu0 0
    %6309 = vmatpush1.bf16.msra.mxu0 0
    %6310 = vmatprep.subr.bf16.mxu0 0
    %6311 = vmatpush1.bf16.msra.mxu0 0
    %6312 = vmatprep.subr.bf16.mxu0 0
    %6313 = vmatpush1.bf16.msra.mxu0 0
    %6314 = vmatprep.subr.bf16.mxu0 0
    %6315 = vmatpush1.bf16.msra.mxu0 0
    %6316 = vmatprep.mubr.bf16.mxu0 0
    %6317 = vmatmul.mubr.bf16.gmra.mrb[0].mxu0 %v6282
    %v6318 = vpop.f32.mrb[0].mxu0
    %v6319 = vadd.f32 %v6247, %v6318
    %v6320 = vpop.f32.mrb[0].mxu0
    %v6321 = vpop.f32.mrb[0].mxu0
    %v6322 = vpop.f32.mrb[0].mxu0
    %6323 = vdwg.mxu0
    %v6326 = vunpack.c.l.s4 1983009808
    %v6327 = vunpack.c.0.s8 %v6326
    %v6328 = vlaneseq
    %v6329 = vshrl.u32 %v6328, 7
    %v6330 = vsub.s32 %v6327, %v6329
    %v6331 = vrot.slane %v6319, %v6330
    %v6332 = vcombine.high %v6331, %v6331
    %v6335 = vld [vmem:[%s47 + $0x10] sm:$0xf]
    %v6336 = vld [vmem:[%s47 + $0x14] sm:$0xf]
    %v6337 = vld [vmem:[%s47 + $0x18] sm:$0xf]
    %v6338 = vld [vmem:[%s47 + $0x1c] sm:$0xf]
    %v6339 = vpack.c.bf16 %v6072, %v6072
    %v6340 = vpack.c.bf16 %v6073, %v6073
    %v6341 = vld [vmem:[%s6175 + $0x10] sm:$0xf]
    %v6342 = vld [vmem:[%s6175 + $0x14] sm:$0xf]
    %v6343 = vld [vmem:[%s6175 + $0x18] sm:$0xf]
    %v6344 = vld [vmem:[%s6175 + $0x1c] sm:$0xf]
    %v6347 = vcombine.low %v5984, %v5985
    %v6349 = vunpack.c.l.s4 1966171168
    %v6350 = vunpack.c.0.s8 %v6349
    %v6351 = vlaneseq
    %v6352 = vshrl.u32 %v6351, 7
    %v6353 = vsub.s32 %v6350, %v6352
    %v6354 = vrot.slane %v6347, %v6353
    %v6356 = vunpack.c.l.s4 1966171168
    %v6357 = vunpack.c.0.s8 %v6356
    %v6358 = vlaneseq
    %v6359 = vshrl.u32 %v6358, 7
    %v6360 = vsub.s32 %v6357, %v6359
    %v6361 = vrot.slane %v6354, %v6360
    %v6366 = vunpack.c.l.b16 %v6341
    %v6367 = vunpack.c.l.b16 %v6342
    %v6368 = vunpack.c.l.b16 %v6343
    %v6369 = vunpack.c.l.b16 %v6344
    %v6370 = vpack.c.b16 %v6367, %v6366
    %v6371 = vpack.c.b16 %v6369, %v6368
    %v6375 = vsel %vm678, %v6361, 0
    %6377 = vmatprep.subr.bf16.mxu0 0
    %6378 = vmatpush1.bf16.msra.mxu0 %v6370
    %6379 = vmatprep.subr.bf16.mxu0 0
    %6380 = vmatpush1.bf16.msra.mxu0 %v6371
    %6381 = vmatprep.subr.bf16.mxu0 0
    %6382 = vmatpush1.bf16.msra.mxu0 0
    %6383 = vmatprep.subr.bf16.mxu0 0
    %6384 = vmatpush1.bf16.msra.mxu0 0
    %6385 = vmatprep.subr.bf16.mxu0 0
    %6386 = vmatpush1.bf16.msra.mxu0 0
    %6387 = vmatprep.subr.bf16.mxu0 0
    %6388 = vmatpush1.bf16.msra.mxu0 0
    %6389 = vmatprep.subr.bf16.mxu0 0
    %6390 = vmatpush1.bf16.msra.mxu0 0
    %6391 = vmatprep.subr.bf16.mxu0 0
    %6392 = vmatpush1.bf16.msra.mxu0 0
    %6393 = vmatprep.subr.bf16.mxu0 0
    %6394 = vmatpush1.bf16.msra.mxu0 0
    %6395 = vmatprep.subr.bf16.mxu0 0
    %6396 = vmatpush1.bf16.msra.mxu0 0
    %6397 = vmatprep.subr.bf16.mxu0 0
    %6398 = vmatpush1.bf16.msra.mxu0 0
    %6399 = vmatprep.subr.bf16.mxu0 0
    %6400 = vmatpush1.bf16.msra.mxu0 0
    %6401 = vmatprep.subr.bf16.mxu0 0
    %6402 = vmatpush1.bf16.msra.mxu0 0
    %6403 = vmatprep.subr.bf16.mxu0 0
    %6404 = vmatpush1.bf16.msra.mxu0 0
    %6405 = vmatprep.subr.bf16.mxu0 0
    %6406 = vmatpush1.bf16.msra.mxu0 0
    %6407 = vmatprep.subr.bf16.mxu0 0
    %6408 = vmatpush1.bf16.msra.mxu0 0
    %6409 = vmatprep.mubr.bf16.mxu0 0
    %6410 = vmatmul.mubr.bf16.gmra.mrb[0].mxu0 %v6375
    %v6411 = vpop.f32.mrb[0].mxu0
    %v6412 = vadd.f32 0.0, %v6411
    %v6413 = vpop.f32.mrb[0].mxu0
    %v6414 = vpop.f32.mrb[0].mxu0
    %v6415 = vpop.f32.mrb[0].mxu0
    %6416 = vdwg.mxu0
    %v6419 = vcombine.low %v6339, %v6340
    %v6421 = vunpack.c.l.s4 1966171168
    %v6422 = vunpack.c.0.s8 %v6421
    %v6423 = vlaneseq
    %v6424 = vshrl.u32 %v6423, 7
    %v6425 = vsub.s32 %v6422, %v6424
    %v6426 = vrot.slane %v6419, %v6425
    %v6428 = vunpack.c.l.s4 1966171168
    %v6429 = vunpack.c.0.s8 %v6428
    %v6430 = vlaneseq
    %v6431 = vshrl.u32 %v6430, 7
    %v6432 = vsub.s32 %v6429, %v6431
    %v6433 = vrot.slane %v6426, %v6432
    %v6438 = vunpack.c.l.b16 %v6335
    %v6439 = vunpack.c.l.b16 %v6336
    %v6440 = vunpack.c.l.b16 %v6337
    %v6441 = vunpack.c.l.b16 %v6338
    %v6442 = vpack.c.b16 %v6439, %v6438
    %v6443 = vpack.c.b16 %v6441, %v6440
    %v6447 = vsel %vm678, %v6433, 0
    %6449 = vmatprep.subr.bf16.mxu0 0
    %6450 = vmatpush1.bf16.msra.mxu0 %v6442
    %6451 = vmatprep.subr.bf16.mxu0 0
    %6452 = vmatpush1.bf16.msra.mxu0 %v6443
    %6453 = vmatprep.subr.bf16.mxu0 0
    %6454 = vmatpush1.bf16.msra.mxu0 0
    %6455 = vmatprep.subr.bf16.mxu0 0
    %6456 = vmatpush1.bf16.msra.mxu0 0
    %6457 = vmatprep.subr.bf16.mxu0 0
    %6458 = vmatpush1.bf16.msra.mxu0 0
    %6459 = vmatprep.subr.bf16.mxu0 0
    %6460 = vmatpush1.bf16.msra.mxu0 0
    %6461 = vmatprep.subr.bf16.mxu0 0
    %6462 = vmatpush1.bf16.msra.mxu0 0
    %6463 = vmatprep.subr.bf16.mxu0 0
    %6464 = vmatpush1.bf16.msra.mxu0 0
    %6465 = vmatprep.subr.bf16.mxu0 0
    %6466 = vmatpush1.bf16.msra.mxu0 0
    %6467 = vmatprep.subr.bf16.mxu0 0
    %6468 = vmatpush1.bf16.msra.mxu0 0
    %6469 = vmatprep.subr.bf16.mxu0 0
    %6470 = vmatpush1.bf16.msra.mxu0 0
    %6471 = vmatprep.subr.bf16.mxu0 0
    %6472 = vmatpush1.bf16.msra.mxu0 0
    %6473 = vmatprep.subr.bf16.mxu0 0
    %6474 = vmatpush1.bf16.msra.mxu0 0
    %6475 = vmatprep.subr.bf16.mxu0 0
    %6476 = vmatpush1.bf16.msra.mxu0 0
    %6477 = vmatprep.subr.bf16.mxu0 0
    %6478 = vmatpush1.bf16.msra.mxu0 0
    %6479 = vmatprep.subr.bf16.mxu0 0
    %6480 = vmatpush1.bf16.msra.mxu0 0
    %6481 = vmatprep.mubr.bf16.mxu0 0
    %6482 = vmatmul.mubr.bf16.gmra.mrb[0].mxu0 %v6447
    %v6483 = vpop.f32.mrb[0].mxu0
    %v6484 = vadd.f32 %v6412, %v6483
    %v6485 = vpop.f32.mrb[0].mxu0
    %v6486 = vpop.f32.mrb[0].mxu0
    %v6487 = vpop.f32.mrb[0].mxu0
    %6488 = vdwg.mxu0
    %v6491 = vunpack.c.l.s4 1983009808
    %v6492 = vunpack.c.0.s8 %v6491
    %v6493 = vlaneseq
    %v6494 = vshrl.u32 %v6493, 7
    %v6495 = vsub.s32 %v6492, %v6494
    %v6496 = vrot.slane %v6484, %v6495
    %v6497 = vcombine.high %v6496, %v6496
    %v6500 = vadd.f32 %v6331, %v6496
    %v6501 = vadd.f32 %v6332, %v6497
    %v6502 = vld [vmem:[%s47 + $0x20] sm:$0xf]
    %v6503 = vld [vmem:[%s47 + $0x24] sm:$0xf]
    %v6504 = vld [vmem:[%s47 + $0x28] sm:$0xf]
    %v6505 = vld [vmem:[%s47 + $0x2c] sm:$0xf]
    %v6506 = vpack.c.bf16 %v6162, %v6162
    %v6507 = vpack.c.bf16 %v6163, %v6163
    %v6508 = vld [vmem:[%s6175 + $0x20] sm:$0xf]
    %v6509 = vld [vmem:[%s6175 + $0x24] sm:$0xf]
    %v6510 = vld [vmem:[%s6175 + $0x28] sm:$0xf]
    %v6511 = vld [vmem:[%s6175 + $0x2c] sm:$0xf]
    %v6514 = vcombine.low %v6074, %v6075
    %v6516 = vunpack.c.l.s4 1966171168
    %v6517 = vunpack.c.0.s8 %v6516
    %v6518 = vlaneseq
    %v6519 = vshrl.u32 %v6518, 7
    %v6520 = vsub.s32 %v6517, %v6519
    %v6521 = vrot.slane %v6514, %v6520
    %v6523 = vunpack.c.l.s4 1966171168
    %v6524 = vunpack.c.0.s8 %v6523
    %v6525 = vlaneseq
    %v6526 = vshrl.u32 %v6525, 7
    %v6527 = vsub.s32 %v6524, %v6526
    %v6528 = vrot.slane %v6521, %v6527
    %v6533 = vunpack.c.l.b16 %v6508
    %v6534 = vunpack.c.l.b16 %v6509
    %v6535 = vunpack.c.l.b16 %v6510
    %v6536 = vunpack.c.l.b16 %v6511
    %v6537 = vpack.c.b16 %v6534, %v6533
    %v6538 = vpack.c.b16 %v6536, %v6535
    %v6542 = vsel %vm678, %v6528, 0
    %6544 = vmatprep.subr.bf16.mxu0 0
    %6545 = vmatpush1.bf16.msra.mxu0 %v6537
    %6546 = vmatprep.subr.bf16.mxu0 0
    %6547 = vmatpush1.bf16.msra.mxu0 %v6538
    %6548 = vmatprep.subr.bf16.mxu0 0
    %6549 = vmatpush1.bf16.msra.mxu0 0
    %6550 = vmatprep.subr.bf16.mxu0 0
    %6551 = vmatpush1.bf16.msra.mxu0 0
    %6552 = vmatprep.subr.bf16.mxu0 0
    %6553 = vmatpush1.bf16.msra.mxu0 0
    %6554 = vmatprep.subr.bf16.mxu0 0
    %6555 = vmatpush1.bf16.msra.mxu0 0
    %6556 = vmatprep.subr.bf16.mxu0 0
    %6557 = vmatpush1.bf16.msra.mxu0 0
    %6558 = vmatprep.subr.bf16.mxu0 0
    %6559 = vmatpush1.bf16.msra.mxu0 0
    %6560 = vmatprep.subr.bf16.mxu0 0
    %6561 = vmatpush1.bf16.msra.mxu0 0
    %6562 = vmatprep.subr.bf16.mxu0 0
    %6563 = vmatpush1.bf16.msra.mxu0 0
    %6564 = vmatprep.subr.bf16.mxu0 0
    %6565 = vmatpush1.bf16.msra.mxu0 0
    %6566 = vmatprep.subr.bf16.mxu0 0
    %6567 = vmatpush1.bf16.msra.mxu0 0
    %6568 = vmatprep.subr.bf16.mxu0 0
    %6569 = vmatpush1.bf16.msra.mxu0 0
    %6570 = vmatprep.subr.bf16.mxu0 0
    %6571 = vmatpush1.bf16.msra.mxu0 0
    %6572 = vmatprep.subr.bf16.mxu0 0
    %6573 = vmatpush1.bf16.msra.mxu0 0
    %6574 = vmatprep.subr.bf16.mxu0 0
    %6575 = vmatpush1.bf16.msra.mxu0 0
    %6576 = vmatprep.mubr.bf16.mxu0 0
    %6577 = vmatmul.mubr.bf16.gmra.mrb[0].mxu0 %v6542
    %v6578 = vpop.f32.mrb[0].mxu0
    %v6579 = vadd.f32 0.0, %v6578
    %v6580 = vpop.f32.mrb[0].mxu0
    %v6581 = vpop.f32.mrb[0].mxu0
    %v6582 = vpop.f32.mrb[0].mxu0
    %6583 = vdwg.mxu0
    %v6586 = vcombine.low %v6506, %v6507
    %v6588 = vunpack.c.l.s4 1966171168
    %v6589 = vunpack.c.0.s8 %v6588
    %v6590 = vlaneseq
    %v6591 = vshrl.u32 %v6590, 7
    %v6592 = vsub.s32 %v6589, %v6591
    %v6593 = vrot.slane %v6586, %v6592
    %v6595 = vunpack.c.l.s4 1966171168
    %v6596 = vunpack.c.0.s8 %v6595
    %v6597 = vlaneseq
    %v6598 = vshrl.u32 %v6597, 7
    %v6599 = vsub.s32 %v6596, %v6598
    %v6600 = vrot.slane %v6593, %v6599
    %v6605 = vunpack.c.l.b16 %v6502
    %v6606 = vunpack.c.l.b16 %v6503
    %v6607 = vunpack.c.l.b16 %v6504
    %v6608 = vunpack.c.l.b16 %v6505
    %v6609 = vpack.c.b16 %v6606, %v6605
    %v6610 = vpack.c.b16 %v6608, %v6607
    %v6614 = vsel %vm678, %v6600, 0
    %6616 = vmatprep.subr.bf16.mxu0 0
    %6617 = vmatpush1.bf16.msra.mxu0 %v6609
    %6618 = vmatprep.subr.bf16.mxu0 0
    %6619 = vmatpush1.bf16.msra.mxu0 %v6610
    %6620 = vmatprep.subr.bf16.mxu0 0
    %6621 = vmatpush1.bf16.msra.mxu0 0
    %6622 = vmatprep.subr.bf16.mxu0 0
    %6623 = vmatpush1.bf16.msra.mxu0 0
    %6624 = vmatprep.subr.bf16.mxu0 0
    %6625 = vmatpush1.bf16.msra.mxu0 0
    %6626 = vmatprep.subr.bf16.mxu0 0
    %6627 = vmatpush1.bf16.msra.mxu0 0
    %6628 = vmatprep.subr.bf16.mxu0 0
    %6629 = vmatpush1.bf16.msra.mxu0 0
    %6630 = vmatprep.subr.bf16.mxu0 0
    %6631 = vmatpush1.bf16.msra.mxu0 0
    %6632 = vmatprep.subr.bf16.mxu0 0
    %6633 = vmatpush1.bf16.msra.mxu0 0
    %6634 = vmatprep.subr.bf16.mxu0 0
    %6635 = vmatpush1.bf16.msra.mxu0 0
    %6636 = vmatprep.subr.bf16.mxu0 0
    %6637 = vmatpush1.bf16.msra.mxu0 0
    %6638 = vmatprep.subr.bf16.mxu0 0
    %6639 = vmatpush1.bf16.msra.mxu0 0
    %6640 = vmatprep.subr.bf16.mxu0 0
    %6641 = vmatpush1.bf16.msra.mxu0 0
    %6642 = vmatprep.subr.bf16.mxu0 0
    %6643 = vmatpush1.bf16.msra.mxu0 0
    %6644 = vmatprep.subr.bf16.mxu0 0
    %6645 = vmatpush1.bf16.msra.mxu0 0
    %6646 = vmatprep.subr.bf16.mxu0 0
    %6647 = vmatpush1.bf16.msra.mxu0 0
    %6648 = vmatprep.mubr.bf16.mxu0 0
    %6649 = vmatmul.mubr.bf16.gmra.mrb[0].mxu0 %v6614
    %v6650 = vpop.f32.mrb[0].mxu0
    %v6651 = vadd.f32 %v6579, %v6650
    %v6652 = vpop.f32.mrb[0].mxu0
    %v6653 = vpop.f32.mrb[0].mxu0
    %v6654 = vpop.f32.mrb[0].mxu0
    %6655 = vdwg.mxu0
    %v6658 = vunpack.c.l.s4 1983009808
    %v6659 = vunpack.c.0.s8 %v6658
    %v6660 = vlaneseq
    %v6661 = vshrl.u32 %v6660, 7
    %v6662 = vsub.s32 %v6659, %v6661
    %v6663 = vrot.slane %v6651, %v6662
    %v6664 = vcombine.high %v6663, %v6663
    %v6667 = vadd.f32 %v6500, %v6663
    %v6668 = vadd.f32 %v6501, %v6664
    %v6669 = vlaneseq
    %v6670 = vshrl.u32 %v6669, 7
    %v6671 = vsub.s32 0, %v6670
    %v6672 = vrot.slane %v6164, %v6671
    %v6673 = vadd.f32 %v6667, %v6672
    %v6674 = vadd.f32 %v6668, %v6672
    %v6675 = vmax.f32 %v6673, 0.0
    %v6676 = vmax.f32 %v6674, 0.0
    %vm6677 = vcmask 254976
    %v6678 = vsel %vm6677, %v6675, 0.0
    %v6679 = vsel %vm6677, %v6676, 0.0
    %v6680 = vadd.f32 %v6678, %v6679
    %v6681 = vrot.slane %v6680, 4
    %v6682 = vadd.f32 %v6680, %v6681
    %v6683 = vrot.slane %v6682, 2
    %v6684 = vadd.f32 %v6682, %v6683
    %v6685 = vrot.slane %v6684, 1
    %v6686 = vadd.f32 %v6684, %v6685
    %v6687 = vrcp.pop 4.0
    %v6688 = vmul.f32 %v6686, %v6687
    %v6689 = vmul.f32 %v6675, %v6675
    %v6690 = vmul.f32 %v6676, %v6676
    %v6691 = vsel %vm6677, %v6689, 0.0
    %v6692 = vsel %vm6677, %v6690, 0.0
    %v6693 = vadd.f32 %v6691, %v6692
    %v6694 = vrot.slane %v6693, 4
    %v6695 = vadd.f32 %v6693, %v6694
    %v6696 = vrot.slane %v6695, 2
    %v6697 = vadd.f32 %v6695, %v6696
    %v6698 = vrot.slane %v6697, 1
    %v6699 = vadd.f32 %v6697, %v6698
    %v6700 = vmul.f32 %v6699, %v6687
    %v6701 = vmul.f32 %v6688, %v6688
    %v6702 = vsub.f32 %v6700, %v6701
    %v6703 = vmax.f32 %v6702, 0.0
    %v6704 = vadd.f32 %v6703, 1e-05
    %v6705 = vrsqrt.pop %v6704
    %v6706 = vmul.f32 %v6705, %v6164
    %v6707 = vlaneseq
    %v6708 = vshrl.u32 %v6707, 7
    %v6709 = vsub.s32 1, %v6708
    %v6710 = vrot.slane %v6706, %v6709
    %v6711 = vmul.f32 %v6675, %v6710
    %v6712 = vmul.f32 %v6676, %v6710
    %v6713 = vmul.f32 %v6688, %v6706
    %v6715 = vrot.slane %v6713, 7
    %v6717 = vsub.f32 %v6164, %v6715
    %v6718 = vlaneseq
    %v6719 = vshrl.u32 %v6718, 7
    %v6720 = vsub.s32 2, %v6719
    %v6721 = vrot.slane %v6717, %v6720
    %v6722 = vadd.f32 %v6711, %v6721
    %v6723 = vadd.f32 %v6712, %v6721
    %v6724 = vpack.c.bf16 %v6722, %v6722
    %v6725 = vpack.c.bf16 %v6723, %v6723
    %v6727 = vsel %vm4284, %v6724, 0
    %6729 = vmatprep.subr.bf16.mxu0 0
    %6730 = vmatpush1.bf16.msra.mxu0 %v6727
    %6731 = vmatprep.subr.bf16.mxu0 0
    %6732 = vmatpush1.bf16.msra.mxu0 0
    %6733 = vmatprep.subr.bf16.mxu0 0
    %6734 = vmatpush1.bf16.msra.mxu0 0
    %6735 = vmatprep.subr.bf16.mxu0 0
    %6736 = vmatpush1.bf16.msra.mxu0 0
    %6737 = vmatprep.subr.bf16.mxu0 0
    %6738 = vmatpush1.bf16.msra.mxu0 0
    %6739 = vmatprep.subr.bf16.mxu0 0
    %6740 = vmatpush1.bf16.msra.mxu0 0
    %6741 = vmatprep.subr.bf16.mxu0 0
    %6742 = vmatpush1.bf16.msra.mxu0 0
    %6743 = vmatprep.subr.bf16.mxu0 0
    %6744 = vmatpush1.bf16.msra.mxu0 0
    %6745 = vmatprep.subr.bf16.mxu0 0
    %6746 = vmatpush1.bf16.msra.mxu0 0
    %6747 = vmatprep.subr.bf16.mxu0 0
    %6748 = vmatpush1.bf16.msra.mxu0 0
    %6749 = vmatprep.subr.bf16.mxu0 0
    %6750 = vmatpush1.bf16.msra.mxu0 0
    %6751 = vmatprep.subr.bf16.mxu0 0
    %6752 = vmatpush1.bf16.msra.mxu0 0
    %6753 = vmatprep.subr.bf16.mxu0 0
    %6754 = vmatpush1.bf16.msra.mxu0 0
    %6755 = vmatprep.subr.bf16.mxu0 0
    %6756 = vmatpush1.bf16.msra.mxu0 0
    %6757 = vmatprep.subr.bf16.mxu0 0
    %6758 = vmatpush1.bf16.msra.mxu0 0
    %6759 = vmatprep.subr.bf16.mxu0 0
    %6760 = vmatpush1.bf16.msra.mxu0 0
    %6761 = vmatprep.mubr.bf16.mxu0 0
    %6762 = vmatmul.mubr.bf16.gmra.mrb[0].mxu0 %v5867
    %v6763 = vpop.f32.mrb[0].mxu0
    %v6764 = vadd.f32 0.0, %v6763
    %v6765 = vpop.f32.mrb[0].mxu0
    %v6766 = vpop.f32.mrb[0].mxu0
    %v6767 = vpop.f32.mrb[0].mxu0
    %6768 = vdwg.mxu0
    %v6770 = vsel %vm4284, %v6725, 0
    %6772 = vmatprep.subr.bf16.mxu0 0
    %6773 = vmatpush1.bf16.msra.mxu0 %v6770
    %6774 = vmatprep.subr.bf16.mxu0 0
    %6775 = vmatpush1.bf16.msra.mxu0 0
    %6776 = vmatprep.subr.bf16.mxu0 0
    %6777 = vmatpush1.bf16.msra.mxu0 0
    %6778 = vmatprep.subr.bf16.mxu0 0
    %6779 = vmatpush1.bf16.msra.mxu0 0
    %6780 = vmatprep.subr.bf16.mxu0 0
    %6781 = vmatpush1.bf16.msra.mxu0 0
    %6782 = vmatprep.subr.bf16.mxu0 0
    %6783 = vmatpush1.bf16.msra.mxu0 0
    %6784 = vmatprep.subr.bf16.mxu0 0
    %6785 = vmatpush1.bf16.msra.mxu0 0
    %6786 = vmatprep.subr.bf16.mxu0 0
    %6787 = vmatpush1.bf16.msra.mxu0 0
    %6788 = vmatprep.subr.bf16.mxu0 0
    %6789 = vmatpush1.bf16.msra.mxu0 0
    %6790 = vmatprep.subr.bf16.mxu0 0
    %6791 = vmatpush1.bf16.msra.mxu0 0
    %6792 = vmatprep.subr.bf16.mxu0 0
    %6793 = vmatpush1.bf16.msra.mxu0 0
    %6794 = vmatprep.subr.bf16.mxu0 0
    %6795 = vmatpush1.bf16.msra.mxu0 0
    %6796 = vmatprep.subr.bf16.mxu0 0
    %6797 = vmatpush1.bf16.msra.mxu0 0
    %6798 = vmatprep.subr.bf16.mxu0 0
    %6799 = vmatpush1.bf16.msra.mxu0 0
    %6800 = vmatprep.subr.bf16.mxu0 0
    %6801 = vmatpush1.bf16.msra.mxu0 0
    %6802 = vmatprep.subr.bf16.mxu0 0
    %6803 = vmatpush1.bf16.msra.mxu0 0
    %6804 = vmatprep.mubr.bf16.mxu0 0
    %6805 = vmatmul.mubr.bf16.gmra.mrb[0].mxu0 %v5913
    %v6806 = vpop.f32.mrb[0].mxu0
    %v6807 = vadd.f32 0.0, %v6806
    %v6808 = vpop.f32.mrb[0].mxu0
    %v6809 = vpop.f32.mrb[0].mxu0
    %v6810 = vpop.f32.mrb[0].mxu0
    %6811 = vdwg.mxu0
    %v6812 = vmul.f32 %v6764, %v5969
    %v6813 = vmul.f32 %v6807, %v5981
    %v6814 = vld [vmem:[#allocation33] sm:$0xf]
    %v6815 = vld [vmem:[#allocation33 + $0x4] sm:$0xf]
    %v6816 = vld [vmem:[#allocation33 + $0x8] sm:$0xf]
    %v6817 = vld [vmem:[#allocation33 + $0xc] sm:$0xf]
    %v6818 = vpack.c.bf16 %v6812, %v6812
    %v6819 = vpack.c.bf16 %v6813, %v6813
    %s6820 = scalar_lea.vmem [#allocation33], 16
    %v6821 = vld [vmem:[%s6820] sm:$0xf]
    %v6822 = vld [vmem:[%s6820 + $0x4] sm:$0xf]
    %v6823 = vld [vmem:[%s6820 + $0x8] sm:$0xf]
    %v6824 = vld [vmem:[%s6820 + $0xc] sm:$0xf]
    %v6827 = vcombine.low %v6724, %v6725
    %v6829 = vunpack.c.l.s4 1966171168
    %v6830 = vunpack.c.0.s8 %v6829
    %v6831 = vlaneseq
    %v6832 = vshrl.u32 %v6831, 7
    %v6833 = vsub.s32 %v6830, %v6832
    %v6834 = vrot.slane %v6827, %v6833
    %v6836 = vunpack.c.l.s4 1966171168
    %v6837 = vunpack.c.0.s8 %v6836
    %v6838 = vlaneseq
    %v6839 = vshrl.u32 %v6838, 7
    %v6840 = vsub.s32 %v6837, %v6839
    %v6841 = vrot.slane %v6834, %v6840
    %v6846 = vunpack.c.l.b16 %v6821
    %v6847 = vunpack.c.l.b16 %v6822
    %v6848 = vunpack.c.l.b16 %v6823
    %v6849 = vunpack.c.l.b16 %v6824
    %v6850 = vpack.c.b16 %v6847, %v6846
    %v6851 = vpack.c.b16 %v6849, %v6848
    %v6855 = vsel %vm678, %v6841, 0
    %6857 = vmatprep.subr.bf16.mxu0 0
    %6858 = vmatpush1.bf16.msra.mxu0 %v6850
    %6859 = vmatprep.subr.bf16.mxu0 0
    %6860 = vmatpush1.bf16.msra.mxu0 %v6851
    %6861 = vmatprep.subr.bf16.mxu0 0
    %6862 = vmatpush1.bf16.msra.mxu0 0
    %6863 = vmatprep.subr.bf16.mxu0 0
    %6864 = vmatpush1.bf16.msra.mxu0 0
    %6865 = vmatprep.subr.bf16.mxu0 0
    %6866 = vmatpush1.bf16.msra.mxu0 0
    %6867 = vmatprep.subr.bf16.mxu0 0
    %6868 = vmatpush1.bf16.msra.mxu0 0
    %6869 = vmatprep.subr.bf16.mxu0 0
    %6870 = vmatpush1.bf16.msra.mxu0 0
    %6871 = vmatprep.subr.bf16.mxu0 0
    %6872 = vmatpush1.bf16.msra.mxu0 0
    %6873 = vmatprep.subr.bf16.mxu0 0
    %6874 = vmatpush1.bf16.msra.mxu0 0
    %6875 = vmatprep.subr.bf16.mxu0 0
    %6876 = vmatpush1.bf16.msra.mxu0 0
    %6877 = vmatprep.subr.bf16.mxu0 0
    %6878 = vmatpush1.bf16.msra.mxu0 0
    %6879 = vmatprep.subr.bf16.mxu0 0
    %6880 = vmatpush1.bf16.msra.mxu0 0
    %6881 = vmatprep.subr.bf16.mxu0 0
    %6882 = vmatpush1.bf16.msra.mxu0 0
    %6883 = vmatprep.subr.bf16.mxu0 0
    %6884 = vmatpush1.bf16.msra.mxu0 0
    %6885 = vmatprep.subr.bf16.mxu0 0
    %6886 = vmatpush1.bf16.msra.mxu0 0
    %6887 = vmatprep.subr.bf16.mxu0 0
    %6888 = vmatpush1.bf16.msra.mxu0 0
    %6889 = vmatprep.mubr.bf16.mxu0 0
    %6890 = vmatmul.mubr.bf16.gmra.mrb[0].mxu0 %v6855
    %v6891 = vpop.f32.mrb[0].mxu0
    %v6892 = vadd.f32 0.0, %v6891
    %v6893 = vpop.f32.mrb[0].mxu0
    %v6894 = vpop.f32.mrb[0].mxu0
    %v6895 = vpop.f32.mrb[0].mxu0
    %6896 = vdwg.mxu0
    %v6899 = vcombine.low %v6818, %v6819
    %v6901 = vunpack.c.l.s4 1966171168
    %v6902 = vunpack.c.0.s8 %v6901
    %v6903 = vlaneseq
    %v6904 = vshrl.u32 %v6903, 7
    %v6905 = vsub.s32 %v6902, %v6904
    %v6906 = vrot.slane %v6899, %v6905
    %v6908 = vunpack.c.l.s4 1966171168
    %v6909 = vunpack.c.0.s8 %v6908
    %v6910 = vlaneseq
    %v6911 = vshrl.u32 %v6910, 7
    %v6912 = vsub.s32 %v6909, %v6911
    %v6913 = vrot.slane %v6906, %v6912
    %v6918 = vunpack.c.l.b16 %v6814
    %v6919 = vunpack.c.l.b16 %v6815
    %v6920 = vunpack.c.l.b16 %v6816
    %v6921 = vunpack.c.l.b16 %v6817
    %v6922 = vpack.c.b16 %v6919, %v6918
    %v6923 = vpack.c.b16 %v6921, %v6920
    %v6927 = vsel %vm678, %v6913, 0
    %6929 = vmatprep.subr.bf16.mxu0 0
    %6930 = vmatpush1.bf16.msra.mxu0 %v6922
    %6931 = vmatprep.subr.bf16.mxu0 0
    %6932 = vmatpush1.bf16.msra.mxu0 %v6923
    %6933 = vmatprep.subr.bf16.mxu0 0
    %6934 = vmatpush1.bf16.msra.mxu0 0
    %6935 = vmatprep.subr.bf16.mxu0 0
    %6936 = vmatpush1.bf16.msra.mxu0 0
    %6937 = vmatprep.subr.bf16.mxu0 0
    %6938 = vmatpush1.bf16.msra.mxu0 0
    %6939 = vmatprep.subr.bf16.mxu0 0
    %6940 = vmatpush1.bf16.msra.mxu0 0
    %6941 = vmatprep.subr.bf16.mxu0 0
    %6942 = vmatpush1.bf16.msra.mxu0 0
    %6943 = vmatprep.subr.bf16.mxu0 0
    %6944 = vmatpush1.bf16.msra.mxu0 0
    %6945 = vmatprep.subr.bf16.mxu0 0
    %6946 = vmatpush1.bf16.msra.mxu0 0
    %6947 = vmatprep.subr.bf16.mxu0 0
    %6948 = vmatpush1.bf16.msra.mxu0 0
    %6949 = vmatprep.subr.bf16.mxu0 0
    %6950 = vmatpush1.bf16.msra.mxu0 0
    %6951 = vmatprep.subr.bf16.mxu0 0
    %6952 = vmatpush1.bf16.msra.mxu0 0
    %6953 = vmatprep.subr.bf16.mxu0 0
    %6954 = vmatpush1.bf16.msra.mxu0 0
    %6955 = vmatprep.subr.bf16.mxu0 0
    %6956 = vmatpush1.bf16.msra.mxu0 0
    %6957 = vmatprep.subr.bf16.mxu0 0
    %6958 = vmatpush1.bf16.msra.mxu0 0
    %6959 = vmatprep.subr.bf16.mxu0 0
    %6960 = vmatpush1.bf16.msra.mxu0 0
    %6961 = vmatprep.mubr.bf16.mxu0 0
    %6962 = vmatmul.mubr.bf16.gmra.mrb[0].mxu0 %v6927
    %v6963 = vpop.f32.mrb[0].mxu0
    %v6964 = vadd.f32 %v6892, %v6963
    %v6965 = vpop.f32.mrb[0].mxu0
    %v6966 = vpop.f32.mrb[0].mxu0
    %v6967 = vpop.f32.mrb[0].mxu0
    %6968 = vdwg.mxu0
    %v6971 = vunpack.c.l.s4 1983009808
    %v6972 = vunpack.c.0.s8 %v6971
    %v6973 = vlaneseq
    %v6974 = vshrl.u32 %v6973, 7
    %v6975 = vsub.s32 %v6972, %v6974
    %v6976 = vrot.slane %v6964, %v6975
    %v6977 = vcombine.high %v6976, %v6976
    %v6980 = vlaneseq
    %v6981 = vshrl.u32 %v6980, 7
    %v6982 = vsub.s32 0, %v6981
    %v6983 = vrot.slane %v6166, %v6982
    %v6984 = vadd.f32 %v6976, %v6983
    %v6985 = vadd.f32 %v6977, %v6983
    %v6986 = vmax.f32 %v6984, 0.0
    %v6987 = vmax.f32 %v6985, 0.0
    %v6988 = vsel %vm6677, %v6986, 0.0
    %v6989 = vsel %vm6677, %v6987, 0.0
    %v6990 = vadd.f32 %v6988, %v6989
    %v6991 = vrot.slane %v6990, 4
    %v6992 = vadd.f32 %v6990, %v6991
    %v6993 = vrot.slane %v6992, 2
    %v6994 = vadd.f32 %v6992, %v6993
    %v6995 = vrot.slane %v6994, 1
    %v6996 = vadd.f32 %v6994, %v6995
    %v6997 = vmul.f32 %v6996, %v6687
    %v6998 = vmul.f32 %v6986, %v6986
    %v6999 = vmul.f32 %v6987, %v6987
    %v7000 = vsel %vm6677, %v6998, 0.0
    %v7001 = vsel %vm6677, %v6999, 0.0
    %v7002 = vadd.f32 %v7000, %v7001
    %v7003 = vrot.slane %v7002, 4
    %v7004 = vadd.f32 %v7002, %v7003
    %v7005 = vrot.slane %v7004, 2
    %v7006 = vadd.f32 %v7004, %v7005
    %v7007 = vrot.slane %v7006, 1
    %v7008 = vadd.f32 %v7006, %v7007
    %v7009 = vmul.f32 %v7008, %v6687
    %v7010 = vmul.f32 %v6997, %v6997
    %v7011 = vsub.f32 %v7009, %v7010
    %v7012 = vmax.f32 %v7011, 0.0
    %v7013 = vadd.f32 %v7012, 1e-05
    %v7014 = vrsqrt.pop %v7013
    %v7015 = vmul.f32 %v7014, %v6166
    %v7016 = vlaneseq
    %v7017 = vshrl.u32 %v7016, 7
    %v7018 = vsub.s32 1, %v7017
    %v7019 = vrot.slane %v7015, %v7018
    %v7020 = vmul.f32 %v6986, %v7019
    %v7021 = vmul.f32 %v6987, %v7019
    %v7022 = vmul.f32 %v6997, %v7015
    %v7024 = vrot.slane %v7022, 7
    %v7026 = vsub.f32 %v6166, %v7024
    %v7027 = vlaneseq
    %v7028 = vshrl.u32 %v7027, 7
    %v7029 = vsub.s32 2, %v7028
    %v7030 = vrot.slane %v7026, %v7029
    %v7031 = vadd.f32 %v7020, %v7030
    %v7032 = vadd.f32 %v7021, %v7030
    %v7033 = vpack.c.bf16 %v7031, %v7031
    %v7034 = vpack.c.bf16 %v7032, %v7032
    %v7036 = vsel %vm4284, %v7033, 0
    %7038 = vmatprep.subr.bf16.mxu0 0
    %7039 = vmatpush1.bf16.msra.mxu0 %v7036
    %7040 = vmatprep.subr.bf16.mxu0 0
    %7041 = vmatpush1.bf16.msra.mxu0 0
    %7042 = vmatprep.subr.bf16.mxu0 0
    %7043 = vmatpush1.bf16.msra.mxu0 0
    %7044 = vmatprep.subr.bf16.mxu0 0
    %7045 = vmatpush1.bf16.msra.mxu0 0
    %7046 = vmatprep.subr.bf16.mxu0 0
    %7047 = vmatpush1.bf16.msra.mxu0 0
    %7048 = vmatprep.subr.bf16.mxu0 0
    %7049 = vmatpush1.bf16.msra.mxu0 0
    %7050 = vmatprep.subr.bf16.mxu0 0
    %7051 = vmatpush1.bf16.msra.mxu0 0
    %7052 = vmatprep.subr.bf16.mxu0 0
    %7053 = vmatpush1.bf16.msra.mxu0 0
    %7054 = vmatprep.subr.bf16.mxu0 0
    %7055 = vmatpush1.bf16.msra.mxu0 0
    %7056 = vmatprep.subr.bf16.mxu0 0
    %7057 = vmatpush1.bf16.msra.mxu0 0
    %7058 = vmatprep.subr.bf16.mxu0 0
    %7059 = vmatpush1.bf16.msra.mxu0 0
    %7060 = vmatprep.subr.bf16.mxu0 0
    %7061 = vmatpush1.bf16.msra.mxu0 0
    %7062 = vmatprep.subr.bf16.mxu0 0
    %7063 = vmatpush1.bf16.msra.mxu0 0
    %7064 = vmatprep.subr.bf16.mxu0 0
    %7065 = vmatpush1.bf16.msra.mxu0 0
    %7066 = vmatprep.subr.bf16.mxu0 0
    %7067 = vmatpush1.bf16.msra.mxu0 0
    %7068 = vmatprep.subr.bf16.mxu0 0
    %7069 = vmatpush1.bf16.msra.mxu0 0
    %7070 = vmatprep.mubr.bf16.mxu0 0
    %7071 = vmatmul.mubr.bf16.gmra.mrb[0].mxu0 %v5867
    %v7072 = vpop.f32.mrb[0].mxu0
    %v7073 = vadd.f32 0.0, %v7072
    %v7074 = vpop.f32.mrb[0].mxu0
    %v7075 = vpop.f32.mrb[0].mxu0
    %v7076 = vpop.f32.mrb[0].mxu0
    %7077 = vdwg.mxu0
    %v7079 = vsel %vm4284, %v7034, 0
    %7081 = vmatprep.subr.bf16.mxu0 0
    %7082 = vmatpush1.bf16.msra.mxu0 %v7079
    %7083 = vmatprep.subr.bf16.mxu0 0
    %7084 = vmatpush1.bf16.msra.mxu0 0
    %7085 = vmatprep.subr.bf16.mxu0 0
    %7086 = vmatpush1.bf16.msra.mxu0 0
    %7087 = vmatprep.subr.bf16.mxu0 0
    %7088 = vmatpush1.bf16.msra.mxu0 0
    %7089 = vmatprep.subr.bf16.mxu0 0
    %7090 = vmatpush1.bf16.msra.mxu0 0
    %7091 = vmatprep.subr.bf16.mxu0 0
    %7092 = vmatpush1.bf16.msra.mxu0 0
    %7093 = vmatprep.subr.bf16.mxu0 0
    %7094 = vmatpush1.bf16.msra.mxu0 0
    %7095 = vmatprep.subr.bf16.mxu0 0
    %7096 = vmatpush1.bf16.msra.mxu0 0
    %7097 = vmatprep.subr.bf16.mxu0 0
    %7098 = vmatpush1.bf16.msra.mxu0 0
    %7099 = vmatprep.subr.bf16.mxu0 0
    %7100 = vmatpush1.bf16.msra.mxu0 0
    %7101 = vmatprep.subr.bf16.mxu0 0
    %7102 = vmatpush1.bf16.msra.mxu0 0
    %7103 = vmatprep.subr.bf16.mxu0 0
    %7104 = vmatpush1.bf16.msra.mxu0 0
    %7105 = vmatprep.subr.bf16.mxu0 0
    %7106 = vmatpush1.bf16.msra.mxu0 0
    %7107 = vmatprep.subr.bf16.mxu0 0
    %7108 = vmatpush1.bf16.msra.mxu0 0
    %7109 = vmatprep.subr.bf16.mxu0 0
    %7110 = vmatpush1.bf16.msra.mxu0 0
    %7111 = vmatprep.subr.bf16.mxu0 0
    %7112 = vmatpush1.bf16.msra.mxu0 0
    %7113 = vmatprep.mubr.bf16.mxu0 0
    %7114 = vmatmul.mubr.bf16.gmra.mrb[0].mxu0 %v5913
    %v7115 = vpop.f32.mrb[0].mxu0
    %v7116 = vadd.f32 0.0, %v7115
    %v7117 = vpop.f32.mrb[0].mxu0
    %v7118 = vpop.f32.mrb[0].mxu0
    %v7119 = vpop.f32.mrb[0].mxu0
    %7120 = vdwg.mxu0
    %v7121 = vmul.f32 %v7073, %v5969
    %v7122 = vmul.f32 %v7116, %v5981
    %v7123 = vld [vmem:[#allocation34] sm:$0xf]
    %v7124 = vld [vmem:[#allocation34 + $0x4] sm:$0xf]
    %v7125 = vld [vmem:[#allocation34 + $0x8] sm:$0xf]
    %v7126 = vld [vmem:[#allocation34 + $0xc] sm:$0xf]
    %v7127 = vpack.c.bf16 %v7121, %v7121
    %v7128 = vpack.c.bf16 %v7122, %v7122
    %s7129 = scalar_lea.vmem [#allocation34], 16
    %v7130 = vld [vmem:[%s7129] sm:$0xf]
    %v7131 = vld [vmem:[%s7129 + $0x4] sm:$0xf]
    %v7132 = vld [vmem:[%s7129 + $0x8] sm:$0xf]
    %v7133 = vld [vmem:[%s7129 + $0xc] sm:$0xf]
    %v7136 = vcombine.low %v7033, %v7034
    %v7138 = vunpack.c.l.s4 1966171168
    %v7139 = vunpack.c.0.s8 %v7138
    %v7140 = vlaneseq
    %v7141 = vshrl.u32 %v7140, 7
    %v7142 = vsub.s32 %v7139, %v7141
    %v7143 = vrot.slane %v7136, %v7142
    %v7145 = vunpack.c.l.s4 1966171168
    %v7146 = vunpack.c.0.s8 %v7145
    %v7147 = vlaneseq
    %v7148 = vshrl.u32 %v7147, 7
    %v7149 = vsub.s32 %v7146, %v7148
    %v7150 = vrot.slane %v7143, %v7149
    %v7155 = vunpack.c.l.b16 %v7130
    %v7156 = vunpack.c.l.b16 %v7131
    %v7157 = vunpack.c.l.b16 %v7132
    %v7158 = vunpack.c.l.b16 %v7133
    %v7159 = vpack.c.b16 %v7156, %v7155
    %v7160 = vpack.c.b16 %v7158, %v7157
    %v7164 = vsel %vm678, %v7150, 0
    %7166 = vmatprep.subr.bf16.mxu0 0
    %7167 = vmatpush1.bf16.msra.mxu0 %v7159
    %7168 = vmatprep.subr.bf16.mxu0 0
    %7169 = vmatpush1.bf16.msra.mxu0 %v7160
    %7170 = vmatprep.subr.bf16.mxu0 0
    %7171 = vmatpush1.bf16.msra.mxu0 0
    %7172 = vmatprep.subr.bf16.mxu0 0
    %7173 = vmatpush1.bf16.msra.mxu0 0
    %7174 = vmatprep.subr.bf16.mxu0 0
    %7175 = vmatpush1.bf16.msra.mxu0 0
    %7176 = vmatprep.subr.bf16.mxu0 0
    %7177 = vmatpush1.bf16.msra.mxu0 0
    %7178 = vmatprep.subr.bf16.mxu0 0
    %7179 = vmatpush1.bf16.msra.mxu0 0
    %7180 = vmatprep.subr.bf16.mxu0 0
    %7181 = vmatpush1.bf16.msra.mxu0 0
    %7182 = vmatprep.subr.bf16.mxu0 0
    %7183 = vmatpush1.bf16.msra.mxu0 0
    %7184 = vmatprep.subr.bf16.mxu0 0
    %7185 = vmatpush1.bf16.msra.mxu0 0
    %7186 = vmatprep.subr.bf16.mxu0 0
    %7187 = vmatpush1.bf16.msra.mxu0 0
    %7188 = vmatprep.subr.bf16.mxu0 0
    %7189 = vmatpush1.bf16.msra.mxu0 0
    %7190 = vmatprep.subr.bf16.mxu0 0
    %7191 = vmatpush1.bf16.msra.mxu0 0
    %7192 = vmatprep.subr.bf16.mxu0 0
    %7193 = vmatpush1.bf16.msra.mxu0 0
    %7194 = vmatprep.subr.bf16.mxu0 0
    %7195 = vmatpush1.bf16.msra.mxu0 0
    %7196 = vmatprep.subr.bf16.mxu0 0
    %7197 = vmatpush1.bf16.msra.mxu0 0
    %7198 = vmatprep.mubr.bf16.mxu0 0
    %7199 = vmatmul.mubr.bf16.gmra.mrb[0].mxu0 %v7164
    %v7200 = vpop.f32.mrb[0].mxu0
    %v7201 = vadd.f32 0.0, %v7200
    %v7202 = vpop.f32.mrb[0].mxu0
    %v7203 = vpop.f32.mrb[0].mxu0
    %v7204 = vpop.f32.mrb[0].mxu0
    %7205 = vdwg.mxu0
    %v7208 = vcombine.low %v7127, %v7128
    %v7210 = vunpack.c.l.s4 1966171168
    %v7211 = vunpack.c.0.s8 %v7210
    %v7212 = vlaneseq
    %v7213 = vshrl.u32 %v7212, 7
    %v7214 = vsub.s32 %v7211, %v7213
    %v7215 = vrot.slane %v7208, %v7214
    %v7217 = vunpack.c.l.s4 1966171168
    %v7218 = vunpack.c.0.s8 %v7217
    %v7219 = vlaneseq
    %v7220 = vshrl.u32 %v7219, 7
    %v7221 = vsub.s32 %v7218, %v7220
    %v7222 = vrot.slane %v7215, %v7221
    %v7227 = vunpack.c.l.b16 %v7123
    %v7228 = vunpack.c.l.b16 %v7124
    %v7229 = vunpack.c.l.b16 %v7125
    %v7230 = vunpack.c.l.b16 %v7126
    %v7231 = vpack.c.b16 %v7228, %v7227
    %v7232 = vpack.c.b16 %v7230, %v7229
    %v7236 = vsel %vm678, %v7222, 0
    %7238 = vmatprep.subr.bf16.mxu0 0
    %7239 = vmatpush1.bf16.msra.mxu0 %v7231
    %7240 = vmatprep.subr.bf16.mxu0 0
    %7241 = vmatpush1.bf16.msra.mxu0 %v7232
    %7242 = vmatprep.subr.bf16.mxu0 0
    %7243 = vmatpush1.bf16.msra.mxu0 0
    %7244 = vmatprep.subr.bf16.mxu0 0
    %7245 = vmatpush1.bf16.msra.mxu0 0
    %7246 = vmatprep.subr.bf16.mxu0 0
    %7247 = vmatpush1.bf16.msra.mxu0 0
    %7248 = vmatprep.subr.bf16.mxu0 0
    %7249 = vmatpush1.bf16.msra.mxu0 0
    %7250 = vmatprep.subr.bf16.mxu0 0
    %7251 = vmatpush1.bf16.msra.mxu0 0
    %7252 = vmatprep.subr.bf16.mxu0 0
    %7253 = vmatpush1.bf16.msra.mxu0 0
    %7254 = vmatprep.subr.bf16.mxu0 0
    %7255 = vmatpush1.bf16.msra.mxu0 0
    %7256 = vmatprep.subr.bf16.mxu0 0
    %7257 = vmatpush1.bf16.msra.mxu0 0
    %7258 = vmatprep.subr.bf16.mxu0 0
    %7259 = vmatpush1.bf16.msra.mxu0 0
    %7260 = vmatprep.subr.bf16.mxu0 0
    %7261 = vmatpush1.bf16.msra.mxu0 0
    %7262 = vmatprep.subr.bf16.mxu0 0
    %7263 = vmatpush1.bf16.msra.mxu0 0
    %7264 = vmatprep.subr.bf16.mxu0 0
    %7265 = vmatpush1.bf16.msra.mxu0 0
    %7266 = vmatprep.subr.bf16.mxu0 0
    %7267 = vmatpush1.bf16.msra.mxu0 0
    %7268 = vmatprep.subr.bf16.mxu0 0
    %7269 = vmatpush1.bf16.msra.mxu0 0
    %7270 = vmatprep.mubr.bf16.mxu0 0
    %7271 = vmatmul.mubr.bf16.gmra.mrb[0].mxu0 %v7236
    %v7272 = vpop.f32.mrb[0].mxu0
    %v7273 = vadd.f32 %v7201, %v7272
    %v7274 = vpop.f32.mrb[0].mxu0
    %v7275 = vpop.f32.mrb[0].mxu0
    %v7276 = vpop.f32.mrb[0].mxu0
    %7277 = vdwg.mxu0
    %v7280 = vunpack.c.l.s4 1983009808
    %v7281 = vunpack.c.0.s8 %v7280
    %v7282 = vlaneseq
    %v7283 = vshrl.u32 %v7282, 7
    %v7284 = vsub.s32 %v7281, %v7283
    %v7285 = vrot.slane %v7273, %v7284
    %v7286 = vcombine.high %v7285, %v7285
    %v7289 = vlaneseq
    %v7290 = vshrl.u32 %v7289, 7
    %v7291 = vsub.s32 0, %v7290
    %v7292 = vrot.slane %v6168, %v7291
    %v7293 = vadd.f32 %v7285, %v7292
    %v7294 = vadd.f32 %v7286, %v7292
    %v7295 = vmax.f32 %v7293, 0.0
    %v7296 = vmax.f32 %v7294, 0.0
    %v7297 = vsel %vm6677, %v7295, 0.0
    %v7298 = vsel %vm6677, %v7296, 0.0
    %v7299 = vadd.f32 %v7297, %v7298
    %v7300 = vrot.slane %v7299, 4
    %v7301 = vadd.f32 %v7299, %v7300
    %v7302 = vrot.slane %v7301, 2
    %v7303 = vadd.f32 %v7301, %v7302
    %v7304 = vrot.slane %v7303, 1
    %v7305 = vadd.f32 %v7303, %v7304
    %v7306 = vmul.f32 %v7305, %v6687
    %v7307 = vmul.f32 %v7295, %v7295
    %v7308 = vmul.f32 %v7296, %v7296
    %v7309 = vsel %vm6677, %v7307, 0.0
    %v7310 = vsel %vm6677, %v7308, 0.0
    %v7311 = vadd.f32 %v7309, %v7310
    %v7312 = vrot.slane %v7311, 4
    %v7313 = vadd.f32 %v7311, %v7312
    %v7314 = vrot.slane %v7313, 2
    %v7315 = vadd.f32 %v7313, %v7314
    %v7316 = vrot.slane %v7315, 1
    %v7317 = vadd.f32 %v7315, %v7316
    %v7318 = vmul.f32 %v7317, %v6687
    %v7319 = vmul.f32 %v7306, %v7306
    %v7320 = vsub.f32 %v7318, %v7319
    %v7321 = vmax.f32 %v7320, 0.0
    %v7322 = vadd.f32 %v7321, 1e-05
    %v7323 = vrsqrt.pop %v7322
    %v7324 = vmul.f32 %v7323, %v6168
    %v7325 = vlaneseq
    %v7326 = vshrl.u32 %v7325, 7
    %v7327 = vsub.s32 1, %v7326
    %v7328 = vrot.slane %v7324, %v7327
    %v7329 = vmul.f32 %v7295, %v7328
    %v7330 = vmul.f32 %v7296, %v7328
    %v7331 = vmul.f32 %v7306, %v7324
    %v7333 = vrot.slane %v7331, 7
    %v7335 = vsub.f32 %v6168, %v7333
    %v7336 = vlaneseq
    %v7337 = vshrl.u32 %v7336, 7
    %v7338 = vsub.s32 2, %v7337
    %v7339 = vrot.slane %v7335, %v7338
    %v7340 = vadd.f32 %v7329, %v7339
    %v7341 = vadd.f32 %v7330, %v7339
    %v7342 = vsel %vm6677, %v6722, 0.0
    %v7343 = vrot.slane %v7342, 4
    %v7344 = vadd.f32 %v7342, %v7343
    %v7345 = vrot.slane %v7344, 2
    %v7346 = vadd.f32 %v7344, %v7345
    %v7347 = vrot.slane %v7346, 1
    %v7348 = vadd.f32 %v7346, %v7347
    %v7349 = vsel %vm6677, %v6723, 0.0
    %v7350 = vrot.slane %v7349, 4
    %v7351 = vadd.f32 %v7349, %v7350
    %v7352 = vrot.slane %v7351, 2
    %v7353 = vadd.f32 %v7351, %v7352
    %v7354 = vrot.slane %v7353, 1
    %v7355 = vadd.f32 %v7353, %v7354
    %v7356 = vrcp.pop 2.0
    %v7357 = vmul.f32 %v7348, %v7356
    %v7358 = vmul.f32 %v7355, %v7356
    %v7359 = vsel %vm6677, %v7031, 0.0
    %v7360 = vrot.slane %v7359, 4
    %v7361 = vadd.f32 %v7359, %v7360
    %v7362 = vrot.slane %v7361, 2
    %v7363 = vadd.f32 %v7361, %v7362
    %v7364 = vrot.slane %v7363, 1
    %v7365 = vadd.f32 %v7363, %v7364
    %v7366 = vsel %vm6677, %v7032, 0.0
    %v7367 = vrot.slane %v7366, 4
    %v7368 = vadd.f32 %v7366, %v7367
    %v7369 = vrot.slane %v7368, 2
    %v7370 = vadd.f32 %v7368, %v7369
    %v7371 = vrot.slane %v7370, 1
    %v7372 = vadd.f32 %v7370, %v7371
    %v7373 = vmul.f32 %v7365, %v7356
    %v7374 = vmul.f32 %v7372, %v7356
    %v7375 = vsel %vm6677, %v7340, 0.0
    %v7376 = vrot.slane %v7375, 4
    %v7377 = vadd.f32 %v7375, %v7376
    %v7378 = vrot.slane %v7377, 2
    %v7379 = vadd.f32 %v7377, %v7378
    %v7380 = vrot.slane %v7379, 1
    %v7381 = vadd.f32 %v7379, %v7380
    %v7382 = vsel %vm6677, %v7341, 0.0
    %v7383 = vrot.slane %v7382, 4
    %v7384 = vadd.f32 %v7382, %v7383
    %v7385 = vrot.slane %v7384, 2
    %v7386 = vadd.f32 %v7384, %v7385
    %v7387 = vrot.slane %v7386, 1
    %v7388 = vadd.f32 %v7386, %v7387
    %v7389 = vmul.f32 %v7381, %v7356
    %v7390 = vmul.f32 %v7388, %v7356
    %v7391 = vld [vmem:[#allocation37] sm:$0xf]
    %v7392 = vld [vmem:[#allocation37 + $0x4] sm:$0xf]
    %v7393 = vld [vmem:[#allocation37 + $0x8] sm:$0xf]
    %v7394 = vld [vmem:[#allocation37 + $0xc] sm:$0xf]
    %v7395 = vpack.c.bf16 %v7357, %v7357
    %v7396 = vpack.c.bf16 %v7358, %v7358
    %v7397 = vld [vmem:[#allocation37 + $0x10] sm:$0xf]
    %v7398 = vld [vmem:[#allocation37 + $0x14] sm:$0xf]
    %v7399 = vld [vmem:[#allocation37 + $0x18] sm:$0xf]
    %v7400 = vld [vmem:[#allocation37 + $0x1c] sm:$0xf]
    %v7401 = vpack.c.bf16 %v7373, %v7373
    %v7402 = vpack.c.bf16 %v7374, %v7374
    %v7405 = vunpack.c.l.b16 %v7401
    %v7406 = vunpack.c.l.b16 %v7402
    %vm7407 = vcmask 1041409
    %v7408 = vsel %vm7407, %v7406, %v7405
    %v7409 = vpack.c.b16 %v7408, %v7408
    %v7414 = vunpack.c.l.b16 %v7397
    %v7415 = vunpack.c.l.b16 %v7398
    %v7416 = vunpack.c.l.b16 %v7399
    %v7417 = vunpack.c.l.b16 %v7400
    %v7418 = vpack.c.b16 %v7415, %v7414
    %v7419 = vpack.c.b16 %v7417, %v7416
    %v7423 = vsel %vm678, %v7409, 0
    %7425 = vmatprep.subr.bf16.mxu0 0
    %7426 = vmatpush1.bf16.msra.mxu0 %v7418
    %7427 = vmatprep.subr.bf16.mxu0 0
    %7428 = vmatpush1.bf16.msra.mxu0 %v7419
    %7429 = vmatprep.subr.bf16.mxu0 0
    %7430 = vmatpush1.bf16.msra.mxu0 0
    %7431 = vmatprep.subr.bf16.mxu0 0
    %7432 = vmatpush1.bf16.msra.mxu0 0
    %7433 = vmatprep.subr.bf16.mxu0 0
    %7434 = vmatpush1.bf16.msra.mxu0 0
    %7435 = vmatprep.subr.bf16.mxu0 0
    %7436 = vmatpush1.bf16.msra.mxu0 0
    %7437 = vmatprep.subr.bf16.mxu0 0
    %7438 = vmatpush1.bf16.msra.mxu0 0
    %7439 = vmatprep.subr.bf16.mxu0 0
    %7440 = vmatpush1.bf16.msra.mxu0 0
    %7441 = vmatprep.subr.bf16.mxu0 0
    %7442 = vmatpush1.bf16.msra.mxu0 0
    %7443 = vmatprep.subr.bf16.mxu0 0
    %7444 = vmatpush1.bf16.msra.mxu0 0
    %7445 = vmatprep.subr.bf16.mxu0 0
    %7446 = vmatpush1.bf16.msra.mxu0 0
    %7447 = vmatprep.subr.bf16.mxu0 0
    %7448 = vmatpush1.bf16.msra.mxu0 0
    %7449 = vmatprep.subr.bf16.mxu0 0
    %7450 = vmatpush1.bf16.msra.mxu0 0
    %7451 = vmatprep.subr.bf16.mxu0 0
    %7452 = vmatpush1.bf16.msra.mxu0 0
    %7453 = vmatprep.subr.bf16.mxu0 0
    %7454 = vmatpush1.bf16.msra.mxu0 0
    %7455 = vmatprep.subr.bf16.mxu0 0
    %7456 = vmatpush1.bf16.msra.mxu0 0
    %7457 = vmatprep.mubr.bf16.mxu0 0
    %7458 = vmatmul.mubr.bf16.gmra.mrb[0].mxu0 %v7423
    %v7459 = vpop.f32.mrb[0].mxu0
    %v7460 = vadd.f32 0.0, %v7459
    %v7461 = vpop.f32.mrb[0].mxu0
    %v7462 = vpop.f32.mrb[0].mxu0
    %v7463 = vpop.f32.mrb[0].mxu0
    %7464 = vdwg.mxu0
    %v7467 = vunpack.c.l.b16 %v7395
    %v7468 = vunpack.c.l.b16 %v7396
    %v7469 = vsel %vm7407, %v7468, %v7467
    %v7470 = vpack.c.b16 %v7469, %v7469
    %v7475 = vunpack.c.l.b16 %v7391
    %v7476 = vunpack.c.l.b16 %v7392
    %v7477 = vunpack.c.l.b16 %v7393
    %v7478 = vunpack.c.l.b16 %v7394
    %v7479 = vpack.c.b16 %v7476, %v7475
    %v7480 = vpack.c.b16 %v7478, %v7477
    %v7484 = vsel %vm678, %v7470, 0
    %7486 = vmatprep.subr.bf16.mxu0 0
    %7487 = vmatpush1.bf16.msra.mxu0 %v7479
    %7488 = vmatprep.subr.bf16.mxu0 0
    %7489 = vmatpush1.bf16.msra.mxu0 %v7480
    %7490 = vmatprep.subr.bf16.mxu0 0
    %7491 = vmatpush1.bf16.msra.mxu0 0
    %7492 = vmatprep.subr.bf16.mxu0 0
    %7493 = vmatpush1.bf16.msra.mxu0 0
    %7494 = vmatprep.subr.bf16.mxu0 0
    %7495 = vmatpush1.bf16.msra.mxu0 0
    %7496 = vmatprep.subr.bf16.mxu0 0
    %7497 = vmatpush1.bf16.msra.mxu0 0
    %7498 = vmatprep.subr.bf16.mxu0 0
    %7499 = vmatpush1.bf16.msra.mxu0 0
    %7500 = vmatprep.subr.bf16.mxu0 0
    %7501 = vmatpush1.bf16.msra.mxu0 0
    %7502 = vmatprep.subr.bf16.mxu0 0
    %7503 = vmatpush1.bf16.msra.mxu0 0
    %7504 = vmatprep.subr.bf16.mxu0 0
    %7505 = vmatpush1.bf16.msra.mxu0 0
    %7506 = vmatprep.subr.bf16.mxu0 0
    %7507 = vmatpush1.bf16.msra.mxu0 0
    %7508 = vmatprep.subr.bf16.mxu0 0
    %7509 = vmatpush1.bf16.msra.mxu0 0
    %7510 = vmatprep.subr.bf16.mxu0 0
    %7511 = vmatpush1.bf16.msra.mxu0 0
    %7512 = vmatprep.subr.bf16.mxu0 0
    %7513 = vmatpush1.bf16.msra.mxu0 0
    %7514 = vmatprep.subr.bf16.mxu0 0
    %7515 = vmatpush1.bf16.msra.mxu0 0
    %7516 = vmatprep.subr.bf16.mxu0 0
    %7517 = vmatpush1.bf16.msra.mxu0 0
    %7518 = vmatprep.mubr.bf16.mxu0 0
    %7519 = vmatmul.mubr.bf16.gmra.mrb[0].mxu0 %v7484
    %v7520 = vpop.f32.mrb[0].mxu0
    %v7521 = vadd.f32 %v7460, %v7520
    %v7522 = vpop.f32.mrb[0].mxu0
    %v7523 = vpop.f32.mrb[0].mxu0
    %v7524 = vpop.f32.mrb[0].mxu0
    %7525 = vdwg.mxu0
    %v7526 = vld [vmem:[#allocation37 + $0x20] sm:$0xf]
    %v7527 = vld [vmem:[#allocation37 + $0x24] sm:$0xf]
    %v7528 = vld [vmem:[#allocation37 + $0x28] sm:$0xf]
    %v7529 = vld [vmem:[#allocation37 + $0x2c] sm:$0xf]
    %v7530 = vpack.c.bf16 %v7389, %v7389
    %v7531 = vpack.c.bf16 %v7390, %v7390
    %v7534 = vunpack.c.l.b16 %v7530
    %v7535 = vunpack.c.l.b16 %v7531
    %v7536 = vsel %vm7407, %v7535, %v7534
    %v7537 = vpack.c.b16 %v7536, %v7536
    %v7542 = vunpack.c.l.b16 %v7526
    %v7543 = vunpack.c.l.b16 %v7527
    %v7544 = vunpack.c.l.b16 %v7528
    %v7545 = vunpack.c.l.b16 %v7529
    %v7546 = vpack.c.b16 %v7543, %v7542
    %v7547 = vpack.c.b16 %v7545, %v7544
    %v7551 = vsel %vm678, %v7537, 0
    %7553 = vmatprep.subr.bf16.mxu0 0
    %7554 = vmatpush1.bf16.msra.mxu0 %v7546
    %7555 = vmatprep.subr.bf16.mxu0 0
    %7556 = vmatpush1.bf16.msra.mxu0 %v7547
    %7557 = vmatprep.subr.bf16.mxu0 0
    %7558 = vmatpush1.bf16.msra.mxu0 0
    %7559 = vmatprep.subr.bf16.mxu0 0
    %7560 = vmatpush1.bf16.msra.mxu0 0
    %7561 = vmatprep.subr.bf16.mxu0 0
    %7562 = vmatpush1.bf16.msra.mxu0 0
    %7563 = vmatprep.subr.bf16.mxu0 0
    %7564 = vmatpush1.bf16.msra.mxu0 0
    %7565 = vmatprep.subr.bf16.mxu0 0
    %7566 = vmatpush1.bf16.msra.mxu0 0
    %7567 = vmatprep.subr.bf16.mxu0 0
    %7568 = vmatpush1.bf16.msra.mxu0 0
    %7569 = vmatprep.subr.bf16.mxu0 0
    %7570 = vmatpush1.bf16.msra.mxu0 0
    %7571 = vmatprep.subr.bf16.mxu0 0
    %7572 = vmatpush1.bf16.msra.mxu0 0
    %7573 = vmatprep.subr.bf16.mxu0 0
    %7574 = vmatpush1.bf16.msra.mxu0 0
    %7575 = vmatprep.subr.bf16.mxu0 0
    %7576 = vmatpush1.bf16.msra.mxu0 0
    %7577 = vmatprep.subr.bf16.mxu0 0
    %7578 = vmatpush1.bf16.msra.mxu0 0
    %7579 = vmatprep.subr.bf16.mxu0 0
    %7580 = vmatpush1.bf16.msra.mxu0 0
    %7581 = vmatprep.subr.bf16.mxu0 0
    %7582 = vmatpush1.bf16.msra.mxu0 0
    %7583 = vmatprep.subr.bf16.mxu0 0
    %7584 = vmatpush1.bf16.msra.mxu0 0
    %7585 = vmatprep.mubr.bf16.mxu0 0
    %7586 = vmatmul.mubr.bf16.gmra.mrb[0].mxu0 %v7551
    %v7587 = vpop.f32.mrb[0].mxu0
    %v7588 = vadd.f32 0.0, %v7587
    %v7589 = vpop.f32.mrb[0].mxu0
    %v7590 = vpop.f32.mrb[0].mxu0
    %v7591 = vpop.f32.mrb[0].mxu0
    %7592 = vdwg.mxu0
    %v7593 = vadd.f32 %v7521, %v7588
    %v7594 = vld [vmem:[#allocation39] sm:$0x1]
    %v7596 = vlaneseq
    %v7597 = vshrl.u32 %v7596, 7
    %v7598 = vsub.s32 0, %v7597
    %v7599 = vrot.slane %v7594, %v7598
    %v7601 = vadd.f32 %v7593, %v7599
    %v7602 = vmax.f32 %v7601, 0.0
    %v7603 = vld [vmem:[%s59] sm:$0xf]
    %v7604 = vld [vmem:[%s59 + $0x4] sm:$0xf]
    %v7605 = vld [vmem:[%s59 + $0x8] sm:$0xf]
    %v7606 = vld [vmem:[%s59 + $0xc] sm:$0xf]
    %v7607 = vpack.c.bf16 %v7602, %v7602
    %v7608 = vld [vmem:[#allocation40] sm:$0x1]
    %v7610 = vlaneseq
    %v7611 = vshrl.u32 %v7610, 7
    %v7612 = vsub.s32 0, %v7611
    %v7613 = vrot.slane %v7608, %v7612
    %v7619 = vunpack.c.l.b16 %v7603
    %v7620 = vunpack.c.l.b16 %v7604
    %v7621 = vunpack.c.l.b16 %v7605
    %v7622 = vunpack.c.l.b16 %v7606
    %v7623 = vpack.c.b16 %v7620, %v7619
    %v7624 = vpack.c.b16 %v7622, %v7621
    %v7628 = vsel %vm678, %v7607, 0
    %7630 = vmatprep.subr.bf16.mxu0 0
    %7631 = vmatpush1.bf16.msra.mxu0 %v7623
    %7632 = vmatprep.subr.bf16.mxu0 0
    %7633 = vmatpush1.bf16.msra.mxu0 %v7624
    %7634 = vmatprep.subr.bf16.mxu0 0
    %7635 = vmatpush1.bf16.msra.mxu0 0
    %7636 = vmatprep.subr.bf16.mxu0 0
    %7637 = vmatpush1.bf16.msra.mxu0 0
    %7638 = vmatprep.subr.bf16.mxu0 0
    %7639 = vmatpush1.bf16.msra.mxu0 0
    %7640 = vmatprep.subr.bf16.mxu0 0
    %7641 = vmatpush1.bf16.msra.mxu0 0
    %7642 = vmatprep.subr.bf16.mxu0 0
    %7643 = vmatpush1.bf16.msra.mxu0 0
    %7644 = vmatprep.subr.bf16.mxu0 0
    %7645 = vmatpush1.bf16.msra.mxu0 0
    %7646 = vmatprep.subr.bf16.mxu0 0
    %7647 = vmatpush1.bf16.msra.mxu0 0
    %7648 = vmatprep.subr.bf16.mxu0 0
    %7649 = vmatpush1.bf16.msra.mxu0 0
    %7650 = vmatprep.subr.bf16.mxu0 0
    %7651 = vmatpush1.bf16.msra.mxu0 0
    %7652 = vmatprep.subr.bf16.mxu0 0
    %7653 = vmatpush1.bf16.msra.mxu0 0
    %7654 = vmatprep.subr.bf16.mxu0 0
    %7655 = vmatpush1.bf16.msra.mxu0 0
    %7656 = vmatprep.subr.bf16.mxu0 0
    %7657 = vmatpush1.bf16.msra.mxu0 0
    %7658 = vmatprep.subr.bf16.mxu0 0
    %7659 = vmatpush1.bf16.msra.mxu0 0
    %7660 = vmatprep.subr.bf16.mxu0 0
    %7661 = vmatpush1.bf16.msra.mxu0 0
    %7662 = vmatprep.mubr.bf16.mxu0 0
    %7663 = vmatmul.mubr.bf16.gmra.mrb[0].mxu0 %v7628
    %v7664 = vpop.f32.mrb[0].mxu0
    %v7665 = vadd.f32 %v7613, %v7664
    %v7666 = vpop.f32.mrb[0].mxu0
    %v7667 = vpop.f32.mrb[0].mxu0
    %v7668 = vpop.f32.mrb[0].mxu0
    %7669 = vdwg.mxu0
    %7670 = vst [vmem:[%s63] sm:$0x3] %v7665
    // Predicated region
    $region230: #{_lambda_.1} parent=1 // pred_check
      _
    $region231: #{_lambda_.1} parent=1 // pred_check_branch
      %7672 = sbr.rel (0) target = $region233
    $region232: #{_lambda_.1} parent=1 // pred_region
      _
    $region233: #{_lambda_.1} parent=1 // pred_fallthru
      _
    // Predicated region
    $region234: #{_lambda_.1} parent=1 // pred_check
      _
    $region235: #{_lambda_.1} parent=1 // pred_check_branch
      %7674 = sbr.rel (0) target = $region237
    $region236: #{_lambda_.1} parent=1 // pred_region
      _
    $region237: #{_lambda_.1} parent=1 // pred_fallthru
      _
    %7675 = vsyncpa [#allocation3], 1
    %7676 = vsyncpa [#allocation5], 1
    %7677 = vsyncpa [#allocation8], 1
    %7678 = vsyncpa [#allocation11], 1
    %7679 = vsyncpa [#allocation14], 1
    %7680 = vsyncpa [#allocation17], 1
    %7681 = vsyncpa [#allocation20], 1
    %7682 = vsyncpa [#allocation23], 1
    %7683 = vsyncpa [#allocation26], 1
    %7684 = vsyncpa [#allocation29], 1
    %7685 = vsyncpa [#allocation32], 1
    %7686 = vsyncpa [#allocation35], 1
    %7687 = vsyncpa [#allocation38], 1
    %7688 = vsyncpa [#allocation41], 1

</llo_original>
